<compile_context>
chip_gen: v7x
topology: tpu7x:2x2x1
jax: 0.10.0
libtpu: 0.0.40
codegen_flags: <defaults>
</compile_context>

<pallas_src>
import functools

import numpy as np
import jax
import jax.numpy as jnp
from jax import lax
from jax.experimental import pallas as pl
from jax.experimental.pallas import tpu as pltpu

_SUB = 8               # channel padding granularity (f32 sublanes)
_REFS_PER_LAYER = 8    # e, vin, gsum_in, vout, gsum_out, w1, w2, wsc


def _pad_up(n, m):
    return ((n + m - 1) // m) * m


def _silu(v):
    return v * jax.nn.sigmoid(v)


# ------------------------------ in-kernel helpers ------------------------------

def _group_norm(x, gamma, beta, gsum, gbcast, inv_n, eps):
    """GroupNorm on (Cp, L) activations whose halo columns / pad channels are zero.

    gsum:   (G, Cp) 0/1 gather matrix (real channel -> its group).
    gbcast: (Cp, G) 0/1 broadcast matrix (group stat -> every channel of the group).
    inv_n = 1/(HW * group_size) uses the REAL pixel/channel counts, so zero halo
    columns and zero pad channels drop out of the sums exactly.
    """
    s1 = jnp.sum(x, axis=1, keepdims=True)                                  # (Cp,1)
    s2 = jnp.sum(x * x, axis=1, keepdims=True)                              # (Cp,1)
    m1 = jnp.dot(gbcast, jnp.dot(gsum, s1, preferred_element_type=jnp.float32),
                 preferred_element_type=jnp.float32) * inv_n                # mean
    m2 = jnp.dot(gbcast, jnp.dot(gsum, s2, preferred_element_type=jnp.float32),
                 preferred_element_type=jnp.float32) * inv_n                # E[x^2]
    var = jnp.maximum(m2 - m1 * m1, 0.0)
    return (x - m1) * lax.rsqrt(var + eps) * gamma + beta


# ----------------------------------- kernel ------------------------------------

def _res_attn_kernel(x_ref, hm_ref, *rest, H, W, chans, groups, eps):
    *lrefs, o_ref, pad_ref = rest
    Wp = W + 2
    Lout = H * Wp                    # row-halo-padded spatial length of all activations
    HW = H * W

    # Zero the conv staging scratch once per grid step: halo/margin lanes are never
    # written again; real lanes are fully overwritten before every conv.
    pad_ref[...] = jnp.zeros_like(pad_ref)
    hm = hm_ref[...]                 # (1, Lout) halo-column mask (1 = real pixel)

    def stage(t, cp):
        # One masked bf16 cast + one contiguous store per conv (no rolls, no concat).
        pad_ref[0:cp, Wp + 1:Wp + 1 + Lout] = (t * hm).astype(pad_ref.dtype)

    def conv3x3(w_ref, cp):
        # 9 shifted static views of the halo-padded scratch -> 9 accumulated MXU matmuls.
        acc = None
        for tap in range(9):
            dy, dx = tap // 3 - 1, tap % 3 - 1
            s = (dy + 1) * Wp + (dx + 1)
            part = jnp.dot(w_ref[tap], pad_ref[0:cp, s:s + Lout],
                           preferred_element_type=jnp.float32)
            acc = part if acc is None else acc + part
        return acc                                                           # (cout_p, Lout) f32

    h = x_ref[0].astype(jnp.float32)             # (c0_p, Lout); halo cols & pad channels zero
    for l, (cin, cout) in enumerate(chans):
        (e_ref, vin_ref, gsi_ref, vout_ref, gso_ref,
         w1_ref, w2_ref, wsc_ref) = lrefs[l * _REFS_PER_LAYER:(l + 1) * _REFS_PER_LAYER]
        cin_p, cout_p = vin_ref.shape[0], vout_ref.shape[0]
        vin, vout = vin_ref[...], vout_ref[...]
        inv_n1 = 1.0 / float(HW * (cin // groups))
        inv_n2 = 1.0 / float(HW * (cout // groups))

        x_in = h
        # norm1 -> SiLU -> conv1  (+ emb projection, conv1 bias already folded into e)
        t = _group_norm(x_in, vin[:, 0:1], vin[:, 1:2],
                        gsi_ref[...], vin[:, 2:2 + groups], inv_n1, eps)
        t = _silu(t)
        stage(t, cin_p)
        t = conv3x3(w1_ref, cin_p) + e_ref[0]                                # (cout_p, Lout)
        t = t * hm                                   # re-zero halo cols for norm2 statistics
        # norm2 -> SiLU -> dropout -> conv2
        t = _group_norm(t, vout[:, 0:1], vout[:, 1:2],
                        gso_ref[...], vout[:, 3:3 + groups], inv_n2, eps)
        t = _silu(t)
        # TODO(synk): nn.Dropout treated as identity (inference); add pltpu PRNG mask for training.
        stage(t, cout_p)
        t = conv3x3(w2_ref, cout_p)
        # 1x1 shortcut conv (conv2 bias + shortcut bias folded on the host) + residual
        sc = jnp.dot(wsc_ref[...], x_in.astype(jnp.bfloat16),
                     preferred_element_type=jnp.float32) + vout[:, 2:3]
        h = (t + sc) * hm                            # zero halos for next layer / output
    o_ref[0] = h.astype(o_ref.dtype)


# ----------------------------- host-side packing --------------------------------

def _pack_layer(p, groups):
    """Repack one ResBlock's params into padded, kernel-friendly layouts."""
    cin, cout = p["w1"].shape[1], p["w1"].shape[2]
    cin_p, cout_p = _pad_up(cin, _SUB), _pad_up(cout, _SUB)
    G = groups

    def col(v, c, c_p):                       # (1,c) -> (c_p,1) f32, zero padded
        return jnp.pad(v.reshape(c, 1).astype(jnp.float32), ((0, c_p - c), (0, 0)))

    def gmats(c, c_p):                        # gather (G,c_p) and broadcast (c_p,G) 0/1 matrices
        gsz = c // G
        bcast = np.zeros((c_p, G), np.float32)
        for i in range(c):
            bcast[i, i // gsz] = 1.0
        return jnp.asarray(np.ascontiguousarray(bcast.T)), jnp.asarray(bcast)

    def conv_w(w9, ci, ci_p, co, co_p):       # (9,ci,co) -> (9,co_p,ci_p) bf16
        wp = jnp.pad(w9, ((0, 0), (0, ci_p - ci), (0, co_p - co)))
        return jnp.transpose(wp, (0, 2, 1)).astype(jnp.bfloat16)

    gsum_in, gb_in = gmats(cin, cin_p)
    gsum_out, gb_out = gmats(cout, cout_p)
    vin = jnp.concatenate([col(p["g1"], cin, cin_p), col(p["be1"], cin, cin_p),
                           gb_in], axis=1)                                   # (cin_p, 2+G)
    vout = jnp.concatenate([col(p["g2"], cout, cout_p), col(p["be2"], cout, cout_p),
                            col(p["bsc"], cout, cout_p) + col(p["bc2"], cout, cout_p),
                            gb_out], axis=1)                                 # (cout_p, 3+G)
    wsc = jnp.pad(p["wsc"], ((0, cin_p - cin), (0, cout_p - cout))).T.astype(jnp.bfloat16)
    packed = [vin, gsum_in, vout, gsum_out,
              conv_w(p["w1"], cin, cin_p, cout, cout_p),
              conv_w(p["w2"], cout, cout_p, cout, cout_p),
              wsc]
    return packed, cin, cin_p, cout, cout_p


def _const_spec(arr):
    nd = arr.ndim
    return pl.BlockSpec(arr.shape, lambda b, _nd=nd: (0,) * _nd)


# ------------------------------- pallas wrapper ----------------------------------

def res_attn_block(x_nchw, emb, layer_params, *, groups, eps=1e-5):
    """Res_AttnBlock.forward: all ResBlocks fused into one pallas_call."""
    B, C0, H, W = x_nchw.shape
    HW = H * W
    Wp = W + 2
    Lout = H * Wp                      # row-halo-padded spatial length
    Lin = (H + 2) * Wp + 2             # conv staging scratch length (adds top/bottom margin)

    c_prev, c_prev_p = C0, _pad_up(C0, _SUB)
    # Host-side layout prep: NCHW -> (B, C0p, H*(W+2)) with zero halo columns.
    x = jnp.pad(x_nchw, ((0, 0), (0, c_prev_p - C0), (0, 0), (1, 1)))
    x = x.reshape(B, c_prev_p, Lout)

    # Halo-column mask: 1 at real pixels, 0 at the two pad columns of every row.
    colmod = np.arange(Lout) % Wp
    hm = jnp.asarray(((colmod != 0) & (colmod != Wp - 1)).astype(np.float32))[None, :]

    emb_act = _silu(emb)

    inputs = [x, hm]
    in_specs = [pl.BlockSpec((1, c_prev_p, Lout), lambda b: (b, 0, 0)),
                _const_spec(hm)]

    chans = []
    c_scr = c_prev_p
    for p in layer_params:
        packed, cin, cin_p, cout, cout_p = _pack_layer(p, groups)
        assert cin == c_prev and cin_p == c_prev_p
        chans.append((cin, cout))
        c_scr = max(c_scr, cin_p, cout_p)
        # emb projection once per layer in plain XLA; conv1 bias folded in.
        e = jnp.dot(emb_act, p["we"]) + p["bemb"] + p["bc1"]                 # (B, cout)
        e = jnp.pad(e, ((0, 0), (0, cout_p - cout)))[:, :, None]             # (B, cout_p, 1)
        inputs.append(e)
        in_specs.append(pl.BlockSpec((1, cout_p, 1), lambda b: (b, 0, 0)))
        inputs.extend(packed)
        in_specs.extend(_const_spec(a) for a in packed)
        c_prev, c_prev_p = cout, cout_p

    kernel = functools.partial(_res_attn_kernel, H=H, W=W, chans=tuple(chans),
                               groups=groups, eps=eps)
    out = pl.pallas_call(
        kernel,
        out_shape=jax.ShapeDtypeStruct((B, c_prev_p, Lout), jnp.float32),
        grid_spec=pltpu.PrefetchScalarGridSpec(
            num_scalar_prefetch=0,
            grid=(B,),
            in_specs=in_specs,
            out_specs=pl.BlockSpec((1, c_prev_p, Lout), lambda b: (b, 0, 0)),
            scratch_shapes=[pltpu.VMEM((c_scr, Lin), jnp.bfloat16)],
        ),
        compiler_params=pltpu.CompilerParams(
            dimension_semantics=("parallel",),
            vmem_limit_bytes=48 * 1024 * 1024,
        ),
    )(*inputs)
    # Host-side un-pad: strip pad channels and the two halo columns of every row -> NCHW.
    out = out[:, :c_prev, :].reshape(B, c_prev, H, Wp)[:, :, :, 1:1 + W]
    return out


# ------------------------------ params / reference --------------------------------

def init_resblock_params(key, in_ch, out_ch, embch):
    ks = jax.random.split(key, 10)
    f32 = jnp.float32
    return dict(
        g1=1.0 + 0.1 * jax.random.normal(ks[6], (1, in_ch), f32),        # GroupNorm1 weight
        be1=0.1 * jax.random.normal(ks[7], (1, in_ch), f32),             # GroupNorm1 bias
        w1=0.1 * jax.random.normal(ks[0], (9, in_ch, out_ch), f32),      # conv1 3x3 (tap,cin,cout)
        bc1=0.02 * jax.random.normal(ks[1], (1, out_ch), f32),
        we=0.1 * jax.random.normal(ks[2], (embch, out_ch), f32),         # emb_proj Linear
        bemb=0.02 * jax.random.normal(ks[8], (1, out_ch), f32),
        g2=1.0 + 0.1 * jax.random.normal(ks[9], (1, out_ch), f32),
        be2=jnp.zeros((1, out_ch), f32),
        w2=0.1 * jax.random.normal(ks[3], (9, out_ch, out_ch), f32),     # conv2 3x3
        bc2=0.02 * jax.random.normal(ks[4], (1, out_ch), f32),
        wsc=0.1 * jax.random.normal(ks[5], (in_ch, out_ch), f32),        # 1x1 shortcut
        bsc=jnp.zeros((1, out_ch), f32),
    )


def _gn_ref(x, gamma, beta, groups, eps=1e-5):
    B, H, W, C = x.shape
    xg = x.reshape(B, H, W, groups, C // groups)
    mean = xg.mean(axis=(1, 2, 4), keepdims=True)
    var = ((xg - mean) ** 2).mean(axis=(1, 2, 4), keepdims=True)
    xn = ((xg - mean) / jnp.sqrt(var + eps)).reshape(B, H, W, C)
    return xn * gamma.reshape(1, 1, 1, C) + beta.reshape(1, 1, 1, C)


def _conv3x3_ref(x, w9, bias):
    cin, cout = w9.shape[1], w9.shape[2]
    k = w9.reshape(3, 3, cin, cout)
    y = lax.conv_general_dilated(x, k, (1, 1), "SAME",
                                 dimension_numbers=("NHWC", "HWIO", "NHWC"))
    return y + bias.reshape(1, 1, 1, cout)


def res_attn_block_ref(x_nchw, emb, layer_params, groups):
    x = jnp.transpose(x_nchw, (0, 2, 3, 1))
    for p in layer_params:
        h = _gn_ref(x, p["g1"], p["be1"], groups)
        h = _silu(h)
        h = _conv3x3_ref(h, p["w1"], p["bc1"])
        e = jnp.dot(_silu(emb), p["we"]) + p["bemb"]
        h = h + e[:, None, None, :]
        h = _gn_ref(h, p["g2"], p["be2"], groups)
        h = _silu(h)
        h = _conv3x3_ref(h, p["w2"], p["bc2"])
        sc = jnp.einsum("bhwc,co->bhwo", x, p["wsc"]) + p["bsc"].reshape(1, 1, 1, -1)
        x = h + sc
    return jnp.transpose(x, (0, 3, 1, 2))


# ----------------------------------- main -------------------------------------

if __name__ == "__main__":
    key = jax.random.PRNGKey(0)
    B, C_in, H, W = 2, 4, 16, 16
    embch, groups = 32, 2
    k_x, k_e, k1, k2 = jax.random.split(key, 4)

    x = jax.random.normal(k_x, (B, C_in, H, W), jnp.float32)             # NCHW like PyTorch
    emb = jax.random.normal(k_e, (B, embch), jnp.float32)

    # Res_AttnBlock([ResBlock(4, 32, ., 8, 2, False, SiLU), ResBlock(8, 32, ., 8, 2, False, SiLU)])
    layers = [init_resblock_params(k1, C_in, 8, embch),
              init_resblock_params(k2, 8, 8, embch)]

    fwd = jax.jit(res_attn_block, static_argnames=("groups",))
    out = jax.block_until_ready(fwd(x, emb, layers, groups=groups))

    assert out.shape == (B, 8, H, W), out.shape
    ref = res_attn_block_ref(x, emb, layers, groups)
    err = float(jnp.max(jnp.abs(out - ref)))
    # bf16 MXU operands with f32 accumulation across two stacked layers.
    assert jnp.allclose(out, ref, rtol=2e-2, atol=4e-2), err
    print("KERNEL_OK")
</pallas_src>

<mosaic_0001>
module attributes {stable_mosaic.version = 11 : i64} {
  func.func @_res_attn_kernel(%arg0: i32, %arg1: memref<1x8x288xf32, #tpu.memory_space<vmem>>, %arg2: memref<1x288xf32, #tpu.memory_space<vmem>>, %arg3: memref<1x8x1xf32, #tpu.memory_space<vmem>>, %arg4: memref<8x4xf32, #tpu.memory_space<vmem>>, %arg5: memref<2x8xf32, #tpu.memory_space<vmem>>, %arg6: memref<8x5xf32, #tpu.memory_space<vmem>>, %arg7: memref<2x8xf32, #tpu.memory_space<vmem>>, %arg8: memref<9x8x8xbf16, #tpu.memory_space<vmem>>, %arg9: memref<9x8x8xbf16, #tpu.memory_space<vmem>>, %arg10: memref<8x8xbf16, #tpu.memory_space<vmem>>, %arg11: memref<1x8x1xf32, #tpu.memory_space<vmem>>, %arg12: memref<8x4xf32, #tpu.memory_space<vmem>>, %arg13: memref<2x8xf32, #tpu.memory_space<vmem>>, %arg14: memref<8x5xf32, #tpu.memory_space<vmem>>, %arg15: memref<2x8xf32, #tpu.memory_space<vmem>>, %arg16: memref<9x8x8xbf16, #tpu.memory_space<vmem>>, %arg17: memref<9x8x8xbf16, #tpu.memory_space<vmem>>, %arg18: memref<8x8xbf16, #tpu.memory_space<vmem>>, %arg19: memref<1x8x288xf32, #tpu.memory_space<vmem>>, %arg20: memref<8x326xbf16, #tpu.memory_space<vmem>>) attributes {dimension_semantics = [#tpu.dimension_semantics<parallel>], iteration_bounds = array<i64: 2>, scalar_prefetch = 0 : i64, scratch_operands = 1 : i64, tpu.core_type = #tpu.core_type<tc>, window_params = [{transform_indices = @transform_0, window_bounds = array<i64: 1, 8, 288>}, {pipeline_mode = #tpu.pipeline_mode<synchronous>, transform_indices = @transform_1, window_bounds = array<i64: 1, 288>}, {transform_indices = @transform_2, window_bounds = array<i64: 1, 8, 1>}, {pipeline_mode = #tpu.pipeline_mode<synchronous>, transform_indices = @transform_3, window_bounds = array<i64: 8, 4>}, {pipeline_mode = #tpu.pipeline_mode<synchronous>, transform_indices = @transform_4, window_bounds = array<i64: 2, 8>}, {pipeline_mode = #tpu.pipeline_mode<synchronous>, transform_indices = @transform_5, window_bounds = array<i64: 8, 5>}, {pipeline_mode = #tpu.pipeline_mode<synchronous>, transform_indices = @transform_6, window_bounds = array<i64: 2, 8>}, {pipeline_mode = #tpu.pipeline_mode<synchronous>, transform_indices = @transform_7, window_bounds = array<i64: 9, 8, 8>}, {pipeline_mode = #tpu.pipeline_mode<synchronous>, transform_indices = @transform_8, window_bounds = array<i64: 9, 8, 8>}, {pipeline_mode = #tpu.pipeline_mode<synchronous>, transform_indices = @transform_9, window_bounds = array<i64: 8, 8>}, {transform_indices = @transform_10, window_bounds = array<i64: 1, 8, 1>}, {pipeline_mode = #tpu.pipeline_mode<synchronous>, transform_indices = @transform_11, window_bounds = array<i64: 8, 4>}, {pipeline_mode = #tpu.pipeline_mode<synchronous>, transform_indices = @transform_12, window_bounds = array<i64: 2, 8>}, {pipeline_mode = #tpu.pipeline_mode<synchronous>, transform_indices = @transform_13, window_bounds = array<i64: 8, 5>}, {pipeline_mode = #tpu.pipeline_mode<synchronous>, transform_indices = @transform_14, window_bounds = array<i64: 2, 8>}, {pipeline_mode = #tpu.pipeline_mode<synchronous>, transform_indices = @transform_15, window_bounds = array<i64: 9, 8, 8>}, {pipeline_mode = #tpu.pipeline_mode<synchronous>, transform_indices = @transform_16, window_bounds = array<i64: 9, 8, 8>}, {pipeline_mode = #tpu.pipeline_mode<synchronous>, transform_indices = @transform_17, window_bounds = array<i64: 8, 8>}, {transform_indices = @transform_18, window_bounds = array<i64: 1, 8, 288>}]} {
    %cst = arith.constant 0.000000e+00 : bf16
    %0 = vector.broadcast %cst : bf16 to vector<8x326xbf16>
    %c0 = arith.constant 0 : index
    %c0_0 = arith.constant 0 : index
    %1 = vector.load %arg20[%c0, %c0_0] : memref<8x326xbf16, #tpu.memory_space<vmem>>, vector<8x326xbf16>
    tpu.vector_store %arg20[%c0, %c0_0], %0 {strides = array<i32>} : memref<8x326xbf16, #tpu.memory_space<vmem>>, vector<8x326xbf16>,
    %c0_1 = arith.constant 0 : index
    %c0_2 = arith.constant 0 : index
    %2 = vector.load %arg2[%c0_1, %c0_2] : memref<1x288xf32, #tpu.memory_space<vmem>>, vector<1x288xf32>
    %c0_3 = arith.constant 0 : index
    %c0_4 = arith.constant 0 : index
    %c0_5 = arith.constant 0 : index
    %3 = vector.load %arg1[%c0_3, %c0_4, %c0_5] : memref<1x8x288xf32, #tpu.memory_space<vmem>>, vector<1x8x288xf32>
    %4 = vector.shape_cast %3 : vector<1x8x288xf32> to vector<8x288xf32>
    %c0_6 = arith.constant 0 : index
    %c0_7 = arith.constant 0 : index
    %5 = vector.load %arg4[%c0_6, %c0_7] : memref<8x4xf32, #tpu.memory_space<vmem>>, vector<8x4xf32>
    %c0_8 = arith.constant 0 : index
    %c0_9 = arith.constant 0 : index
    %6 = vector.load %arg6[%c0_8, %c0_9] : memref<8x5xf32, #tpu.memory_space<vmem>>, vector<8x5xf32>
    %7 = vector.extract_strided_slice %5 {offsets = [0, 0], sizes = [8, 1], strides = [1, 1]} : vector<8x4xf32> to vector<8x1xf32>
    %8 = vector.extract_strided_slice %5 {offsets = [0, 1], sizes = [8, 1], strides = [1, 1]} : vector<8x4xf32> to vector<8x1xf32>
    %c0_10 = arith.constant 0 : index
    %c0_11 = arith.constant 0 : index
    %9 = vector.load %arg5[%c0_10, %c0_11] : memref<2x8xf32, #tpu.memory_space<vmem>>, vector<2x8xf32>
    %10 = vector.extract_strided_slice %5 {offsets = [0, 2], sizes = [8, 2], strides = [1, 1]} : vector<8x4xf32> to vector<8x2xf32>
    %cst_12 = arith.constant dense<0.000000e+00> : vector<8xf32>
    %11 = vector.multi_reduction <add>, %4, %cst_12 [1] : vector<8x288xf32> to vector<8xf32>
    %12 = vector.shape_cast %11 : vector<8xf32> to vector<8x1xf32>
    %13 = arith.mulf %4, %4 : vector<8x288xf32>
    %cst_13 = arith.constant dense<0.000000e+00> : vector<8xf32>
    %14 = vector.multi_reduction <add>, %13, %cst_13 [1] : vector<8x288xf32> to vector<8xf32>
    %15 = vector.shape_cast %14 : vector<8xf32> to vector<8x1xf32>
    %cst_14 = arith.constant dense<0.000000e+00> : vector<2x1xf32>
    %16 = tpu.matmul %9, %12, %cst_14 {dimension_numbers = #tpu.dot_dimension_numbers<[1], [0], [0], [1], [0, 0, 1, 1], [], []>} : vector<2x8xf32>, vector<8x1xf32>, vector<2x1xf32> -> vector<2x1xf32>
    %cst_15 = arith.constant dense<0.000000e+00> : vector<8x1xf32>
    %17 = tpu.matmul %10, %16, %cst_15 {dimension_numbers = #tpu.dot_dimension_numbers<[1], [0], [0], [1], [0, 0, 1, 1], [], []>} : vector<8x2xf32>, vector<2x1xf32>, vector<8x1xf32> -> vector<8x1xf32>
    %cst_16 = arith.constant 0.001953125 : f32
    %18 = vector.broadcast %cst_16 : f32 to vector<8x1xf32>
    %19 = arith.mulf %17, %18 : vector<8x1xf32>
    %cst_17 = arith.constant dense<0.000000e+00> : vector<2x1xf32>
    %20 = tpu.matmul %9, %15, %cst_17 {dimension_numbers = #tpu.dot_dimension_numbers<[1], [0], [0], [1], [0, 0, 1, 1], [], []>} : vector<2x8xf32>, vector<8x1xf32>, vector<2x1xf32> -> vector<2x1xf32>
    %cst_18 = arith.constant dense<0.000000e+00> : vector<8x1xf32>
    %21 = tpu.matmul %10, %20, %cst_18 {dimension_numbers = #tpu.dot_dimension_numbers<[1], [0], [0], [1], [0, 0, 1, 1], [], []>} : vector<8x2xf32>, vector<2x1xf32>, vector<8x1xf32> -> vector<8x1xf32>
    %cst_19 = arith.constant 0.001953125 : f32
    %22 = vector.broadcast %cst_19 : f32 to vector<8x1xf32>
    %23 = arith.mulf %21, %22 : vector<8x1xf32>
    %24 = arith.mulf %19, %19 : vector<8x1xf32>
    %25 = arith.subf %23, %24 : vector<8x1xf32>
    %cst_20 = arith.constant 0.000000e+00 : f32
    %26 = vector.broadcast %cst_20 : f32 to vector<8x1xf32>
    %27 = arith.maximumf %25, %26 : vector<8x1xf32>
    %28 = vector.broadcast %19 : vector<8x1xf32> to vector<8x288xf32>
    %29 = arith.subf %4, %28 : vector<8x288xf32>
    %cst_21 = arith.constant 9.99999974E-6 : f32
    %30 = vector.broadcast %cst_21 : f32 to vector<8x1xf32>
    %31 = arith.addf %27, %30 : vector<8x1xf32>
    %32 = math.rsqrt %31 : vector<8x1xf32>
    %33 = vector.broadcast %32 : vector<8x1xf32> to vector<8x288xf32>
    %34 = arith.mulf %29, %33 : vector<8x288xf32>
    %35 = vector.broadcast %7 : vector<8x1xf32> to vector<8x288xf32>
    %36 = arith.mulf %34, %35 : vector<8x288xf32>
    %37 = vector.broadcast %8 : vector<8x1xf32> to vector<8x288xf32>
    %38 = arith.addf %36, %37 : vector<8x288xf32>
    %39 = arith.negf %38 : vector<8x288xf32>
    %40 = math.exp %39 : vector<8x288xf32>
    %cst_22 = arith.constant 1.000000e+00 : f32
    %41 = vector.broadcast %cst_22 : f32 to vector<8x288xf32>
    %42 = arith.addf %41, %40 : vector<8x288xf32>
    %43 = arith.divf %41, %42 : vector<8x288xf32>
    %44 = arith.mulf %38, %43 : vector<8x288xf32>
    %45 = vector.broadcast %2 : vector<1x288xf32> to vector<8x288xf32>
    %46 = arith.mulf %44, %45 : vector<8x288xf32>
    %47 = arith.truncf %46 : vector<8x288xf32> to vector<8x288xbf16>
    %c0_23 = arith.constant 0 : index
    %c19 = arith.constant 19 : index
    %48 = vector.load %arg20[%c0_23, %c19] : memref<8x326xbf16, #tpu.memory_space<vmem>>, vector<8x288xbf16>
    tpu.vector_store %arg20[%c0_23, %c19], %47 {strides = array<i32>} : memref<8x326xbf16, #tpu.memory_space<vmem>>, vector<8x288xbf16>,
    %c0_24 = arith.constant 0 : index
    %c0_25 = arith.constant 0 : index
    %c0_26 = arith.constant 0 : index
    %49 = vector.load %arg8[%c0_24, %c0_25, %c0_26] : memref<9x8x8xbf16, #tpu.memory_space<vmem>>, vector<1x8x8xbf16>
    %50 = vector.shape_cast %49 : vector<1x8x8xbf16> to vector<8x8xbf16>
    %c0_27 = arith.constant 0 : index
    %c0_28 = arith.constant 0 : index
    %51 = vector.load %arg20[%c0_27, %c0_28] : memref<8x326xbf16, #tpu.memory_space<vmem>>, vector<8x288xbf16>
    %cst_29 = arith.constant dense<0.000000e+00> : vector<8x288xf32>
    %52 = tpu.matmul %50, %51, %cst_29 {dimension_numbers = #tpu.dot_dimension_numbers<[1], [0], [0], [1], [0, 0, 1, 1], [], []>} : vector<8x8xbf16>, vector<8x288xbf16>, vector<8x288xf32> -> vector<8x288xf32>
    %c1 = arith.constant 1 : index
    %c0_30 = arith.constant 0 : index
    %c0_31 = arith.constant 0 : index
    %53 = vector.load %arg8[%c1, %c0_30, %c0_31] : memref<9x8x8xbf16, #tpu.memory_space<vmem>>, vector<1x8x8xbf16>
    %54 = vector.shape_cast %53 : vector<1x8x8xbf16> to vector<8x8xbf16>
    %c0_32 = arith.constant 0 : index
    %c1_33 = arith.constant 1 : index
    %55 = vector.load %arg20[%c0_32, %c1_33] : memref<8x326xbf16, #tpu.memory_space<vmem>>, vector<8x288xbf16>
    %cst_34 = arith.constant dense<0.000000e+00> : vector<8x288xf32>
    %56 = tpu.matmul %54, %55, %cst_34 {dimension_numbers = #tpu.dot_dimension_numbers<[1], [0], [0], [1], [0, 0, 1, 1], [], []>} : vector<8x8xbf16>, vector<8x288xbf16>, vector<8x288xf32> -> vector<8x288xf32>
    %57 = arith.addf %52, %56 : vector<8x288xf32>
    %c2 = arith.constant 2 : index
    %c0_35 = arith.constant 0 : index
    %c0_36 = arith.constant 0 : index
    %58 = vector.load %arg8[%c2, %c0_35, %c0_36] : memref<9x8x8xbf16, #tpu.memory_space<vmem>>, vector<1x8x8xbf16>
    %59 = vector.shape_cast %58 : vector<1x8x8xbf16> to vector<8x8xbf16>
    %c0_37 = arith.constant 0 : index
    %c2_38 = arith.constant 2 : index
    %60 = vector.load %arg20[%c0_37, %c2_38] : memref<8x326xbf16, #tpu.memory_space<vmem>>, vector<8x288xbf16>
    %cst_39 = arith.constant dense<0.000000e+00> : vector<8x288xf32>
    %61 = tpu.matmul %59, %60, %cst_39 {dimension_numbers = #tpu.dot_dimension_numbers<[1], [0], [0], [1], [0, 0, 1, 1], [], []>} : vector<8x8xbf16>, vector<8x288xbf16>, vector<8x288xf32> -> vector<8x288xf32>
    %62 = arith.addf %57, %61 : vector<8x288xf32>
    %c3 = arith.constant 3 : index
    %c0_40 = arith.constant 0 : index
    %c0_41 = arith.constant 0 : index
    %63 = vector.load %arg8[%c3, %c0_40, %c0_41] : memref<9x8x8xbf16, #tpu.memory_space<vmem>>, vector<1x8x8xbf16>
    %64 = vector.shape_cast %63 : vector<1x8x8xbf16> to vector<8x8xbf16>
    %c0_42 = arith.constant 0 : index
    %c18 = arith.constant 18 : index
    %65 = vector.load %arg20[%c0_42, %c18] : memref<8x326xbf16, #tpu.memory_space<vmem>>, vector<8x288xbf16>
    %cst_43 = arith.constant dense<0.000000e+00> : vector<8x288xf32>
    %66 = tpu.matmul %64, %65, %cst_43 {dimension_numbers = #tpu.dot_dimension_numbers<[1], [0], [0], [1], [0, 0, 1, 1], [], []>} : vector<8x8xbf16>, vector<8x288xbf16>, vector<8x288xf32> -> vector<8x288xf32>
    %67 = arith.addf %62, %66 : vector<8x288xf32>
    %c4 = arith.constant 4 : index
    %c0_44 = arith.constant 0 : index
    %c0_45 = arith.constant 0 : index
    %68 = vector.load %arg8[%c4, %c0_44, %c0_45] : memref<9x8x8xbf16, #tpu.memory_space<vmem>>, vector<1x8x8xbf16>
    %69 = vector.shape_cast %68 : vector<1x8x8xbf16> to vector<8x8xbf16>
    %c0_46 = arith.constant 0 : index
    %c19_47 = arith.constant 19 : index
    %70 = vector.load %arg20[%c0_46, %c19_47] : memref<8x326xbf16, #tpu.memory_space<vmem>>, vector<8x288xbf16>
    %cst_48 = arith.constant dense<0.000000e+00> : vector<8x288xf32>
    %71 = tpu.matmul %69, %70, %cst_48 {dimension_numbers = #tpu.dot_dimension_numbers<[1], [0], [0], [1], [0, 0, 1, 1], [], []>} : vector<8x8xbf16>, vector<8x288xbf16>, vector<8x288xf32> -> vector<8x288xf32>
    %72 = arith.addf %67, %71 : vector<8x288xf32>
    %c5 = arith.constant 5 : index
    %c0_49 = arith.constant 0 : index
    %c0_50 = arith.constant 0 : index
    %73 = vector.load %arg8[%c5, %c0_49, %c0_50] : memref<9x8x8xbf16, #tpu.memory_space<vmem>>, vector<1x8x8xbf16>
    %74 = vector.shape_cast %73 : vector<1x8x8xbf16> to vector<8x8xbf16>
    %c0_51 = arith.constant 0 : index
    %c20 = arith.constant 20 : index
    %75 = vector.load %arg20[%c0_51, %c20] : memref<8x326xbf16, #tpu.memory_space<vmem>>, vector<8x288xbf16>
    %cst_52 = arith.constant dense<0.000000e+00> : vector<8x288xf32>
    %76 = tpu.matmul %74, %75, %cst_52 {dimension_numbers = #tpu.dot_dimension_numbers<[1], [0], [0], [1], [0, 0, 1, 1], [], []>} : vector<8x8xbf16>, vector<8x288xbf16>, vector<8x288xf32> -> vector<8x288xf32>
    %77 = arith.addf %72, %76 : vector<8x288xf32>
    %c6 = arith.constant 6 : index
    %c0_53 = arith.constant 0 : index
    %c0_54 = arith.constant 0 : index
    %78 = vector.load %arg8[%c6, %c0_53, %c0_54] : memref<9x8x8xbf16, #tpu.memory_space<vmem>>, vector<1x8x8xbf16>
    %79 = vector.shape_cast %78 : vector<1x8x8xbf16> to vector<8x8xbf16>
    %c0_55 = arith.constant 0 : index
    %c36 = arith.constant 36 : index
    %80 = vector.load %arg20[%c0_55, %c36] : memref<8x326xbf16, #tpu.memory_space<vmem>>, vector<8x288xbf16>
    %cst_56 = arith.constant dense<0.000000e+00> : vector<8x288xf32>
    %81 = tpu.matmul %79, %80, %cst_56 {dimension_numbers = #tpu.dot_dimension_numbers<[1], [0], [0], [1], [0, 0, 1, 1], [], []>} : vector<8x8xbf16>, vector<8x288xbf16>, vector<8x288xf32> -> vector<8x288xf32>
    %82 = arith.addf %77, %81 : vector<8x288xf32>
    %c7 = arith.constant 7 : index
    %c0_57 = arith.constant 0 : index
    %c0_58 = arith.constant 0 : index
    %83 = vector.load %arg8[%c7, %c0_57, %c0_58] : memref<9x8x8xbf16, #tpu.memory_space<vmem>>, vector<1x8x8xbf16>
    %84 = vector.shape_cast %83 : vector<1x8x8xbf16> to vector<8x8xbf16>
    %c0_59 = arith.constant 0 : index
    %c37 = arith.constant 37 : index
    %85 = vector.load %arg20[%c0_59, %c37] : memref<8x326xbf16, #tpu.memory_space<vmem>>, vector<8x288xbf16>
    %cst_60 = arith.constant dense<0.000000e+00> : vector<8x288xf32>
    %86 = tpu.matmul %84, %85, %cst_60 {dimension_numbers = #tpu.dot_dimension_numbers<[1], [0], [0], [1], [0, 0, 1, 1], [], []>} : vector<8x8xbf16>, vector<8x288xbf16>, vector<8x288xf32> -> vector<8x288xf32>
    %87 = arith.addf %82, %86 : vector<8x288xf32>
    %c8 = arith.constant 8 : index
    %c0_61 = arith.constant 0 : index
    %c0_62 = arith.constant 0 : index
    %88 = vector.load %arg8[%c8, %c0_61, %c0_62] : memref<9x8x8xbf16, #tpu.memory_space<vmem>>, vector<1x8x8xbf16>
    %89 = vector.shape_cast %88 : vector<1x8x8xbf16> to vector<8x8xbf16>
    %c0_63 = arith.constant 0 : index
    %c38 = arith.constant 38 : index
    %90 = vector.load %arg20[%c0_63, %c38] : memref<8x326xbf16, #tpu.memory_space<vmem>>, vector<8x288xbf16>
    %cst_64 = arith.constant dense<0.000000e+00> : vector<8x288xf32>
    %91 = tpu.matmul %89, %90, %cst_64 {dimension_numbers = #tpu.dot_dimension_numbers<[1], [0], [0], [1], [0, 0, 1, 1], [], []>} : vector<8x8xbf16>, vector<8x288xbf16>, vector<8x288xf32> -> vector<8x288xf32>
    %92 = arith.addf %87, %91 : vector<8x288xf32>
    %c0_65 = arith.constant 0 : index
    %c0_66 = arith.constant 0 : index
    %c0_67 = arith.constant 0 : index
    %93 = vector.load %arg3[%c0_65, %c0_66, %c0_67] : memref<1x8x1xf32, #tpu.memory_space<vmem>>, vector<1x8x1xf32>
    %94 = vector.shape_cast %93 : vector<1x8x1xf32> to vector<8x1xf32>
    %95 = vector.broadcast %94 : vector<8x1xf32> to vector<8x288xf32>
    %96 = arith.addf %92, %95 : vector<8x288xf32>
    %97 = vector.broadcast %2 : vector<1x288xf32> to vector<8x288xf32>
    %98 = arith.mulf %96, %97 : vector<8x288xf32>
    %99 = vector.extract_strided_slice %6 {offsets = [0, 0], sizes = [8, 1], strides = [1, 1]} : vector<8x5xf32> to vector<8x1xf32>
    %100 = vector.extract_strided_slice %6 {offsets = [0, 1], sizes = [8, 1], strides = [1, 1]} : vector<8x5xf32> to vector<8x1xf32>
    %c0_68 = arith.constant 0 : index
    %c0_69 = arith.constant 0 : index
    %101 = vector.load %arg7[%c0_68, %c0_69] : memref<2x8xf32, #tpu.memory_space<vmem>>, vector<2x8xf32>
    %102 = vector.extract_strided_slice %6 {offsets = [0, 3], sizes = [8, 2], strides = [1, 1]} : vector<8x5xf32> to vector<8x2xf32>
    %cst_70 = arith.constant dense<0.000000e+00> : vector<8xf32>
    %103 = vector.multi_reduction <add>, %98, %cst_70 [1] : vector<8x288xf32> to vector<8xf32>
    %104 = vector.shape_cast %103 : vector<8xf32> to vector<8x1xf32>
    %105 = arith.mulf %98, %98 : vector<8x288xf32>
    %cst_71 = arith.constant dense<0.000000e+00> : vector<8xf32>
    %106 = vector.multi_reduction <add>, %105, %cst_71 [1] : vector<8x288xf32> to vector<8xf32>
    %107 = vector.shape_cast %106 : vector<8xf32> to vector<8x1xf32>
    %cst_72 = arith.constant dense<0.000000e+00> : vector<2x1xf32>
    %108 = tpu.matmul %101, %104, %cst_72 {dimension_numbers = #tpu.dot_dimension_numbers<[1], [0], [0], [1], [0, 0, 1, 1], [], []>} : vector<2x8xf32>, vector<8x1xf32>, vector<2x1xf32> -> vector<2x1xf32>
    %cst_73 = arith.constant dense<0.000000e+00> : vector<8x1xf32>
    %109 = tpu.matmul %102, %108, %cst_73 {dimension_numbers = #tpu.dot_dimension_numbers<[1], [0], [0], [1], [0, 0, 1, 1], [], []>} : vector<8x2xf32>, vector<2x1xf32>, vector<8x1xf32> -> vector<8x1xf32>
    %cst_74 = arith.constant 9.765625E-4 : f32
    %110 = vector.broadcast %cst_74 : f32 to vector<8x1xf32>
    %111 = arith.mulf %109, %110 : vector<8x1xf32>
    %cst_75 = arith.constant dense<0.000000e+00> : vector<2x1xf32>
    %112 = tpu.matmul %101, %107, %cst_75 {dimension_numbers = #tpu.dot_dimension_numbers<[1], [0], [0], [1], [0, 0, 1, 1], [], []>} : vector<2x8xf32>, vector<8x1xf32>, vector<2x1xf32> -> vector<2x1xf32>
    %cst_76 = arith.constant dense<0.000000e+00> : vector<8x1xf32>
    %113 = tpu.matmul %102, %112, %cst_76 {dimension_numbers = #tpu.dot_dimension_numbers<[1], [0], [0], [1], [0, 0, 1, 1], [], []>} : vector<8x2xf32>, vector<2x1xf32>, vector<8x1xf32> -> vector<8x1xf32>
    %cst_77 = arith.constant 9.765625E-4 : f32
    %114 = vector.broadcast %cst_77 : f32 to vector<8x1xf32>
    %115 = arith.mulf %113, %114 : vector<8x1xf32>
    %116 = arith.mulf %111, %111 : vector<8x1xf32>
    %117 = arith.subf %115, %116 : vector<8x1xf32>
    %cst_78 = arith.constant 0.000000e+00 : f32
    %118 = vector.broadcast %cst_78 : f32 to vector<8x1xf32>
    %119 = arith.maximumf %117, %118 : vector<8x1xf32>
    %120 = vector.broadcast %111 : vector<8x1xf32> to vector<8x288xf32>
    %121 = arith.subf %98, %120 : vector<8x288xf32>
    %cst_79 = arith.constant 9.99999974E-6 : f32
    %122 = vector.broadcast %cst_79 : f32 to vector<8x1xf32>
    %123 = arith.addf %119, %122 : vector<8x1xf32>
    %124 = math.rsqrt %123 : vector<8x1xf32>
    %125 = vector.broadcast %124 : vector<8x1xf32> to vector<8x288xf32>
    %126 = arith.mulf %121, %125 : vector<8x288xf32>
    %127 = vector.broadcast %99 : vector<8x1xf32> to vector<8x288xf32>
    %128 = arith.mulf %126, %127 : vector<8x288xf32>
    %129 = vector.broadcast %100 : vector<8x1xf32> to vector<8x288xf32>
    %130 = arith.addf %128, %129 : vector<8x288xf32>
    %131 = arith.negf %130 : vector<8x288xf32>
    %132 = math.exp %131 : vector<8x288xf32>
    %cst_80 = arith.constant 1.000000e+00 : f32
    %133 = vector.broadcast %cst_80 : f32 to vector<8x288xf32>
    %134 = arith.addf %133, %132 : vector<8x288xf32>
    %135 = arith.divf %133, %134 : vector<8x288xf32>
    %136 = arith.mulf %130, %135 : vector<8x288xf32>
    %137 = vector.broadcast %2 : vector<1x288xf32> to vector<8x288xf32>
    %138 = arith.mulf %136, %137 : vector<8x288xf32>
    %139 = arith.truncf %138 : vector<8x288xf32> to vector<8x288xbf16>
    %c0_81 = arith.constant 0 : index
    %c19_82 = arith.constant 19 : index
    %140 = vector.load %arg20[%c0_81, %c19_82] : memref<8x326xbf16, #tpu.memory_space<vmem>>, vector<8x288xbf16>
    tpu.vector_store %arg20[%c0_81, %c19_82], %139 {strides = array<i32>} : memref<8x326xbf16, #tpu.memory_space<vmem>>, vector<8x288xbf16>,
    %c0_83 = arith.constant 0 : index
    %c0_84 = arith.constant 0 : index
    %c0_85 = arith.constant 0 : index
    %141 = vector.load %arg9[%c0_83, %c0_84, %c0_85] : memref<9x8x8xbf16, #tpu.memory_space<vmem>>, vector<1x8x8xbf16>
    %142 = vector.shape_cast %141 : vector<1x8x8xbf16> to vector<8x8xbf16>
    %c0_86 = arith.constant 0 : index
    %c0_87 = arith.constant 0 : index
    %143 = vector.load %arg20[%c0_86, %c0_87] : memref<8x326xbf16, #tpu.memory_space<vmem>>, vector<8x288xbf16>
    %cst_88 = arith.constant dense<0.000000e+00> : vector<8x288xf32>
    %144 = tpu.matmul %142, %143, %cst_88 {dimension_numbers = #tpu.dot_dimension_numbers<[1], [0], [0], [1], [0, 0, 1, 1], [], []>} : vector<8x8xbf16>, vector<8x288xbf16>, vector<8x288xf32> -> vector<8x288xf32>
    %c1_89 = arith.constant 1 : index
    %c0_90 = arith.constant 0 : index
    %c0_91 = arith.constant 0 : index
    %145 = vector.load %arg9[%c1_89, %c0_90, %c0_91] : memref<9x8x8xbf16, #tpu.memory_space<vmem>>, vector<1x8x8xbf16>
    %146 = vector.shape_cast %145 : vector<1x8x8xbf16> to vector<8x8xbf16>
    %c0_92 = arith.constant 0 : index
    %c1_93 = arith.constant 1 : index
    %147 = vector.load %arg20[%c0_92, %c1_93] : memref<8x326xbf16, #tpu.memory_space<vmem>>, vector<8x288xbf16>
    %cst_94 = arith.constant dense<0.000000e+00> : vector<8x288xf32>
    %148 = tpu.matmul %146, %147, %cst_94 {dimension_numbers = #tpu.dot_dimension_numbers<[1], [0], [0], [1], [0, 0, 1, 1], [], []>} : vector<8x8xbf16>, vector<8x288xbf16>, vector<8x288xf32> -> vector<8x288xf32>
    %149 = arith.addf %144, %148 : vector<8x288xf32>
    %c2_95 = arith.constant 2 : index
    %c0_96 = arith.constant 0 : index
    %c0_97 = arith.constant 0 : index
    %150 = vector.load %arg9[%c2_95, %c0_96, %c0_97] : memref<9x8x8xbf16, #tpu.memory_space<vmem>>, vector<1x8x8xbf16>
    %151 = vector.shape_cast %150 : vector<1x8x8xbf16> to vector<8x8xbf16>
    %c0_98 = arith.constant 0 : index
    %c2_99 = arith.constant 2 : index
    %152 = vector.load %arg20[%c0_98, %c2_99] : memref<8x326xbf16, #tpu.memory_space<vmem>>, vector<8x288xbf16>
    %cst_100 = arith.constant dense<0.000000e+00> : vector<8x288xf32>
    %153 = tpu.matmul %151, %152, %cst_100 {dimension_numbers = #tpu.dot_dimension_numbers<[1], [0], [0], [1], [0, 0, 1, 1], [], []>} : vector<8x8xbf16>, vector<8x288xbf16>, vector<8x288xf32> -> vector<8x288xf32>
    %154 = arith.addf %149, %153 : vector<8x288xf32>
    %c3_101 = arith.constant 3 : index
    %c0_102 = arith.constant 0 : index
    %c0_103 = arith.constant 0 : index
    %155 = vector.load %arg9[%c3_101, %c0_102, %c0_103] : memref<9x8x8xbf16, #tpu.memory_space<vmem>>, vector<1x8x8xbf16>
    %156 = vector.shape_cast %155 : vector<1x8x8xbf16> to vector<8x8xbf16>
    %c0_104 = arith.constant 0 : index
    %c18_105 = arith.constant 18 : index
    %157 = vector.load %arg20[%c0_104, %c18_105] : memref<8x326xbf16, #tpu.memory_space<vmem>>, vector<8x288xbf16>
    %cst_106 = arith.constant dense<0.000000e+00> : vector<8x288xf32>
    %158 = tpu.matmul %156, %157, %cst_106 {dimension_numbers = #tpu.dot_dimension_numbers<[1], [0], [0], [1], [0, 0, 1, 1], [], []>} : vector<8x8xbf16>, vector<8x288xbf16>, vector<8x288xf32> -> vector<8x288xf32>
    %159 = arith.addf %154, %158 : vector<8x288xf32>
    %c4_107 = arith.constant 4 : index
    %c0_108 = arith.constant 0 : index
    %c0_109 = arith.constant 0 : index
    %160 = vector.load %arg9[%c4_107, %c0_108, %c0_109] : memref<9x8x8xbf16, #tpu.memory_space<vmem>>, vector<1x8x8xbf16>
    %161 = vector.shape_cast %160 : vector<1x8x8xbf16> to vector<8x8xbf16>
    %c0_110 = arith.constant 0 : index
    %c19_111 = arith.constant 19 : index
    %162 = vector.load %arg20[%c0_110, %c19_111] : memref<8x326xbf16, #tpu.memory_space<vmem>>, vector<8x288xbf16>
    %cst_112 = arith.constant dense<0.000000e+00> : vector<8x288xf32>
    %163 = tpu.matmul %161, %162, %cst_112 {dimension_numbers = #tpu.dot_dimension_numbers<[1], [0], [0], [1], [0, 0, 1, 1], [], []>} : vector<8x8xbf16>, vector<8x288xbf16>, vector<8x288xf32> -> vector<8x288xf32>
    %164 = arith.addf %159, %163 : vector<8x288xf32>
    %c5_113 = arith.constant 5 : index
    %c0_114 = arith.constant 0 : index
    %c0_115 = arith.constant 0 : index
    %165 = vector.load %arg9[%c5_113, %c0_114, %c0_115] : memref<9x8x8xbf16, #tpu.memory_space<vmem>>, vector<1x8x8xbf16>
    %166 = vector.shape_cast %165 : vector<1x8x8xbf16> to vector<8x8xbf16>
    %c0_116 = arith.constant 0 : index
    %c20_117 = arith.constant 20 : index
    %167 = vector.load %arg20[%c0_116, %c20_117] : memref<8x326xbf16, #tpu.memory_space<vmem>>, vector<8x288xbf16>
    %cst_118 = arith.constant dense<0.000000e+00> : vector<8x288xf32>
    %168 = tpu.matmul %166, %167, %cst_118 {dimension_numbers = #tpu.dot_dimension_numbers<[1], [0], [0], [1], [0, 0, 1, 1], [], []>} : vector<8x8xbf16>, vector<8x288xbf16>, vector<8x288xf32> -> vector<8x288xf32>
    %169 = arith.addf %164, %168 : vector<8x288xf32>
    %c6_119 = arith.constant 6 : index
    %c0_120 = arith.constant 0 : index
    %c0_121 = arith.constant 0 : index
    %170 = vector.load %arg9[%c6_119, %c0_120, %c0_121] : memref<9x8x8xbf16, #tpu.memory_space<vmem>>, vector<1x8x8xbf16>
    %171 = vector.shape_cast %170 : vector<1x8x8xbf16> to vector<8x8xbf16>
    %c0_122 = arith.constant 0 : index
    %c36_123 = arith.constant 36 : index
    %172 = vector.load %arg20[%c0_122, %c36_123] : memref<8x326xbf16, #tpu.memory_space<vmem>>, vector<8x288xbf16>
    %cst_124 = arith.constant dense<0.000000e+00> : vector<8x288xf32>
    %173 = tpu.matmul %171, %172, %cst_124 {dimension_numbers = #tpu.dot_dimension_numbers<[1], [0], [0], [1], [0, 0, 1, 1], [], []>} : vector<8x8xbf16>, vector<8x288xbf16>, vector<8x288xf32> -> vector<8x288xf32>
    %174 = arith.addf %169, %173 : vector<8x288xf32>
    %c7_125 = arith.constant 7 : index
    %c0_126 = arith.constant 0 : index
    %c0_127 = arith.constant 0 : index
    %175 = vector.load %arg9[%c7_125, %c0_126, %c0_127] : memref<9x8x8xbf16, #tpu.memory_space<vmem>>, vector<1x8x8xbf16>
    %176 = vector.shape_cast %175 : vector<1x8x8xbf16> to vector<8x8xbf16>
    %c0_128 = arith.constant 0 : index
    %c37_129 = arith.constant 37 : index
    %177 = vector.load %arg20[%c0_128, %c37_129] : memref<8x326xbf16, #tpu.memory_space<vmem>>, vector<8x288xbf16>
    %cst_130 = arith.constant dense<0.000000e+00> : vector<8x288xf32>
    %178 = tpu.matmul %176, %177, %cst_130 {dimension_numbers = #tpu.dot_dimension_numbers<[1], [0], [0], [1], [0, 0, 1, 1], [], []>} : vector<8x8xbf16>, vector<8x288xbf16>, vector<8x288xf32> -> vector<8x288xf32>
    %179 = arith.addf %174, %178 : vector<8x288xf32>
    %c8_131 = arith.constant 8 : index
    %c0_132 = arith.constant 0 : index
    %c0_133 = arith.constant 0 : index
    %180 = vector.load %arg9[%c8_131, %c0_132, %c0_133] : memref<9x8x8xbf16, #tpu.memory_space<vmem>>, vector<1x8x8xbf16>
    %181 = vector.shape_cast %180 : vector<1x8x8xbf16> to vector<8x8xbf16>
    %c0_134 = arith.constant 0 : index
    %c38_135 = arith.constant 38 : index
    %182 = vector.load %arg20[%c0_134, %c38_135] : memref<8x326xbf16, #tpu.memory_space<vmem>>, vector<8x288xbf16>
    %cst_136 = arith.constant dense<0.000000e+00> : vector<8x288xf32>
    %183 = tpu.matmul %181, %182, %cst_136 {dimension_numbers = #tpu.dot_dimension_numbers<[1], [0], [0], [1], [0, 0, 1, 1], [], []>} : vector<8x8xbf16>, vector<8x288xbf16>, vector<8x288xf32> -> vector<8x288xf32>
    %184 = arith.addf %179, %183 : vector<8x288xf32>
    %c0_137 = arith.constant 0 : index
    %c0_138 = arith.constant 0 : index
    %185 = vector.load %arg10[%c0_137, %c0_138] : memref<8x8xbf16, #tpu.memory_space<vmem>>, vector<8x8xbf16>
    %186 = arith.truncf %4 : vector<8x288xf32> to vector<8x288xbf16>
    %cst_139 = arith.constant dense<0.000000e+00> : vector<8x288xf32>
    %187 = tpu.matmul %185, %186, %cst_139 {dimension_numbers = #tpu.dot_dimension_numbers<[1], [0], [0], [1], [0, 0, 1, 1], [], []>} : vector<8x8xbf16>, vector<8x288xbf16>, vector<8x288xf32> -> vector<8x288xf32>
    %188 = vector.extract_strided_slice %6 {offsets = [0, 2], sizes = [8, 1], strides = [1, 1]} : vector<8x5xf32> to vector<8x1xf32>
    %189 = vector.broadcast %188 : vector<8x1xf32> to vector<8x288xf32>
    %190 = arith.addf %187, %189 : vector<8x288xf32>
    %191 = arith.addf %184, %190 : vector<8x288xf32>
    %192 = vector.broadcast %2 : vector<1x288xf32> to vector<8x288xf32>
    %193 = arith.mulf %191, %192 : vector<8x288xf32>
    %c0_140 = arith.constant 0 : index
    %c0_141 = arith.constant 0 : index
    %194 = vector.load %arg12[%c0_140, %c0_141] : memref<8x4xf32, #tpu.memory_space<vmem>>, vector<8x4xf32>
    %c0_142 = arith.constant 0 : index
    %c0_143 = arith.constant 0 : index
    %195 = vector.load %arg14[%c0_142, %c0_143] : memref<8x5xf32, #tpu.memory_space<vmem>>, vector<8x5xf32>
    %196 = vector.extract_strided_slice %194 {offsets = [0, 0], sizes = [8, 1], strides = [1, 1]} : vector<8x4xf32> to vector<8x1xf32>
    %197 = vector.extract_strided_slice %194 {offsets = [0, 1], sizes = [8, 1], strides = [1, 1]} : vector<8x4xf32> to vector<8x1xf32>
    %c0_144 = arith.constant 0 : index
    %c0_145 = arith.constant 0 : index
    %198 = vector.load %arg13[%c0_144, %c0_145] : memref<2x8xf32, #tpu.memory_space<vmem>>, vector<2x8xf32>
    %199 = vector.extract_strided_slice %194 {offsets = [0, 2], sizes = [8, 2], strides = [1, 1]} : vector<8x4xf32> to vector<8x2xf32>
    %cst_146 = arith.constant dense<0.000000e+00> : vector<8xf32>
    %200 = vector.multi_reduction <add>, %193, %cst_146 [1] : vector<8x288xf32> to vector<8xf32>
    %201 = vector.shape_cast %200 : vector<8xf32> to vector<8x1xf32>
    %202 = arith.mulf %193, %193 : vector<8x288xf32>
    %cst_147 = arith.constant dense<0.000000e+00> : vector<8xf32>
    %203 = vector.multi_reduction <add>, %202, %cst_147 [1] : vector<8x288xf32> to vector<8xf32>
    %204 = vector.shape_cast %203 : vector<8xf32> to vector<8x1xf32>
    %cst_148 = arith.constant dense<0.000000e+00> : vector<2x1xf32>
    %205 = tpu.matmul %198, %201, %cst_148 {dimension_numbers = #tpu.dot_dimension_numbers<[1], [0], [0], [1], [0, 0, 1, 1], [], []>} : vector<2x8xf32>, vector<8x1xf32>, vector<2x1xf32> -> vector<2x1xf32>
    %cst_149 = arith.constant dense<0.000000e+00> : vector<8x1xf32>
    %206 = tpu.matmul %199, %205, %cst_149 {dimension_numbers = #tpu.dot_dimension_numbers<[1], [0], [0], [1], [0, 0, 1, 1], [], []>} : vector<8x2xf32>, vector<2x1xf32>, vector<8x1xf32> -> vector<8x1xf32>
    %cst_150 = arith.constant 9.765625E-4 : f32
    %207 = vector.broadcast %cst_150 : f32 to vector<8x1xf32>
    %208 = arith.mulf %206, %207 : vector<8x1xf32>
    %cst_151 = arith.constant dense<0.000000e+00> : vector<2x1xf32>
    %209 = tpu.matmul %198, %204, %cst_151 {dimension_numbers = #tpu.dot_dimension_numbers<[1], [0], [0], [1], [0, 0, 1, 1], [], []>} : vector<2x8xf32>, vector<8x1xf32>, vector<2x1xf32> -> vector<2x1xf32>
    %cst_152 = arith.constant dense<0.000000e+00> : vector<8x1xf32>
    %210 = tpu.matmul %199, %209, %cst_152 {dimension_numbers = #tpu.dot_dimension_numbers<[1], [0], [0], [1], [0, 0, 1, 1], [], []>} : vector<8x2xf32>, vector<2x1xf32>, vector<8x1xf32> -> vector<8x1xf32>
    %cst_153 = arith.constant 9.765625E-4 : f32
    %211 = vector.broadcast %cst_153 : f32 to vector<8x1xf32>
    %212 = arith.mulf %210, %211 : vector<8x1xf32>
    %213 = arith.mulf %208, %208 : vector<8x1xf32>
    %214 = arith.subf %212, %213 : vector<8x1xf32>
    %cst_154 = arith.constant 0.000000e+00 : f32
    %215 = vector.broadcast %cst_154 : f32 to vector<8x1xf32>
    %216 = arith.maximumf %214, %215 : vector<8x1xf32>
    %217 = vector.broadcast %208 : vector<8x1xf32> to vector<8x288xf32>
    %218 = arith.subf %193, %217 : vector<8x288xf32>
    %cst_155 = arith.constant 9.99999974E-6 : f32
    %219 = vector.broadcast %cst_155 : f32 to vector<8x1xf32>
    %220 = arith.addf %216, %219 : vector<8x1xf32>
    %221 = math.rsqrt %220 : vector<8x1xf32>
    %222 = vector.broadcast %221 : vector<8x1xf32> to vector<8x288xf32>
    %223 = arith.mulf %218, %222 : vector<8x288xf32>
    %224 = vector.broadcast %196 : vector<8x1xf32> to vector<8x288xf32>
    %225 = arith.mulf %223, %224 : vector<8x288xf32>
    %226 = vector.broadcast %197 : vector<8x1xf32> to vector<8x288xf32>
    %227 = arith.addf %225, %226 : vector<8x288xf32>
    %228 = arith.negf %227 : vector<8x288xf32>
    %229 = math.exp %228 : vector<8x288xf32>
    %cst_156 = arith.constant 1.000000e+00 : f32
    %230 = vector.broadcast %cst_156 : f32 to vector<8x288xf32>
    %231 = arith.addf %230, %229 : vector<8x288xf32>
    %232 = arith.divf %230, %231 : vector<8x288xf32>
    %233 = arith.mulf %227, %232 : vector<8x288xf32>
    %234 = vector.broadcast %2 : vector<1x288xf32> to vector<8x288xf32>
    %235 = arith.mulf %233, %234 : vector<8x288xf32>
    %236 = arith.truncf %235 : vector<8x288xf32> to vector<8x288xbf16>
    %c0_157 = arith.constant 0 : index
    %c19_158 = arith.constant 19 : index
    %237 = vector.load %arg20[%c0_157, %c19_158] : memref<8x326xbf16, #tpu.memory_space<vmem>>, vector<8x288xbf16>
    tpu.vector_store %arg20[%c0_157, %c19_158], %236 {strides = array<i32>} : memref<8x326xbf16, #tpu.memory_space<vmem>>, vector<8x288xbf16>,
    %c0_159 = arith.constant 0 : index
    %c0_160 = arith.constant 0 : index
    %c0_161 = arith.constant 0 : index
    %238 = vector.load %arg16[%c0_159, %c0_160, %c0_161] : memref<9x8x8xbf16, #tpu.memory_space<vmem>>, vector<1x8x8xbf16>
    %239 = vector.shape_cast %238 : vector<1x8x8xbf16> to vector<8x8xbf16>
    %c0_162 = arith.constant 0 : index
    %c0_163 = arith.constant 0 : index
    %240 = vector.load %arg20[%c0_162, %c0_163] : memref<8x326xbf16, #tpu.memory_space<vmem>>, vector<8x288xbf16>
    %cst_164 = arith.constant dense<0.000000e+00> : vector<8x288xf32>
    %241 = tpu.matmul %239, %240, %cst_164 {dimension_numbers = #tpu.dot_dimension_numbers<[1], [0], [0], [1], [0, 0, 1, 1], [], []>} : vector<8x8xbf16>, vector<8x288xbf16>, vector<8x288xf32> -> vector<8x288xf32>
    %c1_165 = arith.constant 1 : index
    %c0_166 = arith.constant 0 : index
    %c0_167 = arith.constant 0 : index
    %242 = vector.load %arg16[%c1_165, %c0_166, %c0_167] : memref<9x8x8xbf16, #tpu.memory_space<vmem>>, vector<1x8x8xbf16>
    %243 = vector.shape_cast %242 : vector<1x8x8xbf16> to vector<8x8xbf16>
    %c0_168 = arith.constant 0 : index
    %c1_169 = arith.constant 1 : index
    %244 = vector.load %arg20[%c0_168, %c1_169] : memref<8x326xbf16, #tpu.memory_space<vmem>>, vector<8x288xbf16>
    %cst_170 = arith.constant dense<0.000000e+00> : vector<8x288xf32>
    %245 = tpu.matmul %243, %244, %cst_170 {dimension_numbers = #tpu.dot_dimension_numbers<[1], [0], [0], [1], [0, 0, 1, 1], [], []>} : vector<8x8xbf16>, vector<8x288xbf16>, vector<8x288xf32> -> vector<8x288xf32>
    %246 = arith.addf %241, %245 : vector<8x288xf32>
    %c2_171 = arith.constant 2 : index
    %c0_172 = arith.constant 0 : index
    %c0_173 = arith.constant 0 : index
    %247 = vector.load %arg16[%c2_171, %c0_172, %c0_173] : memref<9x8x8xbf16, #tpu.memory_space<vmem>>, vector<1x8x8xbf16>
    %248 = vector.shape_cast %247 : vector<1x8x8xbf16> to vector<8x8xbf16>
    %c0_174 = arith.constant 0 : index
    %c2_175 = arith.constant 2 : index
    %249 = vector.load %arg20[%c0_174, %c2_175] : memref<8x326xbf16, #tpu.memory_space<vmem>>, vector<8x288xbf16>
    %cst_176 = arith.constant dense<0.000000e+00> : vector<8x288xf32>
    %250 = tpu.matmul %248, %249, %cst_176 {dimension_numbers = #tpu.dot_dimension_numbers<[1], [0], [0], [1], [0, 0, 1, 1], [], []>} : vector<8x8xbf16>, vector<8x288xbf16>, vector<8x288xf32> -> vector<8x288xf32>
    %251 = arith.addf %246, %250 : vector<8x288xf32>
    %c3_177 = arith.constant 3 : index
    %c0_178 = arith.constant 0 : index
    %c0_179 = arith.constant 0 : index
    %252 = vector.load %arg16[%c3_177, %c0_178, %c0_179] : memref<9x8x8xbf16, #tpu.memory_space<vmem>>, vector<1x8x8xbf16>
    %253 = vector.shape_cast %252 : vector<1x8x8xbf16> to vector<8x8xbf16>
    %c0_180 = arith.constant 0 : index
    %c18_181 = arith.constant 18 : index
    %254 = vector.load %arg20[%c0_180, %c18_181] : memref<8x326xbf16, #tpu.memory_space<vmem>>, vector<8x288xbf16>
    %cst_182 = arith.constant dense<0.000000e+00> : vector<8x288xf32>
    %255 = tpu.matmul %253, %254, %cst_182 {dimension_numbers = #tpu.dot_dimension_numbers<[1], [0], [0], [1], [0, 0, 1, 1], [], []>} : vector<8x8xbf16>, vector<8x288xbf16>, vector<8x288xf32> -> vector<8x288xf32>
    %256 = arith.addf %251, %255 : vector<8x288xf32>
    %c4_183 = arith.constant 4 : index
    %c0_184 = arith.constant 0 : index
    %c0_185 = arith.constant 0 : index
    %257 = vector.load %arg16[%c4_183, %c0_184, %c0_185] : memref<9x8x8xbf16, #tpu.memory_space<vmem>>, vector<1x8x8xbf16>
    %258 = vector.shape_cast %257 : vector<1x8x8xbf16> to vector<8x8xbf16>
    %c0_186 = arith.constant 0 : index
    %c19_187 = arith.constant 19 : index
    %259 = vector.load %arg20[%c0_186, %c19_187] : memref<8x326xbf16, #tpu.memory_space<vmem>>, vector<8x288xbf16>
    %cst_188 = arith.constant dense<0.000000e+00> : vector<8x288xf32>
    %260 = tpu.matmul %258, %259, %cst_188 {dimension_numbers = #tpu.dot_dimension_numbers<[1], [0], [0], [1], [0, 0, 1, 1], [], []>} : vector<8x8xbf16>, vector<8x288xbf16>, vector<8x288xf32> -> vector<8x288xf32>
    %261 = arith.addf %256, %260 : vector<8x288xf32>
    %c5_189 = arith.constant 5 : index
    %c0_190 = arith.constant 0 : index
    %c0_191 = arith.constant 0 : index
    %262 = vector.load %arg16[%c5_189, %c0_190, %c0_191] : memref<9x8x8xbf16, #tpu.memory_space<vmem>>, vector<1x8x8xbf16>
    %263 = vector.shape_cast %262 : vector<1x8x8xbf16> to vector<8x8xbf16>
    %c0_192 = arith.constant 0 : index
    %c20_193 = arith.constant 20 : index
    %264 = vector.load %arg20[%c0_192, %c20_193] : memref<8x326xbf16, #tpu.memory_space<vmem>>, vector<8x288xbf16>
    %cst_194 = arith.constant dense<0.000000e+00> : vector<8x288xf32>
    %265 = tpu.matmul %263, %264, %cst_194 {dimension_numbers = #tpu.dot_dimension_numbers<[1], [0], [0], [1], [0, 0, 1, 1], [], []>} : vector<8x8xbf16>, vector<8x288xbf16>, vector<8x288xf32> -> vector<8x288xf32>
    %266 = arith.addf %261, %265 : vector<8x288xf32>
    %c6_195 = arith.constant 6 : index
    %c0_196 = arith.constant 0 : index
    %c0_197 = arith.constant 0 : index
    %267 = vector.load %arg16[%c6_195, %c0_196, %c0_197] : memref<9x8x8xbf16, #tpu.memory_space<vmem>>, vector<1x8x8xbf16>
    %268 = vector.shape_cast %267 : vector<1x8x8xbf16> to vector<8x8xbf16>
    %c0_198 = arith.constant 0 : index
    %c36_199 = arith.constant 36 : index
    %269 = vector.load %arg20[%c0_198, %c36_199] : memref<8x326xbf16, #tpu.memory_space<vmem>>, vector<8x288xbf16>
    %cst_200 = arith.constant dense<0.000000e+00> : vector<8x288xf32>
    %270 = tpu.matmul %268, %269, %cst_200 {dimension_numbers = #tpu.dot_dimension_numbers<[1], [0], [0], [1], [0, 0, 1, 1], [], []>} : vector<8x8xbf16>, vector<8x288xbf16>, vector<8x288xf32> -> vector<8x288xf32>
    %271 = arith.addf %266, %270 : vector<8x288xf32>
    %c7_201 = arith.constant 7 : index
    %c0_202 = arith.constant 0 : index
    %c0_203 = arith.constant 0 : index
    %272 = vector.load %arg16[%c7_201, %c0_202, %c0_203] : memref<9x8x8xbf16, #tpu.memory_space<vmem>>, vector<1x8x8xbf16>
    %273 = vector.shape_cast %272 : vector<1x8x8xbf16> to vector<8x8xbf16>
    %c0_204 = arith.constant 0 : index
    %c37_205 = arith.constant 37 : index
    %274 = vector.load %arg20[%c0_204, %c37_205] : memref<8x326xbf16, #tpu.memory_space<vmem>>, vector<8x288xbf16>
    %cst_206 = arith.constant dense<0.000000e+00> : vector<8x288xf32>
    %275 = tpu.matmul %273, %274, %cst_206 {dimension_numbers = #tpu.dot_dimension_numbers<[1], [0], [0], [1], [0, 0, 1, 1], [], []>} : vector<8x8xbf16>, vector<8x288xbf16>, vector<8x288xf32> -> vector<8x288xf32>
    %276 = arith.addf %271, %275 : vector<8x288xf32>
    %c8_207 = arith.constant 8 : index
    %c0_208 = arith.constant 0 : index
    %c0_209 = arith.constant 0 : index
    %277 = vector.load %arg16[%c8_207, %c0_208, %c0_209] : memref<9x8x8xbf16, #tpu.memory_space<vmem>>, vector<1x8x8xbf16>
    %278 = vector.shape_cast %277 : vector<1x8x8xbf16> to vector<8x8xbf16>
    %c0_210 = arith.constant 0 : index
    %c38_211 = arith.constant 38 : index
    %279 = vector.load %arg20[%c0_210, %c38_211] : memref<8x326xbf16, #tpu.memory_space<vmem>>, vector<8x288xbf16>
    %cst_212 = arith.constant dense<0.000000e+00> : vector<8x288xf32>
    %280 = tpu.matmul %278, %279, %cst_212 {dimension_numbers = #tpu.dot_dimension_numbers<[1], [0], [0], [1], [0, 0, 1, 1], [], []>} : vector<8x8xbf16>, vector<8x288xbf16>, vector<8x288xf32> -> vector<8x288xf32>
    %281 = arith.addf %276, %280 : vector<8x288xf32>
    %c0_213 = arith.constant 0 : index
    %c0_214 = arith.constant 0 : index
    %c0_215 = arith.constant 0 : index
    %282 = vector.load %arg11[%c0_213, %c0_214, %c0_215] : memref<1x8x1xf32, #tpu.memory_space<vmem>>, vector<1x8x1xf32>
    %283 = vector.shape_cast %282 : vector<1x8x1xf32> to vector<8x1xf32>
    %284 = vector.broadcast %283 : vector<8x1xf32> to vector<8x288xf32>
    %285 = arith.addf %281, %284 : vector<8x288xf32>
    %286 = vector.broadcast %2 : vector<1x288xf32> to vector<8x288xf32>
    %287 = arith.mulf %285, %286 : vector<8x288xf32>
    %288 = vector.extract_strided_slice %195 {offsets = [0, 0], sizes = [8, 1], strides = [1, 1]} : vector<8x5xf32> to vector<8x1xf32>
    %289 = vector.extract_strided_slice %195 {offsets = [0, 1], sizes = [8, 1], strides = [1, 1]} : vector<8x5xf32> to vector<8x1xf32>
    %c0_216 = arith.constant 0 : index
    %c0_217 = arith.constant 0 : index
    %290 = vector.load %arg15[%c0_216, %c0_217] : memref<2x8xf32, #tpu.memory_space<vmem>>, vector<2x8xf32>
    %291 = vector.extract_strided_slice %195 {offsets = [0, 3], sizes = [8, 2], strides = [1, 1]} : vector<8x5xf32> to vector<8x2xf32>
    %cst_218 = arith.constant dense<0.000000e+00> : vector<8xf32>
    %292 = vector.multi_reduction <add>, %287, %cst_218 [1] : vector<8x288xf32> to vector<8xf32>
    %293 = vector.shape_cast %292 : vector<8xf32> to vector<8x1xf32>
    %294 = arith.mulf %287, %287 : vector<8x288xf32>
    %cst_219 = arith.constant dense<0.000000e+00> : vector<8xf32>
    %295 = vector.multi_reduction <add>, %294, %cst_219 [1] : vector<8x288xf32> to vector<8xf32>
    %296 = vector.shape_cast %295 : vector<8xf32> to vector<8x1xf32>
    %cst_220 = arith.constant dense<0.000000e+00> : vector<2x1xf32>
    %297 = tpu.matmul %290, %293, %cst_220 {dimension_numbers = #tpu.dot_dimension_numbers<[1], [0], [0], [1], [0, 0, 1, 1], [], []>} : vector<2x8xf32>, vector<8x1xf32>, vector<2x1xf32> -> vector<2x1xf32>
    %cst_221 = arith.constant dense<0.000000e+00> : vector<8x1xf32>
    %298 = tpu.matmul %291, %297, %cst_221 {dimension_numbers = #tpu.dot_dimension_numbers<[1], [0], [0], [1], [0, 0, 1, 1], [], []>} : vector<8x2xf32>, vector<2x1xf32>, vector<8x1xf32> -> vector<8x1xf32>
    %cst_222 = arith.constant 9.765625E-4 : f32
    %299 = vector.broadcast %cst_222 : f32 to vector<8x1xf32>
    %300 = arith.mulf %298, %299 : vector<8x1xf32>
    %cst_223 = arith.constant dense<0.000000e+00> : vector<2x1xf32>
    %301 = tpu.matmul %290, %296, %cst_223 {dimension_numbers = #tpu.dot_dimension_numbers<[1], [0], [0], [1], [0, 0, 1, 1], [], []>} : vector<2x8xf32>, vector<8x1xf32>, vector<2x1xf32> -> vector<2x1xf32>
    %cst_224 = arith.constant dense<0.000000e+00> : vector<8x1xf32>
    %302 = tpu.matmul %291, %301, %cst_224 {dimension_numbers = #tpu.dot_dimension_numbers<[1], [0], [0], [1], [0, 0, 1, 1], [], []>} : vector<8x2xf32>, vector<2x1xf32>, vector<8x1xf32> -> vector<8x1xf32>
    %cst_225 = arith.constant 9.765625E-4 : f32
    %303 = vector.broadcast %cst_225 : f32 to vector<8x1xf32>
    %304 = arith.mulf %302, %303 : vector<8x1xf32>
    %305 = arith.mulf %300, %300 : vector<8x1xf32>
    %306 = arith.subf %304, %305 : vector<8x1xf32>
    %cst_226 = arith.constant 0.000000e+00 : f32
    %307 = vector.broadcast %cst_226 : f32 to vector<8x1xf32>
    %308 = arith.maximumf %306, %307 : vector<8x1xf32>
    %309 = vector.broadcast %300 : vector<8x1xf32> to vector<8x288xf32>
    %310 = arith.subf %287, %309 : vector<8x288xf32>
    %cst_227 = arith.constant 9.99999974E-6 : f32
    %311 = vector.broadcast %cst_227 : f32 to vector<8x1xf32>
    %312 = arith.addf %308, %311 : vector<8x1xf32>
    %313 = math.rsqrt %312 : vector<8x1xf32>
    %314 = vector.broadcast %313 : vector<8x1xf32> to vector<8x288xf32>
    %315 = arith.mulf %310, %314 : vector<8x288xf32>
    %316 = vector.broadcast %288 : vector<8x1xf32> to vector<8x288xf32>
    %317 = arith.mulf %315, %316 : vector<8x288xf32>
    %318 = vector.broadcast %289 : vector<8x1xf32> to vector<8x288xf32>
    %319 = arith.addf %317, %318 : vector<8x288xf32>
    %320 = arith.negf %319 : vector<8x288xf32>
    %321 = math.exp %320 : vector<8x288xf32>
    %cst_228 = arith.constant 1.000000e+00 : f32
    %322 = vector.broadcast %cst_228 : f32 to vector<8x288xf32>
    %323 = arith.addf %322, %321 : vector<8x288xf32>
    %324 = arith.divf %322, %323 : vector<8x288xf32>
    %325 = arith.mulf %319, %324 : vector<8x288xf32>
    %326 = vector.broadcast %2 : vector<1x288xf32> to vector<8x288xf32>
    %327 = arith.mulf %325, %326 : vector<8x288xf32>
    %328 = arith.truncf %327 : vector<8x288xf32> to vector<8x288xbf16>
    %c0_229 = arith.constant 0 : index
    %c19_230 = arith.constant 19 : index
    %329 = vector.load %arg20[%c0_229, %c19_230] : memref<8x326xbf16, #tpu.memory_space<vmem>>, vector<8x288xbf16>
    tpu.vector_store %arg20[%c0_229, %c19_230], %328 {strides = array<i32>} : memref<8x326xbf16, #tpu.memory_space<vmem>>, vector<8x288xbf16>,
    %c0_231 = arith.constant 0 : index
    %c0_232 = arith.constant 0 : index
    %c0_233 = arith.constant 0 : index
    %330 = vector.load %arg17[%c0_231, %c0_232, %c0_233] : memref<9x8x8xbf16, #tpu.memory_space<vmem>>, vector<1x8x8xbf16>
    %331 = vector.shape_cast %330 : vector<1x8x8xbf16> to vector<8x8xbf16>
    %c0_234 = arith.constant 0 : index
    %c0_235 = arith.constant 0 : index
    %332 = vector.load %arg20[%c0_234, %c0_235] : memref<8x326xbf16, #tpu.memory_space<vmem>>, vector<8x288xbf16>
    %cst_236 = arith.constant dense<0.000000e+00> : vector<8x288xf32>
    %333 = tpu.matmul %331, %332, %cst_236 {dimension_numbers = #tpu.dot_dimension_numbers<[1], [0], [0], [1], [0, 0, 1, 1], [], []>} : vector<8x8xbf16>, vector<8x288xbf16>, vector<8x288xf32> -> vector<8x288xf32>
    %c1_237 = arith.constant 1 : index
    %c0_238 = arith.constant 0 : index
    %c0_239 = arith.constant 0 : index
    %334 = vector.load %arg17[%c1_237, %c0_238, %c0_239] : memref<9x8x8xbf16, #tpu.memory_space<vmem>>, vector<1x8x8xbf16>
    %335 = vector.shape_cast %334 : vector<1x8x8xbf16> to vector<8x8xbf16>
    %c0_240 = arith.constant 0 : index
    %c1_241 = arith.constant 1 : index
    %336 = vector.load %arg20[%c0_240, %c1_241] : memref<8x326xbf16, #tpu.memory_space<vmem>>, vector<8x288xbf16>
    %cst_242 = arith.constant dense<0.000000e+00> : vector<8x288xf32>
    %337 = tpu.matmul %335, %336, %cst_242 {dimension_numbers = #tpu.dot_dimension_numbers<[1], [0], [0], [1], [0, 0, 1, 1], [], []>} : vector<8x8xbf16>, vector<8x288xbf16>, vector<8x288xf32> -> vector<8x288xf32>
    %338 = arith.addf %333, %337 : vector<8x288xf32>
    %c2_243 = arith.constant 2 : index
    %c0_244 = arith.constant 0 : index
    %c0_245 = arith.constant 0 : index
    %339 = vector.load %arg17[%c2_243, %c0_244, %c0_245] : memref<9x8x8xbf16, #tpu.memory_space<vmem>>, vector<1x8x8xbf16>
    %340 = vector.shape_cast %339 : vector<1x8x8xbf16> to vector<8x8xbf16>
    %c0_246 = arith.constant 0 : index
    %c2_247 = arith.constant 2 : index
    %341 = vector.load %arg20[%c0_246, %c2_247] : memref<8x326xbf16, #tpu.memory_space<vmem>>, vector<8x288xbf16>
    %cst_248 = arith.constant dense<0.000000e+00> : vector<8x288xf32>
    %342 = tpu.matmul %340, %341, %cst_248 {dimension_numbers = #tpu.dot_dimension_numbers<[1], [0], [0], [1], [0, 0, 1, 1], [], []>} : vector<8x8xbf16>, vector<8x288xbf16>, vector<8x288xf32> -> vector<8x288xf32>
    %343 = arith.addf %338, %342 : vector<8x288xf32>
    %c3_249 = arith.constant 3 : index
    %c0_250 = arith.constant 0 : index
    %c0_251 = arith.constant 0 : index
    %344 = vector.load %arg17[%c3_249, %c0_250, %c0_251] : memref<9x8x8xbf16, #tpu.memory_space<vmem>>, vector<1x8x8xbf16>
    %345 = vector.shape_cast %344 : vector<1x8x8xbf16> to vector<8x8xbf16>
    %c0_252 = arith.constant 0 : index
    %c18_253 = arith.constant 18 : index
    %346 = vector.load %arg20[%c0_252, %c18_253] : memref<8x326xbf16, #tpu.memory_space<vmem>>, vector<8x288xbf16>
    %cst_254 = arith.constant dense<0.000000e+00> : vector<8x288xf32>
    %347 = tpu.matmul %345, %346, %cst_254 {dimension_numbers = #tpu.dot_dimension_numbers<[1], [0], [0], [1], [0, 0, 1, 1], [], []>} : vector<8x8xbf16>, vector<8x288xbf16>, vector<8x288xf32> -> vector<8x288xf32>
    %348 = arith.addf %343, %347 : vector<8x288xf32>
    %c4_255 = arith.constant 4 : index
    %c0_256 = arith.constant 0 : index
    %c0_257 = arith.constant 0 : index
    %349 = vector.load %arg17[%c4_255, %c0_256, %c0_257] : memref<9x8x8xbf16, #tpu.memory_space<vmem>>, vector<1x8x8xbf16>
    %350 = vector.shape_cast %349 : vector<1x8x8xbf16> to vector<8x8xbf16>
    %c0_258 = arith.constant 0 : index
    %c19_259 = arith.constant 19 : index
    %351 = vector.load %arg20[%c0_258, %c19_259] : memref<8x326xbf16, #tpu.memory_space<vmem>>, vector<8x288xbf16>
    %cst_260 = arith.constant dense<0.000000e+00> : vector<8x288xf32>
    %352 = tpu.matmul %350, %351, %cst_260 {dimension_numbers = #tpu.dot_dimension_numbers<[1], [0], [0], [1], [0, 0, 1, 1], [], []>} : vector<8x8xbf16>, vector<8x288xbf16>, vector<8x288xf32> -> vector<8x288xf32>
    %353 = arith.addf %348, %352 : vector<8x288xf32>
    %c5_261 = arith.constant 5 : index
    %c0_262 = arith.constant 0 : index
    %c0_263 = arith.constant 0 : index
    %354 = vector.load %arg17[%c5_261, %c0_262, %c0_263] : memref<9x8x8xbf16, #tpu.memory_space<vmem>>, vector<1x8x8xbf16>
    %355 = vector.shape_cast %354 : vector<1x8x8xbf16> to vector<8x8xbf16>
    %c0_264 = arith.constant 0 : index
    %c20_265 = arith.constant 20 : index
    %356 = vector.load %arg20[%c0_264, %c20_265] : memref<8x326xbf16, #tpu.memory_space<vmem>>, vector<8x288xbf16>
    %cst_266 = arith.constant dense<0.000000e+00> : vector<8x288xf32>
    %357 = tpu.matmul %355, %356, %cst_266 {dimension_numbers = #tpu.dot_dimension_numbers<[1], [0], [0], [1], [0, 0, 1, 1], [], []>} : vector<8x8xbf16>, vector<8x288xbf16>, vector<8x288xf32> -> vector<8x288xf32>
    %358 = arith.addf %353, %357 : vector<8x288xf32>
    %c6_267 = arith.constant 6 : index
    %c0_268 = arith.constant 0 : index
    %c0_269 = arith.constant 0 : index
    %359 = vector.load %arg17[%c6_267, %c0_268, %c0_269] : memref<9x8x8xbf16, #tpu.memory_space<vmem>>, vector<1x8x8xbf16>
    %360 = vector.shape_cast %359 : vector<1x8x8xbf16> to vector<8x8xbf16>
    %c0_270 = arith.constant 0 : index
    %c36_271 = arith.constant 36 : index
    %361 = vector.load %arg20[%c0_270, %c36_271] : memref<8x326xbf16, #tpu.memory_space<vmem>>, vector<8x288xbf16>
    %cst_272 = arith.constant dense<0.000000e+00> : vector<8x288xf32>
    %362 = tpu.matmul %360, %361, %cst_272 {dimension_numbers = #tpu.dot_dimension_numbers<[1], [0], [0], [1], [0, 0, 1, 1], [], []>} : vector<8x8xbf16>, vector<8x288xbf16>, vector<8x288xf32> -> vector<8x288xf32>
    %363 = arith.addf %358, %362 : vector<8x288xf32>
    %c7_273 = arith.constant 7 : index
    %c0_274 = arith.constant 0 : index
    %c0_275 = arith.constant 0 : index
    %364 = vector.load %arg17[%c7_273, %c0_274, %c0_275] : memref<9x8x8xbf16, #tpu.memory_space<vmem>>, vector<1x8x8xbf16>
    %365 = vector.shape_cast %364 : vector<1x8x8xbf16> to vector<8x8xbf16>
    %c0_276 = arith.constant 0 : index
    %c37_277 = arith.constant 37 : index
    %366 = vector.load %arg20[%c0_276, %c37_277] : memref<8x326xbf16, #tpu.memory_space<vmem>>, vector<8x288xbf16>
    %cst_278 = arith.constant dense<0.000000e+00> : vector<8x288xf32>
    %367 = tpu.matmul %365, %366, %cst_278 {dimension_numbers = #tpu.dot_dimension_numbers<[1], [0], [0], [1], [0, 0, 1, 1], [], []>} : vector<8x8xbf16>, vector<8x288xbf16>, vector<8x288xf32> -> vector<8x288xf32>
    %368 = arith.addf %363, %367 : vector<8x288xf32>
    %c8_279 = arith.constant 8 : index
    %c0_280 = arith.constant 0 : index
    %c0_281 = arith.constant 0 : index
    %369 = vector.load %arg17[%c8_279, %c0_280, %c0_281] : memref<9x8x8xbf16, #tpu.memory_space<vmem>>, vector<1x8x8xbf16>
    %370 = vector.shape_cast %369 : vector<1x8x8xbf16> to vector<8x8xbf16>
    %c0_282 = arith.constant 0 : index
    %c38_283 = arith.constant 38 : index
    %371 = vector.load %arg20[%c0_282, %c38_283] : memref<8x326xbf16, #tpu.memory_space<vmem>>, vector<8x288xbf16>
    %cst_284 = arith.constant dense<0.000000e+00> : vector<8x288xf32>
    %372 = tpu.matmul %370, %371, %cst_284 {dimension_numbers = #tpu.dot_dimension_numbers<[1], [0], [0], [1], [0, 0, 1, 1], [], []>} : vector<8x8xbf16>, vector<8x288xbf16>, vector<8x288xf32> -> vector<8x288xf32>
    %373 = arith.addf %368, %372 : vector<8x288xf32>
    %c0_285 = arith.constant 0 : index
    %c0_286 = arith.constant 0 : index
    %374 = vector.load %arg18[%c0_285, %c0_286] : memref<8x8xbf16, #tpu.memory_space<vmem>>, vector<8x8xbf16>
    %375 = arith.truncf %193 : vector<8x288xf32> to vector<8x288xbf16>
    %cst_287 = arith.constant dense<0.000000e+00> : vector<8x288xf32>
    %376 = tpu.matmul %374, %375, %cst_287 {dimension_numbers = #tpu.dot_dimension_numbers<[1], [0], [0], [1], [0, 0, 1, 1], [], []>} : vector<8x8xbf16>, vector<8x288xbf16>, vector<8x288xf32> -> vector<8x288xf32>
    %377 = vector.extract_strided_slice %195 {offsets = [0, 2], sizes = [8, 1], strides = [1, 1]} : vector<8x5xf32> to vector<8x1xf32>
    %378 = vector.broadcast %377 : vector<8x1xf32> to vector<8x288xf32>
    %379 = arith.addf %376, %378 : vector<8x288xf32>
    %380 = arith.addf %373, %379 : vector<8x288xf32>
    %381 = vector.broadcast %2 : vector<1x288xf32> to vector<8x288xf32>
    %382 = arith.mulf %380, %381 : vector<8x288xf32>
    %c0_288 = arith.constant 0 : index
    %c0_289 = arith.constant 0 : index
    %c0_290 = arith.constant 0 : index
    %383 = vector.load %arg19[%c0_288, %c0_289, %c0_290] : memref<1x8x288xf32, #tpu.memory_space<vmem>>, vector<1x8x288xf32>
    %384 = vector.shape_cast %383 : vector<1x8x288xf32> to vector<8x288xf32>
    %385 = vector.shape_cast %382 : vector<8x288xf32> to vector<1x8x288xf32>
    tpu.vector_store %arg19[%c0_288, %c0_289, %c0_290], %385 {strides = array<i32>} : memref<1x8x288xf32, #tpu.memory_space<vmem>>, vector<1x8x288xf32>,
    return
  }
  func.func @transform_0(%arg0: i32) -> (i32, i32, i32) {
    %c0_i32 = arith.constant 0 : i32
    %c0_i32_0 = arith.constant 0 : i32
    %c0_i32_1 = arith.constant 0 : i32
    return %arg0, %c0_i32, %c0_i32_0 : i32, i32, i32
  }
  func.func @transform_1(%arg0: i32) -> (i32, i32) {
    %c0_i32 = arith.constant 0 : i32
    %c0_i32_0 = arith.constant 0 : i32
    %c0_i32_1 = arith.constant 0 : i32
    return %c0_i32, %c0_i32_0 : i32, i32
  }
  func.func @transform_2(%arg0: i32) -> (i32, i32, i32) {
    %c0_i32 = arith.constant 0 : i32
    %c0_i32_0 = arith.constant 0 : i32
    %c0_i32_1 = arith.constant 0 : i32
    return %arg0, %c0_i32, %c0_i32_0 : i32, i32, i32
  }
  func.func @transform_3(%arg0: i32) -> (i32, i32) {
    %c0_i32 = arith.constant 0 : i32
    %c0_i32_0 = arith.constant 0 : i32
    %c0_i32_1 = arith.constant 0 : i32
    return %c0_i32, %c0_i32_0 : i32, i32
  }
  func.func @transform_4(%arg0: i32) -> (i32, i32) {
    %c0_i32 = arith.constant 0 : i32
    %c0_i32_0 = arith.constant 0 : i32
    %c0_i32_1 = arith.constant 0 : i32
    return %c0_i32, %c0_i32_0 : i32, i32
  }
  func.func @transform_5(%arg0: i32) -> (i32, i32) {
    %c0_i32 = arith.constant 0 : i32
    %c0_i32_0 = arith.constant 0 : i32
    %c0_i32_1 = arith.constant 0 : i32
    return %c0_i32, %c0_i32_0 : i32, i32
  }
  func.func @transform_6(%arg0: i32) -> (i32, i32) {
    %c0_i32 = arith.constant 0 : i32
    %c0_i32_0 = arith.constant 0 : i32
    %c0_i32_1 = arith.constant 0 : i32
    return %c0_i32, %c0_i32_0 : i32, i32
  }
  func.func @transform_7(%arg0: i32) -> (i32, i32, i32) {
    %c0_i32 = arith.constant 0 : i32
    %c0_i32_0 = arith.constant 0 : i32
    %c0_i32_1 = arith.constant 0 : i32
    %c0_i32_2 = arith.constant 0 : i32
    return %c0_i32, %c0_i32_0, %c0_i32_1 : i32, i32, i32
  }
  func.func @transform_8(%arg0: i32) -> (i32, i32, i32) {
    %c0_i32 = arith.constant 0 : i32
    %c0_i32_0 = arith.constant 0 : i32
    %c0_i32_1 = arith.constant 0 : i32
    %c0_i32_2 = arith.constant 0 : i32
    return %c0_i32, %c0_i32_0, %c0_i32_1 : i32, i32, i32
  }
  func.func @transform_9(%arg0: i32) -> (i32, i32) {
    %c0_i32 = arith.constant 0 : i32
    %c0_i32_0 = arith.constant 0 : i32
    %c0_i32_1 = arith.constant 0 : i32
    return %c0_i32, %c0_i32_0 : i32, i32
  }
  func.func @transform_10(%arg0: i32) -> (i32, i32, i32) {
    %c0_i32 = arith.constant 0 : i32
    %c0_i32_0 = arith.constant 0 : i32
    %c0_i32_1 = arith.constant 0 : i32
    return %arg0, %c0_i32, %c0_i32_0 : i32, i32, i32
  }
  func.func @transform_11(%arg0: i32) -> (i32, i32) {
    %c0_i32 = arith.constant 0 : i32
    %c0_i32_0 = arith.constant 0 : i32
    %c0_i32_1 = arith.constant 0 : i32
    return %c0_i32, %c0_i32_0 : i32, i32
  }
  func.func @transform_12(%arg0: i32) -> (i32, i32) {
    %c0_i32 = arith.constant 0 : i32
    %c0_i32_0 = arith.constant 0 : i32
    %c0_i32_1 = arith.constant 0 : i32
    return %c0_i32, %c0_i32_0 : i32, i32
  }
  func.func @transform_13(%arg0: i32) -> (i32, i32) {
    %c0_i32 = arith.constant 0 : i32
    %c0_i32_0 = arith.constant 0 : i32
    %c0_i32_1 = arith.constant 0 : i32
    return %c0_i32, %c0_i32_0 : i32, i32
  }
  func.func @transform_14(%arg0: i32) -> (i32, i32) {
    %c0_i32 = arith.constant 0 : i32
    %c0_i32_0 = arith.constant 0 : i32
    %c0_i32_1 = arith.constant 0 : i32
    return %c0_i32, %c0_i32_0 : i32, i32
  }
  func.func @transform_15(%arg0: i32) -> (i32, i32, i32) {
    %c0_i32 = arith.constant 0 : i32
    %c0_i32_0 = arith.constant 0 : i32
    %c0_i32_1 = arith.constant 0 : i32
    %c0_i32_2 = arith.constant 0 : i32
    return %c0_i32, %c0_i32_0, %c0_i32_1 : i32, i32, i32
  }
  func.func @transform_16(%arg0: i32) -> (i32, i32, i32) {
    %c0_i32 = arith.constant 0 : i32
    %c0_i32_0 = arith.constant 0 : i32
    %c0_i32_1 = arith.constant 0 : i32
    %c0_i32_2 = arith.constant 0 : i32
    return %c0_i32, %c0_i32_0, %c0_i32_1 : i32, i32, i32
  }
  func.func @transform_17(%arg0: i32) -> (i32, i32) {
    %c0_i32 = arith.constant 0 : i32
    %c0_i32_0 = arith.constant 0 : i32
    %c0_i32_1 = arith.constant 0 : i32
    return %c0_i32, %c0_i32_0 : i32, i32
  }
  func.func @transform_18(%arg0: i32) -> (i32, i32, i32) {
    %c0_i32 = arith.constant 0 : i32
    %c0_i32_0 = arith.constant 0 : i32
    %c0_i32_1 = arith.constant 0 : i32
    return %arg0, %c0_i32, %c0_i32_0 : i32, i32, i32
  }
}

</mosaic_0001>

<llo_original>
// kernel: res_attn_block.1
$region0: #{res_attn_block.1}
  #allocation0 [shape = 'u32[]', space=smem, size = 0x4, offset = 0x4, fixed_abs, tag = 'smem constant byte address 0x4 - core index']
  #allocation1 [shape = 'u32[144,128]{1,0:T(1,128)}', space=vmem, size = 0x12000, scoped, tag = 'internal scratch']
  #allocation2 [shape = 'bf16[8,326]{1,0:T(8,128)(2,1)}', space=vmem, size = 0x1800, scoped, tag = 'scratch operand']
  %s0 = inlined_call_operand.vmem [shape: f32[2,8,288], index: 0, kind: input, shape index: {}]
  %s1 = inlined_call_operand.vmem [shape: f32[1,288], index: 1, kind: input, shape index: {}]
  %s2 = inlined_call_operand.vmem [shape: f32[2,8,1], index: 2, kind: input, shape index: {}]
  %s3 = inlined_call_operand.vmem [shape: f32[8,4], index: 3, kind: input, shape index: {}]
  %s4 = inlined_call_operand.vmem [shape: f32[2,8], index: 4, kind: input, shape index: {}]
  %s5 = inlined_call_operand.vmem [shape: f32[8,5], index: 5, kind: input, shape index: {}]
  %s6 = inlined_call_operand.vmem [shape: f32[2,8], index: 6, kind: input, shape index: {}, may-alias: {6,12,14}]
  %s7 = inlined_call_operand.vmem [shape: bf16[9,8,8], index: 7, kind: input, shape index: {}]
  %s8 = inlined_call_operand.vmem [shape: bf16[9,8,8], index: 8, kind: input, shape index: {}]
  %s9 = inlined_call_operand.vmem [shape: bf16[8,8], index: 9, kind: input, shape index: {}]
  %s10 = inlined_call_operand.vmem [shape: f32[2,8,1], index: 10, kind: input, shape index: {}]
  %s11 = inlined_call_operand.vmem [shape: f32[8,4], index: 11, kind: input, shape index: {}]
  %s12 = inlined_call_operand.vmem [shape: f32[2,8], index: 12, kind: input, shape index: {}, may-alias: {6,12,14}]
  %s13 = inlined_call_operand.vmem [shape: f32[8,5], index: 13, kind: input, shape index: {}]
  %s14 = inlined_call_operand.vmem [shape: f32[2,8], index: 14, kind: input, shape index: {}, may-alias: {6,12,14}]
  %s15 = inlined_call_operand.vmem [shape: bf16[9,8,8], index: 15, kind: input, shape index: {}]
  %s16 = inlined_call_operand.vmem [shape: bf16[9,8,8], index: 16, kind: input, shape index: {}]
  %s17 = inlined_call_operand.vmem [shape: bf16[8,8], index: 17, kind: input, shape index: {}]
  %s18 = inlined_call_operand.vmem [shape: f32[2,8,288], index: 18, kind: output, shape index: {}]
  %s19 = sld [smem:[#allocation0]]
  $region105: #{res_attn_block.1} parent=0
    _
  %s21 = ssub.s32 1, %s19
  %s22 = scalar_select 0, %s21, %s19
  loop: start=0, step=1, limit=4
  $region2: #{res_attn_block.1} parent=0 // loop_pre_header
    _
  $region3: #{res_attn_block.1} parent=0 // loop_header
    %s24 = sphi 0, %s28
    %p25 = scmp.ge.s32.totalorder %s24, 4
    %s34 = sphi 0, %s36
    %s37 = sphi 0, %s34
    %s38 = sphi 0, %s37
    %s54 = sphi 0, %s38
    %s58 = sphi 0, %s58
    %s60 = sphi 0, %s58
    %s61 = sphi 0, %s60
    %s75 = sphi 0, %s61
    %s81 = sphi 0, %s83
    %s84 = sphi 0, %s81
    %s85 = sphi 0, %s84
    %s101 = sphi 0, %s85
    %s105 = sphi 0, %s105
    %s107 = sphi 0, %s105
    %s108 = sphi 0, %s107
    %s122 = sphi 0, %s108
    %s126 = sphi 0, %s126
    %s128 = sphi 0, %s126
    %s129 = sphi 0, %s128
    %s143 = sphi 0, %s129
    %s147 = sphi 0, %s147
    %s149 = sphi 0, %s147
    %s150 = sphi 0, %s149
    %s164 = sphi 0, %s150
    %s168 = sphi 0, %s168
    %s170 = sphi 0, %s168
    %s171 = sphi 0, %s170
    %s185 = sphi 0, %s171
    %s189 = sphi 0, %s189
    %s191 = sphi 0, %s189
    %s192 = sphi 0, %s191
    %s206 = sphi 0, %s192
    %s210 = sphi 0, %s210
    %s212 = sphi 0, %s210
    %s213 = sphi 0, %s212
    %s227 = sphi 0, %s213
    %s231 = sphi 0, %s231
    %s233 = sphi 0, %s231
    %s234 = sphi 0, %s233
    %s248 = sphi 0, %s234
    %s254 = sphi 0, %s256
    %s257 = sphi 0, %s254
    %s258 = sphi 0, %s257
    %s274 = sphi 0, %s258
    %s278 = sphi 0, %s278
    %s280 = sphi 0, %s278
    %s281 = sphi 0, %s280
    %s295 = sphi 0, %s281
    %s299 = sphi 0, %s299
    %s301 = sphi 0, %s299
    %s302 = sphi 0, %s301
    %s316 = sphi 0, %s302
    %s320 = sphi 0, %s320
    %s322 = sphi 0, %s320
    %s323 = sphi 0, %s322
    %s337 = sphi 0, %s323
    %s341 = sphi 0, %s341
    %s343 = sphi 0, %s341
    %s344 = sphi 0, %s343
    %s358 = sphi 0, %s344
    %s362 = sphi 0, %s362
    %s364 = sphi 0, %s362
    %s365 = sphi 0, %s364
    %s379 = sphi 0, %s365
    %s383 = sphi 0, %s383
    %s385 = sphi 0, %s383
    %s386 = sphi 0, %s385
    %s400 = sphi 0, %s386
    %s404 = sphi 0, %s404
    %s406 = sphi 0, %s404
    %s407 = sphi 0, %s406
    %s421 = sphi 0, %s407
    %s427 = sphi 0, %s429
    %s430 = sphi 0, %s427
    %s431 = sphi 0, %s430
    %s447 = sphi 0, %s431
  $region4: #{res_attn_block.1} parent=0 // loop_header_branch
    %27 = sbr.rel (%p25) target = $region8
  $region5: #{res_attn_block.1} parent=0 // loop_body
    %s29 = ssub.s32 %s24, 1
    %s30 = ssub.s32 %s24, 2
    %s31 = sadd.s32 %s24, 1
    %s32 = ssub.s32 %s24, %s31
    %p33 = scmp.eq.s32.totalorder %s32, 0
    %s35 = sadd.s32 %s34, 1
    %s36 = scalar_select %p33, %s34, %s35
    %p39 = pneg %p33
    %p40 = scmp.eq.s32.totalorder %s24, 1
    %p41 = por %p39, %p40
    %p42 = scmp.ne.s32.totalorder %s34, %s37
    %p43 = scmp.eq.s32.totalorder %s24, 0
    %p44 = por %p42, %p43
    %p45 = scmp.ne.s32.totalorder %s34, %s37
    %p46 = scmp.eq.s32.totalorder %s29, 1
    %p47 = por %p45, %p46
    %p48 = scmp.ne.s32.totalorder %s37, %s38
    %p49 = scmp.eq.s32.totalorder %s29, 0
    %p50 = por %p48, %p49
    %p51 = scmp.ne.s32.totalorder %s37, %s38
    %p52 = scmp.eq.s32.totalorder %s30, 1
    %p53 = por %p51, %p52
    %p55 = scmp.ne.s32.totalorder %s38, %s54
    %p56 = scmp.eq.s32.totalorder %s30, 0
    %p57 = por %p55, %p56
    %s59 = sadd.s32 %s58, 1
    %p62 = scmp.eq.s32.totalorder %s24, 1
    %p63 = scmp.ne.s32.totalorder %s58, %s60
    %p64 = scmp.eq.s32.totalorder %s24, 0
    %p65 = por %p63, %p64
    %p66 = scmp.ne.s32.totalorder %s58, %s60
    %p67 = scmp.eq.s32.totalorder %s29, 1
    %p68 = por %p66, %p67
    %p69 = scmp.ne.s32.totalorder %s60, %s61
    %p70 = scmp.eq.s32.totalorder %s29, 0
    %p71 = por %p69, %p70
    %p72 = scmp.ne.s32.totalorder %s60, %s61
    %p73 = scmp.eq.s32.totalorder %s30, 1
    %p74 = por %p72, %p73
    %p76 = scmp.ne.s32.totalorder %s61, %s75
    %p77 = scmp.eq.s32.totalorder %s30, 0
    %p78 = por %p76, %p77
    %s79 = ssub.s32 %s24, %s31
    %p80 = scmp.eq.s32.totalorder %s79, 0
    %s82 = sadd.s32 %s81, 1
    %s83 = scalar_select %p80, %s81, %s82
    %p86 = pneg %p80
    %p87 = scmp.eq.s32.totalorder %s24, 1
    %p88 = por %p86, %p87
    %p89 = scmp.ne.s32.totalorder %s81, %s84
    %p90 = scmp.eq.s32.totalorder %s24, 0
    %p91 = por %p89, %p90
    %p92 = scmp.ne.s32.totalorder %s81, %s84
    %p93 = scmp.eq.s32.totalorder %s29, 1
    %p94 = por %p92, %p93
    %p95 = scmp.ne.s32.totalorder %s84, %s85
    %p96 = scmp.eq.s32.totalorder %s29, 0
    %p97 = por %p95, %p96
    %p98 = scmp.ne.s32.totalorder %s84, %s85
    %p99 = scmp.eq.s32.totalorder %s30, 1
    %p100 = por %p98, %p99
    %p102 = scmp.ne.s32.totalorder %s85, %s101
    %p103 = scmp.eq.s32.totalorder %s30, 0
    %p104 = por %p102, %p103
    %s106 = sadd.s32 %s105, 1
    %p109 = scmp.eq.s32.totalorder %s24, 1
    %p110 = scmp.ne.s32.totalorder %s105, %s107
    %p111 = scmp.eq.s32.totalorder %s24, 0
    %p112 = por %p110, %p111
    %p113 = scmp.ne.s32.totalorder %s105, %s107
    %p114 = scmp.eq.s32.totalorder %s29, 1
    %p115 = por %p113, %p114
    %p116 = scmp.ne.s32.totalorder %s107, %s108
    %p117 = scmp.eq.s32.totalorder %s29, 0
    %p118 = por %p116, %p117
    %p119 = scmp.ne.s32.totalorder %s107, %s108
    %p120 = scmp.eq.s32.totalorder %s30, 1
    %p121 = por %p119, %p120
    %p123 = scmp.ne.s32.totalorder %s108, %s122
    %p124 = scmp.eq.s32.totalorder %s30, 0
    %p125 = por %p123, %p124
    %s127 = sadd.s32 %s126, 1
    %p130 = scmp.eq.s32.totalorder %s24, 1
    %p131 = scmp.ne.s32.totalorder %s126, %s128
    %p132 = scmp.eq.s32.totalorder %s24, 0
    %p133 = por %p131, %p132
    %p134 = scmp.ne.s32.totalorder %s126, %s128
    %p135 = scmp.eq.s32.totalorder %s29, 1
    %p136 = por %p134, %p135
    %p137 = scmp.ne.s32.totalorder %s128, %s129
    %p138 = scmp.eq.s32.totalorder %s29, 0
    %p139 = por %p137, %p138
    %p140 = scmp.ne.s32.totalorder %s128, %s129
    %p141 = scmp.eq.s32.totalorder %s30, 1
    %p142 = por %p140, %p141
    %p144 = scmp.ne.s32.totalorder %s129, %s143
    %p145 = scmp.eq.s32.totalorder %s30, 0
    %p146 = por %p144, %p145
    %s148 = sadd.s32 %s147, 1
    %p151 = scmp.eq.s32.totalorder %s24, 1
    %p152 = scmp.ne.s32.totalorder %s147, %s149
    %p153 = scmp.eq.s32.totalorder %s24, 0
    %p154 = por %p152, %p153
    %p155 = scmp.ne.s32.totalorder %s147, %s149
    %p156 = scmp.eq.s32.totalorder %s29, 1
    %p157 = por %p155, %p156
    %p158 = scmp.ne.s32.totalorder %s149, %s150
    %p159 = scmp.eq.s32.totalorder %s29, 0
    %p160 = por %p158, %p159
    %p161 = scmp.ne.s32.totalorder %s149, %s150
    %p162 = scmp.eq.s32.totalorder %s30, 1
    %p163 = por %p161, %p162
    %p165 = scmp.ne.s32.totalorder %s150, %s164
    %p166 = scmp.eq.s32.totalorder %s30, 0
    %p167 = por %p165, %p166
    %s169 = sadd.s32 %s168, 1
    %p172 = scmp.eq.s32.totalorder %s24, 1
    %p173 = scmp.ne.s32.totalorder %s168, %s170
    %p174 = scmp.eq.s32.totalorder %s24, 0
    %p175 = por %p173, %p174
    %p176 = scmp.ne.s32.totalorder %s168, %s170
    %p177 = scmp.eq.s32.totalorder %s29, 1
    %p178 = por %p176, %p177
    %p179 = scmp.ne.s32.totalorder %s170, %s171
    %p180 = scmp.eq.s32.totalorder %s29, 0
    %p181 = por %p179, %p180
    %p182 = scmp.ne.s32.totalorder %s170, %s171
    %p183 = scmp.eq.s32.totalorder %s30, 1
    %p184 = por %p182, %p183
    %p186 = scmp.ne.s32.totalorder %s171, %s185
    %p187 = scmp.eq.s32.totalorder %s30, 0
    %p188 = por %p186, %p187
    %s190 = sadd.s32 %s189, 1
    %p193 = scmp.eq.s32.totalorder %s24, 1
    %p194 = scmp.ne.s32.totalorder %s189, %s191
    %p195 = scmp.eq.s32.totalorder %s24, 0
    %p196 = por %p194, %p195
    %p197 = scmp.ne.s32.totalorder %s189, %s191
    %p198 = scmp.eq.s32.totalorder %s29, 1
    %p199 = por %p197, %p198
    %p200 = scmp.ne.s32.totalorder %s191, %s192
    %p201 = scmp.eq.s32.totalorder %s29, 0
    %p202 = por %p200, %p201
    %p203 = scmp.ne.s32.totalorder %s191, %s192
    %p204 = scmp.eq.s32.totalorder %s30, 1
    %p205 = por %p203, %p204
    %p207 = scmp.ne.s32.totalorder %s192, %s206
    %p208 = scmp.eq.s32.totalorder %s30, 0
    %p209 = por %p207, %p208
    %s211 = sadd.s32 %s210, 1
    %p214 = scmp.eq.s32.totalorder %s24, 1
    %p215 = scmp.ne.s32.totalorder %s210, %s212
    %p216 = scmp.eq.s32.totalorder %s24, 0
    %p217 = por %p215, %p216
    %p218 = scmp.ne.s32.totalorder %s210, %s212
    %p219 = scmp.eq.s32.totalorder %s29, 1
    %p220 = por %p218, %p219
    %p221 = scmp.ne.s32.totalorder %s212, %s213
    %p222 = scmp.eq.s32.totalorder %s29, 0
    %p223 = por %p221, %p222
    %p224 = scmp.ne.s32.totalorder %s212, %s213
    %p225 = scmp.eq.s32.totalorder %s30, 1
    %p226 = por %p224, %p225
    %p228 = scmp.ne.s32.totalorder %s213, %s227
    %p229 = scmp.eq.s32.totalorder %s30, 0
    %p230 = por %p228, %p229
    %s232 = sadd.s32 %s231, 1
    %p235 = scmp.eq.s32.totalorder %s24, 1
    %p236 = scmp.ne.s32.totalorder %s231, %s233
    %p237 = scmp.eq.s32.totalorder %s24, 0
    %p238 = por %p236, %p237
    %p239 = scmp.ne.s32.totalorder %s231, %s233
    %p240 = scmp.eq.s32.totalorder %s29, 1
    %p241 = por %p239, %p240
    %p242 = scmp.ne.s32.totalorder %s233, %s234
    %p243 = scmp.eq.s32.totalorder %s29, 0
    %p244 = por %p242, %p243
    %p245 = scmp.ne.s32.totalorder %s233, %s234
    %p246 = scmp.eq.s32.totalorder %s30, 1
    %p247 = por %p245, %p246
    %p249 = scmp.ne.s32.totalorder %s234, %s248
    %p250 = scmp.eq.s32.totalorder %s30, 0
    %p251 = por %p249, %p250
    %s252 = ssub.s32 %s24, %s31
    %p253 = scmp.eq.s32.totalorder %s252, 0
    %s255 = sadd.s32 %s254, 1
    %s256 = scalar_select %p253, %s254, %s255
    %p259 = pneg %p253
    %p260 = scmp.eq.s32.totalorder %s24, 1
    %p261 = por %p259, %p260
    %p262 = scmp.ne.s32.totalorder %s254, %s257
    %p263 = scmp.eq.s32.totalorder %s24, 0
    %p264 = por %p262, %p263
    %p265 = scmp.ne.s32.totalorder %s254, %s257
    %p266 = scmp.eq.s32.totalorder %s29, 1
    %p267 = por %p265, %p266
    %p268 = scmp.ne.s32.totalorder %s257, %s258
    %p269 = scmp.eq.s32.totalorder %s29, 0
    %p270 = por %p268, %p269
    %p271 = scmp.ne.s32.totalorder %s257, %s258
    %p272 = scmp.eq.s32.totalorder %s30, 1
    %p273 = por %p271, %p272
    %p275 = scmp.ne.s32.totalorder %s258, %s274
    %p276 = scmp.eq.s32.totalorder %s30, 0
    %p277 = por %p275, %p276
    %s279 = sadd.s32 %s278, 1
    %p282 = scmp.eq.s32.totalorder %s24, 1
    %p283 = scmp.ne.s32.totalorder %s278, %s280
    %p284 = scmp.eq.s32.totalorder %s24, 0
    %p285 = por %p283, %p284
    %p286 = scmp.ne.s32.totalorder %s278, %s280
    %p287 = scmp.eq.s32.totalorder %s29, 1
    %p288 = por %p286, %p287
    %p289 = scmp.ne.s32.totalorder %s280, %s281
    %p290 = scmp.eq.s32.totalorder %s29, 0
    %p291 = por %p289, %p290
    %p292 = scmp.ne.s32.totalorder %s280, %s281
    %p293 = scmp.eq.s32.totalorder %s30, 1
    %p294 = por %p292, %p293
    %p296 = scmp.ne.s32.totalorder %s281, %s295
    %p297 = scmp.eq.s32.totalorder %s30, 0
    %p298 = por %p296, %p297
    %s300 = sadd.s32 %s299, 1
    %p303 = scmp.eq.s32.totalorder %s24, 1
    %p304 = scmp.ne.s32.totalorder %s299, %s301
    %p305 = scmp.eq.s32.totalorder %s24, 0
    %p306 = por %p304, %p305
    %p307 = scmp.ne.s32.totalorder %s299, %s301
    %p308 = scmp.eq.s32.totalorder %s29, 1
    %p309 = por %p307, %p308
    %p310 = scmp.ne.s32.totalorder %s301, %s302
    %p311 = scmp.eq.s32.totalorder %s29, 0
    %p312 = por %p310, %p311
    %p313 = scmp.ne.s32.totalorder %s301, %s302
    %p314 = scmp.eq.s32.totalorder %s30, 1
    %p315 = por %p313, %p314
    %p317 = scmp.ne.s32.totalorder %s302, %s316
    %p318 = scmp.eq.s32.totalorder %s30, 0
    %p319 = por %p317, %p318
    %s321 = sadd.s32 %s320, 1
    %p324 = scmp.eq.s32.totalorder %s24, 1
    %p325 = scmp.ne.s32.totalorder %s320, %s322
    %p326 = scmp.eq.s32.totalorder %s24, 0
    %p327 = por %p325, %p326
    %p328 = scmp.ne.s32.totalorder %s320, %s322
    %p329 = scmp.eq.s32.totalorder %s29, 1
    %p330 = por %p328, %p329
    %p331 = scmp.ne.s32.totalorder %s322, %s323
    %p332 = scmp.eq.s32.totalorder %s29, 0
    %p333 = por %p331, %p332
    %p334 = scmp.ne.s32.totalorder %s322, %s323
    %p335 = scmp.eq.s32.totalorder %s30, 1
    %p336 = por %p334, %p335
    %p338 = scmp.ne.s32.totalorder %s323, %s337
    %p339 = scmp.eq.s32.totalorder %s30, 0
    %p340 = por %p338, %p339
    %s342 = sadd.s32 %s341, 1
    %p345 = scmp.eq.s32.totalorder %s24, 1
    %p346 = scmp.ne.s32.totalorder %s341, %s343
    %p347 = scmp.eq.s32.totalorder %s24, 0
    %p348 = por %p346, %p347
    %p349 = scmp.ne.s32.totalorder %s341, %s343
    %p350 = scmp.eq.s32.totalorder %s29, 1
    %p351 = por %p349, %p350
    %p352 = scmp.ne.s32.totalorder %s343, %s344
    %p353 = scmp.eq.s32.totalorder %s29, 0
    %p354 = por %p352, %p353
    %p355 = scmp.ne.s32.totalorder %s343, %s344
    %p356 = scmp.eq.s32.totalorder %s30, 1
    %p357 = por %p355, %p356
    %p359 = scmp.ne.s32.totalorder %s344, %s358
    %p360 = scmp.eq.s32.totalorder %s30, 0
    %p361 = por %p359, %p360
    %s363 = sadd.s32 %s362, 1
    %p366 = scmp.eq.s32.totalorder %s24, 1
    %p367 = scmp.ne.s32.totalorder %s362, %s364
    %p368 = scmp.eq.s32.totalorder %s24, 0
    %p369 = por %p367, %p368
    %p370 = scmp.ne.s32.totalorder %s362, %s364
    %p371 = scmp.eq.s32.totalorder %s29, 1
    %p372 = por %p370, %p371
    %p373 = scmp.ne.s32.totalorder %s364, %s365
    %p374 = scmp.eq.s32.totalorder %s29, 0
    %p375 = por %p373, %p374
    %p376 = scmp.ne.s32.totalorder %s364, %s365
    %p377 = scmp.eq.s32.totalorder %s30, 1
    %p378 = por %p376, %p377
    %p380 = scmp.ne.s32.totalorder %s365, %s379
    %p381 = scmp.eq.s32.totalorder %s30, 0
    %p382 = por %p380, %p381
    %s384 = sadd.s32 %s383, 1
    %p387 = scmp.eq.s32.totalorder %s24, 1
    %p388 = scmp.ne.s32.totalorder %s383, %s385
    %p389 = scmp.eq.s32.totalorder %s24, 0
    %p390 = por %p388, %p389
    %p391 = scmp.ne.s32.totalorder %s383, %s385
    %p392 = scmp.eq.s32.totalorder %s29, 1
    %p393 = por %p391, %p392
    %p394 = scmp.ne.s32.totalorder %s385, %s386
    %p395 = scmp.eq.s32.totalorder %s29, 0
    %p396 = por %p394, %p395
    %p397 = scmp.ne.s32.totalorder %s385, %s386
    %p398 = scmp.eq.s32.totalorder %s30, 1
    %p399 = por %p397, %p398
    %p401 = scmp.ne.s32.totalorder %s386, %s400
    %p402 = scmp.eq.s32.totalorder %s30, 0
    %p403 = por %p401, %p402
    %s405 = sadd.s32 %s404, 1
    %p408 = scmp.eq.s32.totalorder %s24, 1
    %p409 = scmp.ne.s32.totalorder %s404, %s406
    %p410 = scmp.eq.s32.totalorder %s24, 0
    %p411 = por %p409, %p410
    %p412 = scmp.ne.s32.totalorder %s404, %s406
    %p413 = scmp.eq.s32.totalorder %s29, 1
    %p414 = por %p412, %p413
    %p415 = scmp.ne.s32.totalorder %s406, %s407
    %p416 = scmp.eq.s32.totalorder %s29, 0
    %p417 = por %p415, %p416
    %p418 = scmp.ne.s32.totalorder %s406, %s407
    %p419 = scmp.eq.s32.totalorder %s30, 1
    %p420 = por %p418, %p419
    %p422 = scmp.ne.s32.totalorder %s407, %s421
    %p423 = scmp.eq.s32.totalorder %s30, 0
    %p424 = por %p422, %p423
    %s425 = ssub.s32 %s24, %s31
    %p426 = scmp.eq.s32.totalorder %s425, 0
    %s428 = sadd.s32 %s427, 1
    %s429 = scalar_select %p426, %s427, %s428
    %p432 = pneg %p426
    %p433 = scmp.eq.s32.totalorder %s24, 1
    %p434 = por %p432, %p433
    %p435 = scmp.ne.s32.totalorder %s427, %s430
    %p436 = scmp.eq.s32.totalorder %s24, 0
    %p437 = por %p435, %p436
    %p438 = scmp.ne.s32.totalorder %s427, %s430
    %p439 = scmp.eq.s32.totalorder %s29, 1
    %p440 = por %p438, %p439
    %p441 = scmp.ne.s32.totalorder %s430, %s431
    %p442 = scmp.eq.s32.totalorder %s29, 0
    %p443 = por %p441, %p442
    %p444 = scmp.ne.s32.totalorder %s430, %s431
    %p445 = scmp.eq.s32.totalorder %s30, 1
    %p446 = por %p444, %p445
    %p448 = scmp.ne.s32.totalorder %s431, %s447
    %p449 = scmp.eq.s32.totalorder %s30, 0
    %p450 = por %p448, %p449
    %p451 = scmp.le.s32.totalorder 1, %s24
    %p452 = scmp.lt.s32.totalorder %s24, 3
    %p453 = pnand %p451, %p452
    %p454 = pneg %p453
    // Predicated region
    $region9: #{res_attn_block.1} parent=5 // pred_check
      _
    $region10: #{res_attn_block.1} parent=5 // pred_check_branch
      %456 = sbr.rel (%p453) target = $region12
    $region11: #{res_attn_block.1} parent=5 // pred_region
      %s457 = ssub.s32 %s24, 1
      // Predicated region
      $region13: #{res_attn_block.1} parent=11 // pred_check
        %p458 = pneg %p71
      $region14: #{res_attn_block.1} parent=11 // pred_check_branch
        %460 = sbr.rel (%p458) target = $region16
      $region15: #{res_attn_block.1} parent=11 // pred_region
        _
      $region16: #{res_attn_block.1} parent=11 // pred_fallthru
        _
      // Predicated region
      $region17: #{res_attn_block.1} parent=11 // pred_check
        %p461 = pneg %p118
      $region18: #{res_attn_block.1} parent=11 // pred_check_branch
        %463 = sbr.rel (%p461) target = $region20
      $region19: #{res_attn_block.1} parent=11 // pred_region
        _
      $region20: #{res_attn_block.1} parent=11 // pred_fallthru
        _
      // Predicated region
      $region21: #{res_attn_block.1} parent=11 // pred_check
        %p464 = pneg %p139
      $region22: #{res_attn_block.1} parent=11 // pred_check_branch
        %466 = sbr.rel (%p464) target = $region24
      $region23: #{res_attn_block.1} parent=11 // pred_region
        _
      $region24: #{res_attn_block.1} parent=11 // pred_fallthru
        _
      // Predicated region
      $region25: #{res_attn_block.1} parent=11 // pred_check
        %p467 = pneg %p160
      $region26: #{res_attn_block.1} parent=11 // pred_check_branch
        %469 = sbr.rel (%p467) target = $region28
      $region27: #{res_attn_block.1} parent=11 // pred_region
        _
      $region28: #{res_attn_block.1} parent=11 // pred_fallthru
        _
      // Predicated region
      $region29: #{res_attn_block.1} parent=11 // pred_check
        %p470 = pneg %p181
      $region30: #{res_attn_block.1} parent=11 // pred_check_branch
        %472 = sbr.rel (%p470) target = $region32
      $region31: #{res_attn_block.1} parent=11 // pred_region
        _
      $region32: #{res_attn_block.1} parent=11 // pred_fallthru
        _
      // Predicated region
      $region33: #{res_attn_block.1} parent=11 // pred_check
        %p473 = pneg %p202
      $region34: #{res_attn_block.1} parent=11 // pred_check_branch
        %475 = sbr.rel (%p473) target = $region36
      $region35: #{res_attn_block.1} parent=11 // pred_region
        _
      $region36: #{res_attn_block.1} parent=11 // pred_fallthru
        _
      // Predicated region
      $region37: #{res_attn_block.1} parent=11 // pred_check
        %p476 = pneg %p223
      $region38: #{res_attn_block.1} parent=11 // pred_check_branch
        %478 = sbr.rel (%p476) target = $region40
      $region39: #{res_attn_block.1} parent=11 // pred_region
        _
      $region40: #{res_attn_block.1} parent=11 // pred_fallthru
        _
      // Predicated region
      $region41: #{res_attn_block.1} parent=11 // pred_check
        %p479 = pneg %p244
      $region42: #{res_attn_block.1} parent=11 // pred_check_branch
        %481 = sbr.rel (%p479) target = $region44
      $region43: #{res_attn_block.1} parent=11 // pred_region
        _
      $region44: #{res_attn_block.1} parent=11 // pred_fallthru
        _
      // Predicated region
      $region45: #{res_attn_block.1} parent=11 // pred_check
        %p482 = pneg %p291
      $region46: #{res_attn_block.1} parent=11 // pred_check_branch
        %484 = sbr.rel (%p482) target = $region48
      $region47: #{res_attn_block.1} parent=11 // pred_region
        _
      $region48: #{res_attn_block.1} parent=11 // pred_fallthru
        _
      // Predicated region
      $region49: #{res_attn_block.1} parent=11 // pred_check
        %p485 = pneg %p312
      $region50: #{res_attn_block.1} parent=11 // pred_check_branch
        %487 = sbr.rel (%p485) target = $region52
      $region51: #{res_attn_block.1} parent=11 // pred_region
        _
      $region52: #{res_attn_block.1} parent=11 // pred_fallthru
        _
      // Predicated region
      $region53: #{res_attn_block.1} parent=11 // pred_check
        %p488 = pneg %p333
      $region54: #{res_attn_block.1} parent=11 // pred_check_branch
        %490 = sbr.rel (%p488) target = $region56
      $region55: #{res_attn_block.1} parent=11 // pred_region
        _
      $region56: #{res_attn_block.1} parent=11 // pred_fallthru
        _
      // Predicated region
      $region57: #{res_attn_block.1} parent=11 // pred_check
        %p491 = pneg %p354
      $region58: #{res_attn_block.1} parent=11 // pred_check_branch
        %493 = sbr.rel (%p491) target = $region60
      $region59: #{res_attn_block.1} parent=11 // pred_region
        _
      $region60: #{res_attn_block.1} parent=11 // pred_fallthru
        _
      // Predicated region
      $region61: #{res_attn_block.1} parent=11 // pred_check
        %p494 = pneg %p375
      $region62: #{res_attn_block.1} parent=11 // pred_check_branch
        %496 = sbr.rel (%p494) target = $region64
      $region63: #{res_attn_block.1} parent=11 // pred_region
        _
      $region64: #{res_attn_block.1} parent=11 // pred_fallthru
        _
      // Predicated region
      $region65: #{res_attn_block.1} parent=11 // pred_check
        %p497 = pneg %p396
      $region66: #{res_attn_block.1} parent=11 // pred_check_branch
        %499 = sbr.rel (%p497) target = $region68
      $region67: #{res_attn_block.1} parent=11 // pred_region
        _
      $region68: #{res_attn_block.1} parent=11 // pred_fallthru
        _
      // Predicated region
      $region69: #{res_attn_block.1} parent=11 // pred_check
        %p500 = pneg %p417
      $region70: #{res_attn_block.1} parent=11 // pred_check_branch
        %502 = sbr.rel (%p500) target = $region72
      $region71: #{res_attn_block.1} parent=11 // pred_region
        _
      $region72: #{res_attn_block.1} parent=11 // pred_fallthru
        _
    $region12: #{res_attn_block.1} parent=5 // pred_fallthru
      _
    %p503 = scmp.lt.s32.totalorder %s24, 2
    // Predicated region
    $region73: #{res_attn_block.1} parent=5 // pred_check
      %p504 = pneg %p503
    $region74: #{res_attn_block.1} parent=5 // pred_check_branch
      %506 = sbr.rel (%p504) target = $region76
    $region75: #{res_attn_block.1} parent=5 // pred_region
      // Predicated region
      $region77: #{res_attn_block.1} parent=75 // pred_check
        %p507 = pneg %p44
      $region78: #{res_attn_block.1} parent=75 // pred_check_branch
        %509 = sbr.rel (%p507) target = $region80
      $region79: #{res_attn_block.1} parent=75 // pred_region
        %p510 = scmp.lt.s32.totalorder %s24, 1
        %s511 = scalar_select %p510, %s24, 1
        %s512 = smul.addr %s511, 3
        %s513 = smul.addr %s512, 8
        %s514 = scalar_lea.vmem %s0, %s513
      $region80: #{res_attn_block.1} parent=75 // pred_fallthru
        _
      // Predicated region
      $region81: #{res_attn_block.1} parent=75 // pred_check
        %p515 = pneg %p91
      $region82: #{res_attn_block.1} parent=75 // pred_check_branch
        %517 = sbr.rel (%p515) target = $region84
      $region83: #{res_attn_block.1} parent=75 // pred_region
        %p518 = scmp.lt.s32.totalorder %s24, 1
        %s519 = scalar_select %p518, %s24, 1
        %s520 = smul.addr %s519, 8
        %s521 = scalar_lea.vmem %s2, %s520
      $region84: #{res_attn_block.1} parent=75 // pred_fallthru
        _
      // Predicated region
      $region85: #{res_attn_block.1} parent=75 // pred_check
        %p522 = pneg %p264
      $region86: #{res_attn_block.1} parent=75 // pred_check_branch
        %524 = sbr.rel (%p522) target = $region88
      $region87: #{res_attn_block.1} parent=75 // pred_region
        %p525 = scmp.lt.s32.totalorder %s24, 1
        %s526 = scalar_select %p525, %s24, 1
        %s527 = smul.addr %s526, 8
        %s528 = scalar_lea.vmem %s10, %s527
      $region88: #{res_attn_block.1} parent=75 // pred_fallthru
        _
    $region76: #{res_attn_block.1} parent=5 // pred_fallthru
      _
    %p529 = scmp.le.s32.totalorder 1, %s24
    %p530 = scmp.lt.s32.totalorder %s24, 3
    %p531 = pnand %p529, %p530
    %p532 = pneg %p531
    // Predicated region
    $region89: #{res_attn_block.1} parent=5 // pred_check
      _
    $region90: #{res_attn_block.1} parent=5 // pred_check_branch
      %534 = sbr.rel (%p531) target = $region92
    $region91: #{res_attn_block.1} parent=5 // pred_region
      %s535 = ssub.s32 %s24, 1
      %p536 = scmp.lt.s32.totalorder %s29, 1
      %s537 = scalar_select %p536, %s29, 1
      %s538 = smul.addr %s537, 3
      %s539 = smul.addr %s538, 8
      %s540 = scalar_lea.vmem %s0, %s539
      %p541 = pneg %p50
      %p542 = pneg %p47
      %p543 = pneg %p71
      %p544 = pneg %p68
      %p545 = scmp.lt.s32.totalorder %s29, 1
      %s546 = scalar_select %p545, %s29, 1
      %s547 = smul.addr %s546, 8
      %s548 = scalar_lea.vmem %s2, %s547
      %p549 = pneg %p97
      %p550 = pneg %p94
      %p551 = pneg %p118
      %p552 = pneg %p115
      %p553 = pneg %p139
      %p554 = pneg %p136
      %p555 = pneg %p160
      %p556 = pneg %p157
      %p557 = pneg %p181
      %p558 = pneg %p178
      %p559 = pneg %p202
      %p560 = pneg %p199
      %p561 = pneg %p223
      %p562 = pneg %p220
      %p563 = pneg %p244
      %p564 = pneg %p241
      %p565 = scmp.lt.s32.totalorder %s29, 1
      %s566 = scalar_select %p565, %s29, 1
      %s567 = smul.addr %s566, 8
      %s568 = scalar_lea.vmem %s10, %s567
      %p569 = pneg %p270
      %p570 = pneg %p267
      %p571 = pneg %p291
      %p572 = pneg %p288
      %p573 = pneg %p312
      %p574 = pneg %p309
      %p575 = pneg %p333
      %p576 = pneg %p330
      %p577 = pneg %p354
      %p578 = pneg %p351
      %p579 = pneg %p375
      %p580 = pneg %p372
      %p581 = pneg %p396
      %p582 = pneg %p393
      %p583 = pneg %p417
      %p584 = pneg %p414
      %p585 = pneg %p443
      %p586 = pneg %p440
      %p587 = scmp.lt.s32.totalorder %s29, 1
      %s588 = scalar_select %p587, %s29, 1
      %s589 = smul.addr %s588, 3
      %s590 = smul.addr %s589, 8
      %s591 = scalar_lea.vmem %s18, %s590
      %p592 = scmp.lt.s32.totalorder %s29, 1
      %s593 = scalar_select %p592, %s29, 1
      %s594 = smul.addr %s593, 3
      %s595 = smul.addr %s594, 8
      %s596 = scalar_lea.vmem %s0, %s595
      %p597 = scmp.lt.s32.totalorder %s29, 1
      %s598 = scalar_select %p597, %s29, 1
      %s599 = smul.addr %s598, 8
      %s600 = scalar_lea.vmem %s2, %s599
      %p601 = scmp.lt.s32.totalorder %s29, 1
      %s602 = scalar_select %p601, %s29, 1
      %s603 = smul.addr %s602, 8
      %s604 = scalar_lea.vmem %s10, %s603
      %p605 = scmp.lt.s32.totalorder %s29, 1
      %s606 = scalar_select %p605, %s29, 1
      %s607 = smul.addr %s606, 3
      %s608 = smul.addr %s607, 8
      %s609 = scalar_lea.vmem %s18, %s608
      %611 = vst [vmem:[#allocation2] sm:$0xff] 0
      %vm612 = vcmask 568320
      %613 = vst.msk [vmem:[#allocation2 + $0x8] sm:$0xf] %vm612, 0
      %v614 = vld [vmem:[%s1] sm:$0x7]
      %v615 = vld [vmem:[%s596] sm:$0xff]
      %v616 = vld [vmem:[%s596 + $0x8] sm:$0xff]
      %v617 = vld [vmem:[%s596 + $0x10] sm:$0xff]
      %v618 = vld [vmem:[%s3] sm:$0xff]
      %v619 = vld [vmem:[%s5] sm:$0xff]
      %v620 = vld [vmem:[%s4] sm:$0x3]
      %v621 = vadd.f32 %v615, %v616
      %vm622 = vcmask 261120
      %v623 = vsel %vm622, %v617, 0.0
      %v624 = vadd.f32 %v621, %v623
      %625 = vadd.xlane.f32.xlu0 %v624
      %v626 = vpop.xlane.xlu0 %625
      %v627 = vmul.f32 %v615, %v615
      %v628 = vmul.f32 %v616, %v616
      %v629 = vmul.f32 %v617, %v617
      %v630 = vadd.f32 %v627, %v628
      %v631 = vsel %vm622, %v629, 0.0
      %v632 = vadd.f32 %v630, %v631
      %633 = vadd.xlane.f32.xlu0 %v632
      %v634 = vpop.xlane.xlu0 %633
      %vm635 = vcmask 64512
      %v637 = vsel %vm635, %v620, 0
      %639 = vmatprep.subr.mxu0 0.0
      %640 = vmatpush1.msra.mxu0 %v626
      %641 = vmatprep.subr.mxu0 0.0
      %642 = vmatpush1.msra.mxu0 0.0
      %643 = vmatprep.subr.mxu0 0.0
      %644 = vmatpush1.msra.mxu0 0.0
      %645 = vmatprep.subr.mxu0 0.0
      %646 = vmatpush1.msra.mxu0 0.0
      %647 = vmatprep.subr.mxu0 0.0
      %648 = vmatpush1.msra.mxu0 0.0
      %649 = vmatprep.subr.mxu0 0.0
      %650 = vmatpush1.msra.mxu0 0.0
      %651 = vmatprep.subr.mxu0 0.0
      %652 = vmatpush1.msra.mxu0 0.0
      %653 = vmatprep.subr.mxu0 0.0
      %654 = vmatpush1.msra.mxu0 0.0
      %655 = vmatprep.subr.mxu0 0.0
      %656 = vmatpush1.msra.mxu0 0.0
      %657 = vmatprep.subr.mxu0 0.0
      %658 = vmatpush1.msra.mxu0 0.0
      %659 = vmatprep.subr.mxu0 0.0
      %660 = vmatpush1.msra.mxu0 0.0
      %661 = vmatprep.subr.mxu0 0.0
      %662 = vmatpush1.msra.mxu0 0.0
      %663 = vmatprep.subr.mxu0 0.0
      %664 = vmatpush1.msra.mxu0 0.0
      %665 = vmatprep.subr.mxu0 0.0
      %666 = vmatpush1.msra.mxu0 0.0
      %667 = vmatprep.subr.mxu0 0.0
      %668 = vmatpush1.msra.mxu0 0.0
      %669 = vmatprep.subr.mxu0 0.0
      %670 = vmatpush1.msra.mxu0 0.0
      %671 = vmatprep.subr.mxu0 0.0
      %672 = vmatpush1.msra.mxu0 0.0
      %673 = vmatprep.subr.mxu0 0.0
      %674 = vmatpush1.msra.mxu0 0.0
      %675 = vmatprep.subr.mxu0 0.0
      %676 = vmatpush1.msra.mxu0 0.0
      %677 = vmatprep.subr.mxu0 0.0
      %678 = vmatpush1.msra.mxu0 0.0
      %679 = vmatprep.subr.mxu0 0.0
      %680 = vmatpush1.msra.mxu0 0.0
      %681 = vmatprep.subr.mxu0 0.0
      %682 = vmatpush1.msra.mxu0 0.0
      %683 = vmatprep.subr.mxu0 0.0
      %684 = vmatpush1.msra.mxu0 0.0
      %685 = vmatprep.subr.mxu0 0.0
      %686 = vmatpush1.msra.mxu0 0.0
      %687 = vmatprep.subr.mxu0 0.0
      %688 = vmatpush1.msra.mxu0 0.0
      %689 = vmatprep.subr.mxu0 0.0
      %690 = vmatpush1.msra.mxu0 0.0
      %691 = vmatprep.subr.mxu0 0.0
      %692 = vmatpush1.msra.mxu0 0.0
      %693 = vmatprep.subr.mxu0 0.0
      %694 = vmatpush1.msra.mxu0 0.0
      %695 = vmatprep.subr.mxu0 0.0
      %696 = vmatpush1.msra.mxu0 0.0
      %697 = vmatprep.subr.mxu0 0.0
      %698 = vmatpush1.msra.mxu0 0.0
      %699 = vmatprep.subr.mxu0 0.0
      %700 = vmatpush1.msra.mxu0 0.0
      %701 = vmatprep.subr.mxu0 0.0
      %702 = vmatpush1.msra.mxu0 0.0
      %703 = vmatprep.mubr.f32.mxu0 0.0
      %704 = vmatmul.mubr.f32.gmra.mrb[0].mxu0 %v637
      %v705 = vpop.f32.mrb[0].mxu0
      %v706 = vadd.f32 0.0, %v705
      %v707 = vpop.f32.mrb[0].mxu0
      %708 = vdwg.mxu0
      %710 = vrot.lane.b32.xlu0 %v618, 126
      %v711 = vpop.permute.xlu0 %710
      %vm712 = vcmask 15360
      %v713 = vsel %vm712, %v711, 0
      %vm715 = vcmask 1041408
      %v717 = vsel %vm715, %v706, 0
      %719 = vmatprep.subr.mxu0 0.0
      %720 = vmatpush1.msra.mxu0 %v717
      %721 = vmatprep.subr.mxu0 0.0
      %722 = vmatpush1.msra.mxu0 0.0
      %723 = vmatprep.subr.mxu0 0.0
      %724 = vmatpush1.msra.mxu0 0.0
      %725 = vmatprep.subr.mxu0 0.0
      %726 = vmatpush1.msra.mxu0 0.0
      %727 = vmatprep.subr.mxu0 0.0
      %728 = vmatpush1.msra.mxu0 0.0
      %729 = vmatprep.subr.mxu0 0.0
      %730 = vmatpush1.msra.mxu0 0.0
      %731 = vmatprep.subr.mxu0 0.0
      %732 = vmatpush1.msra.mxu0 0.0
      %733 = vmatprep.subr.mxu0 0.0
      %734 = vmatpush1.msra.mxu0 0.0
      %735 = vmatprep.subr.mxu0 0.0
      %736 = vmatpush1.msra.mxu0 0.0
      %737 = vmatprep.subr.mxu0 0.0
      %738 = vmatpush1.msra.mxu0 0.0
      %739 = vmatprep.subr.mxu0 0.0
      %740 = vmatpush1.msra.mxu0 0.0
      %741 = vmatprep.subr.mxu0 0.0
      %742 = vmatpush1.msra.mxu0 0.0
      %743 = vmatprep.subr.mxu0 0.0
      %744 = vmatpush1.msra.mxu0 0.0
      %745 = vmatprep.subr.mxu0 0.0
      %746 = vmatpush1.msra.mxu0 0.0
      %747 = vmatprep.subr.mxu0 0.0
      %748 = vmatpush1.msra.mxu0 0.0
      %749 = vmatprep.subr.mxu0 0.0
      %750 = vmatpush1.msra.mxu0 0.0
      %751 = vmatprep.subr.mxu0 0.0
      %752 = vmatpush1.msra.mxu0 0.0
      %753 = vmatprep.subr.mxu0 0.0
      %754 = vmatpush1.msra.mxu0 0.0
      %755 = vmatprep.subr.mxu0 0.0
      %756 = vmatpush1.msra.mxu0 0.0
      %757 = vmatprep.subr.mxu0 0.0
      %758 = vmatpush1.msra.mxu0 0.0
      %759 = vmatprep.subr.mxu0 0.0
      %760 = vmatpush1.msra.mxu0 0.0
      %761 = vmatprep.subr.mxu0 0.0
      %762 = vmatpush1.msra.mxu0 0.0
      %763 = vmatprep.subr.mxu0 0.0
      %764 = vmatpush1.msra.mxu0 0.0
      %765 = vmatprep.subr.mxu0 0.0
      %766 = vmatpush1.msra.mxu0 0.0
      %767 = vmatprep.subr.mxu0 0.0
      %768 = vmatpush1.msra.mxu0 0.0
      %769 = vmatprep.subr.mxu0 0.0
      %770 = vmatpush1.msra.mxu0 0.0
      %771 = vmatprep.subr.mxu0 0.0
      %772 = vmatpush1.msra.mxu0 0.0
      %773 = vmatprep.subr.mxu0 0.0
      %774 = vmatpush1.msra.mxu0 0.0
      %775 = vmatprep.subr.mxu0 0.0
      %776 = vmatpush1.msra.mxu0 0.0
      %777 = vmatprep.subr.mxu0 0.0
      %778 = vmatpush1.msra.mxu0 0.0
      %779 = vmatprep.subr.mxu0 0.0
      %780 = vmatpush1.msra.mxu0 0.0
      %781 = vmatprep.subr.mxu0 0.0
      %782 = vmatpush1.msra.mxu0 0.0
      %783 = vmatprep.mubr.f32.mxu0 0.0
      %784 = vmatmul.mubr.f32.gmra.mrb[0].mxu0 %v713
      %v785 = vpop.f32.mrb[0].mxu0
      %v786 = vadd.f32 0.0, %v785
      %v787 = vpop.f32.mrb[0].mxu0
      %788 = vdwg.mxu0
      %v789 = vmul.f32 %v786, 0.001953125
      %790 = vmatprep.subr.mxu0 0.0
      %791 = vmatpush1.msra.mxu0 %v634
      %792 = vmatprep.subr.mxu0 0.0
      %793 = vmatpush1.msra.mxu0 0.0
      %794 = vmatprep.subr.mxu0 0.0
      %795 = vmatpush1.msra.mxu0 0.0
      %796 = vmatprep.subr.mxu0 0.0
      %797 = vmatpush1.msra.mxu0 0.0
      %798 = vmatprep.subr.mxu0 0.0
      %799 = vmatpush1.msra.mxu0 0.0
      %800 = vmatprep.subr.mxu0 0.0
      %801 = vmatpush1.msra.mxu0 0.0
      %802 = vmatprep.subr.mxu0 0.0
      %803 = vmatpush1.msra.mxu0 0.0
      %804 = vmatprep.subr.mxu0 0.0
      %805 = vmatpush1.msra.mxu0 0.0
      %806 = vmatprep.subr.mxu0 0.0
      %807 = vmatpush1.msra.mxu0 0.0
      %808 = vmatprep.subr.mxu0 0.0
      %809 = vmatpush1.msra.mxu0 0.0
      %810 = vmatprep.subr.mxu0 0.0
      %811 = vmatpush1.msra.mxu0 0.0
      %812 = vmatprep.subr.mxu0 0.0
      %813 = vmatpush1.msra.mxu0 0.0
      %814 = vmatprep.subr.mxu0 0.0
      %815 = vmatpush1.msra.mxu0 0.0
      %816 = vmatprep.subr.mxu0 0.0
      %817 = vmatpush1.msra.mxu0 0.0
      %818 = vmatprep.subr.mxu0 0.0
      %819 = vmatpush1.msra.mxu0 0.0
      %820 = vmatprep.subr.mxu0 0.0
      %821 = vmatpush1.msra.mxu0 0.0
      %822 = vmatprep.subr.mxu0 0.0
      %823 = vmatpush1.msra.mxu0 0.0
      %824 = vmatprep.subr.mxu0 0.0
      %825 = vmatpush1.msra.mxu0 0.0
      %826 = vmatprep.subr.mxu0 0.0
      %827 = vmatpush1.msra.mxu0 0.0
      %828 = vmatprep.subr.mxu0 0.0
      %829 = vmatpush1.msra.mxu0 0.0
      %830 = vmatprep.subr.mxu0 0.0
      %831 = vmatpush1.msra.mxu0 0.0
      %832 = vmatprep.subr.mxu0 0.0
      %833 = vmatpush1.msra.mxu0 0.0
      %834 = vmatprep.subr.mxu0 0.0
      %835 = vmatpush1.msra.mxu0 0.0
      %836 = vmatprep.subr.mxu0 0.0
      %837 = vmatpush1.msra.mxu0 0.0
      %838 = vmatprep.subr.mxu0 0.0
      %839 = vmatpush1.msra.mxu0 0.0
      %840 = vmatprep.subr.mxu0 0.0
      %841 = vmatpush1.msra.mxu0 0.0
      %842 = vmatprep.subr.mxu0 0.0
      %843 = vmatpush1.msra.mxu0 0.0
      %844 = vmatprep.subr.mxu0 0.0
      %845 = vmatpush1.msra.mxu0 0.0
      %846 = vmatprep.subr.mxu0 0.0
      %847 = vmatpush1.msra.mxu0 0.0
      %848 = vmatprep.subr.mxu0 0.0
      %849 = vmatpush1.msra.mxu0 0.0
      %850 = vmatprep.subr.mxu0 0.0
      %851 = vmatpush1.msra.mxu0 0.0
      %852 = vmatprep.subr.mxu0 0.0
      %853 = vmatpush1.msra.mxu0 0.0
      %854 = vmatprep.mubr.f32.mxu0 0.0
      %855 = vmatmul.mubr.f32.gmra.mrb[0].mxu0 %v637
      %v856 = vpop.f32.mrb[0].mxu0
      %v857 = vadd.f32 0.0, %v856
      %v858 = vpop.f32.mrb[0].mxu0
      %859 = vdwg.mxu0
      %v861 = vsel %vm715, %v857, 0
      %863 = vmatprep.subr.mxu0 0.0
      %864 = vmatpush1.msra.mxu0 %v861
      %865 = vmatprep.subr.mxu0 0.0
      %866 = vmatpush1.msra.mxu0 0.0
      %867 = vmatprep.subr.mxu0 0.0
      %868 = vmatpush1.msra.mxu0 0.0
      %869 = vmatprep.subr.mxu0 0.0
      %870 = vmatpush1.msra.mxu0 0.0
      %871 = vmatprep.subr.mxu0 0.0
      %872 = vmatpush1.msra.mxu0 0.0
      %873 = vmatprep.subr.mxu0 0.0
      %874 = vmatpush1.msra.mxu0 0.0
      %875 = vmatprep.subr.mxu0 0.0
      %876 = vmatpush1.msra.mxu0 0.0
      %877 = vmatprep.subr.mxu0 0.0
      %878 = vmatpush1.msra.mxu0 0.0
      %879 = vmatprep.subr.mxu0 0.0
      %880 = vmatpush1.msra.mxu0 0.0
      %881 = vmatprep.subr.mxu0 0.0
      %882 = vmatpush1.msra.mxu0 0.0
      %883 = vmatprep.subr.mxu0 0.0
      %884 = vmatpush1.msra.mxu0 0.0
      %885 = vmatprep.subr.mxu0 0.0
      %886 = vmatpush1.msra.mxu0 0.0
      %887 = vmatprep.subr.mxu0 0.0
      %888 = vmatpush1.msra.mxu0 0.0
      %889 = vmatprep.subr.mxu0 0.0
      %890 = vmatpush1.msra.mxu0 0.0
      %891 = vmatprep.subr.mxu0 0.0
      %892 = vmatpush1.msra.mxu0 0.0
      %893 = vmatprep.subr.mxu0 0.0
      %894 = vmatpush1.msra.mxu0 0.0
      %895 = vmatprep.subr.mxu0 0.0
      %896 = vmatpush1.msra.mxu0 0.0
      %897 = vmatprep.subr.mxu0 0.0
      %898 = vmatpush1.msra.mxu0 0.0
      %899 = vmatprep.subr.mxu0 0.0
      %900 = vmatpush1.msra.mxu0 0.0
      %901 = vmatprep.subr.mxu0 0.0
      %902 = vmatpush1.msra.mxu0 0.0
      %903 = vmatprep.subr.mxu0 0.0
      %904 = vmatpush1.msra.mxu0 0.0
      %905 = vmatprep.subr.mxu0 0.0
      %906 = vmatpush1.msra.mxu0 0.0
      %907 = vmatprep.subr.mxu0 0.0
      %908 = vmatpush1.msra.mxu0 0.0
      %909 = vmatprep.subr.mxu0 0.0
      %910 = vmatpush1.msra.mxu0 0.0
      %911 = vmatprep.subr.mxu0 0.0
      %912 = vmatpush1.msra.mxu0 0.0
      %913 = vmatprep.subr.mxu0 0.0
      %914 = vmatpush1.msra.mxu0 0.0
      %915 = vmatprep.subr.mxu0 0.0
      %916 = vmatpush1.msra.mxu0 0.0
      %917 = vmatprep.subr.mxu0 0.0
      %918 = vmatpush1.msra.mxu0 0.0
      %919 = vmatprep.subr.mxu0 0.0
      %920 = vmatpush1.msra.mxu0 0.0
      %921 = vmatprep.subr.mxu0 0.0
      %922 = vmatpush1.msra.mxu0 0.0
      %923 = vmatprep.subr.mxu0 0.0
      %924 = vmatpush1.msra.mxu0 0.0
      %925 = vmatprep.subr.mxu0 0.0
      %926 = vmatpush1.msra.mxu0 0.0
      %927 = vmatprep.mubr.f32.mxu0 0.0
      %928 = vmatmul.mubr.f32.gmra.mrb[0].mxu0 %v713
      %v929 = vpop.f32.mrb[0].mxu0
      %v930 = vadd.f32 0.0, %v929
      %v931 = vpop.f32.mrb[0].mxu0
      %932 = vdwg.mxu0
      %v933 = vmul.f32 %v930, 0.001953125
      %v934 = vmul.f32 %v789, %v789
      %v935 = vsub.f32 %v933, %v934
      %v936 = vmax.f32 %v935, 0.0
      %938 = vset.pattern.permute.xlu0 0
      %939 = vperm.xlu0 %938, %v789
      %v940 = vpop.permute.xlu0 %939
      %v942 = vsub.f32 %v615, %v940
      %v943 = vsub.f32 %v616, %v940
      %v944 = vsub.f32 %v617, %v940
      %v945 = vadd.f32 %v936, 1e-05
      %v946 = vrsqrt.pop %v945
      %948 = vset.pattern.permute.xlu0 0
      %949 = vperm.xlu0 %948, %v946
      %v950 = vpop.permute.xlu0 %949
      %v952 = vmul.f32 %v942, %v950
      %v953 = vmul.f32 %v943, %v950
      %v954 = vmul.f32 %v944, %v950
      %955 = vset.pattern.permute.xlu0 0
      %956 = vperm.xlu0 %955, %v618
      %v957 = vpop.permute.xlu0 %956
      %v959 = vmul.f32 %v952, %v957
      %v960 = vmul.f32 %v953, %v957
      %v961 = vmul.f32 %v954, %v957
      %962 = vset.pattern.permute.xlu0 1
      %963 = vperm.xlu0 %962, %v618
      %v964 = vpop.permute.xlu0 %963
      %v966 = vadd.f32 %v959, %v964
      %v967 = vadd.f32 %v960, %v964
      %v968 = vadd.f32 %v961, %v964
      %v969 = vxor.u32 %v966, 2147483648
      %v970 = vxor.u32 %v967, 2147483648
      %v971 = vxor.u32 %v968, 2147483648
      %v972 = vmul.f32 %v969, 1.442695
      %v973 = vpow.pop %v972
      %v974 = vmul.f32 %v970, 1.442695
      %v975 = vpow.pop %v974
      %v976 = vmul.f32 %v971, 1.442695
      %v977 = vpow.pop %v976
      %v978 = vadd.f32 %v973, 1.0
      %v979 = vadd.f32 %v975, 1.0
      %v980 = vadd.f32 %v977, 1.0
      %v981 = vrcp.pop %v978
      %v982 = vmul.f32 1.0, %v981
      %v983 = vrcp.pop %v979
      %v984 = vmul.f32 1.0, %v983
      %v985 = vrcp.pop %v980
      %v986 = vmul.f32 1.0, %v985
      %v987 = vmul.f32 %v966, %v982
      %v988 = vmul.f32 %v967, %v984
      %v989 = vmul.f32 %v968, %v986
      %v991 = vlaneseq
      %v992 = vshrl.u32 %v991, 7
      %v993 = vsub.s32 0, %v992
      %v994 = vrot.slane %v614, %v993
      %v995 = vlaneseq
      %v996 = vshrl.u32 %v995, 7
      %v997 = vsub.s32 1, %v996
      %v998 = vrot.slane %v614, %v997
      %v999 = vlaneseq
      %v1000 = vshrl.u32 %v999, 7
      %v1001 = vsub.s32 2, %v1000
      %v1002 = vrot.slane %v614, %v1001
      %v1006 = vmul.f32 %v987, %v994
      %v1007 = vmul.f32 %v988, %v998
      %v1008 = vmul.f32 %v989, %v1002
      %v1009 = vpack.c.bf16 %v1006, %v1006
      %v1010 = vpack.c.bf16 %v1007, %v1007
      %v1011 = vpack.c.bf16 %v1008, %v1008
      %v1015 = vunpack.c.l.b16 %v1009
      %v1016 = vunpack.c.l.b16 %v1010
      %v1017 = vunpack.c.l.b16 %v1011
      %v1018 = vpack.c.b16 %v1016, %v1015
      %v1019 = vpack.c.b16 %v1017, %v1017
      %1020 = vrot.lane.b32.xlu0 %v1018, 19
      %v1021 = vpop.permute.xlu0 %1020
      %1022 = vrot.lane.b32.xlu0 %v1019, 19
      %v1023 = vpop.permute.xlu0 %1022
      %v1024 = vrot.slane %v1021, 4
      %vm1025 = vcmask 154624
      %v1026 = vsel %vm1025, %v1024, %v1021
      %v1027 = vsel %vm1025, %v1024, %v1023
      %vm1030 = vcmask 1043608
      %vm1031 = vcmask 1047556
      %vm1032 = vmor %vm1031, %vm1030
      %1033 = vst.msk [vmem:[#allocation2] sm:$0xff] %vm1032, %v1026
      %vm1034 = vcmask 412672
      %1035 = vst.msk [vmem:[#allocation2 + $0x8] sm:$0xf] %vm1034, %v1027
      %v1036 = vld [vmem:[%s7] sm:$0xf]
      %v1037 = vld [vmem:[#allocation2] sm:$0xff]
      %v1038 = vld [vmem:[#allocation2 + $0x8] sm:$0xf]
      %s1039 = scalar_lea.vmem %s7, 4
      %v1040 = vld [vmem:[%s1039] sm:$0xf]
      %v1043 = vunpack.c.l.b16 %v1037
      %v1044 = vunpack.c.h.b16 %v1037
      %v1045 = vunpack.c.l.b16 %v1038
      %v1046 = vpack.c.b16 %v1043, %v1043
      %v1047 = vpack.c.b16 %v1044, %v1044
      %v1048 = vpack.c.b16 %v1045, %v1045
      %1049 = vrot.lane.b32.xlu0 %v1046, 127
      %v1050 = vpop.permute.xlu0 %1049
      %1051 = vrot.lane.b32.xlu0 %v1047, 127
      %v1052 = vpop.permute.xlu0 %1051
      %1053 = vrot.lane.b32.xlu0 %v1048, 127
      %v1054 = vpop.permute.xlu0 %1053
      %vm1055 = vcmask 1039360
      %v1056 = vsel %vm1055, %v1050, %v1052
      %v1057 = vsel %vm1055, %v1052, %v1054
      %v1059 = vsel %vm635, %v1040, 0
      %vm1061 = vcmask 1043456
      %v1063 = vsel %vm1061, %v1056, 0
      %v1066 = vsel %vm1061, %v1057, 0
      %v1069 = vsel %vm1061, %v1054, 0
      %1071 = vmatprep.subr.bf16.mxu0 %v1066
      %1072 = vmatpush1.bf16.msra.mxu0 %v1063
      %1073 = vmatprep.subr.bf16.mxu0 0
      %1074 = vmatpush1.bf16.msra.mxu0 0
      %1075 = vmatprep.subr.bf16.mxu0 0
      %1076 = vmatpush1.bf16.msra.mxu0 0
      %1077 = vmatprep.subr.bf16.mxu0 0
      %1078 = vmatpush1.bf16.msra.mxu0 0
      %1079 = vmatprep.subr.bf16.mxu0 0
      %1080 = vmatpush1.bf16.msra.mxu0 0
      %1081 = vmatprep.subr.bf16.mxu0 0
      %1082 = vmatpush1.bf16.msra.mxu0 0
      %1083 = vmatprep.subr.bf16.mxu0 0
      %1084 = vmatpush1.bf16.msra.mxu0 0
      %1085 = vmatprep.subr.bf16.mxu0 0
      %1086 = vmatpush1.bf16.msra.mxu0 0
      %1087 = vmatprep.subr.bf16.mxu0 0
      %1088 = vmatpush1.bf16.msra.mxu0 0
      %1089 = vmatprep.subr.bf16.mxu0 0
      %1090 = vmatpush1.bf16.msra.mxu0 0
      %1091 = vmatprep.subr.bf16.mxu0 0
      %1092 = vmatpush1.bf16.msra.mxu0 0
      %1093 = vmatprep.subr.bf16.mxu0 0
      %1094 = vmatpush1.bf16.msra.mxu0 0
      %1095 = vmatprep.subr.bf16.mxu0 0
      %1096 = vmatpush1.bf16.msra.mxu0 0
      %1097 = vmatprep.subr.bf16.mxu0 0
      %1098 = vmatpush1.bf16.msra.mxu0 0
      %1099 = vmatprep.subr.bf16.mxu0 0
      %1100 = vmatpush1.bf16.msra.mxu0 0
      %1101 = vmatprep.subr.bf16.mxu0 0
      %1102 = vmatpush1.bf16.msra.mxu0 0
      %1103 = vmatprep.mubr.bf16.mxu0 0
      %1104 = vmatmul.mubr.bf16.gmra.mrb[0].mxu0 %v1059
      %v1105 = vpop.f32.mrb[0].mxu0
      %v1106 = vadd.f32 0.0, %v1105
      %v1107 = vpop.f32.mrb[0].mxu0
      %v1108 = vadd.f32 0.0, %v1107
      %v1109 = vpop.f32.mrb[0].mxu0
      %v1110 = vpop.f32.mrb[0].mxu0
      %1111 = vdwg.mxu0
      %1112 = vmatprep.subr.bf16.mxu0 0
      %1113 = vmatpush1.bf16.msra.mxu0 %v1069
      %1114 = vmatprep.subr.bf16.mxu0 0
      %1115 = vmatpush1.bf16.msra.mxu0 0
      %1116 = vmatprep.subr.bf16.mxu0 0
      %1117 = vmatpush1.bf16.msra.mxu0 0
      %1118 = vmatprep.subr.bf16.mxu0 0
      %1119 = vmatpush1.bf16.msra.mxu0 0
      %1120 = vmatprep.subr.bf16.mxu0 0
      %1121 = vmatpush1.bf16.msra.mxu0 0
      %1122 = vmatprep.subr.bf16.mxu0 0
      %1123 = vmatpush1.bf16.msra.mxu0 0
      %1124 = vmatprep.subr.bf16.mxu0 0
      %1125 = vmatpush1.bf16.msra.mxu0 0
      %1126 = vmatprep.subr.bf16.mxu0 0
      %1127 = vmatpush1.bf16.msra.mxu0 0
      %1128 = vmatprep.subr.bf16.mxu0 0
      %1129 = vmatpush1.bf16.msra.mxu0 0
      %1130 = vmatprep.subr.bf16.mxu0 0
      %1131 = vmatpush1.bf16.msra.mxu0 0
      %1132 = vmatprep.subr.bf16.mxu0 0
      %1133 = vmatpush1.bf16.msra.mxu0 0
      %1134 = vmatprep.subr.bf16.mxu0 0
      %1135 = vmatpush1.bf16.msra.mxu0 0
      %1136 = vmatprep.subr.bf16.mxu0 0
      %1137 = vmatpush1.bf16.msra.mxu0 0
      %1138 = vmatprep.subr.bf16.mxu0 0
      %1139 = vmatpush1.bf16.msra.mxu0 0
      %1140 = vmatprep.subr.bf16.mxu0 0
      %1141 = vmatpush1.bf16.msra.mxu0 0
      %1142 = vmatprep.subr.bf16.mxu0 0
      %1143 = vmatpush1.bf16.msra.mxu0 0
      %1144 = vmatprep.mubr.bf16.mxu0 0
      %1145 = vmatmul.mubr.bf16.gmra.mrb[0].mxu0 %v1059
      %v1146 = vpop.f32.mrb[0].mxu0
      %v1147 = vadd.f32 0.0, %v1146
      %v1148 = vpop.f32.mrb[0].mxu0
      %v1149 = vpop.f32.mrb[0].mxu0
      %v1150 = vpop.f32.mrb[0].mxu0
      %1151 = vdwg.mxu0
      %v1153 = vsel %vm635, %v1036, 0
      %v1156 = vsel %vm1061, %v1046, 0
      %v1159 = vsel %vm1061, %v1047, 0
      %v1162 = vsel %vm1061, %v1048, 0
      %1164 = vmatprep.subr.bf16.mxu0 %v1159
      %1165 = vmatpush1.bf16.msra.mxu0 %v1156
      %1166 = vmatprep.subr.bf16.mxu0 0
      %1167 = vmatpush1.bf16.msra.mxu0 0
      %1168 = vmatprep.subr.bf16.mxu0 0
      %1169 = vmatpush1.bf16.msra.mxu0 0
      %1170 = vmatprep.subr.bf16.mxu0 0
      %1171 = vmatpush1.bf16.msra.mxu0 0
      %1172 = vmatprep.subr.bf16.mxu0 0
      %1173 = vmatpush1.bf16.msra.mxu0 0
      %1174 = vmatprep.subr.bf16.mxu0 0
      %1175 = vmatpush1.bf16.msra.mxu0 0
      %1176 = vmatprep.subr.bf16.mxu0 0
      %1177 = vmatpush1.bf16.msra.mxu0 0
      %1178 = vmatprep.subr.bf16.mxu0 0
      %1179 = vmatpush1.bf16.msra.mxu0 0
      %1180 = vmatprep.subr.bf16.mxu0 0
      %1181 = vmatpush1.bf16.msra.mxu0 0
      %1182 = vmatprep.subr.bf16.mxu0 0
      %1183 = vmatpush1.bf16.msra.mxu0 0
      %1184 = vmatprep.subr.bf16.mxu0 0
      %1185 = vmatpush1.bf16.msra.mxu0 0
      %1186 = vmatprep.subr.bf16.mxu0 0
      %1187 = vmatpush1.bf16.msra.mxu0 0
      %1188 = vmatprep.subr.bf16.mxu0 0
      %1189 = vmatpush1.bf16.msra.mxu0 0
      %1190 = vmatprep.subr.bf16.mxu0 0
      %1191 = vmatpush1.bf16.msra.mxu0 0
      %1192 = vmatprep.subr.bf16.mxu0 0
      %1193 = vmatpush1.bf16.msra.mxu0 0
      %1194 = vmatprep.subr.bf16.mxu0 0
      %1195 = vmatpush1.bf16.msra.mxu0 0
      %1196 = vmatprep.mubr.bf16.mxu0 0
      %1197 = vmatmul.mubr.bf16.gmra.mrb[0].mxu0 %v1153
      %v1198 = vpop.f32.mrb[0].mxu0
      %v1199 = vadd.f32 %v1106, %v1198
      %v1200 = vpop.f32.mrb[0].mxu0
      %v1201 = vadd.f32 %v1108, %v1200
      %v1202 = vpop.f32.mrb[0].mxu0
      %v1203 = vpop.f32.mrb[0].mxu0
      %1204 = vdwg.mxu0
      %1205 = vmatprep.subr.bf16.mxu0 0
      %1206 = vmatpush1.bf16.msra.mxu0 %v1162
      %1207 = vmatprep.subr.bf16.mxu0 0
      %1208 = vmatpush1.bf16.msra.mxu0 0
      %1209 = vmatprep.subr.bf16.mxu0 0
      %1210 = vmatpush1.bf16.msra.mxu0 0
      %1211 = vmatprep.subr.bf16.mxu0 0
      %1212 = vmatpush1.bf16.msra.mxu0 0
      %1213 = vmatprep.subr.bf16.mxu0 0
      %1214 = vmatpush1.bf16.msra.mxu0 0
      %1215 = vmatprep.subr.bf16.mxu0 0
      %1216 = vmatpush1.bf16.msra.mxu0 0
      %1217 = vmatprep.subr.bf16.mxu0 0
      %1218 = vmatpush1.bf16.msra.mxu0 0
      %1219 = vmatprep.subr.bf16.mxu0 0
      %1220 = vmatpush1.bf16.msra.mxu0 0
      %1221 = vmatprep.subr.bf16.mxu0 0
      %1222 = vmatpush1.bf16.msra.mxu0 0
      %1223 = vmatprep.subr.bf16.mxu0 0
      %1224 = vmatpush1.bf16.msra.mxu0 0
      %1225 = vmatprep.subr.bf16.mxu0 0
      %1226 = vmatpush1.bf16.msra.mxu0 0
      %1227 = vmatprep.subr.bf16.mxu0 0
      %1228 = vmatpush1.bf16.msra.mxu0 0
      %1229 = vmatprep.subr.bf16.mxu0 0
      %1230 = vmatpush1.bf16.msra.mxu0 0
      %1231 = vmatprep.subr.bf16.mxu0 0
      %1232 = vmatpush1.bf16.msra.mxu0 0
      %1233 = vmatprep.subr.bf16.mxu0 0
      %1234 = vmatpush1.bf16.msra.mxu0 0
      %1235 = vmatprep.subr.bf16.mxu0 0
      %1236 = vmatpush1.bf16.msra.mxu0 0
      %1237 = vmatprep.mubr.bf16.mxu0 0
      %1238 = vmatmul.mubr.bf16.gmra.mrb[0].mxu0 %v1153
      %v1239 = vpop.f32.mrb[0].mxu0
      %v1240 = vadd.f32 %v1147, %v1239
      %v1241 = vpop.f32.mrb[0].mxu0
      %v1242 = vpop.f32.mrb[0].mxu0
      %v1243 = vpop.f32.mrb[0].mxu0
      %1244 = vdwg.mxu0
      %s1245 = scalar_lea.vmem %s7, 8
      %v1246 = vld [vmem:[%s1245] sm:$0xf]
      %1247 = vrot.lane.b32.xlu0 %v1046, 126
      %v1248 = vpop.permute.xlu0 %1247
      %1249 = vrot.lane.b32.xlu0 %v1047, 126
      %v1250 = vpop.permute.xlu0 %1249
      %1251 = vrot.lane.b32.xlu0 %v1048, 126
      %v1252 = vpop.permute.xlu0 %1251
      %vm1253 = vcmask 1031168
      %v1254 = vsel %vm1253, %v1248, %v1250
      %v1255 = vsel %vm1253, %v1250, %v1252
      %v1257 = vsel %vm635, %v1246, 0
      %v1260 = vsel %vm1061, %v1254, 0
      %v1263 = vsel %vm1061, %v1255, 0
      %v1266 = vsel %vm1061, %v1252, 0
      %1268 = vmatprep.subr.bf16.mxu0 %v1263
      %1269 = vmatpush1.bf16.msra.mxu0 %v1260
      %1270 = vmatprep.subr.bf16.mxu0 0
      %1271 = vmatpush1.bf16.msra.mxu0 0
      %1272 = vmatprep.subr.bf16.mxu0 0
      %1273 = vmatpush1.bf16.msra.mxu0 0
      %1274 = vmatprep.subr.bf16.mxu0 0
      %1275 = vmatpush1.bf16.msra.mxu0 0
      %1276 = vmatprep.subr.bf16.mxu0 0
      %1277 = vmatpush1.bf16.msra.mxu0 0
      %1278 = vmatprep.subr.bf16.mxu0 0
      %1279 = vmatpush1.bf16.msra.mxu0 0
      %1280 = vmatprep.subr.bf16.mxu0 0
      %1281 = vmatpush1.bf16.msra.mxu0 0
      %1282 = vmatprep.subr.bf16.mxu0 0
      %1283 = vmatpush1.bf16.msra.mxu0 0
      %1284 = vmatprep.subr.bf16.mxu0 0
      %1285 = vmatpush1.bf16.msra.mxu0 0
      %1286 = vmatprep.subr.bf16.mxu0 0
      %1287 = vmatpush1.bf16.msra.mxu0 0
      %1288 = vmatprep.subr.bf16.mxu0 0
      %1289 = vmatpush1.bf16.msra.mxu0 0
      %1290 = vmatprep.subr.bf16.mxu0 0
      %1291 = vmatpush1.bf16.msra.mxu0 0
      %1292 = vmatprep.subr.bf16.mxu0 0
      %1293 = vmatpush1.bf16.msra.mxu0 0
      %1294 = vmatprep.subr.bf16.mxu0 0
      %1295 = vmatpush1.bf16.msra.mxu0 0
      %1296 = vmatprep.subr.bf16.mxu0 0
      %1297 = vmatpush1.bf16.msra.mxu0 0
      %1298 = vmatprep.subr.bf16.mxu0 0
      %1299 = vmatpush1.bf16.msra.mxu0 0
      %1300 = vmatprep.mubr.bf16.mxu0 0
      %1301 = vmatmul.mubr.bf16.gmra.mrb[0].mxu0 %v1257
      %v1302 = vpop.f32.mrb[0].mxu0
      %v1303 = vadd.f32 0.0, %v1302
      %v1304 = vpop.f32.mrb[0].mxu0
      %v1305 = vadd.f32 0.0, %v1304
      %v1306 = vpop.f32.mrb[0].mxu0
      %v1307 = vpop.f32.mrb[0].mxu0
      %1308 = vdwg.mxu0
      %1309 = vmatprep.subr.bf16.mxu0 0
      %1310 = vmatpush1.bf16.msra.mxu0 %v1266
      %1311 = vmatprep.subr.bf16.mxu0 0
      %1312 = vmatpush1.bf16.msra.mxu0 0
      %1313 = vmatprep.subr.bf16.mxu0 0
      %1314 = vmatpush1.bf16.msra.mxu0 0
      %1315 = vmatprep.subr.bf16.mxu0 0
      %1316 = vmatpush1.bf16.msra.mxu0 0
      %1317 = vmatprep.subr.bf16.mxu0 0
      %1318 = vmatpush1.bf16.msra.mxu0 0
      %1319 = vmatprep.subr.bf16.mxu0 0
      %1320 = vmatpush1.bf16.msra.mxu0 0
      %1321 = vmatprep.subr.bf16.mxu0 0
      %1322 = vmatpush1.bf16.msra.mxu0 0
      %1323 = vmatprep.subr.bf16.mxu0 0
      %1324 = vmatpush1.bf16.msra.mxu0 0
      %1325 = vmatprep.subr.bf16.mxu0 0
      %1326 = vmatpush1.bf16.msra.mxu0 0
      %1327 = vmatprep.subr.bf16.mxu0 0
      %1328 = vmatpush1.bf16.msra.mxu0 0
      %1329 = vmatprep.subr.bf16.mxu0 0
      %1330 = vmatpush1.bf16.msra.mxu0 0
      %1331 = vmatprep.subr.bf16.mxu0 0
      %1332 = vmatpush1.bf16.msra.mxu0 0
      %1333 = vmatprep.subr.bf16.mxu0 0
      %1334 = vmatpush1.bf16.msra.mxu0 0
      %1335 = vmatprep.subr.bf16.mxu0 0
      %1336 = vmatpush1.bf16.msra.mxu0 0
      %1337 = vmatprep.subr.bf16.mxu0 0
      %1338 = vmatpush1.bf16.msra.mxu0 0
      %1339 = vmatprep.subr.bf16.mxu0 0
      %1340 = vmatpush1.bf16.msra.mxu0 0
      %1341 = vmatprep.mubr.bf16.mxu0 0
      %1342 = vmatmul.mubr.bf16.gmra.mrb[0].mxu0 %v1257
      %v1343 = vpop.f32.mrb[0].mxu0
      %v1344 = vadd.f32 0.0, %v1343
      %v1345 = vpop.f32.mrb[0].mxu0
      %v1346 = vpop.f32.mrb[0].mxu0
      %v1347 = vpop.f32.mrb[0].mxu0
      %1348 = vdwg.mxu0
      %v1349 = vadd.f32 %v1199, %v1303
      %v1350 = vadd.f32 %v1201, %v1305
      %v1351 = vadd.f32 %v1240, %v1344
      %s1352 = scalar_lea.vmem %s7, 12
      %v1353 = vld [vmem:[%s1352] sm:$0xf]
      %1354 = vrot.lane.b32.xlu0 %v1046, 110
      %v1355 = vpop.permute.xlu0 %1354
      %1356 = vrot.lane.b32.xlu0 %v1047, 110
      %v1357 = vpop.permute.xlu0 %1356
      %1358 = vrot.lane.b32.xlu0 %v1048, 110
      %v1359 = vpop.permute.xlu0 %1358
      %vm1360 = vcmask 900096
      %v1361 = vsel %vm1360, %v1355, %v1357
      %v1362 = vsel %vm1360, %v1357, %v1359
      %v1364 = vsel %vm635, %v1353, 0
      %v1367 = vsel %vm1061, %v1361, 0
      %v1370 = vsel %vm1061, %v1362, 0
      %v1373 = vsel %vm1061, %v1359, 0
      %1375 = vmatprep.subr.bf16.mxu0 %v1370
      %1376 = vmatpush1.bf16.msra.mxu0 %v1367
      %1377 = vmatprep.subr.bf16.mxu0 0
      %1378 = vmatpush1.bf16.msra.mxu0 0
      %1379 = vmatprep.subr.bf16.mxu0 0
      %1380 = vmatpush1.bf16.msra.mxu0 0
      %1381 = vmatprep.subr.bf16.mxu0 0
      %1382 = vmatpush1.bf16.msra.mxu0 0
      %1383 = vmatprep.subr.bf16.mxu0 0
      %1384 = vmatpush1.bf16.msra.mxu0 0
      %1385 = vmatprep.subr.bf16.mxu0 0
      %1386 = vmatpush1.bf16.msra.mxu0 0
      %1387 = vmatprep.subr.bf16.mxu0 0
      %1388 = vmatpush1.bf16.msra.mxu0 0
      %1389 = vmatprep.subr.bf16.mxu0 0
      %1390 = vmatpush1.bf16.msra.mxu0 0
      %1391 = vmatprep.subr.bf16.mxu0 0
      %1392 = vmatpush1.bf16.msra.mxu0 0
      %1393 = vmatprep.subr.bf16.mxu0 0
      %1394 = vmatpush1.bf16.msra.mxu0 0
      %1395 = vmatprep.subr.bf16.mxu0 0
      %1396 = vmatpush1.bf16.msra.mxu0 0
      %1397 = vmatprep.subr.bf16.mxu0 0
      %1398 = vmatpush1.bf16.msra.mxu0 0
      %1399 = vmatprep.subr.bf16.mxu0 0
      %1400 = vmatpush1.bf16.msra.mxu0 0
      %1401 = vmatprep.subr.bf16.mxu0 0
      %1402 = vmatpush1.bf16.msra.mxu0 0
      %1403 = vmatprep.subr.bf16.mxu0 0
      %1404 = vmatpush1.bf16.msra.mxu0 0
      %1405 = vmatprep.subr.bf16.mxu0 0
      %1406 = vmatpush1.bf16.msra.mxu0 0
      %1407 = vmatprep.mubr.bf16.mxu0 0
      %1408 = vmatmul.mubr.bf16.gmra.mrb[0].mxu0 %v1364
      %v1409 = vpop.f32.mrb[0].mxu0
      %v1410 = vadd.f32 0.0, %v1409
      %v1411 = vpop.f32.mrb[0].mxu0
      %v1412 = vadd.f32 0.0, %v1411
      %v1413 = vpop.f32.mrb[0].mxu0
      %v1414 = vpop.f32.mrb[0].mxu0
      %1415 = vdwg.mxu0
      %1416 = vmatprep.subr.bf16.mxu0 0
      %1417 = vmatpush1.bf16.msra.mxu0 %v1373
      %1418 = vmatprep.subr.bf16.mxu0 0
      %1419 = vmatpush1.bf16.msra.mxu0 0
      %1420 = vmatprep.subr.bf16.mxu0 0
      %1421 = vmatpush1.bf16.msra.mxu0 0
      %1422 = vmatprep.subr.bf16.mxu0 0
      %1423 = vmatpush1.bf16.msra.mxu0 0
      %1424 = vmatprep.subr.bf16.mxu0 0
      %1425 = vmatpush1.bf16.msra.mxu0 0
      %1426 = vmatprep.subr.bf16.mxu0 0
      %1427 = vmatpush1.bf16.msra.mxu0 0
      %1428 = vmatprep.subr.bf16.mxu0 0
      %1429 = vmatpush1.bf16.msra.mxu0 0
      %1430 = vmatprep.subr.bf16.mxu0 0
      %1431 = vmatpush1.bf16.msra.mxu0 0
      %1432 = vmatprep.subr.bf16.mxu0 0
      %1433 = vmatpush1.bf16.msra.mxu0 0
      %1434 = vmatprep.subr.bf16.mxu0 0
      %1435 = vmatpush1.bf16.msra.mxu0 0
      %1436 = vmatprep.subr.bf16.mxu0 0
      %1437 = vmatpush1.bf16.msra.mxu0 0
      %1438 = vmatprep.subr.bf16.mxu0 0
      %1439 = vmatpush1.bf16.msra.mxu0 0
      %1440 = vmatprep.subr.bf16.mxu0 0
      %1441 = vmatpush1.bf16.msra.mxu0 0
      %1442 = vmatprep.subr.bf16.mxu0 0
      %1443 = vmatpush1.bf16.msra.mxu0 0
      %1444 = vmatprep.subr.bf16.mxu0 0
      %1445 = vmatpush1.bf16.msra.mxu0 0
      %1446 = vmatprep.subr.bf16.mxu0 0
      %1447 = vmatpush1.bf16.msra.mxu0 0
      %1448 = vmatprep.mubr.bf16.mxu0 0
      %1449 = vmatmul.mubr.bf16.gmra.mrb[0].mxu0 %v1364
      %v1450 = vpop.f32.mrb[0].mxu0
      %v1451 = vadd.f32 0.0, %v1450
      %v1452 = vpop.f32.mrb[0].mxu0
      %v1453 = vpop.f32.mrb[0].mxu0
      %v1454 = vpop.f32.mrb[0].mxu0
      %1455 = vdwg.mxu0
      %v1456 = vadd.f32 %v1349, %v1410
      %v1457 = vadd.f32 %v1350, %v1412
      %v1458 = vadd.f32 %v1351, %v1451
      %s1459 = scalar_lea.vmem %s7, 16
      %v1460 = vld [vmem:[%s1459] sm:$0xf]
      %1461 = vrot.lane.b32.xlu0 %v1046, 109
      %v1462 = vpop.permute.xlu0 %1461
      %1463 = vrot.lane.b32.xlu0 %v1047, 109
      %v1464 = vpop.permute.xlu0 %1463
      %1465 = vrot.lane.b32.xlu0 %v1048, 109
      %v1466 = vpop.permute.xlu0 %1465
      %vm1467 = vcmask 891904
      %v1468 = vsel %vm1467, %v1462, %v1464
      %v1469 = vsel %vm1467, %v1464, %v1466
      %v1471 = vsel %vm635, %v1460, 0
      %v1474 = vsel %vm1061, %v1468, 0
      %v1477 = vsel %vm1061, %v1469, 0
      %v1480 = vsel %vm1061, %v1466, 0
      %1482 = vmatprep.subr.bf16.mxu0 %v1477
      %1483 = vmatpush1.bf16.msra.mxu0 %v1474
      %1484 = vmatprep.subr.bf16.mxu0 0
      %1485 = vmatpush1.bf16.msra.mxu0 0
      %1486 = vmatprep.subr.bf16.mxu0 0
      %1487 = vmatpush1.bf16.msra.mxu0 0
      %1488 = vmatprep.subr.bf16.mxu0 0
      %1489 = vmatpush1.bf16.msra.mxu0 0
      %1490 = vmatprep.subr.bf16.mxu0 0
      %1491 = vmatpush1.bf16.msra.mxu0 0
      %1492 = vmatprep.subr.bf16.mxu0 0
      %1493 = vmatpush1.bf16.msra.mxu0 0
      %1494 = vmatprep.subr.bf16.mxu0 0
      %1495 = vmatpush1.bf16.msra.mxu0 0
      %1496 = vmatprep.subr.bf16.mxu0 0
      %1497 = vmatpush1.bf16.msra.mxu0 0
      %1498 = vmatprep.subr.bf16.mxu0 0
      %1499 = vmatpush1.bf16.msra.mxu0 0
      %1500 = vmatprep.subr.bf16.mxu0 0
      %1501 = vmatpush1.bf16.msra.mxu0 0
      %1502 = vmatprep.subr.bf16.mxu0 0
      %1503 = vmatpush1.bf16.msra.mxu0 0
      %1504 = vmatprep.subr.bf16.mxu0 0
      %1505 = vmatpush1.bf16.msra.mxu0 0
      %1506 = vmatprep.subr.bf16.mxu0 0
      %1507 = vmatpush1.bf16.msra.mxu0 0
      %1508 = vmatprep.subr.bf16.mxu0 0
      %1509 = vmatpush1.bf16.msra.mxu0 0
      %1510 = vmatprep.subr.bf16.mxu0 0
      %1511 = vmatpush1.bf16.msra.mxu0 0
      %1512 = vmatprep.subr.bf16.mxu0 0
      %1513 = vmatpush1.bf16.msra.mxu0 0
      %1514 = vmatprep.mubr.bf16.mxu0 0
      %1515 = vmatmul.mubr.bf16.gmra.mrb[0].mxu0 %v1471
      %v1516 = vpop.f32.mrb[0].mxu0
      %v1517 = vadd.f32 0.0, %v1516
      %v1518 = vpop.f32.mrb[0].mxu0
      %v1519 = vadd.f32 0.0, %v1518
      %v1520 = vpop.f32.mrb[0].mxu0
      %v1521 = vpop.f32.mrb[0].mxu0
      %1522 = vdwg.mxu0
      %1523 = vmatprep.subr.bf16.mxu0 0
      %1524 = vmatpush1.bf16.msra.mxu0 %v1480
      %1525 = vmatprep.subr.bf16.mxu0 0
      %1526 = vmatpush1.bf16.msra.mxu0 0
      %1527 = vmatprep.subr.bf16.mxu0 0
      %1528 = vmatpush1.bf16.msra.mxu0 0
      %1529 = vmatprep.subr.bf16.mxu0 0
      %1530 = vmatpush1.bf16.msra.mxu0 0
      %1531 = vmatprep.subr.bf16.mxu0 0
      %1532 = vmatpush1.bf16.msra.mxu0 0
      %1533 = vmatprep.subr.bf16.mxu0 0
      %1534 = vmatpush1.bf16.msra.mxu0 0
      %1535 = vmatprep.subr.bf16.mxu0 0
      %1536 = vmatpush1.bf16.msra.mxu0 0
      %1537 = vmatprep.subr.bf16.mxu0 0
      %1538 = vmatpush1.bf16.msra.mxu0 0
      %1539 = vmatprep.subr.bf16.mxu0 0
      %1540 = vmatpush1.bf16.msra.mxu0 0
      %1541 = vmatprep.subr.bf16.mxu0 0
      %1542 = vmatpush1.bf16.msra.mxu0 0
      %1543 = vmatprep.subr.bf16.mxu0 0
      %1544 = vmatpush1.bf16.msra.mxu0 0
      %1545 = vmatprep.subr.bf16.mxu0 0
      %1546 = vmatpush1.bf16.msra.mxu0 0
      %1547 = vmatprep.subr.bf16.mxu0 0
      %1548 = vmatpush1.bf16.msra.mxu0 0
      %1549 = vmatprep.subr.bf16.mxu0 0
      %1550 = vmatpush1.bf16.msra.mxu0 0
      %1551 = vmatprep.subr.bf16.mxu0 0
      %1552 = vmatpush1.bf16.msra.mxu0 0
      %1553 = vmatprep.subr.bf16.mxu0 0
      %1554 = vmatpush1.bf16.msra.mxu0 0
      %1555 = vmatprep.mubr.bf16.mxu0 0
      %1556 = vmatmul.mubr.bf16.gmra.mrb[0].mxu0 %v1471
      %v1557 = vpop.f32.mrb[0].mxu0
      %v1558 = vadd.f32 0.0, %v1557
      %v1559 = vpop.f32.mrb[0].mxu0
      %v1560 = vpop.f32.mrb[0].mxu0
      %v1561 = vpop.f32.mrb[0].mxu0
      %1562 = vdwg.mxu0
      %v1563 = vadd.f32 %v1456, %v1517
      %v1564 = vadd.f32 %v1457, %v1519
      %v1565 = vadd.f32 %v1458, %v1558
      %s1566 = scalar_lea.vmem %s7, 20
      %v1567 = vld [vmem:[%s1566] sm:$0xf]
      %1568 = vrot.lane.b32.xlu0 %v1046, 108
      %v1569 = vpop.permute.xlu0 %1568
      %1570 = vrot.lane.b32.xlu0 %v1047, 108
      %v1571 = vpop.permute.xlu0 %1570
      %1572 = vrot.lane.b32.xlu0 %v1048, 108
      %v1573 = vpop.permute.xlu0 %1572
      %vm1574 = vcmask 883712
      %v1575 = vsel %vm1574, %v1569, %v1571
      %v1576 = vsel %vm1574, %v1571, %v1573
      %v1578 = vsel %vm635, %v1567, 0
      %v1581 = vsel %vm1061, %v1575, 0
      %v1584 = vsel %vm1061, %v1576, 0
      %v1587 = vsel %vm1061, %v1573, 0
      %1589 = vmatprep.subr.bf16.mxu0 %v1584
      %1590 = vmatpush1.bf16.msra.mxu0 %v1581
      %1591 = vmatprep.subr.bf16.mxu0 0
      %1592 = vmatpush1.bf16.msra.mxu0 0
      %1593 = vmatprep.subr.bf16.mxu0 0
      %1594 = vmatpush1.bf16.msra.mxu0 0
      %1595 = vmatprep.subr.bf16.mxu0 0
      %1596 = vmatpush1.bf16.msra.mxu0 0
      %1597 = vmatprep.subr.bf16.mxu0 0
      %1598 = vmatpush1.bf16.msra.mxu0 0
      %1599 = vmatprep.subr.bf16.mxu0 0
      %1600 = vmatpush1.bf16.msra.mxu0 0
      %1601 = vmatprep.subr.bf16.mxu0 0
      %1602 = vmatpush1.bf16.msra.mxu0 0
      %1603 = vmatprep.subr.bf16.mxu0 0
      %1604 = vmatpush1.bf16.msra.mxu0 0
      %1605 = vmatprep.subr.bf16.mxu0 0
      %1606 = vmatpush1.bf16.msra.mxu0 0
      %1607 = vmatprep.subr.bf16.mxu0 0
      %1608 = vmatpush1.bf16.msra.mxu0 0
      %1609 = vmatprep.subr.bf16.mxu0 0
      %1610 = vmatpush1.bf16.msra.mxu0 0
      %1611 = vmatprep.subr.bf16.mxu0 0
      %1612 = vmatpush1.bf16.msra.mxu0 0
      %1613 = vmatprep.subr.bf16.mxu0 0
      %1614 = vmatpush1.bf16.msra.mxu0 0
      %1615 = vmatprep.subr.bf16.mxu0 0
      %1616 = vmatpush1.bf16.msra.mxu0 0
      %1617 = vmatprep.subr.bf16.mxu0 0
      %1618 = vmatpush1.bf16.msra.mxu0 0
      %1619 = vmatprep.subr.bf16.mxu0 0
      %1620 = vmatpush1.bf16.msra.mxu0 0
      %1621 = vmatprep.mubr.bf16.mxu0 0
      %1622 = vmatmul.mubr.bf16.gmra.mrb[0].mxu0 %v1578
      %v1623 = vpop.f32.mrb[0].mxu0
      %v1624 = vadd.f32 0.0, %v1623
      %v1625 = vpop.f32.mrb[0].mxu0
      %v1626 = vadd.f32 0.0, %v1625
      %v1627 = vpop.f32.mrb[0].mxu0
      %v1628 = vpop.f32.mrb[0].mxu0
      %1629 = vdwg.mxu0
      %1630 = vmatprep.subr.bf16.mxu0 0
      %1631 = vmatpush1.bf16.msra.mxu0 %v1587
      %1632 = vmatprep.subr.bf16.mxu0 0
      %1633 = vmatpush1.bf16.msra.mxu0 0
      %1634 = vmatprep.subr.bf16.mxu0 0
      %1635 = vmatpush1.bf16.msra.mxu0 0
      %1636 = vmatprep.subr.bf16.mxu0 0
      %1637 = vmatpush1.bf16.msra.mxu0 0
      %1638 = vmatprep.subr.bf16.mxu0 0
      %1639 = vmatpush1.bf16.msra.mxu0 0
      %1640 = vmatprep.subr.bf16.mxu0 0
      %1641 = vmatpush1.bf16.msra.mxu0 0
      %1642 = vmatprep.subr.bf16.mxu0 0
      %1643 = vmatpush1.bf16.msra.mxu0 0
      %1644 = vmatprep.subr.bf16.mxu0 0
      %1645 = vmatpush1.bf16.msra.mxu0 0
      %1646 = vmatprep.subr.bf16.mxu0 0
      %1647 = vmatpush1.bf16.msra.mxu0 0
      %1648 = vmatprep.subr.bf16.mxu0 0
      %1649 = vmatpush1.bf16.msra.mxu0 0
      %1650 = vmatprep.subr.bf16.mxu0 0
      %1651 = vmatpush1.bf16.msra.mxu0 0
      %1652 = vmatprep.subr.bf16.mxu0 0
      %1653 = vmatpush1.bf16.msra.mxu0 0
      %1654 = vmatprep.subr.bf16.mxu0 0
      %1655 = vmatpush1.bf16.msra.mxu0 0
      %1656 = vmatprep.subr.bf16.mxu0 0
      %1657 = vmatpush1.bf16.msra.mxu0 0
      %1658 = vmatprep.subr.bf16.mxu0 0
      %1659 = vmatpush1.bf16.msra.mxu0 0
      %1660 = vmatprep.subr.bf16.mxu0 0
      %1661 = vmatpush1.bf16.msra.mxu0 0
      %1662 = vmatprep.mubr.bf16.mxu0 0
      %1663 = vmatmul.mubr.bf16.gmra.mrb[0].mxu0 %v1578
      %v1664 = vpop.f32.mrb[0].mxu0
      %v1665 = vadd.f32 0.0, %v1664
      %v1666 = vpop.f32.mrb[0].mxu0
      %v1667 = vpop.f32.mrb[0].mxu0
      %v1668 = vpop.f32.mrb[0].mxu0
      %1669 = vdwg.mxu0
      %v1670 = vadd.f32 %v1563, %v1624
      %v1671 = vadd.f32 %v1564, %v1626
      %v1672 = vadd.f32 %v1565, %v1665
      %s1673 = scalar_lea.vmem %s7, 24
      %v1674 = vld [vmem:[%s1673] sm:$0xf]
      %1675 = vrot.lane.b32.xlu0 %v1046, 92
      %v1676 = vpop.permute.xlu0 %1675
      %1677 = vrot.lane.b32.xlu0 %v1047, 92
      %v1678 = vpop.permute.xlu0 %1677
      %1679 = vrot.lane.b32.xlu0 %v1048, 92
      %v1680 = vpop.permute.xlu0 %1679
      %vm1681 = vcmask 752640
      %v1682 = vsel %vm1681, %v1676, %v1678
      %v1683 = vsel %vm1681, %v1678, %v1680
      %v1685 = vsel %vm635, %v1674, 0
      %v1688 = vsel %vm1061, %v1682, 0
      %v1691 = vsel %vm1061, %v1683, 0
      %v1694 = vsel %vm1061, %v1680, 0
      %1696 = vmatprep.subr.bf16.mxu0 %v1691
      %1697 = vmatpush1.bf16.msra.mxu0 %v1688
      %1698 = vmatprep.subr.bf16.mxu0 0
      %1699 = vmatpush1.bf16.msra.mxu0 0
      %1700 = vmatprep.subr.bf16.mxu0 0
      %1701 = vmatpush1.bf16.msra.mxu0 0
      %1702 = vmatprep.subr.bf16.mxu0 0
      %1703 = vmatpush1.bf16.msra.mxu0 0
      %1704 = vmatprep.subr.bf16.mxu0 0
      %1705 = vmatpush1.bf16.msra.mxu0 0
      %1706 = vmatprep.subr.bf16.mxu0 0
      %1707 = vmatpush1.bf16.msra.mxu0 0
      %1708 = vmatprep.subr.bf16.mxu0 0
      %1709 = vmatpush1.bf16.msra.mxu0 0
      %1710 = vmatprep.subr.bf16.mxu0 0
      %1711 = vmatpush1.bf16.msra.mxu0 0
      %1712 = vmatprep.subr.bf16.mxu0 0
      %1713 = vmatpush1.bf16.msra.mxu0 0
      %1714 = vmatprep.subr.bf16.mxu0 0
      %1715 = vmatpush1.bf16.msra.mxu0 0
      %1716 = vmatprep.subr.bf16.mxu0 0
      %1717 = vmatpush1.bf16.msra.mxu0 0
      %1718 = vmatprep.subr.bf16.mxu0 0
      %1719 = vmatpush1.bf16.msra.mxu0 0
      %1720 = vmatprep.subr.bf16.mxu0 0
      %1721 = vmatpush1.bf16.msra.mxu0 0
      %1722 = vmatprep.subr.bf16.mxu0 0
      %1723 = vmatpush1.bf16.msra.mxu0 0
      %1724 = vmatprep.subr.bf16.mxu0 0
      %1725 = vmatpush1.bf16.msra.mxu0 0
      %1726 = vmatprep.subr.bf16.mxu0 0
      %1727 = vmatpush1.bf16.msra.mxu0 0
      %1728 = vmatprep.mubr.bf16.mxu0 0
      %1729 = vmatmul.mubr.bf16.gmra.mrb[0].mxu0 %v1685
      %v1730 = vpop.f32.mrb[0].mxu0
      %v1731 = vadd.f32 0.0, %v1730
      %v1732 = vpop.f32.mrb[0].mxu0
      %v1733 = vadd.f32 0.0, %v1732
      %v1734 = vpop.f32.mrb[0].mxu0
      %v1735 = vpop.f32.mrb[0].mxu0
      %1736 = vdwg.mxu0
      %1737 = vmatprep.subr.bf16.mxu0 0
      %1738 = vmatpush1.bf16.msra.mxu0 %v1694
      %1739 = vmatprep.subr.bf16.mxu0 0
      %1740 = vmatpush1.bf16.msra.mxu0 0
      %1741 = vmatprep.subr.bf16.mxu0 0
      %1742 = vmatpush1.bf16.msra.mxu0 0
      %1743 = vmatprep.subr.bf16.mxu0 0
      %1744 = vmatpush1.bf16.msra.mxu0 0
      %1745 = vmatprep.subr.bf16.mxu0 0
      %1746 = vmatpush1.bf16.msra.mxu0 0
      %1747 = vmatprep.subr.bf16.mxu0 0
      %1748 = vmatpush1.bf16.msra.mxu0 0
      %1749 = vmatprep.subr.bf16.mxu0 0
      %1750 = vmatpush1.bf16.msra.mxu0 0
      %1751 = vmatprep.subr.bf16.mxu0 0
      %1752 = vmatpush1.bf16.msra.mxu0 0
      %1753 = vmatprep.subr.bf16.mxu0 0
      %1754 = vmatpush1.bf16.msra.mxu0 0
      %1755 = vmatprep.subr.bf16.mxu0 0
      %1756 = vmatpush1.bf16.msra.mxu0 0
      %1757 = vmatprep.subr.bf16.mxu0 0
      %1758 = vmatpush1.bf16.msra.mxu0 0
      %1759 = vmatprep.subr.bf16.mxu0 0
      %1760 = vmatpush1.bf16.msra.mxu0 0
      %1761 = vmatprep.subr.bf16.mxu0 0
      %1762 = vmatpush1.bf16.msra.mxu0 0
      %1763 = vmatprep.subr.bf16.mxu0 0
      %1764 = vmatpush1.bf16.msra.mxu0 0
      %1765 = vmatprep.subr.bf16.mxu0 0
      %1766 = vmatpush1.bf16.msra.mxu0 0
      %1767 = vmatprep.subr.bf16.mxu0 0
      %1768 = vmatpush1.bf16.msra.mxu0 0
      %1769 = vmatprep.mubr.bf16.mxu0 0
      %1770 = vmatmul.mubr.bf16.gmra.mrb[0].mxu0 %v1685
      %v1771 = vpop.f32.mrb[0].mxu0
      %v1772 = vadd.f32 0.0, %v1771
      %v1773 = vpop.f32.mrb[0].mxu0
      %v1774 = vpop.f32.mrb[0].mxu0
      %v1775 = vpop.f32.mrb[0].mxu0
      %1776 = vdwg.mxu0
      %v1777 = vadd.f32 %v1670, %v1731
      %v1778 = vadd.f32 %v1671, %v1733
      %v1779 = vadd.f32 %v1672, %v1772
      %s1780 = scalar_lea.vmem %s7, 28
      %v1781 = vld [vmem:[%s1780] sm:$0xf]
      %1782 = vrot.lane.b32.xlu0 %v1046, 91
      %v1783 = vpop.permute.xlu0 %1782
      %1784 = vrot.lane.b32.xlu0 %v1047, 91
      %v1785 = vpop.permute.xlu0 %1784
      %1786 = vrot.lane.b32.xlu0 %v1048, 91
      %v1787 = vpop.permute.xlu0 %1786
      %vm1788 = vcmask 744448
      %v1789 = vsel %vm1788, %v1783, %v1785
      %v1790 = vsel %vm1788, %v1785, %v1787
      %v1792 = vsel %vm635, %v1781, 0
      %v1795 = vsel %vm1061, %v1789, 0
      %v1798 = vsel %vm1061, %v1790, 0
      %v1801 = vsel %vm1061, %v1787, 0
      %1803 = vmatprep.subr.bf16.mxu0 %v1798
      %1804 = vmatpush1.bf16.msra.mxu0 %v1795
      %1805 = vmatprep.subr.bf16.mxu0 0
      %1806 = vmatpush1.bf16.msra.mxu0 0
      %1807 = vmatprep.subr.bf16.mxu0 0
      %1808 = vmatpush1.bf16.msra.mxu0 0
      %1809 = vmatprep.subr.bf16.mxu0 0
      %1810 = vmatpush1.bf16.msra.mxu0 0
      %1811 = vmatprep.subr.bf16.mxu0 0
      %1812 = vmatpush1.bf16.msra.mxu0 0
      %1813 = vmatprep.subr.bf16.mxu0 0
      %1814 = vmatpush1.bf16.msra.mxu0 0
      %1815 = vmatprep.subr.bf16.mxu0 0
      %1816 = vmatpush1.bf16.msra.mxu0 0
      %1817 = vmatprep.subr.bf16.mxu0 0
      %1818 = vmatpush1.bf16.msra.mxu0 0
      %1819 = vmatprep.subr.bf16.mxu0 0
      %1820 = vmatpush1.bf16.msra.mxu0 0
      %1821 = vmatprep.subr.bf16.mxu0 0
      %1822 = vmatpush1.bf16.msra.mxu0 0
      %1823 = vmatprep.subr.bf16.mxu0 0
      %1824 = vmatpush1.bf16.msra.mxu0 0
      %1825 = vmatprep.subr.bf16.mxu0 0
      %1826 = vmatpush1.bf16.msra.mxu0 0
      %1827 = vmatprep.subr.bf16.mxu0 0
      %1828 = vmatpush1.bf16.msra.mxu0 0
      %1829 = vmatprep.subr.bf16.mxu0 0
      %1830 = vmatpush1.bf16.msra.mxu0 0
      %1831 = vmatprep.subr.bf16.mxu0 0
      %1832 = vmatpush1.bf16.msra.mxu0 0
      %1833 = vmatprep.subr.bf16.mxu0 0
      %1834 = vmatpush1.bf16.msra.mxu0 0
      %1835 = vmatprep.mubr.bf16.mxu0 0
      %1836 = vmatmul.mubr.bf16.gmra.mrb[0].mxu0 %v1792
      %v1837 = vpop.f32.mrb[0].mxu0
      %v1838 = vadd.f32 0.0, %v1837
      %v1839 = vpop.f32.mrb[0].mxu0
      %v1840 = vadd.f32 0.0, %v1839
      %v1841 = vpop.f32.mrb[0].mxu0
      %v1842 = vpop.f32.mrb[0].mxu0
      %1843 = vdwg.mxu0
      %1844 = vmatprep.subr.bf16.mxu0 0
      %1845 = vmatpush1.bf16.msra.mxu0 %v1801
      %1846 = vmatprep.subr.bf16.mxu0 0
      %1847 = vmatpush1.bf16.msra.mxu0 0
      %1848 = vmatprep.subr.bf16.mxu0 0
      %1849 = vmatpush1.bf16.msra.mxu0 0
      %1850 = vmatprep.subr.bf16.mxu0 0
      %1851 = vmatpush1.bf16.msra.mxu0 0
      %1852 = vmatprep.subr.bf16.mxu0 0
      %1853 = vmatpush1.bf16.msra.mxu0 0
      %1854 = vmatprep.subr.bf16.mxu0 0
      %1855 = vmatpush1.bf16.msra.mxu0 0
      %1856 = vmatprep.subr.bf16.mxu0 0
      %1857 = vmatpush1.bf16.msra.mxu0 0
      %1858 = vmatprep.subr.bf16.mxu0 0
      %1859 = vmatpush1.bf16.msra.mxu0 0
      %1860 = vmatprep.subr.bf16.mxu0 0
      %1861 = vmatpush1.bf16.msra.mxu0 0
      %1862 = vmatprep.subr.bf16.mxu0 0
      %1863 = vmatpush1.bf16.msra.mxu0 0
      %1864 = vmatprep.subr.bf16.mxu0 0
      %1865 = vmatpush1.bf16.msra.mxu0 0
      %1866 = vmatprep.subr.bf16.mxu0 0
      %1867 = vmatpush1.bf16.msra.mxu0 0
      %1868 = vmatprep.subr.bf16.mxu0 0
      %1869 = vmatpush1.bf16.msra.mxu0 0
      %1870 = vmatprep.subr.bf16.mxu0 0
      %1871 = vmatpush1.bf16.msra.mxu0 0
      %1872 = vmatprep.subr.bf16.mxu0 0
      %1873 = vmatpush1.bf16.msra.mxu0 0
      %1874 = vmatprep.subr.bf16.mxu0 0
      %1875 = vmatpush1.bf16.msra.mxu0 0
      %1876 = vmatprep.mubr.bf16.mxu0 0
      %1877 = vmatmul.mubr.bf16.gmra.mrb[0].mxu0 %v1792
      %v1878 = vpop.f32.mrb[0].mxu0
      %v1879 = vadd.f32 0.0, %v1878
      %v1880 = vpop.f32.mrb[0].mxu0
      %v1881 = vpop.f32.mrb[0].mxu0
      %v1882 = vpop.f32.mrb[0].mxu0
      %1883 = vdwg.mxu0
      %v1884 = vadd.f32 %v1777, %v1838
      %v1885 = vadd.f32 %v1778, %v1840
      %v1886 = vadd.f32 %v1779, %v1879
      %s1887 = scalar_lea.vmem %s7, 32
      %v1888 = vld [vmem:[%s1887] sm:$0xf]
      %1889 = vrot.lane.b32.xlu0 %v1046, 90
      %v1890 = vpop.permute.xlu0 %1889
      %1891 = vrot.lane.b32.xlu0 %v1047, 90
      %v1892 = vpop.permute.xlu0 %1891
      %1893 = vrot.lane.b32.xlu0 %v1048, 90
      %v1894 = vpop.permute.xlu0 %1893
      %vm1895 = vcmask 736256
      %v1896 = vsel %vm1895, %v1890, %v1892
      %v1897 = vsel %vm1895, %v1892, %v1894
      %v1899 = vsel %vm635, %v1888, 0
      %v1902 = vsel %vm1061, %v1896, 0
      %v1905 = vsel %vm1061, %v1897, 0
      %v1908 = vsel %vm1061, %v1894, 0
      %1910 = vmatprep.subr.bf16.mxu0 %v1905
      %1911 = vmatpush1.bf16.msra.mxu0 %v1902
      %1912 = vmatprep.subr.bf16.mxu0 0
      %1913 = vmatpush1.bf16.msra.mxu0 0
      %1914 = vmatprep.subr.bf16.mxu0 0
      %1915 = vmatpush1.bf16.msra.mxu0 0
      %1916 = vmatprep.subr.bf16.mxu0 0
      %1917 = vmatpush1.bf16.msra.mxu0 0
      %1918 = vmatprep.subr.bf16.mxu0 0
      %1919 = vmatpush1.bf16.msra.mxu0 0
      %1920 = vmatprep.subr.bf16.mxu0 0
      %1921 = vmatpush1.bf16.msra.mxu0 0
      %1922 = vmatprep.subr.bf16.mxu0 0
      %1923 = vmatpush1.bf16.msra.mxu0 0
      %1924 = vmatprep.subr.bf16.mxu0 0
      %1925 = vmatpush1.bf16.msra.mxu0 0
      %1926 = vmatprep.subr.bf16.mxu0 0
      %1927 = vmatpush1.bf16.msra.mxu0 0
      %1928 = vmatprep.subr.bf16.mxu0 0
      %1929 = vmatpush1.bf16.msra.mxu0 0
      %1930 = vmatprep.subr.bf16.mxu0 0
      %1931 = vmatpush1.bf16.msra.mxu0 0
      %1932 = vmatprep.subr.bf16.mxu0 0
      %1933 = vmatpush1.bf16.msra.mxu0 0
      %1934 = vmatprep.subr.bf16.mxu0 0
      %1935 = vmatpush1.bf16.msra.mxu0 0
      %1936 = vmatprep.subr.bf16.mxu0 0
      %1937 = vmatpush1.bf16.msra.mxu0 0
      %1938 = vmatprep.subr.bf16.mxu0 0
      %1939 = vmatpush1.bf16.msra.mxu0 0
      %1940 = vmatprep.subr.bf16.mxu0 0
      %1941 = vmatpush1.bf16.msra.mxu0 0
      %1942 = vmatprep.mubr.bf16.mxu0 0
      %1943 = vmatmul.mubr.bf16.gmra.mrb[0].mxu0 %v1899
      %v1944 = vpop.f32.mrb[0].mxu0
      %v1945 = vadd.f32 0.0, %v1944
      %v1946 = vpop.f32.mrb[0].mxu0
      %v1947 = vadd.f32 0.0, %v1946
      %v1948 = vpop.f32.mrb[0].mxu0
      %v1949 = vpop.f32.mrb[0].mxu0
      %1950 = vdwg.mxu0
      %1951 = vmatprep.subr.bf16.mxu0 0
      %1952 = vmatpush1.bf16.msra.mxu0 %v1908
      %1953 = vmatprep.subr.bf16.mxu0 0
      %1954 = vmatpush1.bf16.msra.mxu0 0
      %1955 = vmatprep.subr.bf16.mxu0 0
      %1956 = vmatpush1.bf16.msra.mxu0 0
      %1957 = vmatprep.subr.bf16.mxu0 0
      %1958 = vmatpush1.bf16.msra.mxu0 0
      %1959 = vmatprep.subr.bf16.mxu0 0
      %1960 = vmatpush1.bf16.msra.mxu0 0
      %1961 = vmatprep.subr.bf16.mxu0 0
      %1962 = vmatpush1.bf16.msra.mxu0 0
      %1963 = vmatprep.subr.bf16.mxu0 0
      %1964 = vmatpush1.bf16.msra.mxu0 0
      %1965 = vmatprep.subr.bf16.mxu0 0
      %1966 = vmatpush1.bf16.msra.mxu0 0
      %1967 = vmatprep.subr.bf16.mxu0 0
      %1968 = vmatpush1.bf16.msra.mxu0 0
      %1969 = vmatprep.subr.bf16.mxu0 0
      %1970 = vmatpush1.bf16.msra.mxu0 0
      %1971 = vmatprep.subr.bf16.mxu0 0
      %1972 = vmatpush1.bf16.msra.mxu0 0
      %1973 = vmatprep.subr.bf16.mxu0 0
      %1974 = vmatpush1.bf16.msra.mxu0 0
      %1975 = vmatprep.subr.bf16.mxu0 0
      %1976 = vmatpush1.bf16.msra.mxu0 0
      %1977 = vmatprep.subr.bf16.mxu0 0
      %1978 = vmatpush1.bf16.msra.mxu0 0
      %1979 = vmatprep.subr.bf16.mxu0 0
      %1980 = vmatpush1.bf16.msra.mxu0 0
      %1981 = vmatprep.subr.bf16.mxu0 0
      %1982 = vmatpush1.bf16.msra.mxu0 0
      %1983 = vmatprep.mubr.bf16.mxu0 0
      %1984 = vmatmul.mubr.bf16.gmra.mrb[0].mxu0 %v1899
      %v1985 = vpop.f32.mrb[0].mxu0
      %v1986 = vadd.f32 0.0, %v1985
      %v1987 = vpop.f32.mrb[0].mxu0
      %v1988 = vpop.f32.mrb[0].mxu0
      %v1989 = vpop.f32.mrb[0].mxu0
      %1990 = vdwg.mxu0
      %v1991 = vadd.f32 %v1884, %v1945
      %v1992 = vadd.f32 %v1885, %v1947
      %v1993 = vadd.f32 %v1886, %v1986
      %v1994 = vld [vmem:[%s600] sm:$0xff]
      %1996 = vset.pattern.permute.xlu0 0
      %1997 = vperm.xlu0 %1996, %v1994
      %v1998 = vpop.permute.xlu0 %1997
      %v2000 = vadd.f32 %v1991, %v1998
      %v2001 = vadd.f32 %v1992, %v1998
      %v2002 = vadd.f32 %v1993, %v1998
      %v2003 = vmul.f32 %v2000, %v994
      %v2004 = vmul.f32 %v2001, %v998
      %v2005 = vmul.f32 %v2002, %v1002
      %v2006 = vld [vmem:[%s6] sm:$0x3]
      %v2007 = vadd.f32 %v2003, %v2004
      %v2008 = vsel %vm622, %v2005, 0.0
      %v2009 = vadd.f32 %v2007, %v2008
      %2010 = vadd.xlane.f32.xlu0 %v2009
      %v2011 = vpop.xlane.xlu0 %2010
      %v2012 = vmul.f32 %v2003, %v2003
      %v2013 = vmul.f32 %v2004, %v2004
      %v2014 = vmul.f32 %v2005, %v2005
      %v2015 = vadd.f32 %v2012, %v2013
      %v2016 = vsel %vm622, %v2014, 0.0
      %v2017 = vadd.f32 %v2015, %v2016
      %2018 = vadd.xlane.f32.xlu0 %v2017
      %v2019 = vpop.xlane.xlu0 %2018
      %v2021 = vsel %vm635, %v2006, 0
      %2023 = vmatprep.subr.mxu0 0.0
      %2024 = vmatpush1.msra.mxu0 %v2011
      %2025 = vmatprep.subr.mxu0 0.0
      %2026 = vmatpush1.msra.mxu0 0.0
      %2027 = vmatprep.subr.mxu0 0.0
      %2028 = vmatpush1.msra.mxu0 0.0
      %2029 = vmatprep.subr.mxu0 0.0
      %2030 = vmatpush1.msra.mxu0 0.0
      %2031 = vmatprep.subr.mxu0 0.0
      %2032 = vmatpush1.msra.mxu0 0.0
      %2033 = vmatprep.subr.mxu0 0.0
      %2034 = vmatpush1.msra.mxu0 0.0
      %2035 = vmatprep.subr.mxu0 0.0
      %2036 = vmatpush1.msra.mxu0 0.0
      %2037 = vmatprep.subr.mxu0 0.0
      %2038 = vmatpush1.msra.mxu0 0.0
      %2039 = vmatprep.subr.mxu0 0.0
      %2040 = vmatpush1.msra.mxu0 0.0
      %2041 = vmatprep.subr.mxu0 0.0
      %2042 = vmatpush1.msra.mxu0 0.0
      %2043 = vmatprep.subr.mxu0 0.0
      %2044 = vmatpush1.msra.mxu0 0.0
      %2045 = vmatprep.subr.mxu0 0.0
      %2046 = vmatpush1.msra.mxu0 0.0
      %2047 = vmatprep.subr.mxu0 0.0
      %2048 = vmatpush1.msra.mxu0 0.0
      %2049 = vmatprep.subr.mxu0 0.0
      %2050 = vmatpush1.msra.mxu0 0.0
      %2051 = vmatprep.subr.mxu0 0.0
      %2052 = vmatpush1.msra.mxu0 0.0
      %2053 = vmatprep.subr.mxu0 0.0
      %2054 = vmatpush1.msra.mxu0 0.0
      %2055 = vmatprep.subr.mxu0 0.0
      %2056 = vmatpush1.msra.mxu0 0.0
      %2057 = vmatprep.subr.mxu0 0.0
      %2058 = vmatpush1.msra.mxu0 0.0
      %2059 = vmatprep.subr.mxu0 0.0
      %2060 = vmatpush1.msra.mxu0 0.0
      %2061 = vmatprep.subr.mxu0 0.0
      %2062 = vmatpush1.msra.mxu0 0.0
      %2063 = vmatprep.subr.mxu0 0.0
      %2064 = vmatpush1.msra.mxu0 0.0
      %2065 = vmatprep.subr.mxu0 0.0
      %2066 = vmatpush1.msra.mxu0 0.0
      %2067 = vmatprep.subr.mxu0 0.0
      %2068 = vmatpush1.msra.mxu0 0.0
      %2069 = vmatprep.subr.mxu0 0.0
      %2070 = vmatpush1.msra.mxu0 0.0
      %2071 = vmatprep.subr.mxu0 0.0
      %2072 = vmatpush1.msra.mxu0 0.0
      %2073 = vmatprep.subr.mxu0 0.0
      %2074 = vmatpush1.msra.mxu0 0.0
      %2075 = vmatprep.subr.mxu0 0.0
      %2076 = vmatpush1.msra.mxu0 0.0
      %2077 = vmatprep.subr.mxu0 0.0
      %2078 = vmatpush1.msra.mxu0 0.0
      %2079 = vmatprep.subr.mxu0 0.0
      %2080 = vmatpush1.msra.mxu0 0.0
      %2081 = vmatprep.subr.mxu0 0.0
      %2082 = vmatpush1.msra.mxu0 0.0
      %2083 = vmatprep.subr.mxu0 0.0
      %2084 = vmatpush1.msra.mxu0 0.0
      %2085 = vmatprep.subr.mxu0 0.0
      %2086 = vmatpush1.msra.mxu0 0.0
      %2087 = vmatprep.mubr.f32.mxu0 0.0
      %2088 = vmatmul.mubr.f32.gmra.mrb[0].mxu0 %v2021
      %v2089 = vpop.f32.mrb[0].mxu0
      %v2090 = vadd.f32 0.0, %v2089
      %v2091 = vpop.f32.mrb[0].mxu0
      %2092 = vdwg.mxu0
      %2094 = vrot.lane.b32.xlu0 %v619, 125
      %v2095 = vpop.permute.xlu0 %2094
      %v2096 = vsel %vm712, %v2095, 0
      %v2099 = vsel %vm715, %v2090, 0
      %2101 = vmatprep.subr.mxu0 0.0
      %2102 = vmatpush1.msra.mxu0 %v2099
      %2103 = vmatprep.subr.mxu0 0.0
      %2104 = vmatpush1.msra.mxu0 0.0
      %2105 = vmatprep.subr.mxu0 0.0
      %2106 = vmatpush1.msra.mxu0 0.0
      %2107 = vmatprep.subr.mxu0 0.0
      %2108 = vmatpush1.msra.mxu0 0.0
      %2109 = vmatprep.subr.mxu0 0.0
      %2110 = vmatpush1.msra.mxu0 0.0
      %2111 = vmatprep.subr.mxu0 0.0
      %2112 = vmatpush1.msra.mxu0 0.0
      %2113 = vmatprep.subr.mxu0 0.0
      %2114 = vmatpush1.msra.mxu0 0.0
      %2115 = vmatprep.subr.mxu0 0.0
      %2116 = vmatpush1.msra.mxu0 0.0
      %2117 = vmatprep.subr.mxu0 0.0
      %2118 = vmatpush1.msra.mxu0 0.0
      %2119 = vmatprep.subr.mxu0 0.0
      %2120 = vmatpush1.msra.mxu0 0.0
      %2121 = vmatprep.subr.mxu0 0.0
      %2122 = vmatpush1.msra.mxu0 0.0
      %2123 = vmatprep.subr.mxu0 0.0
      %2124 = vmatpush1.msra.mxu0 0.0
      %2125 = vmatprep.subr.mxu0 0.0
      %2126 = vmatpush1.msra.mxu0 0.0
      %2127 = vmatprep.subr.mxu0 0.0
      %2128 = vmatpush1.msra.mxu0 0.0
      %2129 = vmatprep.subr.mxu0 0.0
      %2130 = vmatpush1.msra.mxu0 0.0
      %2131 = vmatprep.subr.mxu0 0.0
      %2132 = vmatpush1.msra.mxu0 0.0
      %2133 = vmatprep.subr.mxu0 0.0
      %2134 = vmatpush1.msra.mxu0 0.0
      %2135 = vmatprep.subr.mxu0 0.0
      %2136 = vmatpush1.msra.mxu0 0.0
      %2137 = vmatprep.subr.mxu0 0.0
      %2138 = vmatpush1.msra.mxu0 0.0
      %2139 = vmatprep.subr.mxu0 0.0
      %2140 = vmatpush1.msra.mxu0 0.0
      %2141 = vmatprep.subr.mxu0 0.0
      %2142 = vmatpush1.msra.mxu0 0.0
      %2143 = vmatprep.subr.mxu0 0.0
      %2144 = vmatpush1.msra.mxu0 0.0
      %2145 = vmatprep.subr.mxu0 0.0
      %2146 = vmatpush1.msra.mxu0 0.0
      %2147 = vmatprep.subr.mxu0 0.0
      %2148 = vmatpush1.msra.mxu0 0.0
      %2149 = vmatprep.subr.mxu0 0.0
      %2150 = vmatpush1.msra.mxu0 0.0
      %2151 = vmatprep.subr.mxu0 0.0
      %2152 = vmatpush1.msra.mxu0 0.0
      %2153 = vmatprep.subr.mxu0 0.0
      %2154 = vmatpush1.msra.mxu0 0.0
      %2155 = vmatprep.subr.mxu0 0.0
      %2156 = vmatpush1.msra.mxu0 0.0
      %2157 = vmatprep.subr.mxu0 0.0
      %2158 = vmatpush1.msra.mxu0 0.0
      %2159 = vmatprep.subr.mxu0 0.0
      %2160 = vmatpush1.msra.mxu0 0.0
      %2161 = vmatprep.subr.mxu0 0.0
      %2162 = vmatpush1.msra.mxu0 0.0
      %2163 = vmatprep.subr.mxu0 0.0
      %2164 = vmatpush1.msra.mxu0 0.0
      %2165 = vmatprep.mubr.f32.mxu0 0.0
      %2166 = vmatmul.mubr.f32.gmra.mrb[0].mxu0 %v2096
      %v2167 = vpop.f32.mrb[0].mxu0
      %v2168 = vadd.f32 0.0, %v2167
      %v2169 = vpop.f32.mrb[0].mxu0
      %2170 = vdwg.mxu0
      %v2171 = vmul.f32 %v2168, 0.0009765625
      %2172 = vmatprep.subr.mxu0 0.0
      %2173 = vmatpush1.msra.mxu0 %v2019
      %2174 = vmatprep.subr.mxu0 0.0
      %2175 = vmatpush1.msra.mxu0 0.0
      %2176 = vmatprep.subr.mxu0 0.0
      %2177 = vmatpush1.msra.mxu0 0.0
      %2178 = vmatprep.subr.mxu0 0.0
      %2179 = vmatpush1.msra.mxu0 0.0
      %2180 = vmatprep.subr.mxu0 0.0
      %2181 = vmatpush1.msra.mxu0 0.0
      %2182 = vmatprep.subr.mxu0 0.0
      %2183 = vmatpush1.msra.mxu0 0.0
      %2184 = vmatprep.subr.mxu0 0.0
      %2185 = vmatpush1.msra.mxu0 0.0
      %2186 = vmatprep.subr.mxu0 0.0
      %2187 = vmatpush1.msra.mxu0 0.0
      %2188 = vmatprep.subr.mxu0 0.0
      %2189 = vmatpush1.msra.mxu0 0.0
      %2190 = vmatprep.subr.mxu0 0.0
      %2191 = vmatpush1.msra.mxu0 0.0
      %2192 = vmatprep.subr.mxu0 0.0
      %2193 = vmatpush1.msra.mxu0 0.0
      %2194 = vmatprep.subr.mxu0 0.0
      %2195 = vmatpush1.msra.mxu0 0.0
      %2196 = vmatprep.subr.mxu0 0.0
      %2197 = vmatpush1.msra.mxu0 0.0
      %2198 = vmatprep.subr.mxu0 0.0
      %2199 = vmatpush1.msra.mxu0 0.0
      %2200 = vmatprep.subr.mxu0 0.0
      %2201 = vmatpush1.msra.mxu0 0.0
      %2202 = vmatprep.subr.mxu0 0.0
      %2203 = vmatpush1.msra.mxu0 0.0
      %2204 = vmatprep.subr.mxu0 0.0
      %2205 = vmatpush1.msra.mxu0 0.0
      %2206 = vmatprep.subr.mxu0 0.0
      %2207 = vmatpush1.msra.mxu0 0.0
      %2208 = vmatprep.subr.mxu0 0.0
      %2209 = vmatpush1.msra.mxu0 0.0
      %2210 = vmatprep.subr.mxu0 0.0
      %2211 = vmatpush1.msra.mxu0 0.0
      %2212 = vmatprep.subr.mxu0 0.0
      %2213 = vmatpush1.msra.mxu0 0.0
      %2214 = vmatprep.subr.mxu0 0.0
      %2215 = vmatpush1.msra.mxu0 0.0
      %2216 = vmatprep.subr.mxu0 0.0
      %2217 = vmatpush1.msra.mxu0 0.0
      %2218 = vmatprep.subr.mxu0 0.0
      %2219 = vmatpush1.msra.mxu0 0.0
      %2220 = vmatprep.subr.mxu0 0.0
      %2221 = vmatpush1.msra.mxu0 0.0
      %2222 = vmatprep.subr.mxu0 0.0
      %2223 = vmatpush1.msra.mxu0 0.0
      %2224 = vmatprep.subr.mxu0 0.0
      %2225 = vmatpush1.msra.mxu0 0.0
      %2226 = vmatprep.subr.mxu0 0.0
      %2227 = vmatpush1.msra.mxu0 0.0
      %2228 = vmatprep.subr.mxu0 0.0
      %2229 = vmatpush1.msra.mxu0 0.0
      %2230 = vmatprep.subr.mxu0 0.0
      %2231 = vmatpush1.msra.mxu0 0.0
      %2232 = vmatprep.subr.mxu0 0.0
      %2233 = vmatpush1.msra.mxu0 0.0
      %2234 = vmatprep.subr.mxu0 0.0
      %2235 = vmatpush1.msra.mxu0 0.0
      %2236 = vmatprep.mubr.f32.mxu0 0.0
      %2237 = vmatmul.mubr.f32.gmra.mrb[0].mxu0 %v2021
      %v2238 = vpop.f32.mrb[0].mxu0
      %v2239 = vadd.f32 0.0, %v2238
      %v2240 = vpop.f32.mrb[0].mxu0
      %2241 = vdwg.mxu0
      %v2243 = vsel %vm715, %v2239, 0
      %2245 = vmatprep.subr.mxu0 0.0
      %2246 = vmatpush1.msra.mxu0 %v2243
      %2247 = vmatprep.subr.mxu0 0.0
      %2248 = vmatpush1.msra.mxu0 0.0
      %2249 = vmatprep.subr.mxu0 0.0
      %2250 = vmatpush1.msra.mxu0 0.0
      %2251 = vmatprep.subr.mxu0 0.0
      %2252 = vmatpush1.msra.mxu0 0.0
      %2253 = vmatprep.subr.mxu0 0.0
      %2254 = vmatpush1.msra.mxu0 0.0
      %2255 = vmatprep.subr.mxu0 0.0
      %2256 = vmatpush1.msra.mxu0 0.0
      %2257 = vmatprep.subr.mxu0 0.0
      %2258 = vmatpush1.msra.mxu0 0.0
      %2259 = vmatprep.subr.mxu0 0.0
      %2260 = vmatpush1.msra.mxu0 0.0
      %2261 = vmatprep.subr.mxu0 0.0
      %2262 = vmatpush1.msra.mxu0 0.0
      %2263 = vmatprep.subr.mxu0 0.0
      %2264 = vmatpush1.msra.mxu0 0.0
      %2265 = vmatprep.subr.mxu0 0.0
      %2266 = vmatpush1.msra.mxu0 0.0
      %2267 = vmatprep.subr.mxu0 0.0
      %2268 = vmatpush1.msra.mxu0 0.0
      %2269 = vmatprep.subr.mxu0 0.0
      %2270 = vmatpush1.msra.mxu0 0.0
      %2271 = vmatprep.subr.mxu0 0.0
      %2272 = vmatpush1.msra.mxu0 0.0
      %2273 = vmatprep.subr.mxu0 0.0
      %2274 = vmatpush1.msra.mxu0 0.0
      %2275 = vmatprep.subr.mxu0 0.0
      %2276 = vmatpush1.msra.mxu0 0.0
      %2277 = vmatprep.subr.mxu0 0.0
      %2278 = vmatpush1.msra.mxu0 0.0
      %2279 = vmatprep.subr.mxu0 0.0
      %2280 = vmatpush1.msra.mxu0 0.0
      %2281 = vmatprep.subr.mxu0 0.0
      %2282 = vmatpush1.msra.mxu0 0.0
      %2283 = vmatprep.subr.mxu0 0.0
      %2284 = vmatpush1.msra.mxu0 0.0
      %2285 = vmatprep.subr.mxu0 0.0
      %2286 = vmatpush1.msra.mxu0 0.0
      %2287 = vmatprep.subr.mxu0 0.0
      %2288 = vmatpush1.msra.mxu0 0.0
      %2289 = vmatprep.subr.mxu0 0.0
      %2290 = vmatpush1.msra.mxu0 0.0
      %2291 = vmatprep.subr.mxu0 0.0
      %2292 = vmatpush1.msra.mxu0 0.0
      %2293 = vmatprep.subr.mxu0 0.0
      %2294 = vmatpush1.msra.mxu0 0.0
      %2295 = vmatprep.subr.mxu0 0.0
      %2296 = vmatpush1.msra.mxu0 0.0
      %2297 = vmatprep.subr.mxu0 0.0
      %2298 = vmatpush1.msra.mxu0 0.0
      %2299 = vmatprep.subr.mxu0 0.0
      %2300 = vmatpush1.msra.mxu0 0.0
      %2301 = vmatprep.subr.mxu0 0.0
      %2302 = vmatpush1.msra.mxu0 0.0
      %2303 = vmatprep.subr.mxu0 0.0
      %2304 = vmatpush1.msra.mxu0 0.0
      %2305 = vmatprep.subr.mxu0 0.0
      %2306 = vmatpush1.msra.mxu0 0.0
      %2307 = vmatprep.subr.mxu0 0.0
      %2308 = vmatpush1.msra.mxu0 0.0
      %2309 = vmatprep.mubr.f32.mxu0 0.0
      %2310 = vmatmul.mubr.f32.gmra.mrb[0].mxu0 %v2096
      %v2311 = vpop.f32.mrb[0].mxu0
      %v2312 = vadd.f32 0.0, %v2311
      %v2313 = vpop.f32.mrb[0].mxu0
      %2314 = vdwg.mxu0
      %v2315 = vmul.f32 %v2312, 0.0009765625
      %v2316 = vmul.f32 %v2171, %v2171
      %v2317 = vsub.f32 %v2315, %v2316
      %v2318 = vmax.f32 %v2317, 0.0
      %2320 = vset.pattern.permute.xlu0 0
      %2321 = vperm.xlu0 %2320, %v2171
      %v2322 = vpop.permute.xlu0 %2321
      %v2324 = vsub.f32 %v2003, %v2322
      %v2325 = vsub.f32 %v2004, %v2322
      %v2326 = vsub.f32 %v2005, %v2322
      %v2327 = vadd.f32 %v2318, 1e-05
      %v2328 = vrsqrt.pop %v2327
      %2330 = vset.pattern.permute.xlu0 0
      %2331 = vperm.xlu0 %2330, %v2328
      %v2332 = vpop.permute.xlu0 %2331
      %v2334 = vmul.f32 %v2324, %v2332
      %v2335 = vmul.f32 %v2325, %v2332
      %v2336 = vmul.f32 %v2326, %v2332
      %2337 = vset.pattern.permute.xlu0 0
      %2338 = vperm.xlu0 %2337, %v619
      %v2339 = vpop.permute.xlu0 %2338
      %v2341 = vmul.f32 %v2334, %v2339
      %v2342 = vmul.f32 %v2335, %v2339
      %v2343 = vmul.f32 %v2336, %v2339
      %2344 = vset.pattern.permute.xlu0 1
      %2345 = vperm.xlu0 %2344, %v619
      %v2346 = vpop.permute.xlu0 %2345
      %v2348 = vadd.f32 %v2341, %v2346
      %v2349 = vadd.f32 %v2342, %v2346
      %v2350 = vadd.f32 %v2343, %v2346
      %v2351 = vxor.u32 %v2348, 2147483648
      %v2352 = vxor.u32 %v2349, 2147483648
      %v2353 = vxor.u32 %v2350, 2147483648
      %v2354 = vmul.f32 %v2351, 1.442695
      %v2355 = vpow.pop %v2354
      %v2356 = vmul.f32 %v2352, 1.442695
      %v2357 = vpow.pop %v2356
      %v2358 = vmul.f32 %v2353, 1.442695
      %v2359 = vpow.pop %v2358
      %v2360 = vadd.f32 %v2355, 1.0
      %v2361 = vadd.f32 %v2357, 1.0
      %v2362 = vadd.f32 %v2359, 1.0
      %v2363 = vrcp.pop %v2360
      %v2364 = vmul.f32 1.0, %v2363
      %v2365 = vrcp.pop %v2361
      %v2366 = vmul.f32 1.0, %v2365
      %v2367 = vrcp.pop %v2362
      %v2368 = vmul.f32 1.0, %v2367
      %v2369 = vmul.f32 %v2348, %v2364
      %v2370 = vmul.f32 %v2349, %v2366
      %v2371 = vmul.f32 %v2350, %v2368
      %v2372 = vmul.f32 %v2369, %v994
      %v2373 = vmul.f32 %v2370, %v998
      %v2374 = vmul.f32 %v2371, %v1002
      %v2375 = vpack.c.bf16 %v2372, %v2372
      %v2376 = vpack.c.bf16 %v2373, %v2373
      %v2377 = vpack.c.bf16 %v2374, %v2374
      %v2381 = vunpack.c.l.b16 %v2375
      %v2382 = vunpack.c.l.b16 %v2376
      %v2383 = vunpack.c.l.b16 %v2377
      %v2384 = vpack.c.b16 %v2382, %v2381
      %v2385 = vpack.c.b16 %v2383, %v2383
      %2386 = vrot.lane.b32.xlu0 %v2384, 19
      %v2387 = vpop.permute.xlu0 %2386
      %2388 = vrot.lane.b32.xlu0 %v2385, 19
      %v2389 = vpop.permute.xlu0 %2388
      %v2390 = vrot.slane %v2387, 4
      %v2391 = vsel %vm1025, %v2390, %v2387
      %v2392 = vsel %vm1025, %v2390, %v2389
      %2395 = vst.msk [vmem:[#allocation2] sm:$0xff] %vm1032, %v2391
      %2396 = vst.msk [vmem:[#allocation2 + $0x8] sm:$0xf] %vm1034, %v2392
      %v2397 = vld [vmem:[%s8] sm:$0xf]
      %v2398 = vld [vmem:[#allocation2] sm:$0xff]
      %v2399 = vld [vmem:[#allocation2 + $0x8] sm:$0xf]
      %s2400 = scalar_lea.vmem %s8, 4
      %v2401 = vld [vmem:[%s2400] sm:$0xf]
      %v2404 = vunpack.c.l.b16 %v2398
      %v2405 = vunpack.c.h.b16 %v2398
      %v2406 = vunpack.c.l.b16 %v2399
      %v2407 = vpack.c.b16 %v2404, %v2404
      %v2408 = vpack.c.b16 %v2405, %v2405
      %v2409 = vpack.c.b16 %v2406, %v2406
      %2410 = vrot.lane.b32.xlu0 %v2407, 127
      %v2411 = vpop.permute.xlu0 %2410
      %2412 = vrot.lane.b32.xlu0 %v2408, 127
      %v2413 = vpop.permute.xlu0 %2412
      %2414 = vrot.lane.b32.xlu0 %v2409, 127
      %v2415 = vpop.permute.xlu0 %2414
      %v2416 = vsel %vm1055, %v2411, %v2413
      %v2417 = vsel %vm1055, %v2413, %v2415
      %v2419 = vsel %vm635, %v2401, 0
      %v2422 = vsel %vm1061, %v2416, 0
      %v2425 = vsel %vm1061, %v2417, 0
      %v2428 = vsel %vm1061, %v2415, 0
      %2430 = vmatprep.subr.bf16.mxu0 %v2425
      %2431 = vmatpush1.bf16.msra.mxu0 %v2422
      %2432 = vmatprep.subr.bf16.mxu0 0
      %2433 = vmatpush1.bf16.msra.mxu0 0
      %2434 = vmatprep.subr.bf16.mxu0 0
      %2435 = vmatpush1.bf16.msra.mxu0 0
      %2436 = vmatprep.subr.bf16.mxu0 0
      %2437 = vmatpush1.bf16.msra.mxu0 0
      %2438 = vmatprep.subr.bf16.mxu0 0
      %2439 = vmatpush1.bf16.msra.mxu0 0
      %2440 = vmatprep.subr.bf16.mxu0 0
      %2441 = vmatpush1.bf16.msra.mxu0 0
      %2442 = vmatprep.subr.bf16.mxu0 0
      %2443 = vmatpush1.bf16.msra.mxu0 0
      %2444 = vmatprep.subr.bf16.mxu0 0
      %2445 = vmatpush1.bf16.msra.mxu0 0
      %2446 = vmatprep.subr.bf16.mxu0 0
      %2447 = vmatpush1.bf16.msra.mxu0 0
      %2448 = vmatprep.subr.bf16.mxu0 0
      %2449 = vmatpush1.bf16.msra.mxu0 0
      %2450 = vmatprep.subr.bf16.mxu0 0
      %2451 = vmatpush1.bf16.msra.mxu0 0
      %2452 = vmatprep.subr.bf16.mxu0 0
      %2453 = vmatpush1.bf16.msra.mxu0 0
      %2454 = vmatprep.subr.bf16.mxu0 0
      %2455 = vmatpush1.bf16.msra.mxu0 0
      %2456 = vmatprep.subr.bf16.mxu0 0
      %2457 = vmatpush1.bf16.msra.mxu0 0
      %2458 = vmatprep.subr.bf16.mxu0 0
      %2459 = vmatpush1.bf16.msra.mxu0 0
      %2460 = vmatprep.subr.bf16.mxu0 0
      %2461 = vmatpush1.bf16.msra.mxu0 0
      %2462 = vmatprep.mubr.bf16.mxu0 0
      %2463 = vmatmul.mubr.bf16.gmra.mrb[0].mxu0 %v2419
      %v2464 = vpop.f32.mrb[0].mxu0
      %v2465 = vadd.f32 0.0, %v2464
      %v2466 = vpop.f32.mrb[0].mxu0
      %v2467 = vadd.f32 0.0, %v2466
      %v2468 = vpop.f32.mrb[0].mxu0
      %v2469 = vpop.f32.mrb[0].mxu0
      %2470 = vdwg.mxu0
      %2471 = vmatprep.subr.bf16.mxu0 0
      %2472 = vmatpush1.bf16.msra.mxu0 %v2428
      %2473 = vmatprep.subr.bf16.mxu0 0
      %2474 = vmatpush1.bf16.msra.mxu0 0
      %2475 = vmatprep.subr.bf16.mxu0 0
      %2476 = vmatpush1.bf16.msra.mxu0 0
      %2477 = vmatprep.subr.bf16.mxu0 0
      %2478 = vmatpush1.bf16.msra.mxu0 0
      %2479 = vmatprep.subr.bf16.mxu0 0
      %2480 = vmatpush1.bf16.msra.mxu0 0
      %2481 = vmatprep.subr.bf16.mxu0 0
      %2482 = vmatpush1.bf16.msra.mxu0 0
      %2483 = vmatprep.subr.bf16.mxu0 0
      %2484 = vmatpush1.bf16.msra.mxu0 0
      %2485 = vmatprep.subr.bf16.mxu0 0
      %2486 = vmatpush1.bf16.msra.mxu0 0
      %2487 = vmatprep.subr.bf16.mxu0 0
      %2488 = vmatpush1.bf16.msra.mxu0 0
      %2489 = vmatprep.subr.bf16.mxu0 0
      %2490 = vmatpush1.bf16.msra.mxu0 0
      %2491 = vmatprep.subr.bf16.mxu0 0
      %2492 = vmatpush1.bf16.msra.mxu0 0
      %2493 = vmatprep.subr.bf16.mxu0 0
      %2494 = vmatpush1.bf16.msra.mxu0 0
      %2495 = vmatprep.subr.bf16.mxu0 0
      %2496 = vmatpush1.bf16.msra.mxu0 0
      %2497 = vmatprep.subr.bf16.mxu0 0
      %2498 = vmatpush1.bf16.msra.mxu0 0
      %2499 = vmatprep.subr.bf16.mxu0 0
      %2500 = vmatpush1.bf16.msra.mxu0 0
      %2501 = vmatprep.subr.bf16.mxu0 0
      %2502 = vmatpush1.bf16.msra.mxu0 0
      %2503 = vmatprep.mubr.bf16.mxu0 0
      %2504 = vmatmul.mubr.bf16.gmra.mrb[0].mxu0 %v2419
      %v2505 = vpop.f32.mrb[0].mxu0
      %v2506 = vadd.f32 0.0, %v2505
      %v2507 = vpop.f32.mrb[0].mxu0
      %v2508 = vpop.f32.mrb[0].mxu0
      %v2509 = vpop.f32.mrb[0].mxu0
      %2510 = vdwg.mxu0
      %v2512 = vsel %vm635, %v2397, 0
      %v2515 = vsel %vm1061, %v2407, 0
      %v2518 = vsel %vm1061, %v2408, 0
      %v2521 = vsel %vm1061, %v2409, 0
      %2523 = vmatprep.subr.bf16.mxu0 %v2518
      %2524 = vmatpush1.bf16.msra.mxu0 %v2515
      %2525 = vmatprep.subr.bf16.mxu0 0
      %2526 = vmatpush1.bf16.msra.mxu0 0
      %2527 = vmatprep.subr.bf16.mxu0 0
      %2528 = vmatpush1.bf16.msra.mxu0 0
      %2529 = vmatprep.subr.bf16.mxu0 0
      %2530 = vmatpush1.bf16.msra.mxu0 0
      %2531 = vmatprep.subr.bf16.mxu0 0
      %2532 = vmatpush1.bf16.msra.mxu0 0
      %2533 = vmatprep.subr.bf16.mxu0 0
      %2534 = vmatpush1.bf16.msra.mxu0 0
      %2535 = vmatprep.subr.bf16.mxu0 0
      %2536 = vmatpush1.bf16.msra.mxu0 0
      %2537 = vmatprep.subr.bf16.mxu0 0
      %2538 = vmatpush1.bf16.msra.mxu0 0
      %2539 = vmatprep.subr.bf16.mxu0 0
      %2540 = vmatpush1.bf16.msra.mxu0 0
      %2541 = vmatprep.subr.bf16.mxu0 0
      %2542 = vmatpush1.bf16.msra.mxu0 0
      %2543 = vmatprep.subr.bf16.mxu0 0
      %2544 = vmatpush1.bf16.msra.mxu0 0
      %2545 = vmatprep.subr.bf16.mxu0 0
      %2546 = vmatpush1.bf16.msra.mxu0 0
      %2547 = vmatprep.subr.bf16.mxu0 0
      %2548 = vmatpush1.bf16.msra.mxu0 0
      %2549 = vmatprep.subr.bf16.mxu0 0
      %2550 = vmatpush1.bf16.msra.mxu0 0
      %2551 = vmatprep.subr.bf16.mxu0 0
      %2552 = vmatpush1.bf16.msra.mxu0 0
      %2553 = vmatprep.subr.bf16.mxu0 0
      %2554 = vmatpush1.bf16.msra.mxu0 0
      %2555 = vmatprep.mubr.bf16.mxu0 0
      %2556 = vmatmul.mubr.bf16.gmra.mrb[0].mxu0 %v2512
      %v2557 = vpop.f32.mrb[0].mxu0
      %v2558 = vadd.f32 %v2465, %v2557
      %v2559 = vpop.f32.mrb[0].mxu0
      %v2560 = vadd.f32 %v2467, %v2559
      %v2561 = vpop.f32.mrb[0].mxu0
      %v2562 = vpop.f32.mrb[0].mxu0
      %2563 = vdwg.mxu0
      %2564 = vmatprep.subr.bf16.mxu0 0
      %2565 = vmatpush1.bf16.msra.mxu0 %v2521
      %2566 = vmatprep.subr.bf16.mxu0 0
      %2567 = vmatpush1.bf16.msra.mxu0 0
      %2568 = vmatprep.subr.bf16.mxu0 0
      %2569 = vmatpush1.bf16.msra.mxu0 0
      %2570 = vmatprep.subr.bf16.mxu0 0
      %2571 = vmatpush1.bf16.msra.mxu0 0
      %2572 = vmatprep.subr.bf16.mxu0 0
      %2573 = vmatpush1.bf16.msra.mxu0 0
      %2574 = vmatprep.subr.bf16.mxu0 0
      %2575 = vmatpush1.bf16.msra.mxu0 0
      %2576 = vmatprep.subr.bf16.mxu0 0
      %2577 = vmatpush1.bf16.msra.mxu0 0
      %2578 = vmatprep.subr.bf16.mxu0 0
      %2579 = vmatpush1.bf16.msra.mxu0 0
      %2580 = vmatprep.subr.bf16.mxu0 0
      %2581 = vmatpush1.bf16.msra.mxu0 0
      %2582 = vmatprep.subr.bf16.mxu0 0
      %2583 = vmatpush1.bf16.msra.mxu0 0
      %2584 = vmatprep.subr.bf16.mxu0 0
      %2585 = vmatpush1.bf16.msra.mxu0 0
      %2586 = vmatprep.subr.bf16.mxu0 0
      %2587 = vmatpush1.bf16.msra.mxu0 0
      %2588 = vmatprep.subr.bf16.mxu0 0
      %2589 = vmatpush1.bf16.msra.mxu0 0
      %2590 = vmatprep.subr.bf16.mxu0 0
      %2591 = vmatpush1.bf16.msra.mxu0 0
      %2592 = vmatprep.subr.bf16.mxu0 0
      %2593 = vmatpush1.bf16.msra.mxu0 0
      %2594 = vmatprep.subr.bf16.mxu0 0
      %2595 = vmatpush1.bf16.msra.mxu0 0
      %2596 = vmatprep.mubr.bf16.mxu0 0
      %2597 = vmatmul.mubr.bf16.gmra.mrb[0].mxu0 %v2512
      %v2598 = vpop.f32.mrb[0].mxu0
      %v2599 = vadd.f32 %v2506, %v2598
      %v2600 = vpop.f32.mrb[0].mxu0
      %v2601 = vpop.f32.mrb[0].mxu0
      %v2602 = vpop.f32.mrb[0].mxu0
      %2603 = vdwg.mxu0
      %s2604 = scalar_lea.vmem %s8, 8
      %v2605 = vld [vmem:[%s2604] sm:$0xf]
      %2606 = vrot.lane.b32.xlu0 %v2407, 126
      %v2607 = vpop.permute.xlu0 %2606
      %2608 = vrot.lane.b32.xlu0 %v2408, 126
      %v2609 = vpop.permute.xlu0 %2608
      %2610 = vrot.lane.b32.xlu0 %v2409, 126
      %v2611 = vpop.permute.xlu0 %2610
      %v2612 = vsel %vm1253, %v2607, %v2609
      %v2613 = vsel %vm1253, %v2609, %v2611
      %v2615 = vsel %vm635, %v2605, 0
      %v2618 = vsel %vm1061, %v2612, 0
      %v2621 = vsel %vm1061, %v2613, 0
      %v2624 = vsel %vm1061, %v2611, 0
      %2626 = vmatprep.subr.bf16.mxu0 %v2621
      %2627 = vmatpush1.bf16.msra.mxu0 %v2618
      %2628 = vmatprep.subr.bf16.mxu0 0
      %2629 = vmatpush1.bf16.msra.mxu0 0
      %2630 = vmatprep.subr.bf16.mxu0 0
      %2631 = vmatpush1.bf16.msra.mxu0 0
      %2632 = vmatprep.subr.bf16.mxu0 0
      %2633 = vmatpush1.bf16.msra.mxu0 0
      %2634 = vmatprep.subr.bf16.mxu0 0
      %2635 = vmatpush1.bf16.msra.mxu0 0
      %2636 = vmatprep.subr.bf16.mxu0 0
      %2637 = vmatpush1.bf16.msra.mxu0 0
      %2638 = vmatprep.subr.bf16.mxu0 0
      %2639 = vmatpush1.bf16.msra.mxu0 0
      %2640 = vmatprep.subr.bf16.mxu0 0
      %2641 = vmatpush1.bf16.msra.mxu0 0
      %2642 = vmatprep.subr.bf16.mxu0 0
      %2643 = vmatpush1.bf16.msra.mxu0 0
      %2644 = vmatprep.subr.bf16.mxu0 0
      %2645 = vmatpush1.bf16.msra.mxu0 0
      %2646 = vmatprep.subr.bf16.mxu0 0
      %2647 = vmatpush1.bf16.msra.mxu0 0
      %2648 = vmatprep.subr.bf16.mxu0 0
      %2649 = vmatpush1.bf16.msra.mxu0 0
      %2650 = vmatprep.subr.bf16.mxu0 0
      %2651 = vmatpush1.bf16.msra.mxu0 0
      %2652 = vmatprep.subr.bf16.mxu0 0
      %2653 = vmatpush1.bf16.msra.mxu0 0
      %2654 = vmatprep.subr.bf16.mxu0 0
      %2655 = vmatpush1.bf16.msra.mxu0 0
      %2656 = vmatprep.subr.bf16.mxu0 0
      %2657 = vmatpush1.bf16.msra.mxu0 0
      %2658 = vmatprep.mubr.bf16.mxu0 0
      %2659 = vmatmul.mubr.bf16.gmra.mrb[0].mxu0 %v2615
      %v2660 = vpop.f32.mrb[0].mxu0
      %v2661 = vadd.f32 0.0, %v2660
      %v2662 = vpop.f32.mrb[0].mxu0
      %v2663 = vadd.f32 0.0, %v2662
      %v2664 = vpop.f32.mrb[0].mxu0
      %v2665 = vpop.f32.mrb[0].mxu0
      %2666 = vdwg.mxu0
      %2667 = vmatprep.subr.bf16.mxu0 0
      %2668 = vmatpush1.bf16.msra.mxu0 %v2624
      %2669 = vmatprep.subr.bf16.mxu0 0
      %2670 = vmatpush1.bf16.msra.mxu0 0
      %2671 = vmatprep.subr.bf16.mxu0 0
      %2672 = vmatpush1.bf16.msra.mxu0 0
      %2673 = vmatprep.subr.bf16.mxu0 0
      %2674 = vmatpush1.bf16.msra.mxu0 0
      %2675 = vmatprep.subr.bf16.mxu0 0
      %2676 = vmatpush1.bf16.msra.mxu0 0
      %2677 = vmatprep.subr.bf16.mxu0 0
      %2678 = vmatpush1.bf16.msra.mxu0 0
      %2679 = vmatprep.subr.bf16.mxu0 0
      %2680 = vmatpush1.bf16.msra.mxu0 0
      %2681 = vmatprep.subr.bf16.mxu0 0
      %2682 = vmatpush1.bf16.msra.mxu0 0
      %2683 = vmatprep.subr.bf16.mxu0 0
      %2684 = vmatpush1.bf16.msra.mxu0 0
      %2685 = vmatprep.subr.bf16.mxu0 0
      %2686 = vmatpush1.bf16.msra.mxu0 0
      %2687 = vmatprep.subr.bf16.mxu0 0
      %2688 = vmatpush1.bf16.msra.mxu0 0
      %2689 = vmatprep.subr.bf16.mxu0 0
      %2690 = vmatpush1.bf16.msra.mxu0 0
      %2691 = vmatprep.subr.bf16.mxu0 0
      %2692 = vmatpush1.bf16.msra.mxu0 0
      %2693 = vmatprep.subr.bf16.mxu0 0
      %2694 = vmatpush1.bf16.msra.mxu0 0
      %2695 = vmatprep.subr.bf16.mxu0 0
      %2696 = vmatpush1.bf16.msra.mxu0 0
      %2697 = vmatprep.subr.bf16.mxu0 0
      %2698 = vmatpush1.bf16.msra.mxu0 0
      %2699 = vmatprep.mubr.bf16.mxu0 0
      %2700 = vmatmul.mubr.bf16.gmra.mrb[0].mxu0 %v2615
      %v2701 = vpop.f32.mrb[0].mxu0
      %v2702 = vadd.f32 0.0, %v2701
      %v2703 = vpop.f32.mrb[0].mxu0
      %v2704 = vpop.f32.mrb[0].mxu0
      %v2705 = vpop.f32.mrb[0].mxu0
      %2706 = vdwg.mxu0
      %v2707 = vadd.f32 %v2558, %v2661
      %v2708 = vadd.f32 %v2560, %v2663
      %v2709 = vadd.f32 %v2599, %v2702
      %s2710 = scalar_lea.vmem %s8, 12
      %v2711 = vld [vmem:[%s2710] sm:$0xf]
      %2712 = vrot.lane.b32.xlu0 %v2407, 110
      %v2713 = vpop.permute.xlu0 %2712
      %2714 = vrot.lane.b32.xlu0 %v2408, 110
      %v2715 = vpop.permute.xlu0 %2714
      %2716 = vrot.lane.b32.xlu0 %v2409, 110
      %v2717 = vpop.permute.xlu0 %2716
      %v2718 = vsel %vm1360, %v2713, %v2715
      %v2719 = vsel %vm1360, %v2715, %v2717
      %v2721 = vsel %vm635, %v2711, 0
      %v2724 = vsel %vm1061, %v2718, 0
      %v2727 = vsel %vm1061, %v2719, 0
      %v2730 = vsel %vm1061, %v2717, 0
      %2732 = vmatprep.subr.bf16.mxu0 %v2727
      %2733 = vmatpush1.bf16.msra.mxu0 %v2724
      %2734 = vmatprep.subr.bf16.mxu0 0
      %2735 = vmatpush1.bf16.msra.mxu0 0
      %2736 = vmatprep.subr.bf16.mxu0 0
      %2737 = vmatpush1.bf16.msra.mxu0 0
      %2738 = vmatprep.subr.bf16.mxu0 0
      %2739 = vmatpush1.bf16.msra.mxu0 0
      %2740 = vmatprep.subr.bf16.mxu0 0
      %2741 = vmatpush1.bf16.msra.mxu0 0
      %2742 = vmatprep.subr.bf16.mxu0 0
      %2743 = vmatpush1.bf16.msra.mxu0 0
      %2744 = vmatprep.subr.bf16.mxu0 0
      %2745 = vmatpush1.bf16.msra.mxu0 0
      %2746 = vmatprep.subr.bf16.mxu0 0
      %2747 = vmatpush1.bf16.msra.mxu0 0
      %2748 = vmatprep.subr.bf16.mxu0 0
      %2749 = vmatpush1.bf16.msra.mxu0 0
      %2750 = vmatprep.subr.bf16.mxu0 0
      %2751 = vmatpush1.bf16.msra.mxu0 0
      %2752 = vmatprep.subr.bf16.mxu0 0
      %2753 = vmatpush1.bf16.msra.mxu0 0
      %2754 = vmatprep.subr.bf16.mxu0 0
      %2755 = vmatpush1.bf16.msra.mxu0 0
      %2756 = vmatprep.subr.bf16.mxu0 0
      %2757 = vmatpush1.bf16.msra.mxu0 0
      %2758 = vmatprep.subr.bf16.mxu0 0
      %2759 = vmatpush1.bf16.msra.mxu0 0
      %2760 = vmatprep.subr.bf16.mxu0 0
      %2761 = vmatpush1.bf16.msra.mxu0 0
      %2762 = vmatprep.subr.bf16.mxu0 0
      %2763 = vmatpush1.bf16.msra.mxu0 0
      %2764 = vmatprep.mubr.bf16.mxu0 0
      %2765 = vmatmul.mubr.bf16.gmra.mrb[0].mxu0 %v2721
      %v2766 = vpop.f32.mrb[0].mxu0
      %v2767 = vadd.f32 0.0, %v2766
      %v2768 = vpop.f32.mrb[0].mxu0
      %v2769 = vadd.f32 0.0, %v2768
      %v2770 = vpop.f32.mrb[0].mxu0
      %v2771 = vpop.f32.mrb[0].mxu0
      %2772 = vdwg.mxu0
      %2773 = vmatprep.subr.bf16.mxu0 0
      %2774 = vmatpush1.bf16.msra.mxu0 %v2730
      %2775 = vmatprep.subr.bf16.mxu0 0
      %2776 = vmatpush1.bf16.msra.mxu0 0
      %2777 = vmatprep.subr.bf16.mxu0 0
      %2778 = vmatpush1.bf16.msra.mxu0 0
      %2779 = vmatprep.subr.bf16.mxu0 0
      %2780 = vmatpush1.bf16.msra.mxu0 0
      %2781 = vmatprep.subr.bf16.mxu0 0
      %2782 = vmatpush1.bf16.msra.mxu0 0
      %2783 = vmatprep.subr.bf16.mxu0 0
      %2784 = vmatpush1.bf16.msra.mxu0 0
      %2785 = vmatprep.subr.bf16.mxu0 0
      %2786 = vmatpush1.bf16.msra.mxu0 0
      %2787 = vmatprep.subr.bf16.mxu0 0
      %2788 = vmatpush1.bf16.msra.mxu0 0
      %2789 = vmatprep.subr.bf16.mxu0 0
      %2790 = vmatpush1.bf16.msra.mxu0 0
      %2791 = vmatprep.subr.bf16.mxu0 0
      %2792 = vmatpush1.bf16.msra.mxu0 0
      %2793 = vmatprep.subr.bf16.mxu0 0
      %2794 = vmatpush1.bf16.msra.mxu0 0
      %2795 = vmatprep.subr.bf16.mxu0 0
      %2796 = vmatpush1.bf16.msra.mxu0 0
      %2797 = vmatprep.subr.bf16.mxu0 0
      %2798 = vmatpush1.bf16.msra.mxu0 0
      %2799 = vmatprep.subr.bf16.mxu0 0
      %2800 = vmatpush1.bf16.msra.mxu0 0
      %2801 = vmatprep.subr.bf16.mxu0 0
      %2802 = vmatpush1.bf16.msra.mxu0 0
      %2803 = vmatprep.subr.bf16.mxu0 0
      %2804 = vmatpush1.bf16.msra.mxu0 0
      %2805 = vmatprep.mubr.bf16.mxu0 0
      %2806 = vmatmul.mubr.bf16.gmra.mrb[0].mxu0 %v2721
      %v2807 = vpop.f32.mrb[0].mxu0
      %v2808 = vadd.f32 0.0, %v2807
      %v2809 = vpop.f32.mrb[0].mxu0
      %v2810 = vpop.f32.mrb[0].mxu0
      %v2811 = vpop.f32.mrb[0].mxu0
      %2812 = vdwg.mxu0
      %v2813 = vadd.f32 %v2707, %v2767
      %v2814 = vadd.f32 %v2708, %v2769
      %v2815 = vadd.f32 %v2709, %v2808
      %s2816 = scalar_lea.vmem %s8, 16
      %v2817 = vld [vmem:[%s2816] sm:$0xf]
      %2818 = vrot.lane.b32.xlu0 %v2407, 109
      %v2819 = vpop.permute.xlu0 %2818
      %2820 = vrot.lane.b32.xlu0 %v2408, 109
      %v2821 = vpop.permute.xlu0 %2820
      %2822 = vrot.lane.b32.xlu0 %v2409, 109
      %v2823 = vpop.permute.xlu0 %2822
      %v2824 = vsel %vm1467, %v2819, %v2821
      %v2825 = vsel %vm1467, %v2821, %v2823
      %v2827 = vsel %vm635, %v2817, 0
      %v2830 = vsel %vm1061, %v2824, 0
      %v2833 = vsel %vm1061, %v2825, 0
      %v2836 = vsel %vm1061, %v2823, 0
      %2838 = vmatprep.subr.bf16.mxu0 %v2833
      %2839 = vmatpush1.bf16.msra.mxu0 %v2830
      %2840 = vmatprep.subr.bf16.mxu0 0
      %2841 = vmatpush1.bf16.msra.mxu0 0
      %2842 = vmatprep.subr.bf16.mxu0 0
      %2843 = vmatpush1.bf16.msra.mxu0 0
      %2844 = vmatprep.subr.bf16.mxu0 0
      %2845 = vmatpush1.bf16.msra.mxu0 0
      %2846 = vmatprep.subr.bf16.mxu0 0
      %2847 = vmatpush1.bf16.msra.mxu0 0
      %2848 = vmatprep.subr.bf16.mxu0 0
      %2849 = vmatpush1.bf16.msra.mxu0 0
      %2850 = vmatprep.subr.bf16.mxu0 0
      %2851 = vmatpush1.bf16.msra.mxu0 0
      %2852 = vmatprep.subr.bf16.mxu0 0
      %2853 = vmatpush1.bf16.msra.mxu0 0
      %2854 = vmatprep.subr.bf16.mxu0 0
      %2855 = vmatpush1.bf16.msra.mxu0 0
      %2856 = vmatprep.subr.bf16.mxu0 0
      %2857 = vmatpush1.bf16.msra.mxu0 0
      %2858 = vmatprep.subr.bf16.mxu0 0
      %2859 = vmatpush1.bf16.msra.mxu0 0
      %2860 = vmatprep.subr.bf16.mxu0 0
      %2861 = vmatpush1.bf16.msra.mxu0 0
      %2862 = vmatprep.subr.bf16.mxu0 0
      %2863 = vmatpush1.bf16.msra.mxu0 0
      %2864 = vmatprep.subr.bf16.mxu0 0
      %2865 = vmatpush1.bf16.msra.mxu0 0
      %2866 = vmatprep.subr.bf16.mxu0 0
      %2867 = vmatpush1.bf16.msra.mxu0 0
      %2868 = vmatprep.subr.bf16.mxu0 0
      %2869 = vmatpush1.bf16.msra.mxu0 0
      %2870 = vmatprep.mubr.bf16.mxu0 0
      %2871 = vmatmul.mubr.bf16.gmra.mrb[0].mxu0 %v2827
      %v2872 = vpop.f32.mrb[0].mxu0
      %v2873 = vadd.f32 0.0, %v2872
      %v2874 = vpop.f32.mrb[0].mxu0
      %v2875 = vadd.f32 0.0, %v2874
      %v2876 = vpop.f32.mrb[0].mxu0
      %v2877 = vpop.f32.mrb[0].mxu0
      %2878 = vdwg.mxu0
      %2879 = vmatprep.subr.bf16.mxu0 0
      %2880 = vmatpush1.bf16.msra.mxu0 %v2836
      %2881 = vmatprep.subr.bf16.mxu0 0
      %2882 = vmatpush1.bf16.msra.mxu0 0
      %2883 = vmatprep.subr.bf16.mxu0 0
      %2884 = vmatpush1.bf16.msra.mxu0 0
      %2885 = vmatprep.subr.bf16.mxu0 0
      %2886 = vmatpush1.bf16.msra.mxu0 0
      %2887 = vmatprep.subr.bf16.mxu0 0
      %2888 = vmatpush1.bf16.msra.mxu0 0
      %2889 = vmatprep.subr.bf16.mxu0 0
      %2890 = vmatpush1.bf16.msra.mxu0 0
      %2891 = vmatprep.subr.bf16.mxu0 0
      %2892 = vmatpush1.bf16.msra.mxu0 0
      %2893 = vmatprep.subr.bf16.mxu0 0
      %2894 = vmatpush1.bf16.msra.mxu0 0
      %2895 = vmatprep.subr.bf16.mxu0 0
      %2896 = vmatpush1.bf16.msra.mxu0 0
      %2897 = vmatprep.subr.bf16.mxu0 0
      %2898 = vmatpush1.bf16.msra.mxu0 0
      %2899 = vmatprep.subr.bf16.mxu0 0
      %2900 = vmatpush1.bf16.msra.mxu0 0
      %2901 = vmatprep.subr.bf16.mxu0 0
      %2902 = vmatpush1.bf16.msra.mxu0 0
      %2903 = vmatprep.subr.bf16.mxu0 0
      %2904 = vmatpush1.bf16.msra.mxu0 0
      %2905 = vmatprep.subr.bf16.mxu0 0
      %2906 = vmatpush1.bf16.msra.mxu0 0
      %2907 = vmatprep.subr.bf16.mxu0 0
      %2908 = vmatpush1.bf16.msra.mxu0 0
      %2909 = vmatprep.subr.bf16.mxu0 0
      %2910 = vmatpush1.bf16.msra.mxu0 0
      %2911 = vmatprep.mubr.bf16.mxu0 0
      %2912 = vmatmul.mubr.bf16.gmra.mrb[0].mxu0 %v2827
      %v2913 = vpop.f32.mrb[0].mxu0
      %v2914 = vadd.f32 0.0, %v2913
      %v2915 = vpop.f32.mrb[0].mxu0
      %v2916 = vpop.f32.mrb[0].mxu0
      %v2917 = vpop.f32.mrb[0].mxu0
      %2918 = vdwg.mxu0
      %v2919 = vadd.f32 %v2813, %v2873
      %v2920 = vadd.f32 %v2814, %v2875
      %v2921 = vadd.f32 %v2815, %v2914
      %s2922 = scalar_lea.vmem %s8, 20
      %v2923 = vld [vmem:[%s2922] sm:$0xf]
      %2924 = vrot.lane.b32.xlu0 %v2407, 108
      %v2925 = vpop.permute.xlu0 %2924
      %2926 = vrot.lane.b32.xlu0 %v2408, 108
      %v2927 = vpop.permute.xlu0 %2926
      %2928 = vrot.lane.b32.xlu0 %v2409, 108
      %v2929 = vpop.permute.xlu0 %2928
      %v2930 = vsel %vm1574, %v2925, %v2927
      %v2931 = vsel %vm1574, %v2927, %v2929
      %v2933 = vsel %vm635, %v2923, 0
      %v2936 = vsel %vm1061, %v2930, 0
      %v2939 = vsel %vm1061, %v2931, 0
      %v2942 = vsel %vm1061, %v2929, 0
      %2944 = vmatprep.subr.bf16.mxu0 %v2939
      %2945 = vmatpush1.bf16.msra.mxu0 %v2936
      %2946 = vmatprep.subr.bf16.mxu0 0
      %2947 = vmatpush1.bf16.msra.mxu0 0
      %2948 = vmatprep.subr.bf16.mxu0 0
      %2949 = vmatpush1.bf16.msra.mxu0 0
      %2950 = vmatprep.subr.bf16.mxu0 0
      %2951 = vmatpush1.bf16.msra.mxu0 0
      %2952 = vmatprep.subr.bf16.mxu0 0
      %2953 = vmatpush1.bf16.msra.mxu0 0
      %2954 = vmatprep.subr.bf16.mxu0 0
      %2955 = vmatpush1.bf16.msra.mxu0 0
      %2956 = vmatprep.subr.bf16.mxu0 0
      %2957 = vmatpush1.bf16.msra.mxu0 0
      %2958 = vmatprep.subr.bf16.mxu0 0
      %2959 = vmatpush1.bf16.msra.mxu0 0
      %2960 = vmatprep.subr.bf16.mxu0 0
      %2961 = vmatpush1.bf16.msra.mxu0 0
      %2962 = vmatprep.subr.bf16.mxu0 0
      %2963 = vmatpush1.bf16.msra.mxu0 0
      %2964 = vmatprep.subr.bf16.mxu0 0
      %2965 = vmatpush1.bf16.msra.mxu0 0
      %2966 = vmatprep.subr.bf16.mxu0 0
      %2967 = vmatpush1.bf16.msra.mxu0 0
      %2968 = vmatprep.subr.bf16.mxu0 0
      %2969 = vmatpush1.bf16.msra.mxu0 0
      %2970 = vmatprep.subr.bf16.mxu0 0
      %2971 = vmatpush1.bf16.msra.mxu0 0
      %2972 = vmatprep.subr.bf16.mxu0 0
      %2973 = vmatpush1.bf16.msra.mxu0 0
      %2974 = vmatprep.subr.bf16.mxu0 0
      %2975 = vmatpush1.bf16.msra.mxu0 0
      %2976 = vmatprep.mubr.bf16.mxu0 0
      %2977 = vmatmul.mubr.bf16.gmra.mrb[0].mxu0 %v2933
      %v2978 = vpop.f32.mrb[0].mxu0
      %v2979 = vadd.f32 0.0, %v2978
      %v2980 = vpop.f32.mrb[0].mxu0
      %v2981 = vadd.f32 0.0, %v2980
      %v2982 = vpop.f32.mrb[0].mxu0
      %v2983 = vpop.f32.mrb[0].mxu0
      %2984 = vdwg.mxu0
      %2985 = vmatprep.subr.bf16.mxu0 0
      %2986 = vmatpush1.bf16.msra.mxu0 %v2942
      %2987 = vmatprep.subr.bf16.mxu0 0
      %2988 = vmatpush1.bf16.msra.mxu0 0
      %2989 = vmatprep.subr.bf16.mxu0 0
      %2990 = vmatpush1.bf16.msra.mxu0 0
      %2991 = vmatprep.subr.bf16.mxu0 0
      %2992 = vmatpush1.bf16.msra.mxu0 0
      %2993 = vmatprep.subr.bf16.mxu0 0
      %2994 = vmatpush1.bf16.msra.mxu0 0
      %2995 = vmatprep.subr.bf16.mxu0 0
      %2996 = vmatpush1.bf16.msra.mxu0 0
      %2997 = vmatprep.subr.bf16.mxu0 0
      %2998 = vmatpush1.bf16.msra.mxu0 0
      %2999 = vmatprep.subr.bf16.mxu0 0
      %3000 = vmatpush1.bf16.msra.mxu0 0
      %3001 = vmatprep.subr.bf16.mxu0 0
      %3002 = vmatpush1.bf16.msra.mxu0 0
      %3003 = vmatprep.subr.bf16.mxu0 0
      %3004 = vmatpush1.bf16.msra.mxu0 0
      %3005 = vmatprep.subr.bf16.mxu0 0
      %3006 = vmatpush1.bf16.msra.mxu0 0
      %3007 = vmatprep.subr.bf16.mxu0 0
      %3008 = vmatpush1.bf16.msra.mxu0 0
      %3009 = vmatprep.subr.bf16.mxu0 0
      %3010 = vmatpush1.bf16.msra.mxu0 0
      %3011 = vmatprep.subr.bf16.mxu0 0
      %3012 = vmatpush1.bf16.msra.mxu0 0
      %3013 = vmatprep.subr.bf16.mxu0 0
      %3014 = vmatpush1.bf16.msra.mxu0 0
      %3015 = vmatprep.subr.bf16.mxu0 0
      %3016 = vmatpush1.bf16.msra.mxu0 0
      %3017 = vmatprep.mubr.bf16.mxu0 0
      %3018 = vmatmul.mubr.bf16.gmra.mrb[0].mxu0 %v2933
      %v3019 = vpop.f32.mrb[0].mxu0
      %v3020 = vadd.f32 0.0, %v3019
      %v3021 = vpop.f32.mrb[0].mxu0
      %v3022 = vpop.f32.mrb[0].mxu0
      %v3023 = vpop.f32.mrb[0].mxu0
      %3024 = vdwg.mxu0
      %v3025 = vadd.f32 %v2919, %v2979
      %v3026 = vadd.f32 %v2920, %v2981
      %v3027 = vadd.f32 %v2921, %v3020
      %s3028 = scalar_lea.vmem %s8, 24
      %v3029 = vld [vmem:[%s3028] sm:$0xf]
      %3030 = vrot.lane.b32.xlu0 %v2407, 92
      %v3031 = vpop.permute.xlu0 %3030
      %3032 = vrot.lane.b32.xlu0 %v2408, 92
      %v3033 = vpop.permute.xlu0 %3032
      %3034 = vrot.lane.b32.xlu0 %v2409, 92
      %v3035 = vpop.permute.xlu0 %3034
      %v3036 = vsel %vm1681, %v3031, %v3033
      %v3037 = vsel %vm1681, %v3033, %v3035
      %v3039 = vsel %vm635, %v3029, 0
      %v3042 = vsel %vm1061, %v3036, 0
      %v3045 = vsel %vm1061, %v3037, 0
      %v3048 = vsel %vm1061, %v3035, 0
      %3050 = vmatprep.subr.bf16.mxu0 %v3045
      %3051 = vmatpush1.bf16.msra.mxu0 %v3042
      %3052 = vmatprep.subr.bf16.mxu0 0
      %3053 = vmatpush1.bf16.msra.mxu0 0
      %3054 = vmatprep.subr.bf16.mxu0 0
      %3055 = vmatpush1.bf16.msra.mxu0 0
      %3056 = vmatprep.subr.bf16.mxu0 0
      %3057 = vmatpush1.bf16.msra.mxu0 0
      %3058 = vmatprep.subr.bf16.mxu0 0
      %3059 = vmatpush1.bf16.msra.mxu0 0
      %3060 = vmatprep.subr.bf16.mxu0 0
      %3061 = vmatpush1.bf16.msra.mxu0 0
      %3062 = vmatprep.subr.bf16.mxu0 0
      %3063 = vmatpush1.bf16.msra.mxu0 0
      %3064 = vmatprep.subr.bf16.mxu0 0
      %3065 = vmatpush1.bf16.msra.mxu0 0
      %3066 = vmatprep.subr.bf16.mxu0 0
      %3067 = vmatpush1.bf16.msra.mxu0 0
      %3068 = vmatprep.subr.bf16.mxu0 0
      %3069 = vmatpush1.bf16.msra.mxu0 0
      %3070 = vmatprep.subr.bf16.mxu0 0
      %3071 = vmatpush1.bf16.msra.mxu0 0
      %3072 = vmatprep.subr.bf16.mxu0 0
      %3073 = vmatpush1.bf16.msra.mxu0 0
      %3074 = vmatprep.subr.bf16.mxu0 0
      %3075 = vmatpush1.bf16.msra.mxu0 0
      %3076 = vmatprep.subr.bf16.mxu0 0
      %3077 = vmatpush1.bf16.msra.mxu0 0
      %3078 = vmatprep.subr.bf16.mxu0 0
      %3079 = vmatpush1.bf16.msra.mxu0 0
      %3080 = vmatprep.subr.bf16.mxu0 0
      %3081 = vmatpush1.bf16.msra.mxu0 0
      %3082 = vmatprep.mubr.bf16.mxu0 0
      %3083 = vmatmul.mubr.bf16.gmra.mrb[0].mxu0 %v3039
      %v3084 = vpop.f32.mrb[0].mxu0
      %v3085 = vadd.f32 0.0, %v3084
      %v3086 = vpop.f32.mrb[0].mxu0
      %v3087 = vadd.f32 0.0, %v3086
      %v3088 = vpop.f32.mrb[0].mxu0
      %v3089 = vpop.f32.mrb[0].mxu0
      %3090 = vdwg.mxu0
      %3091 = vmatprep.subr.bf16.mxu0 0
      %3092 = vmatpush1.bf16.msra.mxu0 %v3048
      %3093 = vmatprep.subr.bf16.mxu0 0
      %3094 = vmatpush1.bf16.msra.mxu0 0
      %3095 = vmatprep.subr.bf16.mxu0 0
      %3096 = vmatpush1.bf16.msra.mxu0 0
      %3097 = vmatprep.subr.bf16.mxu0 0
      %3098 = vmatpush1.bf16.msra.mxu0 0
      %3099 = vmatprep.subr.bf16.mxu0 0
      %3100 = vmatpush1.bf16.msra.mxu0 0
      %3101 = vmatprep.subr.bf16.mxu0 0
      %3102 = vmatpush1.bf16.msra.mxu0 0
      %3103 = vmatprep.subr.bf16.mxu0 0
      %3104 = vmatpush1.bf16.msra.mxu0 0
      %3105 = vmatprep.subr.bf16.mxu0 0
      %3106 = vmatpush1.bf16.msra.mxu0 0
      %3107 = vmatprep.subr.bf16.mxu0 0
      %3108 = vmatpush1.bf16.msra.mxu0 0
      %3109 = vmatprep.subr.bf16.mxu0 0
      %3110 = vmatpush1.bf16.msra.mxu0 0
      %3111 = vmatprep.subr.bf16.mxu0 0
      %3112 = vmatpush1.bf16.msra.mxu0 0
      %3113 = vmatprep.subr.bf16.mxu0 0
      %3114 = vmatpush1.bf16.msra.mxu0 0
      %3115 = vmatprep.subr.bf16.mxu0 0
      %3116 = vmatpush1.bf16.msra.mxu0 0
      %3117 = vmatprep.subr.bf16.mxu0 0
      %3118 = vmatpush1.bf16.msra.mxu0 0
      %3119 = vmatprep.subr.bf16.mxu0 0
      %3120 = vmatpush1.bf16.msra.mxu0 0
      %3121 = vmatprep.subr.bf16.mxu0 0
      %3122 = vmatpush1.bf16.msra.mxu0 0
      %3123 = vmatprep.mubr.bf16.mxu0 0
      %3124 = vmatmul.mubr.bf16.gmra.mrb[0].mxu0 %v3039
      %v3125 = vpop.f32.mrb[0].mxu0
      %v3126 = vadd.f32 0.0, %v3125
      %v3127 = vpop.f32.mrb[0].mxu0
      %v3128 = vpop.f32.mrb[0].mxu0
      %v3129 = vpop.f32.mrb[0].mxu0
      %3130 = vdwg.mxu0
      %v3131 = vadd.f32 %v3025, %v3085
      %v3132 = vadd.f32 %v3026, %v3087
      %v3133 = vadd.f32 %v3027, %v3126
      %s3134 = scalar_lea.vmem %s8, 28
      %v3135 = vld [vmem:[%s3134] sm:$0xf]
      %3136 = vrot.lane.b32.xlu0 %v2407, 91
      %v3137 = vpop.permute.xlu0 %3136
      %3138 = vrot.lane.b32.xlu0 %v2408, 91
      %v3139 = vpop.permute.xlu0 %3138
      %3140 = vrot.lane.b32.xlu0 %v2409, 91
      %v3141 = vpop.permute.xlu0 %3140
      %v3142 = vsel %vm1788, %v3137, %v3139
      %v3143 = vsel %vm1788, %v3139, %v3141
      %v3145 = vsel %vm635, %v3135, 0
      %v3148 = vsel %vm1061, %v3142, 0
      %v3151 = vsel %vm1061, %v3143, 0
      %v3154 = vsel %vm1061, %v3141, 0
      %3156 = vmatprep.subr.bf16.mxu0 %v3151
      %3157 = vmatpush1.bf16.msra.mxu0 %v3148
      %3158 = vmatprep.subr.bf16.mxu0 0
      %3159 = vmatpush1.bf16.msra.mxu0 0
      %3160 = vmatprep.subr.bf16.mxu0 0
      %3161 = vmatpush1.bf16.msra.mxu0 0
      %3162 = vmatprep.subr.bf16.mxu0 0
      %3163 = vmatpush1.bf16.msra.mxu0 0
      %3164 = vmatprep.subr.bf16.mxu0 0
      %3165 = vmatpush1.bf16.msra.mxu0 0
      %3166 = vmatprep.subr.bf16.mxu0 0
      %3167 = vmatpush1.bf16.msra.mxu0 0
      %3168 = vmatprep.subr.bf16.mxu0 0
      %3169 = vmatpush1.bf16.msra.mxu0 0
      %3170 = vmatprep.subr.bf16.mxu0 0
      %3171 = vmatpush1.bf16.msra.mxu0 0
      %3172 = vmatprep.subr.bf16.mxu0 0
      %3173 = vmatpush1.bf16.msra.mxu0 0
      %3174 = vmatprep.subr.bf16.mxu0 0
      %3175 = vmatpush1.bf16.msra.mxu0 0
      %3176 = vmatprep.subr.bf16.mxu0 0
      %3177 = vmatpush1.bf16.msra.mxu0 0
      %3178 = vmatprep.subr.bf16.mxu0 0
      %3179 = vmatpush1.bf16.msra.mxu0 0
      %3180 = vmatprep.subr.bf16.mxu0 0
      %3181 = vmatpush1.bf16.msra.mxu0 0
      %3182 = vmatprep.subr.bf16.mxu0 0
      %3183 = vmatpush1.bf16.msra.mxu0 0
      %3184 = vmatprep.subr.bf16.mxu0 0
      %3185 = vmatpush1.bf16.msra.mxu0 0
      %3186 = vmatprep.subr.bf16.mxu0 0
      %3187 = vmatpush1.bf16.msra.mxu0 0
      %3188 = vmatprep.mubr.bf16.mxu0 0
      %3189 = vmatmul.mubr.bf16.gmra.mrb[0].mxu0 %v3145
      %v3190 = vpop.f32.mrb[0].mxu0
      %v3191 = vadd.f32 0.0, %v3190
      %v3192 = vpop.f32.mrb[0].mxu0
      %v3193 = vadd.f32 0.0, %v3192
      %v3194 = vpop.f32.mrb[0].mxu0
      %v3195 = vpop.f32.mrb[0].mxu0
      %3196 = vdwg.mxu0
      %3197 = vmatprep.subr.bf16.mxu0 0
      %3198 = vmatpush1.bf16.msra.mxu0 %v3154
      %3199 = vmatprep.subr.bf16.mxu0 0
      %3200 = vmatpush1.bf16.msra.mxu0 0
      %3201 = vmatprep.subr.bf16.mxu0 0
      %3202 = vmatpush1.bf16.msra.mxu0 0
      %3203 = vmatprep.subr.bf16.mxu0 0
      %3204 = vmatpush1.bf16.msra.mxu0 0
      %3205 = vmatprep.subr.bf16.mxu0 0
      %3206 = vmatpush1.bf16.msra.mxu0 0
      %3207 = vmatprep.subr.bf16.mxu0 0
      %3208 = vmatpush1.bf16.msra.mxu0 0
      %3209 = vmatprep.subr.bf16.mxu0 0
      %3210 = vmatpush1.bf16.msra.mxu0 0
      %3211 = vmatprep.subr.bf16.mxu0 0
      %3212 = vmatpush1.bf16.msra.mxu0 0
      %3213 = vmatprep.subr.bf16.mxu0 0
      %3214 = vmatpush1.bf16.msra.mxu0 0
      %3215 = vmatprep.subr.bf16.mxu0 0
      %3216 = vmatpush1.bf16.msra.mxu0 0
      %3217 = vmatprep.subr.bf16.mxu0 0
      %3218 = vmatpush1.bf16.msra.mxu0 0
      %3219 = vmatprep.subr.bf16.mxu0 0
      %3220 = vmatpush1.bf16.msra.mxu0 0
      %3221 = vmatprep.subr.bf16.mxu0 0
      %3222 = vmatpush1.bf16.msra.mxu0 0
      %3223 = vmatprep.subr.bf16.mxu0 0
      %3224 = vmatpush1.bf16.msra.mxu0 0
      %3225 = vmatprep.subr.bf16.mxu0 0
      %3226 = vmatpush1.bf16.msra.mxu0 0
      %3227 = vmatprep.subr.bf16.mxu0 0
      %3228 = vmatpush1.bf16.msra.mxu0 0
      %3229 = vmatprep.mubr.bf16.mxu0 0
      %3230 = vmatmul.mubr.bf16.gmra.mrb[0].mxu0 %v3145
      %v3231 = vpop.f32.mrb[0].mxu0
      %v3232 = vadd.f32 0.0, %v3231
      %v3233 = vpop.f32.mrb[0].mxu0
      %v3234 = vpop.f32.mrb[0].mxu0
      %v3235 = vpop.f32.mrb[0].mxu0
      %3236 = vdwg.mxu0
      %v3237 = vadd.f32 %v3131, %v3191
      %v3238 = vadd.f32 %v3132, %v3193
      %v3239 = vadd.f32 %v3133, %v3232
      %s3240 = scalar_lea.vmem %s8, 32
      %v3241 = vld [vmem:[%s3240] sm:$0xf]
      %3242 = vrot.lane.b32.xlu0 %v2407, 90
      %v3243 = vpop.permute.xlu0 %3242
      %3244 = vrot.lane.b32.xlu0 %v2408, 90
      %v3245 = vpop.permute.xlu0 %3244
      %3246 = vrot.lane.b32.xlu0 %v2409, 90
      %v3247 = vpop.permute.xlu0 %3246
      %v3248 = vsel %vm1895, %v3243, %v3245
      %v3249 = vsel %vm1895, %v3245, %v3247
      %v3251 = vsel %vm635, %v3241, 0
      %v3254 = vsel %vm1061, %v3248, 0
      %v3257 = vsel %vm1061, %v3249, 0
      %v3260 = vsel %vm1061, %v3247, 0
      %3262 = vmatprep.subr.bf16.mxu0 %v3257
      %3263 = vmatpush1.bf16.msra.mxu0 %v3254
      %3264 = vmatprep.subr.bf16.mxu0 0
      %3265 = vmatpush1.bf16.msra.mxu0 0
      %3266 = vmatprep.subr.bf16.mxu0 0
      %3267 = vmatpush1.bf16.msra.mxu0 0
      %3268 = vmatprep.subr.bf16.mxu0 0
      %3269 = vmatpush1.bf16.msra.mxu0 0
      %3270 = vmatprep.subr.bf16.mxu0 0
      %3271 = vmatpush1.bf16.msra.mxu0 0
      %3272 = vmatprep.subr.bf16.mxu0 0
      %3273 = vmatpush1.bf16.msra.mxu0 0
      %3274 = vmatprep.subr.bf16.mxu0 0
      %3275 = vmatpush1.bf16.msra.mxu0 0
      %3276 = vmatprep.subr.bf16.mxu0 0
      %3277 = vmatpush1.bf16.msra.mxu0 0
      %3278 = vmatprep.subr.bf16.mxu0 0
      %3279 = vmatpush1.bf16.msra.mxu0 0
      %3280 = vmatprep.subr.bf16.mxu0 0
      %3281 = vmatpush1.bf16.msra.mxu0 0
      %3282 = vmatprep.subr.bf16.mxu0 0
      %3283 = vmatpush1.bf16.msra.mxu0 0
      %3284 = vmatprep.subr.bf16.mxu0 0
      %3285 = vmatpush1.bf16.msra.mxu0 0
      %3286 = vmatprep.subr.bf16.mxu0 0
      %3287 = vmatpush1.bf16.msra.mxu0 0
      %3288 = vmatprep.subr.bf16.mxu0 0
      %3289 = vmatpush1.bf16.msra.mxu0 0
      %3290 = vmatprep.subr.bf16.mxu0 0
      %3291 = vmatpush1.bf16.msra.mxu0 0
      %3292 = vmatprep.subr.bf16.mxu0 0
      %3293 = vmatpush1.bf16.msra.mxu0 0
      %3294 = vmatprep.mubr.bf16.mxu0 0
      %3295 = vmatmul.mubr.bf16.gmra.mrb[0].mxu0 %v3251
      %v3296 = vpop.f32.mrb[0].mxu0
      %v3297 = vadd.f32 0.0, %v3296
      %v3298 = vpop.f32.mrb[0].mxu0
      %v3299 = vadd.f32 0.0, %v3298
      %v3300 = vpop.f32.mrb[0].mxu0
      %v3301 = vpop.f32.mrb[0].mxu0
      %3302 = vdwg.mxu0
      %3303 = vmatprep.subr.bf16.mxu0 0
      %3304 = vmatpush1.bf16.msra.mxu0 %v3260
      %3305 = vmatprep.subr.bf16.mxu0 0
      %3306 = vmatpush1.bf16.msra.mxu0 0
      %3307 = vmatprep.subr.bf16.mxu0 0
      %3308 = vmatpush1.bf16.msra.mxu0 0
      %3309 = vmatprep.subr.bf16.mxu0 0
      %3310 = vmatpush1.bf16.msra.mxu0 0
      %3311 = vmatprep.subr.bf16.mxu0 0
      %3312 = vmatpush1.bf16.msra.mxu0 0
      %3313 = vmatprep.subr.bf16.mxu0 0
      %3314 = vmatpush1.bf16.msra.mxu0 0
      %3315 = vmatprep.subr.bf16.mxu0 0
      %3316 = vmatpush1.bf16.msra.mxu0 0
      %3317 = vmatprep.subr.bf16.mxu0 0
      %3318 = vmatpush1.bf16.msra.mxu0 0
      %3319 = vmatprep.subr.bf16.mxu0 0
      %3320 = vmatpush1.bf16.msra.mxu0 0
      %3321 = vmatprep.subr.bf16.mxu0 0
      %3322 = vmatpush1.bf16.msra.mxu0 0
      %3323 = vmatprep.subr.bf16.mxu0 0
      %3324 = vmatpush1.bf16.msra.mxu0 0
      %3325 = vmatprep.subr.bf16.mxu0 0
      %3326 = vmatpush1.bf16.msra.mxu0 0
      %3327 = vmatprep.subr.bf16.mxu0 0
      %3328 = vmatpush1.bf16.msra.mxu0 0
      %3329 = vmatprep.subr.bf16.mxu0 0
      %3330 = vmatpush1.bf16.msra.mxu0 0
      %3331 = vmatprep.subr.bf16.mxu0 0
      %3332 = vmatpush1.bf16.msra.mxu0 0
      %3333 = vmatprep.subr.bf16.mxu0 0
      %3334 = vmatpush1.bf16.msra.mxu0 0
      %3335 = vmatprep.mubr.bf16.mxu0 0
      %3336 = vmatmul.mubr.bf16.gmra.mrb[0].mxu0 %v3251
      %v3337 = vpop.f32.mrb[0].mxu0
      %v3338 = vadd.f32 0.0, %v3337
      %v3339 = vpop.f32.mrb[0].mxu0
      %v3340 = vpop.f32.mrb[0].mxu0
      %v3341 = vpop.f32.mrb[0].mxu0
      %3342 = vdwg.mxu0
      %v3343 = vadd.f32 %v3237, %v3297
      %v3344 = vadd.f32 %v3238, %v3299
      %v3345 = vadd.f32 %v3239, %v3338
      %v3346 = vld [vmem:[%s9] sm:$0xf]
      %v3347 = vpack.c.bf16 %v615, %v615
      %v3348 = vpack.c.bf16 %v616, %v616
      %v3349 = vpack.c.bf16 %v617, %v617
      %3350 = vset.pattern.permute.xlu0 2
      %3351 = vperm.xlu0 %3350, %v619
      %v3352 = vpop.permute.xlu0 %3351
      %v3355 = vsel %vm635, %v3346, 0
      %v3358 = vsel %vm1061, %v3347, 0
      %v3361 = vsel %vm1061, %v3348, 0
      %v3364 = vsel %vm1061, %v3349, 0
      %3366 = vmatprep.subr.bf16.mxu0 %v3361
      %3367 = vmatpush1.bf16.msra.mxu0 %v3358
      %3368 = vmatprep.subr.bf16.mxu0 0
      %3369 = vmatpush1.bf16.msra.mxu0 0
      %3370 = vmatprep.subr.bf16.mxu0 0
      %3371 = vmatpush1.bf16.msra.mxu0 0
      %3372 = vmatprep.subr.bf16.mxu0 0
      %3373 = vmatpush1.bf16.msra.mxu0 0
      %3374 = vmatprep.subr.bf16.mxu0 0
      %3375 = vmatpush1.bf16.msra.mxu0 0
      %3376 = vmatprep.subr.bf16.mxu0 0
      %3377 = vmatpush1.bf16.msra.mxu0 0
      %3378 = vmatprep.subr.bf16.mxu0 0
      %3379 = vmatpush1.bf16.msra.mxu0 0
      %3380 = vmatprep.subr.bf16.mxu0 0
      %3381 = vmatpush1.bf16.msra.mxu0 0
      %3382 = vmatprep.subr.bf16.mxu0 0
      %3383 = vmatpush1.bf16.msra.mxu0 0
      %3384 = vmatprep.subr.bf16.mxu0 0
      %3385 = vmatpush1.bf16.msra.mxu0 0
      %3386 = vmatprep.subr.bf16.mxu0 0
      %3387 = vmatpush1.bf16.msra.mxu0 0
      %3388 = vmatprep.subr.bf16.mxu0 0
      %3389 = vmatpush1.bf16.msra.mxu0 0
      %3390 = vmatprep.subr.bf16.mxu0 0
      %3391 = vmatpush1.bf16.msra.mxu0 0
      %3392 = vmatprep.subr.bf16.mxu0 0
      %3393 = vmatpush1.bf16.msra.mxu0 0
      %3394 = vmatprep.subr.bf16.mxu0 0
      %3395 = vmatpush1.bf16.msra.mxu0 0
      %3396 = vmatprep.subr.bf16.mxu0 0
      %3397 = vmatpush1.bf16.msra.mxu0 0
      %3398 = vmatprep.mubr.bf16.mxu0 0
      %3399 = vmatmul.mubr.bf16.gmra.mrb[0].mxu0 %v3355
      %v3400 = vpop.f32.mrb[0].mxu0
      %v3401 = vadd.f32 %v3352, %v3400
      %v3402 = vpop.f32.mrb[0].mxu0
      %v3403 = vadd.f32 %v3352, %v3402
      %v3404 = vpop.f32.mrb[0].mxu0
      %v3405 = vpop.f32.mrb[0].mxu0
      %3406 = vdwg.mxu0
      %3407 = vmatprep.subr.bf16.mxu0 0
      %3408 = vmatpush1.bf16.msra.mxu0 %v3364
      %3409 = vmatprep.subr.bf16.mxu0 0
      %3410 = vmatpush1.bf16.msra.mxu0 0
      %3411 = vmatprep.subr.bf16.mxu0 0
      %3412 = vmatpush1.bf16.msra.mxu0 0
      %3413 = vmatprep.subr.bf16.mxu0 0
      %3414 = vmatpush1.bf16.msra.mxu0 0
      %3415 = vmatprep.subr.bf16.mxu0 0
      %3416 = vmatpush1.bf16.msra.mxu0 0
      %3417 = vmatprep.subr.bf16.mxu0 0
      %3418 = vmatpush1.bf16.msra.mxu0 0
      %3419 = vmatprep.subr.bf16.mxu0 0
      %3420 = vmatpush1.bf16.msra.mxu0 0
      %3421 = vmatprep.subr.bf16.mxu0 0
      %3422 = vmatpush1.bf16.msra.mxu0 0
      %3423 = vmatprep.subr.bf16.mxu0 0
      %3424 = vmatpush1.bf16.msra.mxu0 0
      %3425 = vmatprep.subr.bf16.mxu0 0
      %3426 = vmatpush1.bf16.msra.mxu0 0
      %3427 = vmatprep.subr.bf16.mxu0 0
      %3428 = vmatpush1.bf16.msra.mxu0 0
      %3429 = vmatprep.subr.bf16.mxu0 0
      %3430 = vmatpush1.bf16.msra.mxu0 0
      %3431 = vmatprep.subr.bf16.mxu0 0
      %3432 = vmatpush1.bf16.msra.mxu0 0
      %3433 = vmatprep.subr.bf16.mxu0 0
      %3434 = vmatpush1.bf16.msra.mxu0 0
      %3435 = vmatprep.subr.bf16.mxu0 0
      %3436 = vmatpush1.bf16.msra.mxu0 0
      %3437 = vmatprep.subr.bf16.mxu0 0
      %3438 = vmatpush1.bf16.msra.mxu0 0
      %3439 = vmatprep.mubr.bf16.mxu0 0
      %3440 = vmatmul.mubr.bf16.gmra.mrb[0].mxu0 %v3355
      %v3441 = vpop.f32.mrb[0].mxu0
      %v3442 = vadd.f32 %v3352, %v3441
      %v3443 = vpop.f32.mrb[0].mxu0
      %v3444 = vpop.f32.mrb[0].mxu0
      %v3445 = vpop.f32.mrb[0].mxu0
      %3446 = vdwg.mxu0
      %v3447 = vadd.f32 %v3343, %v3401
      %v3448 = vadd.f32 %v3344, %v3403
      %v3449 = vadd.f32 %v3345, %v3442
      %v3450 = vmul.f32 %v3447, %v994
      %v3451 = vmul.f32 %v3448, %v998
      %v3452 = vmul.f32 %v3449, %v1002
      %v3453 = vld [vmem:[%s11] sm:$0xff]
      %v3454 = vld [vmem:[%s13] sm:$0xff]
      %v3455 = vld [vmem:[%s12] sm:$0x3]
      %v3456 = vadd.f32 %v3450, %v3451
      %v3457 = vsel %vm622, %v3452, 0.0
      %v3458 = vadd.f32 %v3456, %v3457
      %3459 = vadd.xlane.f32.xlu0 %v3458
      %v3460 = vpop.xlane.xlu0 %3459
      %v3461 = vmul.f32 %v3450, %v3450
      %v3462 = vmul.f32 %v3451, %v3451
      %v3463 = vmul.f32 %v3452, %v3452
      %v3464 = vadd.f32 %v3461, %v3462
      %v3465 = vsel %vm622, %v3463, 0.0
      %v3466 = vadd.f32 %v3464, %v3465
      %3467 = vadd.xlane.f32.xlu0 %v3466
      %v3468 = vpop.xlane.xlu0 %3467
      %v3470 = vsel %vm635, %v3455, 0
      %3472 = vmatprep.subr.mxu0 0.0
      %3473 = vmatpush1.msra.mxu0 %v3460
      %3474 = vmatprep.subr.mxu0 0.0
      %3475 = vmatpush1.msra.mxu0 0.0
      %3476 = vmatprep.subr.mxu0 0.0
      %3477 = vmatpush1.msra.mxu0 0.0
      %3478 = vmatprep.subr.mxu0 0.0
      %3479 = vmatpush1.msra.mxu0 0.0
      %3480 = vmatprep.subr.mxu0 0.0
      %3481 = vmatpush1.msra.mxu0 0.0
      %3482 = vmatprep.subr.mxu0 0.0
      %3483 = vmatpush1.msra.mxu0 0.0
      %3484 = vmatprep.subr.mxu0 0.0
      %3485 = vmatpush1.msra.mxu0 0.0
      %3486 = vmatprep.subr.mxu0 0.0
      %3487 = vmatpush1.msra.mxu0 0.0
      %3488 = vmatprep.subr.mxu0 0.0
      %3489 = vmatpush1.msra.mxu0 0.0
      %3490 = vmatprep.subr.mxu0 0.0
      %3491 = vmatpush1.msra.mxu0 0.0
      %3492 = vmatprep.subr.mxu0 0.0
      %3493 = vmatpush1.msra.mxu0 0.0
      %3494 = vmatprep.subr.mxu0 0.0
      %3495 = vmatpush1.msra.mxu0 0.0
      %3496 = vmatprep.subr.mxu0 0.0
      %3497 = vmatpush1.msra.mxu0 0.0
      %3498 = vmatprep.subr.mxu0 0.0
      %3499 = vmatpush1.msra.mxu0 0.0
      %3500 = vmatprep.subr.mxu0 0.0
      %3501 = vmatpush1.msra.mxu0 0.0
      %3502 = vmatprep.subr.mxu0 0.0
      %3503 = vmatpush1.msra.mxu0 0.0
      %3504 = vmatprep.subr.mxu0 0.0
      %3505 = vmatpush1.msra.mxu0 0.0
      %3506 = vmatprep.subr.mxu0 0.0
      %3507 = vmatpush1.msra.mxu0 0.0
      %3508 = vmatprep.subr.mxu0 0.0
      %3509 = vmatpush1.msra.mxu0 0.0
      %3510 = vmatprep.subr.mxu0 0.0
      %3511 = vmatpush1.msra.mxu0 0.0
      %3512 = vmatprep.subr.mxu0 0.0
      %3513 = vmatpush1.msra.mxu0 0.0
      %3514 = vmatprep.subr.mxu0 0.0
      %3515 = vmatpush1.msra.mxu0 0.0
      %3516 = vmatprep.subr.mxu0 0.0
      %3517 = vmatpush1.msra.mxu0 0.0
      %3518 = vmatprep.subr.mxu0 0.0
      %3519 = vmatpush1.msra.mxu0 0.0
      %3520 = vmatprep.subr.mxu0 0.0
      %3521 = vmatpush1.msra.mxu0 0.0
      %3522 = vmatprep.subr.mxu0 0.0
      %3523 = vmatpush1.msra.mxu0 0.0
      %3524 = vmatprep.subr.mxu0 0.0
      %3525 = vmatpush1.msra.mxu0 0.0
      %3526 = vmatprep.subr.mxu0 0.0
      %3527 = vmatpush1.msra.mxu0 0.0
      %3528 = vmatprep.subr.mxu0 0.0
      %3529 = vmatpush1.msra.mxu0 0.0
      %3530 = vmatprep.subr.mxu0 0.0
      %3531 = vmatpush1.msra.mxu0 0.0
      %3532 = vmatprep.subr.mxu0 0.0
      %3533 = vmatpush1.msra.mxu0 0.0
      %3534 = vmatprep.subr.mxu0 0.0
      %3535 = vmatpush1.msra.mxu0 0.0
      %3536 = vmatprep.mubr.f32.mxu0 0.0
      %3537 = vmatmul.mubr.f32.gmra.mrb[0].mxu0 %v3470
      %v3538 = vpop.f32.mrb[0].mxu0
      %v3539 = vadd.f32 0.0, %v3538
      %v3540 = vpop.f32.mrb[0].mxu0
      %3541 = vdwg.mxu0
      %3543 = vrot.lane.b32.xlu0 %v3453, 126
      %v3544 = vpop.permute.xlu0 %3543
      %v3545 = vsel %vm712, %v3544, 0
      %v3548 = vsel %vm715, %v3539, 0
      %3550 = vmatprep.subr.mxu0 0.0
      %3551 = vmatpush1.msra.mxu0 %v3548
      %3552 = vmatprep.subr.mxu0 0.0
      %3553 = vmatpush1.msra.mxu0 0.0
      %3554 = vmatprep.subr.mxu0 0.0
      %3555 = vmatpush1.msra.mxu0 0.0
      %3556 = vmatprep.subr.mxu0 0.0
      %3557 = vmatpush1.msra.mxu0 0.0
      %3558 = vmatprep.subr.mxu0 0.0
      %3559 = vmatpush1.msra.mxu0 0.0
      %3560 = vmatprep.subr.mxu0 0.0
      %3561 = vmatpush1.msra.mxu0 0.0
      %3562 = vmatprep.subr.mxu0 0.0
      %3563 = vmatpush1.msra.mxu0 0.0
      %3564 = vmatprep.subr.mxu0 0.0
      %3565 = vmatpush1.msra.mxu0 0.0
      %3566 = vmatprep.subr.mxu0 0.0
      %3567 = vmatpush1.msra.mxu0 0.0
      %3568 = vmatprep.subr.mxu0 0.0
      %3569 = vmatpush1.msra.mxu0 0.0
      %3570 = vmatprep.subr.mxu0 0.0
      %3571 = vmatpush1.msra.mxu0 0.0
      %3572 = vmatprep.subr.mxu0 0.0
      %3573 = vmatpush1.msra.mxu0 0.0
      %3574 = vmatprep.subr.mxu0 0.0
      %3575 = vmatpush1.msra.mxu0 0.0
      %3576 = vmatprep.subr.mxu0 0.0
      %3577 = vmatpush1.msra.mxu0 0.0
      %3578 = vmatprep.subr.mxu0 0.0
      %3579 = vmatpush1.msra.mxu0 0.0
      %3580 = vmatprep.subr.mxu0 0.0
      %3581 = vmatpush1.msra.mxu0 0.0
      %3582 = vmatprep.subr.mxu0 0.0
      %3583 = vmatpush1.msra.mxu0 0.0
      %3584 = vmatprep.subr.mxu0 0.0
      %3585 = vmatpush1.msra.mxu0 0.0
      %3586 = vmatprep.subr.mxu0 0.0
      %3587 = vmatpush1.msra.mxu0 0.0
      %3588 = vmatprep.subr.mxu0 0.0
      %3589 = vmatpush1.msra.mxu0 0.0
      %3590 = vmatprep.subr.mxu0 0.0
      %3591 = vmatpush1.msra.mxu0 0.0
      %3592 = vmatprep.subr.mxu0 0.0
      %3593 = vmatpush1.msra.mxu0 0.0
      %3594 = vmatprep.subr.mxu0 0.0
      %3595 = vmatpush1.msra.mxu0 0.0
      %3596 = vmatprep.subr.mxu0 0.0
      %3597 = vmatpush1.msra.mxu0 0.0
      %3598 = vmatprep.subr.mxu0 0.0
      %3599 = vmatpush1.msra.mxu0 0.0
      %3600 = vmatprep.subr.mxu0 0.0
      %3601 = vmatpush1.msra.mxu0 0.0
      %3602 = vmatprep.subr.mxu0 0.0
      %3603 = vmatpush1.msra.mxu0 0.0
      %3604 = vmatprep.subr.mxu0 0.0
      %3605 = vmatpush1.msra.mxu0 0.0
      %3606 = vmatprep.subr.mxu0 0.0
      %3607 = vmatpush1.msra.mxu0 0.0
      %3608 = vmatprep.subr.mxu0 0.0
      %3609 = vmatpush1.msra.mxu0 0.0
      %3610 = vmatprep.subr.mxu0 0.0
      %3611 = vmatpush1.msra.mxu0 0.0
      %3612 = vmatprep.subr.mxu0 0.0
      %3613 = vmatpush1.msra.mxu0 0.0
      %3614 = vmatprep.mubr.f32.mxu0 0.0
      %3615 = vmatmul.mubr.f32.gmra.mrb[0].mxu0 %v3545
      %v3616 = vpop.f32.mrb[0].mxu0
      %v3617 = vadd.f32 0.0, %v3616
      %v3618 = vpop.f32.mrb[0].mxu0
      %3619 = vdwg.mxu0
      %v3620 = vmul.f32 %v3617, 0.0009765625
      %3621 = vmatprep.subr.mxu0 0.0
      %3622 = vmatpush1.msra.mxu0 %v3468
      %3623 = vmatprep.subr.mxu0 0.0
      %3624 = vmatpush1.msra.mxu0 0.0
      %3625 = vmatprep.subr.mxu0 0.0
      %3626 = vmatpush1.msra.mxu0 0.0
      %3627 = vmatprep.subr.mxu0 0.0
      %3628 = vmatpush1.msra.mxu0 0.0
      %3629 = vmatprep.subr.mxu0 0.0
      %3630 = vmatpush1.msra.mxu0 0.0
      %3631 = vmatprep.subr.mxu0 0.0
      %3632 = vmatpush1.msra.mxu0 0.0
      %3633 = vmatprep.subr.mxu0 0.0
      %3634 = vmatpush1.msra.mxu0 0.0
      %3635 = vmatprep.subr.mxu0 0.0
      %3636 = vmatpush1.msra.mxu0 0.0
      %3637 = vmatprep.subr.mxu0 0.0
      %3638 = vmatpush1.msra.mxu0 0.0
      %3639 = vmatprep.subr.mxu0 0.0
      %3640 = vmatpush1.msra.mxu0 0.0
      %3641 = vmatprep.subr.mxu0 0.0
      %3642 = vmatpush1.msra.mxu0 0.0
      %3643 = vmatprep.subr.mxu0 0.0
      %3644 = vmatpush1.msra.mxu0 0.0
      %3645 = vmatprep.subr.mxu0 0.0
      %3646 = vmatpush1.msra.mxu0 0.0
      %3647 = vmatprep.subr.mxu0 0.0
      %3648 = vmatpush1.msra.mxu0 0.0
      %3649 = vmatprep.subr.mxu0 0.0
      %3650 = vmatpush1.msra.mxu0 0.0
      %3651 = vmatprep.subr.mxu0 0.0
      %3652 = vmatpush1.msra.mxu0 0.0
      %3653 = vmatprep.subr.mxu0 0.0
      %3654 = vmatpush1.msra.mxu0 0.0
      %3655 = vmatprep.subr.mxu0 0.0
      %3656 = vmatpush1.msra.mxu0 0.0
      %3657 = vmatprep.subr.mxu0 0.0
      %3658 = vmatpush1.msra.mxu0 0.0
      %3659 = vmatprep.subr.mxu0 0.0
      %3660 = vmatpush1.msra.mxu0 0.0
      %3661 = vmatprep.subr.mxu0 0.0
      %3662 = vmatpush1.msra.mxu0 0.0
      %3663 = vmatprep.subr.mxu0 0.0
      %3664 = vmatpush1.msra.mxu0 0.0
      %3665 = vmatprep.subr.mxu0 0.0
      %3666 = vmatpush1.msra.mxu0 0.0
      %3667 = vmatprep.subr.mxu0 0.0
      %3668 = vmatpush1.msra.mxu0 0.0
      %3669 = vmatprep.subr.mxu0 0.0
      %3670 = vmatpush1.msra.mxu0 0.0
      %3671 = vmatprep.subr.mxu0 0.0
      %3672 = vmatpush1.msra.mxu0 0.0
      %3673 = vmatprep.subr.mxu0 0.0
      %3674 = vmatpush1.msra.mxu0 0.0
      %3675 = vmatprep.subr.mxu0 0.0
      %3676 = vmatpush1.msra.mxu0 0.0
      %3677 = vmatprep.subr.mxu0 0.0
      %3678 = vmatpush1.msra.mxu0 0.0
      %3679 = vmatprep.subr.mxu0 0.0
      %3680 = vmatpush1.msra.mxu0 0.0
      %3681 = vmatprep.subr.mxu0 0.0
      %3682 = vmatpush1.msra.mxu0 0.0
      %3683 = vmatprep.subr.mxu0 0.0
      %3684 = vmatpush1.msra.mxu0 0.0
      %3685 = vmatprep.mubr.f32.mxu0 0.0
      %3686 = vmatmul.mubr.f32.gmra.mrb[0].mxu0 %v3470
      %v3687 = vpop.f32.mrb[0].mxu0
      %v3688 = vadd.f32 0.0, %v3687
      %v3689 = vpop.f32.mrb[0].mxu0
      %3690 = vdwg.mxu0
      %v3692 = vsel %vm715, %v3688, 0
      %3694 = vmatprep.subr.mxu0 0.0
      %3695 = vmatpush1.msra.mxu0 %v3692
      %3696 = vmatprep.subr.mxu0 0.0
      %3697 = vmatpush1.msra.mxu0 0.0
      %3698 = vmatprep.subr.mxu0 0.0
      %3699 = vmatpush1.msra.mxu0 0.0
      %3700 = vmatprep.subr.mxu0 0.0
      %3701 = vmatpush1.msra.mxu0 0.0
      %3702 = vmatprep.subr.mxu0 0.0
      %3703 = vmatpush1.msra.mxu0 0.0
      %3704 = vmatprep.subr.mxu0 0.0
      %3705 = vmatpush1.msra.mxu0 0.0
      %3706 = vmatprep.subr.mxu0 0.0
      %3707 = vmatpush1.msra.mxu0 0.0
      %3708 = vmatprep.subr.mxu0 0.0
      %3709 = vmatpush1.msra.mxu0 0.0
      %3710 = vmatprep.subr.mxu0 0.0
      %3711 = vmatpush1.msra.mxu0 0.0
      %3712 = vmatprep.subr.mxu0 0.0
      %3713 = vmatpush1.msra.mxu0 0.0
      %3714 = vmatprep.subr.mxu0 0.0
      %3715 = vmatpush1.msra.mxu0 0.0
      %3716 = vmatprep.subr.mxu0 0.0
      %3717 = vmatpush1.msra.mxu0 0.0
      %3718 = vmatprep.subr.mxu0 0.0
      %3719 = vmatpush1.msra.mxu0 0.0
      %3720 = vmatprep.subr.mxu0 0.0
      %3721 = vmatpush1.msra.mxu0 0.0
      %3722 = vmatprep.subr.mxu0 0.0
      %3723 = vmatpush1.msra.mxu0 0.0
      %3724 = vmatprep.subr.mxu0 0.0
      %3725 = vmatpush1.msra.mxu0 0.0
      %3726 = vmatprep.subr.mxu0 0.0
      %3727 = vmatpush1.msra.mxu0 0.0
      %3728 = vmatprep.subr.mxu0 0.0
      %3729 = vmatpush1.msra.mxu0 0.0
      %3730 = vmatprep.subr.mxu0 0.0
      %3731 = vmatpush1.msra.mxu0 0.0
      %3732 = vmatprep.subr.mxu0 0.0
      %3733 = vmatpush1.msra.mxu0 0.0
      %3734 = vmatprep.subr.mxu0 0.0
      %3735 = vmatpush1.msra.mxu0 0.0
      %3736 = vmatprep.subr.mxu0 0.0
      %3737 = vmatpush1.msra.mxu0 0.0
      %3738 = vmatprep.subr.mxu0 0.0
      %3739 = vmatpush1.msra.mxu0 0.0
      %3740 = vmatprep.subr.mxu0 0.0
      %3741 = vmatpush1.msra.mxu0 0.0
      %3742 = vmatprep.subr.mxu0 0.0
      %3743 = vmatpush1.msra.mxu0 0.0
      %3744 = vmatprep.subr.mxu0 0.0
      %3745 = vmatpush1.msra.mxu0 0.0
      %3746 = vmatprep.subr.mxu0 0.0
      %3747 = vmatpush1.msra.mxu0 0.0
      %3748 = vmatprep.subr.mxu0 0.0
      %3749 = vmatpush1.msra.mxu0 0.0
      %3750 = vmatprep.subr.mxu0 0.0
      %3751 = vmatpush1.msra.mxu0 0.0
      %3752 = vmatprep.subr.mxu0 0.0
      %3753 = vmatpush1.msra.mxu0 0.0
      %3754 = vmatprep.subr.mxu0 0.0
      %3755 = vmatpush1.msra.mxu0 0.0
      %3756 = vmatprep.subr.mxu0 0.0
      %3757 = vmatpush1.msra.mxu0 0.0
      %3758 = vmatprep.mubr.f32.mxu0 0.0
      %3759 = vmatmul.mubr.f32.gmra.mrb[0].mxu0 %v3545
      %v3760 = vpop.f32.mrb[0].mxu0
      %v3761 = vadd.f32 0.0, %v3760
      %v3762 = vpop.f32.mrb[0].mxu0
      %3763 = vdwg.mxu0
      %v3764 = vmul.f32 %v3761, 0.0009765625
      %v3765 = vmul.f32 %v3620, %v3620
      %v3766 = vsub.f32 %v3764, %v3765
      %v3767 = vmax.f32 %v3766, 0.0
      %3769 = vset.pattern.permute.xlu0 0
      %3770 = vperm.xlu0 %3769, %v3620
      %v3771 = vpop.permute.xlu0 %3770
      %v3773 = vsub.f32 %v3450, %v3771
      %v3774 = vsub.f32 %v3451, %v3771
      %v3775 = vsub.f32 %v3452, %v3771
      %v3776 = vadd.f32 %v3767, 1e-05
      %v3777 = vrsqrt.pop %v3776
      %3779 = vset.pattern.permute.xlu0 0
      %3780 = vperm.xlu0 %3779, %v3777
      %v3781 = vpop.permute.xlu0 %3780
      %v3783 = vmul.f32 %v3773, %v3781
      %v3784 = vmul.f32 %v3774, %v3781
      %v3785 = vmul.f32 %v3775, %v3781
      %3786 = vset.pattern.permute.xlu0 0
      %3787 = vperm.xlu0 %3786, %v3453
      %v3788 = vpop.permute.xlu0 %3787
      %v3790 = vmul.f32 %v3783, %v3788
      %v3791 = vmul.f32 %v3784, %v3788
      %v3792 = vmul.f32 %v3785, %v3788
      %3793 = vset.pattern.permute.xlu0 1
      %3794 = vperm.xlu0 %3793, %v3453
      %v3795 = vpop.permute.xlu0 %3794
      %v3797 = vadd.f32 %v3790, %v3795
      %v3798 = vadd.f32 %v3791, %v3795
      %v3799 = vadd.f32 %v3792, %v3795
      %v3800 = vxor.u32 %v3797, 2147483648
      %v3801 = vxor.u32 %v3798, 2147483648
      %v3802 = vxor.u32 %v3799, 2147483648
      %v3803 = vmul.f32 %v3800, 1.442695
      %v3804 = vpow.pop %v3803
      %v3805 = vmul.f32 %v3801, 1.442695
      %v3806 = vpow.pop %v3805
      %v3807 = vmul.f32 %v3802, 1.442695
      %v3808 = vpow.pop %v3807
      %v3809 = vadd.f32 %v3804, 1.0
      %v3810 = vadd.f32 %v3806, 1.0
      %v3811 = vadd.f32 %v3808, 1.0
      %v3812 = vrcp.pop %v3809
      %v3813 = vmul.f32 1.0, %v3812
      %v3814 = vrcp.pop %v3810
      %v3815 = vmul.f32 1.0, %v3814
      %v3816 = vrcp.pop %v3811
      %v3817 = vmul.f32 1.0, %v3816
      %v3818 = vmul.f32 %v3797, %v3813
      %v3819 = vmul.f32 %v3798, %v3815
      %v3820 = vmul.f32 %v3799, %v3817
      %v3821 = vmul.f32 %v3818, %v994
      %v3822 = vmul.f32 %v3819, %v998
      %v3823 = vmul.f32 %v3820, %v1002
      %v3824 = vpack.c.bf16 %v3821, %v3821
      %v3825 = vpack.c.bf16 %v3822, %v3822
      %v3826 = vpack.c.bf16 %v3823, %v3823
      %v3830 = vunpack.c.l.b16 %v3824
      %v3831 = vunpack.c.l.b16 %v3825
      %v3832 = vunpack.c.l.b16 %v3826
      %v3833 = vpack.c.b16 %v3831, %v3830
      %v3834 = vpack.c.b16 %v3832, %v3832
      %3835 = vrot.lane.b32.xlu0 %v3833, 19
      %v3836 = vpop.permute.xlu0 %3835
      %3837 = vrot.lane.b32.xlu0 %v3834, 19
      %v3838 = vpop.permute.xlu0 %3837
      %v3839 = vrot.slane %v3836, 4
      %v3840 = vsel %vm1025, %v3839, %v3836
      %v3841 = vsel %vm1025, %v3839, %v3838
      %3844 = vst.msk [vmem:[#allocation2] sm:$0xff] %vm1032, %v3840
      %3845 = vst.msk [vmem:[#allocation2 + $0x8] sm:$0xf] %vm1034, %v3841
      %v3846 = vld [vmem:[%s15] sm:$0xf]
      %v3847 = vld [vmem:[#allocation2] sm:$0xff]
      %v3848 = vld [vmem:[#allocation2 + $0x8] sm:$0xf]
      %s3849 = scalar_lea.vmem %s15, 4
      %v3850 = vld [vmem:[%s3849] sm:$0xf]
      %v3853 = vunpack.c.l.b16 %v3847
      %v3854 = vunpack.c.h.b16 %v3847
      %v3855 = vunpack.c.l.b16 %v3848
      %v3856 = vpack.c.b16 %v3853, %v3853
      %v3857 = vpack.c.b16 %v3854, %v3854
      %v3858 = vpack.c.b16 %v3855, %v3855
      %3859 = vrot.lane.b32.xlu0 %v3856, 127
      %v3860 = vpop.permute.xlu0 %3859
      %3861 = vrot.lane.b32.xlu0 %v3857, 127
      %v3862 = vpop.permute.xlu0 %3861
      %3863 = vrot.lane.b32.xlu0 %v3858, 127
      %v3864 = vpop.permute.xlu0 %3863
      %v3865 = vsel %vm1055, %v3860, %v3862
      %v3866 = vsel %vm1055, %v3862, %v3864
      %v3868 = vsel %vm635, %v3850, 0
      %v3871 = vsel %vm1061, %v3865, 0
      %v3874 = vsel %vm1061, %v3866, 0
      %v3877 = vsel %vm1061, %v3864, 0
      %3879 = vmatprep.subr.bf16.mxu0 %v3874
      %3880 = vmatpush1.bf16.msra.mxu0 %v3871
      %3881 = vmatprep.subr.bf16.mxu0 0
      %3882 = vmatpush1.bf16.msra.mxu0 0
      %3883 = vmatprep.subr.bf16.mxu0 0
      %3884 = vmatpush1.bf16.msra.mxu0 0
      %3885 = vmatprep.subr.bf16.mxu0 0
      %3886 = vmatpush1.bf16.msra.mxu0 0
      %3887 = vmatprep.subr.bf16.mxu0 0
      %3888 = vmatpush1.bf16.msra.mxu0 0
      %3889 = vmatprep.subr.bf16.mxu0 0
      %3890 = vmatpush1.bf16.msra.mxu0 0
      %3891 = vmatprep.subr.bf16.mxu0 0
      %3892 = vmatpush1.bf16.msra.mxu0 0
      %3893 = vmatprep.subr.bf16.mxu0 0
      %3894 = vmatpush1.bf16.msra.mxu0 0
      %3895 = vmatprep.subr.bf16.mxu0 0
      %3896 = vmatpush1.bf16.msra.mxu0 0
      %3897 = vmatprep.subr.bf16.mxu0 0
      %3898 = vmatpush1.bf16.msra.mxu0 0
      %3899 = vmatprep.subr.bf16.mxu0 0
      %3900 = vmatpush1.bf16.msra.mxu0 0
      %3901 = vmatprep.subr.bf16.mxu0 0
      %3902 = vmatpush1.bf16.msra.mxu0 0
      %3903 = vmatprep.subr.bf16.mxu0 0
      %3904 = vmatpush1.bf16.msra.mxu0 0
      %3905 = vmatprep.subr.bf16.mxu0 0
      %3906 = vmatpush1.bf16.msra.mxu0 0
      %3907 = vmatprep.subr.bf16.mxu0 0
      %3908 = vmatpush1.bf16.msra.mxu0 0
      %3909 = vmatprep.subr.bf16.mxu0 0
      %3910 = vmatpush1.bf16.msra.mxu0 0
      %3911 = vmatprep.mubr.bf16.mxu0 0
      %3912 = vmatmul.mubr.bf16.gmra.mrb[0].mxu0 %v3868
      %v3913 = vpop.f32.mrb[0].mxu0
      %v3914 = vadd.f32 0.0, %v3913
      %v3915 = vpop.f32.mrb[0].mxu0
      %v3916 = vadd.f32 0.0, %v3915
      %v3917 = vpop.f32.mrb[0].mxu0
      %v3918 = vpop.f32.mrb[0].mxu0
      %3919 = vdwg.mxu0
      %3920 = vmatprep.subr.bf16.mxu0 0
      %3921 = vmatpush1.bf16.msra.mxu0 %v3877
      %3922 = vmatprep.subr.bf16.mxu0 0
      %3923 = vmatpush1.bf16.msra.mxu0 0
      %3924 = vmatprep.subr.bf16.mxu0 0
      %3925 = vmatpush1.bf16.msra.mxu0 0
      %3926 = vmatprep.subr.bf16.mxu0 0
      %3927 = vmatpush1.bf16.msra.mxu0 0
      %3928 = vmatprep.subr.bf16.mxu0 0
      %3929 = vmatpush1.bf16.msra.mxu0 0
      %3930 = vmatprep.subr.bf16.mxu0 0
      %3931 = vmatpush1.bf16.msra.mxu0 0
      %3932 = vmatprep.subr.bf16.mxu0 0
      %3933 = vmatpush1.bf16.msra.mxu0 0
      %3934 = vmatprep.subr.bf16.mxu0 0
      %3935 = vmatpush1.bf16.msra.mxu0 0
      %3936 = vmatprep.subr.bf16.mxu0 0
      %3937 = vmatpush1.bf16.msra.mxu0 0
      %3938 = vmatprep.subr.bf16.mxu0 0
      %3939 = vmatpush1.bf16.msra.mxu0 0
      %3940 = vmatprep.subr.bf16.mxu0 0
      %3941 = vmatpush1.bf16.msra.mxu0 0
      %3942 = vmatprep.subr.bf16.mxu0 0
      %3943 = vmatpush1.bf16.msra.mxu0 0
      %3944 = vmatprep.subr.bf16.mxu0 0
      %3945 = vmatpush1.bf16.msra.mxu0 0
      %3946 = vmatprep.subr.bf16.mxu0 0
      %3947 = vmatpush1.bf16.msra.mxu0 0
      %3948 = vmatprep.subr.bf16.mxu0 0
      %3949 = vmatpush1.bf16.msra.mxu0 0
      %3950 = vmatprep.subr.bf16.mxu0 0
      %3951 = vmatpush1.bf16.msra.mxu0 0
      %3952 = vmatprep.mubr.bf16.mxu0 0
      %3953 = vmatmul.mubr.bf16.gmra.mrb[0].mxu0 %v3868
      %v3954 = vpop.f32.mrb[0].mxu0
      %v3955 = vadd.f32 0.0, %v3954
      %v3956 = vpop.f32.mrb[0].mxu0
      %v3957 = vpop.f32.mrb[0].mxu0
      %v3958 = vpop.f32.mrb[0].mxu0
      %3959 = vdwg.mxu0
      %v3961 = vsel %vm635, %v3846, 0
      %v3964 = vsel %vm1061, %v3856, 0
      %v3967 = vsel %vm1061, %v3857, 0
      %v3970 = vsel %vm1061, %v3858, 0
      %3972 = vmatprep.subr.bf16.mxu0 %v3967
      %3973 = vmatpush1.bf16.msra.mxu0 %v3964
      %3974 = vmatprep.subr.bf16.mxu0 0
      %3975 = vmatpush1.bf16.msra.mxu0 0
      %3976 = vmatprep.subr.bf16.mxu0 0
      %3977 = vmatpush1.bf16.msra.mxu0 0
      %3978 = vmatprep.subr.bf16.mxu0 0
      %3979 = vmatpush1.bf16.msra.mxu0 0
      %3980 = vmatprep.subr.bf16.mxu0 0
      %3981 = vmatpush1.bf16.msra.mxu0 0
      %3982 = vmatprep.subr.bf16.mxu0 0
      %3983 = vmatpush1.bf16.msra.mxu0 0
      %3984 = vmatprep.subr.bf16.mxu0 0
      %3985 = vmatpush1.bf16.msra.mxu0 0
      %3986 = vmatprep.subr.bf16.mxu0 0
      %3987 = vmatpush1.bf16.msra.mxu0 0
      %3988 = vmatprep.subr.bf16.mxu0 0
      %3989 = vmatpush1.bf16.msra.mxu0 0
      %3990 = vmatprep.subr.bf16.mxu0 0
      %3991 = vmatpush1.bf16.msra.mxu0 0
      %3992 = vmatprep.subr.bf16.mxu0 0
      %3993 = vmatpush1.bf16.msra.mxu0 0
      %3994 = vmatprep.subr.bf16.mxu0 0
      %3995 = vmatpush1.bf16.msra.mxu0 0
      %3996 = vmatprep.subr.bf16.mxu0 0
      %3997 = vmatpush1.bf16.msra.mxu0 0
      %3998 = vmatprep.subr.bf16.mxu0 0
      %3999 = vmatpush1.bf16.msra.mxu0 0
      %4000 = vmatprep.subr.bf16.mxu0 0
      %4001 = vmatpush1.bf16.msra.mxu0 0
      %4002 = vmatprep.subr.bf16.mxu0 0
      %4003 = vmatpush1.bf16.msra.mxu0 0
      %4004 = vmatprep.mubr.bf16.mxu0 0
      %4005 = vmatmul.mubr.bf16.gmra.mrb[0].mxu0 %v3961
      %v4006 = vpop.f32.mrb[0].mxu0
      %v4007 = vadd.f32 %v3914, %v4006
      %v4008 = vpop.f32.mrb[0].mxu0
      %v4009 = vadd.f32 %v3916, %v4008
      %v4010 = vpop.f32.mrb[0].mxu0
      %v4011 = vpop.f32.mrb[0].mxu0
      %4012 = vdwg.mxu0
      %4013 = vmatprep.subr.bf16.mxu0 0
      %4014 = vmatpush1.bf16.msra.mxu0 %v3970
      %4015 = vmatprep.subr.bf16.mxu0 0
      %4016 = vmatpush1.bf16.msra.mxu0 0
      %4017 = vmatprep.subr.bf16.mxu0 0
      %4018 = vmatpush1.bf16.msra.mxu0 0
      %4019 = vmatprep.subr.bf16.mxu0 0
      %4020 = vmatpush1.bf16.msra.mxu0 0
      %4021 = vmatprep.subr.bf16.mxu0 0
      %4022 = vmatpush1.bf16.msra.mxu0 0
      %4023 = vmatprep.subr.bf16.mxu0 0
      %4024 = vmatpush1.bf16.msra.mxu0 0
      %4025 = vmatprep.subr.bf16.mxu0 0
      %4026 = vmatpush1.bf16.msra.mxu0 0
      %4027 = vmatprep.subr.bf16.mxu0 0
      %4028 = vmatpush1.bf16.msra.mxu0 0
      %4029 = vmatprep.subr.bf16.mxu0 0
      %4030 = vmatpush1.bf16.msra.mxu0 0
      %4031 = vmatprep.subr.bf16.mxu0 0
      %4032 = vmatpush1.bf16.msra.mxu0 0
      %4033 = vmatprep.subr.bf16.mxu0 0
      %4034 = vmatpush1.bf16.msra.mxu0 0
      %4035 = vmatprep.subr.bf16.mxu0 0
      %4036 = vmatpush1.bf16.msra.mxu0 0
      %4037 = vmatprep.subr.bf16.mxu0 0
      %4038 = vmatpush1.bf16.msra.mxu0 0
      %4039 = vmatprep.subr.bf16.mxu0 0
      %4040 = vmatpush1.bf16.msra.mxu0 0
      %4041 = vmatprep.subr.bf16.mxu0 0
      %4042 = vmatpush1.bf16.msra.mxu0 0
      %4043 = vmatprep.subr.bf16.mxu0 0
      %4044 = vmatpush1.bf16.msra.mxu0 0
      %4045 = vmatprep.mubr.bf16.mxu0 0
      %4046 = vmatmul.mubr.bf16.gmra.mrb[0].mxu0 %v3961
      %v4047 = vpop.f32.mrb[0].mxu0
      %v4048 = vadd.f32 %v3955, %v4047
      %v4049 = vpop.f32.mrb[0].mxu0
      %v4050 = vpop.f32.mrb[0].mxu0
      %v4051 = vpop.f32.mrb[0].mxu0
      %4052 = vdwg.mxu0
      %s4053 = scalar_lea.vmem %s15, 8
      %v4054 = vld [vmem:[%s4053] sm:$0xf]
      %4055 = vrot.lane.b32.xlu0 %v3856, 126
      %v4056 = vpop.permute.xlu0 %4055
      %4057 = vrot.lane.b32.xlu0 %v3857, 126
      %v4058 = vpop.permute.xlu0 %4057
      %4059 = vrot.lane.b32.xlu0 %v3858, 126
      %v4060 = vpop.permute.xlu0 %4059
      %v4061 = vsel %vm1253, %v4056, %v4058
      %v4062 = vsel %vm1253, %v4058, %v4060
      %v4064 = vsel %vm635, %v4054, 0
      %v4067 = vsel %vm1061, %v4061, 0
      %v4070 = vsel %vm1061, %v4062, 0
      %v4073 = vsel %vm1061, %v4060, 0
      %4075 = vmatprep.subr.bf16.mxu0 %v4070
      %4076 = vmatpush1.bf16.msra.mxu0 %v4067
      %4077 = vmatprep.subr.bf16.mxu0 0
      %4078 = vmatpush1.bf16.msra.mxu0 0
      %4079 = vmatprep.subr.bf16.mxu0 0
      %4080 = vmatpush1.bf16.msra.mxu0 0
      %4081 = vmatprep.subr.bf16.mxu0 0
      %4082 = vmatpush1.bf16.msra.mxu0 0
      %4083 = vmatprep.subr.bf16.mxu0 0
      %4084 = vmatpush1.bf16.msra.mxu0 0
      %4085 = vmatprep.subr.bf16.mxu0 0
      %4086 = vmatpush1.bf16.msra.mxu0 0
      %4087 = vmatprep.subr.bf16.mxu0 0
      %4088 = vmatpush1.bf16.msra.mxu0 0
      %4089 = vmatprep.subr.bf16.mxu0 0
      %4090 = vmatpush1.bf16.msra.mxu0 0
      %4091 = vmatprep.subr.bf16.mxu0 0
      %4092 = vmatpush1.bf16.msra.mxu0 0
      %4093 = vmatprep.subr.bf16.mxu0 0
      %4094 = vmatpush1.bf16.msra.mxu0 0
      %4095 = vmatprep.subr.bf16.mxu0 0
      %4096 = vmatpush1.bf16.msra.mxu0 0
      %4097 = vmatprep.subr.bf16.mxu0 0
      %4098 = vmatpush1.bf16.msra.mxu0 0
      %4099 = vmatprep.subr.bf16.mxu0 0
      %4100 = vmatpush1.bf16.msra.mxu0 0
      %4101 = vmatprep.subr.bf16.mxu0 0
      %4102 = vmatpush1.bf16.msra.mxu0 0
      %4103 = vmatprep.subr.bf16.mxu0 0
      %4104 = vmatpush1.bf16.msra.mxu0 0
      %4105 = vmatprep.subr.bf16.mxu0 0
      %4106 = vmatpush1.bf16.msra.mxu0 0
      %4107 = vmatprep.mubr.bf16.mxu0 0
      %4108 = vmatmul.mubr.bf16.gmra.mrb[0].mxu0 %v4064
      %v4109 = vpop.f32.mrb[0].mxu0
      %v4110 = vadd.f32 0.0, %v4109
      %v4111 = vpop.f32.mrb[0].mxu0
      %v4112 = vadd.f32 0.0, %v4111
      %v4113 = vpop.f32.mrb[0].mxu0
      %v4114 = vpop.f32.mrb[0].mxu0
      %4115 = vdwg.mxu0
      %4116 = vmatprep.subr.bf16.mxu0 0
      %4117 = vmatpush1.bf16.msra.mxu0 %v4073
      %4118 = vmatprep.subr.bf16.mxu0 0
      %4119 = vmatpush1.bf16.msra.mxu0 0
      %4120 = vmatprep.subr.bf16.mxu0 0
      %4121 = vmatpush1.bf16.msra.mxu0 0
      %4122 = vmatprep.subr.bf16.mxu0 0
      %4123 = vmatpush1.bf16.msra.mxu0 0
      %4124 = vmatprep.subr.bf16.mxu0 0
      %4125 = vmatpush1.bf16.msra.mxu0 0
      %4126 = vmatprep.subr.bf16.mxu0 0
      %4127 = vmatpush1.bf16.msra.mxu0 0
      %4128 = vmatprep.subr.bf16.mxu0 0
      %4129 = vmatpush1.bf16.msra.mxu0 0
      %4130 = vmatprep.subr.bf16.mxu0 0
      %4131 = vmatpush1.bf16.msra.mxu0 0
      %4132 = vmatprep.subr.bf16.mxu0 0
      %4133 = vmatpush1.bf16.msra.mxu0 0
      %4134 = vmatprep.subr.bf16.mxu0 0
      %4135 = vmatpush1.bf16.msra.mxu0 0
      %4136 = vmatprep.subr.bf16.mxu0 0
      %4137 = vmatpush1.bf16.msra.mxu0 0
      %4138 = vmatprep.subr.bf16.mxu0 0
      %4139 = vmatpush1.bf16.msra.mxu0 0
      %4140 = vmatprep.subr.bf16.mxu0 0
      %4141 = vmatpush1.bf16.msra.mxu0 0
      %4142 = vmatprep.subr.bf16.mxu0 0
      %4143 = vmatpush1.bf16.msra.mxu0 0
      %4144 = vmatprep.subr.bf16.mxu0 0
      %4145 = vmatpush1.bf16.msra.mxu0 0
      %4146 = vmatprep.subr.bf16.mxu0 0
      %4147 = vmatpush1.bf16.msra.mxu0 0
      %4148 = vmatprep.mubr.bf16.mxu0 0
      %4149 = vmatmul.mubr.bf16.gmra.mrb[0].mxu0 %v4064
      %v4150 = vpop.f32.mrb[0].mxu0
      %v4151 = vadd.f32 0.0, %v4150
      %v4152 = vpop.f32.mrb[0].mxu0
      %v4153 = vpop.f32.mrb[0].mxu0
      %v4154 = vpop.f32.mrb[0].mxu0
      %4155 = vdwg.mxu0
      %v4156 = vadd.f32 %v4007, %v4110
      %v4157 = vadd.f32 %v4009, %v4112
      %v4158 = vadd.f32 %v4048, %v4151
      %s4159 = scalar_lea.vmem %s15, 12
      %v4160 = vld [vmem:[%s4159] sm:$0xf]
      %4161 = vrot.lane.b32.xlu0 %v3856, 110
      %v4162 = vpop.permute.xlu0 %4161
      %4163 = vrot.lane.b32.xlu0 %v3857, 110
      %v4164 = vpop.permute.xlu0 %4163
      %4165 = vrot.lane.b32.xlu0 %v3858, 110
      %v4166 = vpop.permute.xlu0 %4165
      %v4167 = vsel %vm1360, %v4162, %v4164
      %v4168 = vsel %vm1360, %v4164, %v4166
      %v4170 = vsel %vm635, %v4160, 0
      %v4173 = vsel %vm1061, %v4167, 0
      %v4176 = vsel %vm1061, %v4168, 0
      %v4179 = vsel %vm1061, %v4166, 0
      %4181 = vmatprep.subr.bf16.mxu0 %v4176
      %4182 = vmatpush1.bf16.msra.mxu0 %v4173
      %4183 = vmatprep.subr.bf16.mxu0 0
      %4184 = vmatpush1.bf16.msra.mxu0 0
      %4185 = vmatprep.subr.bf16.mxu0 0
      %4186 = vmatpush1.bf16.msra.mxu0 0
      %4187 = vmatprep.subr.bf16.mxu0 0
      %4188 = vmatpush1.bf16.msra.mxu0 0
      %4189 = vmatprep.subr.bf16.mxu0 0
      %4190 = vmatpush1.bf16.msra.mxu0 0
      %4191 = vmatprep.subr.bf16.mxu0 0
      %4192 = vmatpush1.bf16.msra.mxu0 0
      %4193 = vmatprep.subr.bf16.mxu0 0
      %4194 = vmatpush1.bf16.msra.mxu0 0
      %4195 = vmatprep.subr.bf16.mxu0 0
      %4196 = vmatpush1.bf16.msra.mxu0 0
      %4197 = vmatprep.subr.bf16.mxu0 0
      %4198 = vmatpush1.bf16.msra.mxu0 0
      %4199 = vmatprep.subr.bf16.mxu0 0
      %4200 = vmatpush1.bf16.msra.mxu0 0
      %4201 = vmatprep.subr.bf16.mxu0 0
      %4202 = vmatpush1.bf16.msra.mxu0 0
      %4203 = vmatprep.subr.bf16.mxu0 0
      %4204 = vmatpush1.bf16.msra.mxu0 0
      %4205 = vmatprep.subr.bf16.mxu0 0
      %4206 = vmatpush1.bf16.msra.mxu0 0
      %4207 = vmatprep.subr.bf16.mxu0 0
      %4208 = vmatpush1.bf16.msra.mxu0 0
      %4209 = vmatprep.subr.bf16.mxu0 0
      %4210 = vmatpush1.bf16.msra.mxu0 0
      %4211 = vmatprep.subr.bf16.mxu0 0
      %4212 = vmatpush1.bf16.msra.mxu0 0
      %4213 = vmatprep.mubr.bf16.mxu0 0
      %4214 = vmatmul.mubr.bf16.gmra.mrb[0].mxu0 %v4170
      %v4215 = vpop.f32.mrb[0].mxu0
      %v4216 = vadd.f32 0.0, %v4215
      %v4217 = vpop.f32.mrb[0].mxu0
      %v4218 = vadd.f32 0.0, %v4217
      %v4219 = vpop.f32.mrb[0].mxu0
      %v4220 = vpop.f32.mrb[0].mxu0
      %4221 = vdwg.mxu0
      %4222 = vmatprep.subr.bf16.mxu0 0
      %4223 = vmatpush1.bf16.msra.mxu0 %v4179
      %4224 = vmatprep.subr.bf16.mxu0 0
      %4225 = vmatpush1.bf16.msra.mxu0 0
      %4226 = vmatprep.subr.bf16.mxu0 0
      %4227 = vmatpush1.bf16.msra.mxu0 0
      %4228 = vmatprep.subr.bf16.mxu0 0
      %4229 = vmatpush1.bf16.msra.mxu0 0
      %4230 = vmatprep.subr.bf16.mxu0 0
      %4231 = vmatpush1.bf16.msra.mxu0 0
      %4232 = vmatprep.subr.bf16.mxu0 0
      %4233 = vmatpush1.bf16.msra.mxu0 0
      %4234 = vmatprep.subr.bf16.mxu0 0
      %4235 = vmatpush1.bf16.msra.mxu0 0
      %4236 = vmatprep.subr.bf16.mxu0 0
      %4237 = vmatpush1.bf16.msra.mxu0 0
      %4238 = vmatprep.subr.bf16.mxu0 0
      %4239 = vmatpush1.bf16.msra.mxu0 0
      %4240 = vmatprep.subr.bf16.mxu0 0
      %4241 = vmatpush1.bf16.msra.mxu0 0
      %4242 = vmatprep.subr.bf16.mxu0 0
      %4243 = vmatpush1.bf16.msra.mxu0 0
      %4244 = vmatprep.subr.bf16.mxu0 0
      %4245 = vmatpush1.bf16.msra.mxu0 0
      %4246 = vmatprep.subr.bf16.mxu0 0
      %4247 = vmatpush1.bf16.msra.mxu0 0
      %4248 = vmatprep.subr.bf16.mxu0 0
      %4249 = vmatpush1.bf16.msra.mxu0 0
      %4250 = vmatprep.subr.bf16.mxu0 0
      %4251 = vmatpush1.bf16.msra.mxu0 0
      %4252 = vmatprep.subr.bf16.mxu0 0
      %4253 = vmatpush1.bf16.msra.mxu0 0
      %4254 = vmatprep.mubr.bf16.mxu0 0
      %4255 = vmatmul.mubr.bf16.gmra.mrb[0].mxu0 %v4170
      %v4256 = vpop.f32.mrb[0].mxu0
      %v4257 = vadd.f32 0.0, %v4256
      %v4258 = vpop.f32.mrb[0].mxu0
      %v4259 = vpop.f32.mrb[0].mxu0
      %v4260 = vpop.f32.mrb[0].mxu0
      %4261 = vdwg.mxu0
      %v4262 = vadd.f32 %v4156, %v4216
      %v4263 = vadd.f32 %v4157, %v4218
      %v4264 = vadd.f32 %v4158, %v4257
      %s4265 = scalar_lea.vmem %s15, 16
      %v4266 = vld [vmem:[%s4265] sm:$0xf]
      %4267 = vrot.lane.b32.xlu0 %v3856, 109
      %v4268 = vpop.permute.xlu0 %4267
      %4269 = vrot.lane.b32.xlu0 %v3857, 109
      %v4270 = vpop.permute.xlu0 %4269
      %4271 = vrot.lane.b32.xlu0 %v3858, 109
      %v4272 = vpop.permute.xlu0 %4271
      %v4273 = vsel %vm1467, %v4268, %v4270
      %v4274 = vsel %vm1467, %v4270, %v4272
      %v4276 = vsel %vm635, %v4266, 0
      %v4279 = vsel %vm1061, %v4273, 0
      %v4282 = vsel %vm1061, %v4274, 0
      %v4285 = vsel %vm1061, %v4272, 0
      %4287 = vmatprep.subr.bf16.mxu0 %v4282
      %4288 = vmatpush1.bf16.msra.mxu0 %v4279
      %4289 = vmatprep.subr.bf16.mxu0 0
      %4290 = vmatpush1.bf16.msra.mxu0 0
      %4291 = vmatprep.subr.bf16.mxu0 0
      %4292 = vmatpush1.bf16.msra.mxu0 0
      %4293 = vmatprep.subr.bf16.mxu0 0
      %4294 = vmatpush1.bf16.msra.mxu0 0
      %4295 = vmatprep.subr.bf16.mxu0 0
      %4296 = vmatpush1.bf16.msra.mxu0 0
      %4297 = vmatprep.subr.bf16.mxu0 0
      %4298 = vmatpush1.bf16.msra.mxu0 0
      %4299 = vmatprep.subr.bf16.mxu0 0
      %4300 = vmatpush1.bf16.msra.mxu0 0
      %4301 = vmatprep.subr.bf16.mxu0 0
      %4302 = vmatpush1.bf16.msra.mxu0 0
      %4303 = vmatprep.subr.bf16.mxu0 0
      %4304 = vmatpush1.bf16.msra.mxu0 0
      %4305 = vmatprep.subr.bf16.mxu0 0
      %4306 = vmatpush1.bf16.msra.mxu0 0
      %4307 = vmatprep.subr.bf16.mxu0 0
      %4308 = vmatpush1.bf16.msra.mxu0 0
      %4309 = vmatprep.subr.bf16.mxu0 0
      %4310 = vmatpush1.bf16.msra.mxu0 0
      %4311 = vmatprep.subr.bf16.mxu0 0
      %4312 = vmatpush1.bf16.msra.mxu0 0
      %4313 = vmatprep.subr.bf16.mxu0 0
      %4314 = vmatpush1.bf16.msra.mxu0 0
      %4315 = vmatprep.subr.bf16.mxu0 0
      %4316 = vmatpush1.bf16.msra.mxu0 0
      %4317 = vmatprep.subr.bf16.mxu0 0
      %4318 = vmatpush1.bf16.msra.mxu0 0
      %4319 = vmatprep.mubr.bf16.mxu0 0
      %4320 = vmatmul.mubr.bf16.gmra.mrb[0].mxu0 %v4276
      %v4321 = vpop.f32.mrb[0].mxu0
      %v4322 = vadd.f32 0.0, %v4321
      %v4323 = vpop.f32.mrb[0].mxu0
      %v4324 = vadd.f32 0.0, %v4323
      %v4325 = vpop.f32.mrb[0].mxu0
      %v4326 = vpop.f32.mrb[0].mxu0
      %4327 = vdwg.mxu0
      %4328 = vmatprep.subr.bf16.mxu0 0
      %4329 = vmatpush1.bf16.msra.mxu0 %v4285
      %4330 = vmatprep.subr.bf16.mxu0 0
      %4331 = vmatpush1.bf16.msra.mxu0 0
      %4332 = vmatprep.subr.bf16.mxu0 0
      %4333 = vmatpush1.bf16.msra.mxu0 0
      %4334 = vmatprep.subr.bf16.mxu0 0
      %4335 = vmatpush1.bf16.msra.mxu0 0
      %4336 = vmatprep.subr.bf16.mxu0 0
      %4337 = vmatpush1.bf16.msra.mxu0 0
      %4338 = vmatprep.subr.bf16.mxu0 0
      %4339 = vmatpush1.bf16.msra.mxu0 0
      %4340 = vmatprep.subr.bf16.mxu0 0
      %4341 = vmatpush1.bf16.msra.mxu0 0
      %4342 = vmatprep.subr.bf16.mxu0 0
      %4343 = vmatpush1.bf16.msra.mxu0 0
      %4344 = vmatprep.subr.bf16.mxu0 0
      %4345 = vmatpush1.bf16.msra.mxu0 0
      %4346 = vmatprep.subr.bf16.mxu0 0
      %4347 = vmatpush1.bf16.msra.mxu0 0
      %4348 = vmatprep.subr.bf16.mxu0 0
      %4349 = vmatpush1.bf16.msra.mxu0 0
      %4350 = vmatprep.subr.bf16.mxu0 0
      %4351 = vmatpush1.bf16.msra.mxu0 0
      %4352 = vmatprep.subr.bf16.mxu0 0
      %4353 = vmatpush1.bf16.msra.mxu0 0
      %4354 = vmatprep.subr.bf16.mxu0 0
      %4355 = vmatpush1.bf16.msra.mxu0 0
      %4356 = vmatprep.subr.bf16.mxu0 0
      %4357 = vmatpush1.bf16.msra.mxu0 0
      %4358 = vmatprep.subr.bf16.mxu0 0
      %4359 = vmatpush1.bf16.msra.mxu0 0
      %4360 = vmatprep.mubr.bf16.mxu0 0
      %4361 = vmatmul.mubr.bf16.gmra.mrb[0].mxu0 %v4276
      %v4362 = vpop.f32.mrb[0].mxu0
      %v4363 = vadd.f32 0.0, %v4362
      %v4364 = vpop.f32.mrb[0].mxu0
      %v4365 = vpop.f32.mrb[0].mxu0
      %v4366 = vpop.f32.mrb[0].mxu0
      %4367 = vdwg.mxu0
      %v4368 = vadd.f32 %v4262, %v4322
      %v4369 = vadd.f32 %v4263, %v4324
      %v4370 = vadd.f32 %v4264, %v4363
      %s4371 = scalar_lea.vmem %s15, 20
      %v4372 = vld [vmem:[%s4371] sm:$0xf]
      %4373 = vrot.lane.b32.xlu0 %v3856, 108
      %v4374 = vpop.permute.xlu0 %4373
      %4375 = vrot.lane.b32.xlu0 %v3857, 108
      %v4376 = vpop.permute.xlu0 %4375
      %4377 = vrot.lane.b32.xlu0 %v3858, 108
      %v4378 = vpop.permute.xlu0 %4377
      %v4379 = vsel %vm1574, %v4374, %v4376
      %v4380 = vsel %vm1574, %v4376, %v4378
      %v4382 = vsel %vm635, %v4372, 0
      %v4385 = vsel %vm1061, %v4379, 0
      %v4388 = vsel %vm1061, %v4380, 0
      %v4391 = vsel %vm1061, %v4378, 0
      %4393 = vmatprep.subr.bf16.mxu0 %v4388
      %4394 = vmatpush1.bf16.msra.mxu0 %v4385
      %4395 = vmatprep.subr.bf16.mxu0 0
      %4396 = vmatpush1.bf16.msra.mxu0 0
      %4397 = vmatprep.subr.bf16.mxu0 0
      %4398 = vmatpush1.bf16.msra.mxu0 0
      %4399 = vmatprep.subr.bf16.mxu0 0
      %4400 = vmatpush1.bf16.msra.mxu0 0
      %4401 = vmatprep.subr.bf16.mxu0 0
      %4402 = vmatpush1.bf16.msra.mxu0 0
      %4403 = vmatprep.subr.bf16.mxu0 0
      %4404 = vmatpush1.bf16.msra.mxu0 0
      %4405 = vmatprep.subr.bf16.mxu0 0
      %4406 = vmatpush1.bf16.msra.mxu0 0
      %4407 = vmatprep.subr.bf16.mxu0 0
      %4408 = vmatpush1.bf16.msra.mxu0 0
      %4409 = vmatprep.subr.bf16.mxu0 0
      %4410 = vmatpush1.bf16.msra.mxu0 0
      %4411 = vmatprep.subr.bf16.mxu0 0
      %4412 = vmatpush1.bf16.msra.mxu0 0
      %4413 = vmatprep.subr.bf16.mxu0 0
      %4414 = vmatpush1.bf16.msra.mxu0 0
      %4415 = vmatprep.subr.bf16.mxu0 0
      %4416 = vmatpush1.bf16.msra.mxu0 0
      %4417 = vmatprep.subr.bf16.mxu0 0
      %4418 = vmatpush1.bf16.msra.mxu0 0
      %4419 = vmatprep.subr.bf16.mxu0 0
      %4420 = vmatpush1.bf16.msra.mxu0 0
      %4421 = vmatprep.subr.bf16.mxu0 0
      %4422 = vmatpush1.bf16.msra.mxu0 0
      %4423 = vmatprep.subr.bf16.mxu0 0
      %4424 = vmatpush1.bf16.msra.mxu0 0
      %4425 = vmatprep.mubr.bf16.mxu0 0
      %4426 = vmatmul.mubr.bf16.gmra.mrb[0].mxu0 %v4382
      %v4427 = vpop.f32.mrb[0].mxu0
      %v4428 = vadd.f32 0.0, %v4427
      %v4429 = vpop.f32.mrb[0].mxu0
      %v4430 = vadd.f32 0.0, %v4429
      %v4431 = vpop.f32.mrb[0].mxu0
      %v4432 = vpop.f32.mrb[0].mxu0
      %4433 = vdwg.mxu0
      %4434 = vmatprep.subr.bf16.mxu0 0
      %4435 = vmatpush1.bf16.msra.mxu0 %v4391
      %4436 = vmatprep.subr.bf16.mxu0 0
      %4437 = vmatpush1.bf16.msra.mxu0 0
      %4438 = vmatprep.subr.bf16.mxu0 0
      %4439 = vmatpush1.bf16.msra.mxu0 0
      %4440 = vmatprep.subr.bf16.mxu0 0
      %4441 = vmatpush1.bf16.msra.mxu0 0
      %4442 = vmatprep.subr.bf16.mxu0 0
      %4443 = vmatpush1.bf16.msra.mxu0 0
      %4444 = vmatprep.subr.bf16.mxu0 0
      %4445 = vmatpush1.bf16.msra.mxu0 0
      %4446 = vmatprep.subr.bf16.mxu0 0
      %4447 = vmatpush1.bf16.msra.mxu0 0
      %4448 = vmatprep.subr.bf16.mxu0 0
      %4449 = vmatpush1.bf16.msra.mxu0 0
      %4450 = vmatprep.subr.bf16.mxu0 0
      %4451 = vmatpush1.bf16.msra.mxu0 0
      %4452 = vmatprep.subr.bf16.mxu0 0
      %4453 = vmatpush1.bf16.msra.mxu0 0
      %4454 = vmatprep.subr.bf16.mxu0 0
      %4455 = vmatpush1.bf16.msra.mxu0 0
      %4456 = vmatprep.subr.bf16.mxu0 0
      %4457 = vmatpush1.bf16.msra.mxu0 0
      %4458 = vmatprep.subr.bf16.mxu0 0
      %4459 = vmatpush1.bf16.msra.mxu0 0
      %4460 = vmatprep.subr.bf16.mxu0 0
      %4461 = vmatpush1.bf16.msra.mxu0 0
      %4462 = vmatprep.subr.bf16.mxu0 0
      %4463 = vmatpush1.bf16.msra.mxu0 0
      %4464 = vmatprep.subr.bf16.mxu0 0
      %4465 = vmatpush1.bf16.msra.mxu0 0
      %4466 = vmatprep.mubr.bf16.mxu0 0
      %4467 = vmatmul.mubr.bf16.gmra.mrb[0].mxu0 %v4382
      %v4468 = vpop.f32.mrb[0].mxu0
      %v4469 = vadd.f32 0.0, %v4468
      %v4470 = vpop.f32.mrb[0].mxu0
      %v4471 = vpop.f32.mrb[0].mxu0
      %v4472 = vpop.f32.mrb[0].mxu0
      %4473 = vdwg.mxu0
      %v4474 = vadd.f32 %v4368, %v4428
      %v4475 = vadd.f32 %v4369, %v4430
      %v4476 = vadd.f32 %v4370, %v4469
      %s4477 = scalar_lea.vmem %s15, 24
      %v4478 = vld [vmem:[%s4477] sm:$0xf]
      %4479 = vrot.lane.b32.xlu0 %v3856, 92
      %v4480 = vpop.permute.xlu0 %4479
      %4481 = vrot.lane.b32.xlu0 %v3857, 92
      %v4482 = vpop.permute.xlu0 %4481
      %4483 = vrot.lane.b32.xlu0 %v3858, 92
      %v4484 = vpop.permute.xlu0 %4483
      %v4485 = vsel %vm1681, %v4480, %v4482
      %v4486 = vsel %vm1681, %v4482, %v4484
      %v4488 = vsel %vm635, %v4478, 0
      %v4491 = vsel %vm1061, %v4485, 0
      %v4494 = vsel %vm1061, %v4486, 0
      %v4497 = vsel %vm1061, %v4484, 0
      %4499 = vmatprep.subr.bf16.mxu0 %v4494
      %4500 = vmatpush1.bf16.msra.mxu0 %v4491
      %4501 = vmatprep.subr.bf16.mxu0 0
      %4502 = vmatpush1.bf16.msra.mxu0 0
      %4503 = vmatprep.subr.bf16.mxu0 0
      %4504 = vmatpush1.bf16.msra.mxu0 0
      %4505 = vmatprep.subr.bf16.mxu0 0
      %4506 = vmatpush1.bf16.msra.mxu0 0
      %4507 = vmatprep.subr.bf16.mxu0 0
      %4508 = vmatpush1.bf16.msra.mxu0 0
      %4509 = vmatprep.subr.bf16.mxu0 0
      %4510 = vmatpush1.bf16.msra.mxu0 0
      %4511 = vmatprep.subr.bf16.mxu0 0
      %4512 = vmatpush1.bf16.msra.mxu0 0
      %4513 = vmatprep.subr.bf16.mxu0 0
      %4514 = vmatpush1.bf16.msra.mxu0 0
      %4515 = vmatprep.subr.bf16.mxu0 0
      %4516 = vmatpush1.bf16.msra.mxu0 0
      %4517 = vmatprep.subr.bf16.mxu0 0
      %4518 = vmatpush1.bf16.msra.mxu0 0
      %4519 = vmatprep.subr.bf16.mxu0 0
      %4520 = vmatpush1.bf16.msra.mxu0 0
      %4521 = vmatprep.subr.bf16.mxu0 0
      %4522 = vmatpush1.bf16.msra.mxu0 0
      %4523 = vmatprep.subr.bf16.mxu0 0
      %4524 = vmatpush1.bf16.msra.mxu0 0
      %4525 = vmatprep.subr.bf16.mxu0 0
      %4526 = vmatpush1.bf16.msra.mxu0 0
      %4527 = vmatprep.subr.bf16.mxu0 0
      %4528 = vmatpush1.bf16.msra.mxu0 0
      %4529 = vmatprep.subr.bf16.mxu0 0
      %4530 = vmatpush1.bf16.msra.mxu0 0
      %4531 = vmatprep.mubr.bf16.mxu0 0
      %4532 = vmatmul.mubr.bf16.gmra.mrb[0].mxu0 %v4488
      %v4533 = vpop.f32.mrb[0].mxu0
      %v4534 = vadd.f32 0.0, %v4533
      %v4535 = vpop.f32.mrb[0].mxu0
      %v4536 = vadd.f32 0.0, %v4535
      %v4537 = vpop.f32.mrb[0].mxu0
      %v4538 = vpop.f32.mrb[0].mxu0
      %4539 = vdwg.mxu0
      %4540 = vmatprep.subr.bf16.mxu0 0
      %4541 = vmatpush1.bf16.msra.mxu0 %v4497
      %4542 = vmatprep.subr.bf16.mxu0 0
      %4543 = vmatpush1.bf16.msra.mxu0 0
      %4544 = vmatprep.subr.bf16.mxu0 0
      %4545 = vmatpush1.bf16.msra.mxu0 0
      %4546 = vmatprep.subr.bf16.mxu0 0
      %4547 = vmatpush1.bf16.msra.mxu0 0
      %4548 = vmatprep.subr.bf16.mxu0 0
      %4549 = vmatpush1.bf16.msra.mxu0 0
      %4550 = vmatprep.subr.bf16.mxu0 0
      %4551 = vmatpush1.bf16.msra.mxu0 0
      %4552 = vmatprep.subr.bf16.mxu0 0
      %4553 = vmatpush1.bf16.msra.mxu0 0
      %4554 = vmatprep.subr.bf16.mxu0 0
      %4555 = vmatpush1.bf16.msra.mxu0 0
      %4556 = vmatprep.subr.bf16.mxu0 0
      %4557 = vmatpush1.bf16.msra.mxu0 0
      %4558 = vmatprep.subr.bf16.mxu0 0
      %4559 = vmatpush1.bf16.msra.mxu0 0
      %4560 = vmatprep.subr.bf16.mxu0 0
      %4561 = vmatpush1.bf16.msra.mxu0 0
      %4562 = vmatprep.subr.bf16.mxu0 0
      %4563 = vmatpush1.bf16.msra.mxu0 0
      %4564 = vmatprep.subr.bf16.mxu0 0
      %4565 = vmatpush1.bf16.msra.mxu0 0
      %4566 = vmatprep.subr.bf16.mxu0 0
      %4567 = vmatpush1.bf16.msra.mxu0 0
      %4568 = vmatprep.subr.bf16.mxu0 0
      %4569 = vmatpush1.bf16.msra.mxu0 0
      %4570 = vmatprep.subr.bf16.mxu0 0
      %4571 = vmatpush1.bf16.msra.mxu0 0
      %4572 = vmatprep.mubr.bf16.mxu0 0
      %4573 = vmatmul.mubr.bf16.gmra.mrb[0].mxu0 %v4488
      %v4574 = vpop.f32.mrb[0].mxu0
      %v4575 = vadd.f32 0.0, %v4574
      %v4576 = vpop.f32.mrb[0].mxu0
      %v4577 = vpop.f32.mrb[0].mxu0
      %v4578 = vpop.f32.mrb[0].mxu0
      %4579 = vdwg.mxu0
      %v4580 = vadd.f32 %v4474, %v4534
      %v4581 = vadd.f32 %v4475, %v4536
      %v4582 = vadd.f32 %v4476, %v4575
      %s4583 = scalar_lea.vmem %s15, 28
      %v4584 = vld [vmem:[%s4583] sm:$0xf]
      %4585 = vrot.lane.b32.xlu0 %v3856, 91
      %v4586 = vpop.permute.xlu0 %4585
      %4587 = vrot.lane.b32.xlu0 %v3857, 91
      %v4588 = vpop.permute.xlu0 %4587
      %4589 = vrot.lane.b32.xlu0 %v3858, 91
      %v4590 = vpop.permute.xlu0 %4589
      %v4591 = vsel %vm1788, %v4586, %v4588
      %v4592 = vsel %vm1788, %v4588, %v4590
      %v4594 = vsel %vm635, %v4584, 0
      %v4597 = vsel %vm1061, %v4591, 0
      %v4600 = vsel %vm1061, %v4592, 0
      %v4603 = vsel %vm1061, %v4590, 0
      %4605 = vmatprep.subr.bf16.mxu0 %v4600
      %4606 = vmatpush1.bf16.msra.mxu0 %v4597
      %4607 = vmatprep.subr.bf16.mxu0 0
      %4608 = vmatpush1.bf16.msra.mxu0 0
      %4609 = vmatprep.subr.bf16.mxu0 0
      %4610 = vmatpush1.bf16.msra.mxu0 0
      %4611 = vmatprep.subr.bf16.mxu0 0
      %4612 = vmatpush1.bf16.msra.mxu0 0
      %4613 = vmatprep.subr.bf16.mxu0 0
      %4614 = vmatpush1.bf16.msra.mxu0 0
      %4615 = vmatprep.subr.bf16.mxu0 0
      %4616 = vmatpush1.bf16.msra.mxu0 0
      %4617 = vmatprep.subr.bf16.mxu0 0
      %4618 = vmatpush1.bf16.msra.mxu0 0
      %4619 = vmatprep.subr.bf16.mxu0 0
      %4620 = vmatpush1.bf16.msra.mxu0 0
      %4621 = vmatprep.subr.bf16.mxu0 0
      %4622 = vmatpush1.bf16.msra.mxu0 0
      %4623 = vmatprep.subr.bf16.mxu0 0
      %4624 = vmatpush1.bf16.msra.mxu0 0
      %4625 = vmatprep.subr.bf16.mxu0 0
      %4626 = vmatpush1.bf16.msra.mxu0 0
      %4627 = vmatprep.subr.bf16.mxu0 0
      %4628 = vmatpush1.bf16.msra.mxu0 0
      %4629 = vmatprep.subr.bf16.mxu0 0
      %4630 = vmatpush1.bf16.msra.mxu0 0
      %4631 = vmatprep.subr.bf16.mxu0 0
      %4632 = vmatpush1.bf16.msra.mxu0 0
      %4633 = vmatprep.subr.bf16.mxu0 0
      %4634 = vmatpush1.bf16.msra.mxu0 0
      %4635 = vmatprep.subr.bf16.mxu0 0
      %4636 = vmatpush1.bf16.msra.mxu0 0
      %4637 = vmatprep.mubr.bf16.mxu0 0
      %4638 = vmatmul.mubr.bf16.gmra.mrb[0].mxu0 %v4594
      %v4639 = vpop.f32.mrb[0].mxu0
      %v4640 = vadd.f32 0.0, %v4639
      %v4641 = vpop.f32.mrb[0].mxu0
      %v4642 = vadd.f32 0.0, %v4641
      %v4643 = vpop.f32.mrb[0].mxu0
      %v4644 = vpop.f32.mrb[0].mxu0
      %4645 = vdwg.mxu0
      %4646 = vmatprep.subr.bf16.mxu0 0
      %4647 = vmatpush1.bf16.msra.mxu0 %v4603
      %4648 = vmatprep.subr.bf16.mxu0 0
      %4649 = vmatpush1.bf16.msra.mxu0 0
      %4650 = vmatprep.subr.bf16.mxu0 0
      %4651 = vmatpush1.bf16.msra.mxu0 0
      %4652 = vmatprep.subr.bf16.mxu0 0
      %4653 = vmatpush1.bf16.msra.mxu0 0
      %4654 = vmatprep.subr.bf16.mxu0 0
      %4655 = vmatpush1.bf16.msra.mxu0 0
      %4656 = vmatprep.subr.bf16.mxu0 0
      %4657 = vmatpush1.bf16.msra.mxu0 0
      %4658 = vmatprep.subr.bf16.mxu0 0
      %4659 = vmatpush1.bf16.msra.mxu0 0
      %4660 = vmatprep.subr.bf16.mxu0 0
      %4661 = vmatpush1.bf16.msra.mxu0 0
      %4662 = vmatprep.subr.bf16.mxu0 0
      %4663 = vmatpush1.bf16.msra.mxu0 0
      %4664 = vmatprep.subr.bf16.mxu0 0
      %4665 = vmatpush1.bf16.msra.mxu0 0
      %4666 = vmatprep.subr.bf16.mxu0 0
      %4667 = vmatpush1.bf16.msra.mxu0 0
      %4668 = vmatprep.subr.bf16.mxu0 0
      %4669 = vmatpush1.bf16.msra.mxu0 0
      %4670 = vmatprep.subr.bf16.mxu0 0
      %4671 = vmatpush1.bf16.msra.mxu0 0
      %4672 = vmatprep.subr.bf16.mxu0 0
      %4673 = vmatpush1.bf16.msra.mxu0 0
      %4674 = vmatprep.subr.bf16.mxu0 0
      %4675 = vmatpush1.bf16.msra.mxu0 0
      %4676 = vmatprep.subr.bf16.mxu0 0
      %4677 = vmatpush1.bf16.msra.mxu0 0
      %4678 = vmatprep.mubr.bf16.mxu0 0
      %4679 = vmatmul.mubr.bf16.gmra.mrb[0].mxu0 %v4594
      %v4680 = vpop.f32.mrb[0].mxu0
      %v4681 = vadd.f32 0.0, %v4680
      %v4682 = vpop.f32.mrb[0].mxu0
      %v4683 = vpop.f32.mrb[0].mxu0
      %v4684 = vpop.f32.mrb[0].mxu0
      %4685 = vdwg.mxu0
      %v4686 = vadd.f32 %v4580, %v4640
      %v4687 = vadd.f32 %v4581, %v4642
      %v4688 = vadd.f32 %v4582, %v4681
      %s4689 = scalar_lea.vmem %s15, 32
      %v4690 = vld [vmem:[%s4689] sm:$0xf]
      %4691 = vrot.lane.b32.xlu0 %v3856, 90
      %v4692 = vpop.permute.xlu0 %4691
      %4693 = vrot.lane.b32.xlu0 %v3857, 90
      %v4694 = vpop.permute.xlu0 %4693
      %4695 = vrot.lane.b32.xlu0 %v3858, 90
      %v4696 = vpop.permute.xlu0 %4695
      %v4697 = vsel %vm1895, %v4692, %v4694
      %v4698 = vsel %vm1895, %v4694, %v4696
      %v4700 = vsel %vm635, %v4690, 0
      %v4703 = vsel %vm1061, %v4697, 0
      %v4706 = vsel %vm1061, %v4698, 0
      %v4709 = vsel %vm1061, %v4696, 0
      %4711 = vmatprep.subr.bf16.mxu0 %v4706
      %4712 = vmatpush1.bf16.msra.mxu0 %v4703
      %4713 = vmatprep.subr.bf16.mxu0 0
      %4714 = vmatpush1.bf16.msra.mxu0 0
      %4715 = vmatprep.subr.bf16.mxu0 0
      %4716 = vmatpush1.bf16.msra.mxu0 0
      %4717 = vmatprep.subr.bf16.mxu0 0
      %4718 = vmatpush1.bf16.msra.mxu0 0
      %4719 = vmatprep.subr.bf16.mxu0 0
      %4720 = vmatpush1.bf16.msra.mxu0 0
      %4721 = vmatprep.subr.bf16.mxu0 0
      %4722 = vmatpush1.bf16.msra.mxu0 0
      %4723 = vmatprep.subr.bf16.mxu0 0
      %4724 = vmatpush1.bf16.msra.mxu0 0
      %4725 = vmatprep.subr.bf16.mxu0 0
      %4726 = vmatpush1.bf16.msra.mxu0 0
      %4727 = vmatprep.subr.bf16.mxu0 0
      %4728 = vmatpush1.bf16.msra.mxu0 0
      %4729 = vmatprep.subr.bf16.mxu0 0
      %4730 = vmatpush1.bf16.msra.mxu0 0
      %4731 = vmatprep.subr.bf16.mxu0 0
      %4732 = vmatpush1.bf16.msra.mxu0 0
      %4733 = vmatprep.subr.bf16.mxu0 0
      %4734 = vmatpush1.bf16.msra.mxu0 0
      %4735 = vmatprep.subr.bf16.mxu0 0
      %4736 = vmatpush1.bf16.msra.mxu0 0
      %4737 = vmatprep.subr.bf16.mxu0 0
      %4738 = vmatpush1.bf16.msra.mxu0 0
      %4739 = vmatprep.subr.bf16.mxu0 0
      %4740 = vmatpush1.bf16.msra.mxu0 0
      %4741 = vmatprep.subr.bf16.mxu0 0
      %4742 = vmatpush1.bf16.msra.mxu0 0
      %4743 = vmatprep.mubr.bf16.mxu0 0
      %4744 = vmatmul.mubr.bf16.gmra.mrb[0].mxu0 %v4700
      %v4745 = vpop.f32.mrb[0].mxu0
      %v4746 = vadd.f32 0.0, %v4745
      %v4747 = vpop.f32.mrb[0].mxu0
      %v4748 = vadd.f32 0.0, %v4747
      %v4749 = vpop.f32.mrb[0].mxu0
      %v4750 = vpop.f32.mrb[0].mxu0
      %4751 = vdwg.mxu0
      %4752 = vmatprep.subr.bf16.mxu0 0
      %4753 = vmatpush1.bf16.msra.mxu0 %v4709
      %4754 = vmatprep.subr.bf16.mxu0 0
      %4755 = vmatpush1.bf16.msra.mxu0 0
      %4756 = vmatprep.subr.bf16.mxu0 0
      %4757 = vmatpush1.bf16.msra.mxu0 0
      %4758 = vmatprep.subr.bf16.mxu0 0
      %4759 = vmatpush1.bf16.msra.mxu0 0
      %4760 = vmatprep.subr.bf16.mxu0 0
      %4761 = vmatpush1.bf16.msra.mxu0 0
      %4762 = vmatprep.subr.bf16.mxu0 0
      %4763 = vmatpush1.bf16.msra.mxu0 0
      %4764 = vmatprep.subr.bf16.mxu0 0
      %4765 = vmatpush1.bf16.msra.mxu0 0
      %4766 = vmatprep.subr.bf16.mxu0 0
      %4767 = vmatpush1.bf16.msra.mxu0 0
      %4768 = vmatprep.subr.bf16.mxu0 0
      %4769 = vmatpush1.bf16.msra.mxu0 0
      %4770 = vmatprep.subr.bf16.mxu0 0
      %4771 = vmatpush1.bf16.msra.mxu0 0
      %4772 = vmatprep.subr.bf16.mxu0 0
      %4773 = vmatpush1.bf16.msra.mxu0 0
      %4774 = vmatprep.subr.bf16.mxu0 0
      %4775 = vmatpush1.bf16.msra.mxu0 0
      %4776 = vmatprep.subr.bf16.mxu0 0
      %4777 = vmatpush1.bf16.msra.mxu0 0
      %4778 = vmatprep.subr.bf16.mxu0 0
      %4779 = vmatpush1.bf16.msra.mxu0 0
      %4780 = vmatprep.subr.bf16.mxu0 0
      %4781 = vmatpush1.bf16.msra.mxu0 0
      %4782 = vmatprep.subr.bf16.mxu0 0
      %4783 = vmatpush1.bf16.msra.mxu0 0
      %4784 = vmatprep.mubr.bf16.mxu0 0
      %4785 = vmatmul.mubr.bf16.gmra.mrb[0].mxu0 %v4700
      %v4786 = vpop.f32.mrb[0].mxu0
      %v4787 = vadd.f32 0.0, %v4786
      %v4788 = vpop.f32.mrb[0].mxu0
      %v4789 = vpop.f32.mrb[0].mxu0
      %v4790 = vpop.f32.mrb[0].mxu0
      %4791 = vdwg.mxu0
      %v4792 = vadd.f32 %v4686, %v4746
      %v4793 = vadd.f32 %v4687, %v4748
      %v4794 = vadd.f32 %v4688, %v4787
      %v4795 = vld [vmem:[%s604] sm:$0xff]
      %4797 = vset.pattern.permute.xlu0 0
      %4798 = vperm.xlu0 %4797, %v4795
      %v4799 = vpop.permute.xlu0 %4798
      %v4801 = vadd.f32 %v4792, %v4799
      %v4802 = vadd.f32 %v4793, %v4799
      %v4803 = vadd.f32 %v4794, %v4799
      %v4804 = vmul.f32 %v4801, %v994
      %v4805 = vmul.f32 %v4802, %v998
      %v4806 = vmul.f32 %v4803, %v1002
      %v4807 = vld [vmem:[%s14] sm:$0x3]
      %v4808 = vadd.f32 %v4804, %v4805
      %v4809 = vsel %vm622, %v4806, 0.0
      %v4810 = vadd.f32 %v4808, %v4809
      %4811 = vadd.xlane.f32.xlu0 %v4810
      %v4812 = vpop.xlane.xlu0 %4811
      %v4813 = vmul.f32 %v4804, %v4804
      %v4814 = vmul.f32 %v4805, %v4805
      %v4815 = vmul.f32 %v4806, %v4806
      %v4816 = vadd.f32 %v4813, %v4814
      %v4817 = vsel %vm622, %v4815, 0.0
      %v4818 = vadd.f32 %v4816, %v4817
      %4819 = vadd.xlane.f32.xlu0 %v4818
      %v4820 = vpop.xlane.xlu0 %4819
      %v4822 = vsel %vm635, %v4807, 0
      %4824 = vmatprep.subr.mxu0 0.0
      %4825 = vmatpush1.msra.mxu0 %v4812
      %4826 = vmatprep.subr.mxu0 0.0
      %4827 = vmatpush1.msra.mxu0 0.0
      %4828 = vmatprep.subr.mxu0 0.0
      %4829 = vmatpush1.msra.mxu0 0.0
      %4830 = vmatprep.subr.mxu0 0.0
      %4831 = vmatpush1.msra.mxu0 0.0
      %4832 = vmatprep.subr.mxu0 0.0
      %4833 = vmatpush1.msra.mxu0 0.0
      %4834 = vmatprep.subr.mxu0 0.0
      %4835 = vmatpush1.msra.mxu0 0.0
      %4836 = vmatprep.subr.mxu0 0.0
      %4837 = vmatpush1.msra.mxu0 0.0
      %4838 = vmatprep.subr.mxu0 0.0
      %4839 = vmatpush1.msra.mxu0 0.0
      %4840 = vmatprep.subr.mxu0 0.0
      %4841 = vmatpush1.msra.mxu0 0.0
      %4842 = vmatprep.subr.mxu0 0.0
      %4843 = vmatpush1.msra.mxu0 0.0
      %4844 = vmatprep.subr.mxu0 0.0
      %4845 = vmatpush1.msra.mxu0 0.0
      %4846 = vmatprep.subr.mxu0 0.0
      %4847 = vmatpush1.msra.mxu0 0.0
      %4848 = vmatprep.subr.mxu0 0.0
      %4849 = vmatpush1.msra.mxu0 0.0
      %4850 = vmatprep.subr.mxu0 0.0
      %4851 = vmatpush1.msra.mxu0 0.0
      %4852 = vmatprep.subr.mxu0 0.0
      %4853 = vmatpush1.msra.mxu0 0.0
      %4854 = vmatprep.subr.mxu0 0.0
      %4855 = vmatpush1.msra.mxu0 0.0
      %4856 = vmatprep.subr.mxu0 0.0
      %4857 = vmatpush1.msra.mxu0 0.0
      %4858 = vmatprep.subr.mxu0 0.0
      %4859 = vmatpush1.msra.mxu0 0.0
      %4860 = vmatprep.subr.mxu0 0.0
      %4861 = vmatpush1.msra.mxu0 0.0
      %4862 = vmatprep.subr.mxu0 0.0
      %4863 = vmatpush1.msra.mxu0 0.0
      %4864 = vmatprep.subr.mxu0 0.0
      %4865 = vmatpush1.msra.mxu0 0.0
      %4866 = vmatprep.subr.mxu0 0.0
      %4867 = vmatpush1.msra.mxu0 0.0
      %4868 = vmatprep.subr.mxu0 0.0
      %4869 = vmatpush1.msra.mxu0 0.0
      %4870 = vmatprep.subr.mxu0 0.0
      %4871 = vmatpush1.msra.mxu0 0.0
      %4872 = vmatprep.subr.mxu0 0.0
      %4873 = vmatpush1.msra.mxu0 0.0
      %4874 = vmatprep.subr.mxu0 0.0
      %4875 = vmatpush1.msra.mxu0 0.0
      %4876 = vmatprep.subr.mxu0 0.0
      %4877 = vmatpush1.msra.mxu0 0.0
      %4878 = vmatprep.subr.mxu0 0.0
      %4879 = vmatpush1.msra.mxu0 0.0
      %4880 = vmatprep.subr.mxu0 0.0
      %4881 = vmatpush1.msra.mxu0 0.0
      %4882 = vmatprep.subr.mxu0 0.0
      %4883 = vmatpush1.msra.mxu0 0.0
      %4884 = vmatprep.subr.mxu0 0.0
      %4885 = vmatpush1.msra.mxu0 0.0
      %4886 = vmatprep.subr.mxu0 0.0
      %4887 = vmatpush1.msra.mxu0 0.0
      %4888 = vmatprep.mubr.f32.mxu0 0.0
      %4889 = vmatmul.mubr.f32.gmra.mrb[0].mxu0 %v4822
      %v4890 = vpop.f32.mrb[0].mxu0
      %v4891 = vadd.f32 0.0, %v4890
      %v4892 = vpop.f32.mrb[0].mxu0
      %4893 = vdwg.mxu0
      %4895 = vrot.lane.b32.xlu0 %v3454, 125
      %v4896 = vpop.permute.xlu0 %4895
      %v4897 = vsel %vm712, %v4896, 0
      %v4900 = vsel %vm715, %v4891, 0
      %4902 = vmatprep.subr.mxu0 0.0
      %4903 = vmatpush1.msra.mxu0 %v4900
      %4904 = vmatprep.subr.mxu0 0.0
      %4905 = vmatpush1.msra.mxu0 0.0
      %4906 = vmatprep.subr.mxu0 0.0
      %4907 = vmatpush1.msra.mxu0 0.0
      %4908 = vmatprep.subr.mxu0 0.0
      %4909 = vmatpush1.msra.mxu0 0.0
      %4910 = vmatprep.subr.mxu0 0.0
      %4911 = vmatpush1.msra.mxu0 0.0
      %4912 = vmatprep.subr.mxu0 0.0
      %4913 = vmatpush1.msra.mxu0 0.0
      %4914 = vmatprep.subr.mxu0 0.0
      %4915 = vmatpush1.msra.mxu0 0.0
      %4916 = vmatprep.subr.mxu0 0.0
      %4917 = vmatpush1.msra.mxu0 0.0
      %4918 = vmatprep.subr.mxu0 0.0
      %4919 = vmatpush1.msra.mxu0 0.0
      %4920 = vmatprep.subr.mxu0 0.0
      %4921 = vmatpush1.msra.mxu0 0.0
      %4922 = vmatprep.subr.mxu0 0.0
      %4923 = vmatpush1.msra.mxu0 0.0
      %4924 = vmatprep.subr.mxu0 0.0
      %4925 = vmatpush1.msra.mxu0 0.0
      %4926 = vmatprep.subr.mxu0 0.0
      %4927 = vmatpush1.msra.mxu0 0.0
      %4928 = vmatprep.subr.mxu0 0.0
      %4929 = vmatpush1.msra.mxu0 0.0
      %4930 = vmatprep.subr.mxu0 0.0
      %4931 = vmatpush1.msra.mxu0 0.0
      %4932 = vmatprep.subr.mxu0 0.0
      %4933 = vmatpush1.msra.mxu0 0.0
      %4934 = vmatprep.subr.mxu0 0.0
      %4935 = vmatpush1.msra.mxu0 0.0
      %4936 = vmatprep.subr.mxu0 0.0
      %4937 = vmatpush1.msra.mxu0 0.0
      %4938 = vmatprep.subr.mxu0 0.0
      %4939 = vmatpush1.msra.mxu0 0.0
      %4940 = vmatprep.subr.mxu0 0.0
      %4941 = vmatpush1.msra.mxu0 0.0
      %4942 = vmatprep.subr.mxu0 0.0
      %4943 = vmatpush1.msra.mxu0 0.0
      %4944 = vmatprep.subr.mxu0 0.0
      %4945 = vmatpush1.msra.mxu0 0.0
      %4946 = vmatprep.subr.mxu0 0.0
      %4947 = vmatpush1.msra.mxu0 0.0
      %4948 = vmatprep.subr.mxu0 0.0
      %4949 = vmatpush1.msra.mxu0 0.0
      %4950 = vmatprep.subr.mxu0 0.0
      %4951 = vmatpush1.msra.mxu0 0.0
      %4952 = vmatprep.subr.mxu0 0.0
      %4953 = vmatpush1.msra.mxu0 0.0
      %4954 = vmatprep.subr.mxu0 0.0
      %4955 = vmatpush1.msra.mxu0 0.0
      %4956 = vmatprep.subr.mxu0 0.0
      %4957 = vmatpush1.msra.mxu0 0.0
      %4958 = vmatprep.subr.mxu0 0.0
      %4959 = vmatpush1.msra.mxu0 0.0
      %4960 = vmatprep.subr.mxu0 0.0
      %4961 = vmatpush1.msra.mxu0 0.0
      %4962 = vmatprep.subr.mxu0 0.0
      %4963 = vmatpush1.msra.mxu0 0.0
      %4964 = vmatprep.subr.mxu0 0.0
      %4965 = vmatpush1.msra.mxu0 0.0
      %4966 = vmatprep.mubr.f32.mxu0 0.0
      %4967 = vmatmul.mubr.f32.gmra.mrb[0].mxu0 %v4897
      %v4968 = vpop.f32.mrb[0].mxu0
      %v4969 = vadd.f32 0.0, %v4968
      %v4970 = vpop.f32.mrb[0].mxu0
      %4971 = vdwg.mxu0
      %v4972 = vmul.f32 %v4969, 0.0009765625
      %4973 = vmatprep.subr.mxu0 0.0
      %4974 = vmatpush1.msra.mxu0 %v4820
      %4975 = vmatprep.subr.mxu0 0.0
      %4976 = vmatpush1.msra.mxu0 0.0
      %4977 = vmatprep.subr.mxu0 0.0
      %4978 = vmatpush1.msra.mxu0 0.0
      %4979 = vmatprep.subr.mxu0 0.0
      %4980 = vmatpush1.msra.mxu0 0.0
      %4981 = vmatprep.subr.mxu0 0.0
      %4982 = vmatpush1.msra.mxu0 0.0
      %4983 = vmatprep.subr.mxu0 0.0
      %4984 = vmatpush1.msra.mxu0 0.0
      %4985 = vmatprep.subr.mxu0 0.0
      %4986 = vmatpush1.msra.mxu0 0.0
      %4987 = vmatprep.subr.mxu0 0.0
      %4988 = vmatpush1.msra.mxu0 0.0
      %4989 = vmatprep.subr.mxu0 0.0
      %4990 = vmatpush1.msra.mxu0 0.0
      %4991 = vmatprep.subr.mxu0 0.0
      %4992 = vmatpush1.msra.mxu0 0.0
      %4993 = vmatprep.subr.mxu0 0.0
      %4994 = vmatpush1.msra.mxu0 0.0
      %4995 = vmatprep.subr.mxu0 0.0
      %4996 = vmatpush1.msra.mxu0 0.0
      %4997 = vmatprep.subr.mxu0 0.0
      %4998 = vmatpush1.msra.mxu0 0.0
      %4999 = vmatprep.subr.mxu0 0.0
      %5000 = vmatpush1.msra.mxu0 0.0
      %5001 = vmatprep.subr.mxu0 0.0
      %5002 = vmatpush1.msra.mxu0 0.0
      %5003 = vmatprep.subr.mxu0 0.0
      %5004 = vmatpush1.msra.mxu0 0.0
      %5005 = vmatprep.subr.mxu0 0.0
      %5006 = vmatpush1.msra.mxu0 0.0
      %5007 = vmatprep.subr.mxu0 0.0
      %5008 = vmatpush1.msra.mxu0 0.0
      %5009 = vmatprep.subr.mxu0 0.0
      %5010 = vmatpush1.msra.mxu0 0.0
      %5011 = vmatprep.subr.mxu0 0.0
      %5012 = vmatpush1.msra.mxu0 0.0
      %5013 = vmatprep.subr.mxu0 0.0
      %5014 = vmatpush1.msra.mxu0 0.0
      %5015 = vmatprep.subr.mxu0 0.0
      %5016 = vmatpush1.msra.mxu0 0.0
      %5017 = vmatprep.subr.mxu0 0.0
      %5018 = vmatpush1.msra.mxu0 0.0
      %5019 = vmatprep.subr.mxu0 0.0
      %5020 = vmatpush1.msra.mxu0 0.0
      %5021 = vmatprep.subr.mxu0 0.0
      %5022 = vmatpush1.msra.mxu0 0.0
      %5023 = vmatprep.subr.mxu0 0.0
      %5024 = vmatpush1.msra.mxu0 0.0
      %5025 = vmatprep.subr.mxu0 0.0
      %5026 = vmatpush1.msra.mxu0 0.0
      %5027 = vmatprep.subr.mxu0 0.0
      %5028 = vmatpush1.msra.mxu0 0.0
      %5029 = vmatprep.subr.mxu0 0.0
      %5030 = vmatpush1.msra.mxu0 0.0
      %5031 = vmatprep.subr.mxu0 0.0
      %5032 = vmatpush1.msra.mxu0 0.0
      %5033 = vmatprep.subr.mxu0 0.0
      %5034 = vmatpush1.msra.mxu0 0.0
      %5035 = vmatprep.subr.mxu0 0.0
      %5036 = vmatpush1.msra.mxu0 0.0
      %5037 = vmatprep.mubr.f32.mxu0 0.0
      %5038 = vmatmul.mubr.f32.gmra.mrb[0].mxu0 %v4822
      %v5039 = vpop.f32.mrb[0].mxu0
      %v5040 = vadd.f32 0.0, %v5039
      %v5041 = vpop.f32.mrb[0].mxu0
      %5042 = vdwg.mxu0
      %v5044 = vsel %vm715, %v5040, 0
      %5046 = vmatprep.subr.mxu0 0.0
      %5047 = vmatpush1.msra.mxu0 %v5044
      %5048 = vmatprep.subr.mxu0 0.0
      %5049 = vmatpush1.msra.mxu0 0.0
      %5050 = vmatprep.subr.mxu0 0.0
      %5051 = vmatpush1.msra.mxu0 0.0
      %5052 = vmatprep.subr.mxu0 0.0
      %5053 = vmatpush1.msra.mxu0 0.0
      %5054 = vmatprep.subr.mxu0 0.0
      %5055 = vmatpush1.msra.mxu0 0.0
      %5056 = vmatprep.subr.mxu0 0.0
      %5057 = vmatpush1.msra.mxu0 0.0
      %5058 = vmatprep.subr.mxu0 0.0
      %5059 = vmatpush1.msra.mxu0 0.0
      %5060 = vmatprep.subr.mxu0 0.0
      %5061 = vmatpush1.msra.mxu0 0.0
      %5062 = vmatprep.subr.mxu0 0.0
      %5063 = vmatpush1.msra.mxu0 0.0
      %5064 = vmatprep.subr.mxu0 0.0
      %5065 = vmatpush1.msra.mxu0 0.0
      %5066 = vmatprep.subr.mxu0 0.0
      %5067 = vmatpush1.msra.mxu0 0.0
      %5068 = vmatprep.subr.mxu0 0.0
      %5069 = vmatpush1.msra.mxu0 0.0
      %5070 = vmatprep.subr.mxu0 0.0
      %5071 = vmatpush1.msra.mxu0 0.0
      %5072 = vmatprep.subr.mxu0 0.0
      %5073 = vmatpush1.msra.mxu0 0.0
      %5074 = vmatprep.subr.mxu0 0.0
      %5075 = vmatpush1.msra.mxu0 0.0
      %5076 = vmatprep.subr.mxu0 0.0
      %5077 = vmatpush1.msra.mxu0 0.0
      %5078 = vmatprep.subr.mxu0 0.0
      %5079 = vmatpush1.msra.mxu0 0.0
      %5080 = vmatprep.subr.mxu0 0.0
      %5081 = vmatpush1.msra.mxu0 0.0
      %5082 = vmatprep.subr.mxu0 0.0
      %5083 = vmatpush1.msra.mxu0 0.0
      %5084 = vmatprep.subr.mxu0 0.0
      %5085 = vmatpush1.msra.mxu0 0.0
      %5086 = vmatprep.subr.mxu0 0.0
      %5087 = vmatpush1.msra.mxu0 0.0
      %5088 = vmatprep.subr.mxu0 0.0
      %5089 = vmatpush1.msra.mxu0 0.0
      %5090 = vmatprep.subr.mxu0 0.0
      %5091 = vmatpush1.msra.mxu0 0.0
      %5092 = vmatprep.subr.mxu0 0.0
      %5093 = vmatpush1.msra.mxu0 0.0
      %5094 = vmatprep.subr.mxu0 0.0
      %5095 = vmatpush1.msra.mxu0 0.0
      %5096 = vmatprep.subr.mxu0 0.0
      %5097 = vmatpush1.msra.mxu0 0.0
      %5098 = vmatprep.subr.mxu0 0.0
      %5099 = vmatpush1.msra.mxu0 0.0
      %5100 = vmatprep.subr.mxu0 0.0
      %5101 = vmatpush1.msra.mxu0 0.0
      %5102 = vmatprep.subr.mxu0 0.0
      %5103 = vmatpush1.msra.mxu0 0.0
      %5104 = vmatprep.subr.mxu0 0.0
      %5105 = vmatpush1.msra.mxu0 0.0
      %5106 = vmatprep.subr.mxu0 0.0
      %5107 = vmatpush1.msra.mxu0 0.0
      %5108 = vmatprep.subr.mxu0 0.0
      %5109 = vmatpush1.msra.mxu0 0.0
      %5110 = vmatprep.mubr.f32.mxu0 0.0
      %5111 = vmatmul.mubr.f32.gmra.mrb[0].mxu0 %v4897
      %v5112 = vpop.f32.mrb[0].mxu0
      %v5113 = vadd.f32 0.0, %v5112
      %v5114 = vpop.f32.mrb[0].mxu0
      %5115 = vdwg.mxu0
      %v5116 = vmul.f32 %v5113, 0.0009765625
      %v5117 = vmul.f32 %v4972, %v4972
      %v5118 = vsub.f32 %v5116, %v5117
      %v5119 = vmax.f32 %v5118, 0.0
      %5121 = vset.pattern.permute.xlu0 0
      %5122 = vperm.xlu0 %5121, %v4972
      %v5123 = vpop.permute.xlu0 %5122
      %v5125 = vsub.f32 %v4804, %v5123
      %v5126 = vsub.f32 %v4805, %v5123
      %v5127 = vsub.f32 %v4806, %v5123
      %v5128 = vadd.f32 %v5119, 1e-05
      %v5129 = vrsqrt.pop %v5128
      %5131 = vset.pattern.permute.xlu0 0
      %5132 = vperm.xlu0 %5131, %v5129
      %v5133 = vpop.permute.xlu0 %5132
      %v5135 = vmul.f32 %v5125, %v5133
      %v5136 = vmul.f32 %v5126, %v5133
      %v5137 = vmul.f32 %v5127, %v5133
      %5138 = vset.pattern.permute.xlu0 0
      %5139 = vperm.xlu0 %5138, %v3454
      %v5140 = vpop.permute.xlu0 %5139
      %v5142 = vmul.f32 %v5135, %v5140
      %v5143 = vmul.f32 %v5136, %v5140
      %v5144 = vmul.f32 %v5137, %v5140
      %5145 = vset.pattern.permute.xlu0 1
      %5146 = vperm.xlu0 %5145, %v3454
      %v5147 = vpop.permute.xlu0 %5146
      %v5149 = vadd.f32 %v5142, %v5147
      %v5150 = vadd.f32 %v5143, %v5147
      %v5151 = vadd.f32 %v5144, %v5147
      %v5152 = vxor.u32 %v5149, 2147483648
      %v5153 = vxor.u32 %v5150, 2147483648
      %v5154 = vxor.u32 %v5151, 2147483648
      %v5155 = vmul.f32 %v5152, 1.442695
      %v5156 = vpow.pop %v5155
      %v5157 = vmul.f32 %v5153, 1.442695
      %v5158 = vpow.pop %v5157
      %v5159 = vmul.f32 %v5154, 1.442695
      %v5160 = vpow.pop %v5159
      %v5161 = vadd.f32 %v5156, 1.0
      %v5162 = vadd.f32 %v5158, 1.0
      %v5163 = vadd.f32 %v5160, 1.0
      %v5164 = vrcp.pop %v5161
      %v5165 = vmul.f32 1.0, %v5164
      %v5166 = vrcp.pop %v5162
      %v5167 = vmul.f32 1.0, %v5166
      %v5168 = vrcp.pop %v5163
      %v5169 = vmul.f32 1.0, %v5168
      %v5170 = vmul.f32 %v5149, %v5165
      %v5171 = vmul.f32 %v5150, %v5167
      %v5172 = vmul.f32 %v5151, %v5169
      %v5173 = vmul.f32 %v5170, %v994
      %v5174 = vmul.f32 %v5171, %v998
      %v5175 = vmul.f32 %v5172, %v1002
      %v5176 = vpack.c.bf16 %v5173, %v5173
      %v5177 = vpack.c.bf16 %v5174, %v5174
      %v5178 = vpack.c.bf16 %v5175, %v5175
      %v5182 = vunpack.c.l.b16 %v5176
      %v5183 = vunpack.c.l.b16 %v5177
      %v5184 = vunpack.c.l.b16 %v5178
      %v5185 = vpack.c.b16 %v5183, %v5182
      %v5186 = vpack.c.b16 %v5184, %v5184
      %5187 = vrot.lane.b32.xlu0 %v5185, 19
      %v5188 = vpop.permute.xlu0 %5187
      %5189 = vrot.lane.b32.xlu0 %v5186, 19
      %v5190 = vpop.permute.xlu0 %5189
      %v5191 = vrot.slane %v5188, 4
      %v5192 = vsel %vm1025, %v5191, %v5188
      %v5193 = vsel %vm1025, %v5191, %v5190
      %5196 = vst.msk [vmem:[#allocation2] sm:$0xff] %vm1032, %v5192
      %5197 = vst.msk [vmem:[#allocation2 + $0x8] sm:$0xf] %vm1034, %v5193
      %v5198 = vld [vmem:[%s16] sm:$0xf]
      %v5199 = vld [vmem:[#allocation2] sm:$0xff]
      %v5200 = vld [vmem:[#allocation2 + $0x8] sm:$0xf]
      %s5201 = scalar_lea.vmem %s16, 4
      %v5202 = vld [vmem:[%s5201] sm:$0xf]
      %v5205 = vunpack.c.l.b16 %v5199
      %v5206 = vunpack.c.h.b16 %v5199
      %v5207 = vunpack.c.l.b16 %v5200
      %v5208 = vpack.c.b16 %v5205, %v5205
      %v5209 = vpack.c.b16 %v5206, %v5206
      %v5210 = vpack.c.b16 %v5207, %v5207
      %5211 = vrot.lane.b32.xlu0 %v5208, 127
      %v5212 = vpop.permute.xlu0 %5211
      %5213 = vrot.lane.b32.xlu0 %v5209, 127
      %v5214 = vpop.permute.xlu0 %5213
      %5215 = vrot.lane.b32.xlu0 %v5210, 127
      %v5216 = vpop.permute.xlu0 %5215
      %v5217 = vsel %vm1055, %v5212, %v5214
      %v5218 = vsel %vm1055, %v5214, %v5216
      %v5220 = vsel %vm635, %v5202, 0
      %v5223 = vsel %vm1061, %v5217, 0
      %v5226 = vsel %vm1061, %v5218, 0
      %v5229 = vsel %vm1061, %v5216, 0
      %5231 = vmatprep.subr.bf16.mxu0 %v5226
      %5232 = vmatpush1.bf16.msra.mxu0 %v5223
      %5233 = vmatprep.subr.bf16.mxu0 0
      %5234 = vmatpush1.bf16.msra.mxu0 0
      %5235 = vmatprep.subr.bf16.mxu0 0
      %5236 = vmatpush1.bf16.msra.mxu0 0
      %5237 = vmatprep.subr.bf16.mxu0 0
      %5238 = vmatpush1.bf16.msra.mxu0 0
      %5239 = vmatprep.subr.bf16.mxu0 0
      %5240 = vmatpush1.bf16.msra.mxu0 0
      %5241 = vmatprep.subr.bf16.mxu0 0
      %5242 = vmatpush1.bf16.msra.mxu0 0
      %5243 = vmatprep.subr.bf16.mxu0 0
      %5244 = vmatpush1.bf16.msra.mxu0 0
      %5245 = vmatprep.subr.bf16.mxu0 0
      %5246 = vmatpush1.bf16.msra.mxu0 0
      %5247 = vmatprep.subr.bf16.mxu0 0
      %5248 = vmatpush1.bf16.msra.mxu0 0
      %5249 = vmatprep.subr.bf16.mxu0 0
      %5250 = vmatpush1.bf16.msra.mxu0 0
      %5251 = vmatprep.subr.bf16.mxu0 0
      %5252 = vmatpush1.bf16.msra.mxu0 0
      %5253 = vmatprep.subr.bf16.mxu0 0
      %5254 = vmatpush1.bf16.msra.mxu0 0
      %5255 = vmatprep.subr.bf16.mxu0 0
      %5256 = vmatpush1.bf16.msra.mxu0 0
      %5257 = vmatprep.subr.bf16.mxu0 0
      %5258 = vmatpush1.bf16.msra.mxu0 0
      %5259 = vmatprep.subr.bf16.mxu0 0
      %5260 = vmatpush1.bf16.msra.mxu0 0
      %5261 = vmatprep.subr.bf16.mxu0 0
      %5262 = vmatpush1.bf16.msra.mxu0 0
      %5263 = vmatprep.mubr.bf16.mxu0 0
      %5264 = vmatmul.mubr.bf16.gmra.mrb[0].mxu0 %v5220
      %v5265 = vpop.f32.mrb[0].mxu0
      %v5266 = vadd.f32 0.0, %v5265
      %v5267 = vpop.f32.mrb[0].mxu0
      %v5268 = vadd.f32 0.0, %v5267
      %v5269 = vpop.f32.mrb[0].mxu0
      %v5270 = vpop.f32.mrb[0].mxu0
      %5271 = vdwg.mxu0
      %5272 = vmatprep.subr.bf16.mxu0 0
      %5273 = vmatpush1.bf16.msra.mxu0 %v5229
      %5274 = vmatprep.subr.bf16.mxu0 0
      %5275 = vmatpush1.bf16.msra.mxu0 0
      %5276 = vmatprep.subr.bf16.mxu0 0
      %5277 = vmatpush1.bf16.msra.mxu0 0
      %5278 = vmatprep.subr.bf16.mxu0 0
      %5279 = vmatpush1.bf16.msra.mxu0 0
      %5280 = vmatprep.subr.bf16.mxu0 0
      %5281 = vmatpush1.bf16.msra.mxu0 0
      %5282 = vmatprep.subr.bf16.mxu0 0
      %5283 = vmatpush1.bf16.msra.mxu0 0
      %5284 = vmatprep.subr.bf16.mxu0 0
      %5285 = vmatpush1.bf16.msra.mxu0 0
      %5286 = vmatprep.subr.bf16.mxu0 0
      %5287 = vmatpush1.bf16.msra.mxu0 0
      %5288 = vmatprep.subr.bf16.mxu0 0
      %5289 = vmatpush1.bf16.msra.mxu0 0
      %5290 = vmatprep.subr.bf16.mxu0 0
      %5291 = vmatpush1.bf16.msra.mxu0 0
      %5292 = vmatprep.subr.bf16.mxu0 0
      %5293 = vmatpush1.bf16.msra.mxu0 0
      %5294 = vmatprep.subr.bf16.mxu0 0
      %5295 = vmatpush1.bf16.msra.mxu0 0
      %5296 = vmatprep.subr.bf16.mxu0 0
      %5297 = vmatpush1.bf16.msra.mxu0 0
      %5298 = vmatprep.subr.bf16.mxu0 0
      %5299 = vmatpush1.bf16.msra.mxu0 0
      %5300 = vmatprep.subr.bf16.mxu0 0
      %5301 = vmatpush1.bf16.msra.mxu0 0
      %5302 = vmatprep.subr.bf16.mxu0 0
      %5303 = vmatpush1.bf16.msra.mxu0 0
      %5304 = vmatprep.mubr.bf16.mxu0 0
      %5305 = vmatmul.mubr.bf16.gmra.mrb[0].mxu0 %v5220
      %v5306 = vpop.f32.mrb[0].mxu0
      %v5307 = vadd.f32 0.0, %v5306
      %v5308 = vpop.f32.mrb[0].mxu0
      %v5309 = vpop.f32.mrb[0].mxu0
      %v5310 = vpop.f32.mrb[0].mxu0
      %5311 = vdwg.mxu0
      %v5313 = vsel %vm635, %v5198, 0
      %v5316 = vsel %vm1061, %v5208, 0
      %v5319 = vsel %vm1061, %v5209, 0
      %v5322 = vsel %vm1061, %v5210, 0
      %5324 = vmatprep.subr.bf16.mxu0 %v5319
      %5325 = vmatpush1.bf16.msra.mxu0 %v5316
      %5326 = vmatprep.subr.bf16.mxu0 0
      %5327 = vmatpush1.bf16.msra.mxu0 0
      %5328 = vmatprep.subr.bf16.mxu0 0
      %5329 = vmatpush1.bf16.msra.mxu0 0
      %5330 = vmatprep.subr.bf16.mxu0 0
      %5331 = vmatpush1.bf16.msra.mxu0 0
      %5332 = vmatprep.subr.bf16.mxu0 0
      %5333 = vmatpush1.bf16.msra.mxu0 0
      %5334 = vmatprep.subr.bf16.mxu0 0
      %5335 = vmatpush1.bf16.msra.mxu0 0
      %5336 = vmatprep.subr.bf16.mxu0 0
      %5337 = vmatpush1.bf16.msra.mxu0 0
      %5338 = vmatprep.subr.bf16.mxu0 0
      %5339 = vmatpush1.bf16.msra.mxu0 0
      %5340 = vmatprep.subr.bf16.mxu0 0
      %5341 = vmatpush1.bf16.msra.mxu0 0
      %5342 = vmatprep.subr.bf16.mxu0 0
      %5343 = vmatpush1.bf16.msra.mxu0 0
      %5344 = vmatprep.subr.bf16.mxu0 0
      %5345 = vmatpush1.bf16.msra.mxu0 0
      %5346 = vmatprep.subr.bf16.mxu0 0
      %5347 = vmatpush1.bf16.msra.mxu0 0
      %5348 = vmatprep.subr.bf16.mxu0 0
      %5349 = vmatpush1.bf16.msra.mxu0 0
      %5350 = vmatprep.subr.bf16.mxu0 0
      %5351 = vmatpush1.bf16.msra.mxu0 0
      %5352 = vmatprep.subr.bf16.mxu0 0
      %5353 = vmatpush1.bf16.msra.mxu0 0
      %5354 = vmatprep.subr.bf16.mxu0 0
      %5355 = vmatpush1.bf16.msra.mxu0 0
      %5356 = vmatprep.mubr.bf16.mxu0 0
      %5357 = vmatmul.mubr.bf16.gmra.mrb[0].mxu0 %v5313
      %v5358 = vpop.f32.mrb[0].mxu0
      %v5359 = vadd.f32 %v5266, %v5358
      %v5360 = vpop.f32.mrb[0].mxu0
      %v5361 = vadd.f32 %v5268, %v5360
      %v5362 = vpop.f32.mrb[0].mxu0
      %v5363 = vpop.f32.mrb[0].mxu0
      %5364 = vdwg.mxu0
      %5365 = vmatprep.subr.bf16.mxu0 0
      %5366 = vmatpush1.bf16.msra.mxu0 %v5322
      %5367 = vmatprep.subr.bf16.mxu0 0
      %5368 = vmatpush1.bf16.msra.mxu0 0
      %5369 = vmatprep.subr.bf16.mxu0 0
      %5370 = vmatpush1.bf16.msra.mxu0 0
      %5371 = vmatprep.subr.bf16.mxu0 0
      %5372 = vmatpush1.bf16.msra.mxu0 0
      %5373 = vmatprep.subr.bf16.mxu0 0
      %5374 = vmatpush1.bf16.msra.mxu0 0
      %5375 = vmatprep.subr.bf16.mxu0 0
      %5376 = vmatpush1.bf16.msra.mxu0 0
      %5377 = vmatprep.subr.bf16.mxu0 0
      %5378 = vmatpush1.bf16.msra.mxu0 0
      %5379 = vmatprep.subr.bf16.mxu0 0
      %5380 = vmatpush1.bf16.msra.mxu0 0
      %5381 = vmatprep.subr.bf16.mxu0 0
      %5382 = vmatpush1.bf16.msra.mxu0 0
      %5383 = vmatprep.subr.bf16.mxu0 0
      %5384 = vmatpush1.bf16.msra.mxu0 0
      %5385 = vmatprep.subr.bf16.mxu0 0
      %5386 = vmatpush1.bf16.msra.mxu0 0
      %5387 = vmatprep.subr.bf16.mxu0 0
      %5388 = vmatpush1.bf16.msra.mxu0 0
      %5389 = vmatprep.subr.bf16.mxu0 0
      %5390 = vmatpush1.bf16.msra.mxu0 0
      %5391 = vmatprep.subr.bf16.mxu0 0
      %5392 = vmatpush1.bf16.msra.mxu0 0
      %5393 = vmatprep.subr.bf16.mxu0 0
      %5394 = vmatpush1.bf16.msra.mxu0 0
      %5395 = vmatprep.subr.bf16.mxu0 0
      %5396 = vmatpush1.bf16.msra.mxu0 0
      %5397 = vmatprep.mubr.bf16.mxu0 0
      %5398 = vmatmul.mubr.bf16.gmra.mrb[0].mxu0 %v5313
      %v5399 = vpop.f32.mrb[0].mxu0
      %v5400 = vadd.f32 %v5307, %v5399
      %v5401 = vpop.f32.mrb[0].mxu0
      %v5402 = vpop.f32.mrb[0].mxu0
      %v5403 = vpop.f32.mrb[0].mxu0
      %5404 = vdwg.mxu0
      %s5405 = scalar_lea.vmem %s16, 8
      %v5406 = vld [vmem:[%s5405] sm:$0xf]
      %5407 = vrot.lane.b32.xlu0 %v5208, 126
      %v5408 = vpop.permute.xlu0 %5407
      %5409 = vrot.lane.b32.xlu0 %v5209, 126
      %v5410 = vpop.permute.xlu0 %5409
      %5411 = vrot.lane.b32.xlu0 %v5210, 126
      %v5412 = vpop.permute.xlu0 %5411
      %v5413 = vsel %vm1253, %v5408, %v5410
      %v5414 = vsel %vm1253, %v5410, %v5412
      %v5416 = vsel %vm635, %v5406, 0
      %v5419 = vsel %vm1061, %v5413, 0
      %v5422 = vsel %vm1061, %v5414, 0
      %v5425 = vsel %vm1061, %v5412, 0
      %5427 = vmatprep.subr.bf16.mxu0 %v5422
      %5428 = vmatpush1.bf16.msra.mxu0 %v5419
      %5429 = vmatprep.subr.bf16.mxu0 0
      %5430 = vmatpush1.bf16.msra.mxu0 0
      %5431 = vmatprep.subr.bf16.mxu0 0
      %5432 = vmatpush1.bf16.msra.mxu0 0
      %5433 = vmatprep.subr.bf16.mxu0 0
      %5434 = vmatpush1.bf16.msra.mxu0 0
      %5435 = vmatprep.subr.bf16.mxu0 0
      %5436 = vmatpush1.bf16.msra.mxu0 0
      %5437 = vmatprep.subr.bf16.mxu0 0
      %5438 = vmatpush1.bf16.msra.mxu0 0
      %5439 = vmatprep.subr.bf16.mxu0 0
      %5440 = vmatpush1.bf16.msra.mxu0 0
      %5441 = vmatprep.subr.bf16.mxu0 0
      %5442 = vmatpush1.bf16.msra.mxu0 0
      %5443 = vmatprep.subr.bf16.mxu0 0
      %5444 = vmatpush1.bf16.msra.mxu0 0
      %5445 = vmatprep.subr.bf16.mxu0 0
      %5446 = vmatpush1.bf16.msra.mxu0 0
      %5447 = vmatprep.subr.bf16.mxu0 0
      %5448 = vmatpush1.bf16.msra.mxu0 0
      %5449 = vmatprep.subr.bf16.mxu0 0
      %5450 = vmatpush1.bf16.msra.mxu0 0
      %5451 = vmatprep.subr.bf16.mxu0 0
      %5452 = vmatpush1.bf16.msra.mxu0 0
      %5453 = vmatprep.subr.bf16.mxu0 0
      %5454 = vmatpush1.bf16.msra.mxu0 0
      %5455 = vmatprep.subr.bf16.mxu0 0
      %5456 = vmatpush1.bf16.msra.mxu0 0
      %5457 = vmatprep.subr.bf16.mxu0 0
      %5458 = vmatpush1.bf16.msra.mxu0 0
      %5459 = vmatprep.mubr.bf16.mxu0 0
      %5460 = vmatmul.mubr.bf16.gmra.mrb[0].mxu0 %v5416
      %v5461 = vpop.f32.mrb[0].mxu0
      %v5462 = vadd.f32 0.0, %v5461
      %v5463 = vpop.f32.mrb[0].mxu0
      %v5464 = vadd.f32 0.0, %v5463
      %v5465 = vpop.f32.mrb[0].mxu0
      %v5466 = vpop.f32.mrb[0].mxu0
      %5467 = vdwg.mxu0
      %5468 = vmatprep.subr.bf16.mxu0 0
      %5469 = vmatpush1.bf16.msra.mxu0 %v5425
      %5470 = vmatprep.subr.bf16.mxu0 0
      %5471 = vmatpush1.bf16.msra.mxu0 0
      %5472 = vmatprep.subr.bf16.mxu0 0
      %5473 = vmatpush1.bf16.msra.mxu0 0
      %5474 = vmatprep.subr.bf16.mxu0 0
      %5475 = vmatpush1.bf16.msra.mxu0 0
      %5476 = vmatprep.subr.bf16.mxu0 0
      %5477 = vmatpush1.bf16.msra.mxu0 0
      %5478 = vmatprep.subr.bf16.mxu0 0
      %5479 = vmatpush1.bf16.msra.mxu0 0
      %5480 = vmatprep.subr.bf16.mxu0 0
      %5481 = vmatpush1.bf16.msra.mxu0 0
      %5482 = vmatprep.subr.bf16.mxu0 0
      %5483 = vmatpush1.bf16.msra.mxu0 0
      %5484 = vmatprep.subr.bf16.mxu0 0
      %5485 = vmatpush1.bf16.msra.mxu0 0
      %5486 = vmatprep.subr.bf16.mxu0 0
      %5487 = vmatpush1.bf16.msra.mxu0 0
      %5488 = vmatprep.subr.bf16.mxu0 0
      %5489 = vmatpush1.bf16.msra.mxu0 0
      %5490 = vmatprep.subr.bf16.mxu0 0
      %5491 = vmatpush1.bf16.msra.mxu0 0
      %5492 = vmatprep.subr.bf16.mxu0 0
      %5493 = vmatpush1.bf16.msra.mxu0 0
      %5494 = vmatprep.subr.bf16.mxu0 0
      %5495 = vmatpush1.bf16.msra.mxu0 0
      %5496 = vmatprep.subr.bf16.mxu0 0
      %5497 = vmatpush1.bf16.msra.mxu0 0
      %5498 = vmatprep.subr.bf16.mxu0 0
      %5499 = vmatpush1.bf16.msra.mxu0 0
      %5500 = vmatprep.mubr.bf16.mxu0 0
      %5501 = vmatmul.mubr.bf16.gmra.mrb[0].mxu0 %v5416
      %v5502 = vpop.f32.mrb[0].mxu0
      %v5503 = vadd.f32 0.0, %v5502
      %v5504 = vpop.f32.mrb[0].mxu0
      %v5505 = vpop.f32.mrb[0].mxu0
      %v5506 = vpop.f32.mrb[0].mxu0
      %5507 = vdwg.mxu0
      %v5508 = vadd.f32 %v5359, %v5462
      %v5509 = vadd.f32 %v5361, %v5464
      %v5510 = vadd.f32 %v5400, %v5503
      %s5511 = scalar_lea.vmem %s16, 12
      %v5512 = vld [vmem:[%s5511] sm:$0xf]
      %5513 = vrot.lane.b32.xlu0 %v5208, 110
      %v5514 = vpop.permute.xlu0 %5513
      %5515 = vrot.lane.b32.xlu0 %v5209, 110
      %v5516 = vpop.permute.xlu0 %5515
      %5517 = vrot.lane.b32.xlu0 %v5210, 110
      %v5518 = vpop.permute.xlu0 %5517
      %v5519 = vsel %vm1360, %v5514, %v5516
      %v5520 = vsel %vm1360, %v5516, %v5518
      %v5522 = vsel %vm635, %v5512, 0
      %v5525 = vsel %vm1061, %v5519, 0
      %v5528 = vsel %vm1061, %v5520, 0
      %v5531 = vsel %vm1061, %v5518, 0
      %5533 = vmatprep.subr.bf16.mxu0 %v5528
      %5534 = vmatpush1.bf16.msra.mxu0 %v5525
      %5535 = vmatprep.subr.bf16.mxu0 0
      %5536 = vmatpush1.bf16.msra.mxu0 0
      %5537 = vmatprep.subr.bf16.mxu0 0
      %5538 = vmatpush1.bf16.msra.mxu0 0
      %5539 = vmatprep.subr.bf16.mxu0 0
      %5540 = vmatpush1.bf16.msra.mxu0 0
      %5541 = vmatprep.subr.bf16.mxu0 0
      %5542 = vmatpush1.bf16.msra.mxu0 0
      %5543 = vmatprep.subr.bf16.mxu0 0
      %5544 = vmatpush1.bf16.msra.mxu0 0
      %5545 = vmatprep.subr.bf16.mxu0 0
      %5546 = vmatpush1.bf16.msra.mxu0 0
      %5547 = vmatprep.subr.bf16.mxu0 0
      %5548 = vmatpush1.bf16.msra.mxu0 0
      %5549 = vmatprep.subr.bf16.mxu0 0
      %5550 = vmatpush1.bf16.msra.mxu0 0
      %5551 = vmatprep.subr.bf16.mxu0 0
      %5552 = vmatpush1.bf16.msra.mxu0 0
      %5553 = vmatprep.subr.bf16.mxu0 0
      %5554 = vmatpush1.bf16.msra.mxu0 0
      %5555 = vmatprep.subr.bf16.mxu0 0
      %5556 = vmatpush1.bf16.msra.mxu0 0
      %5557 = vmatprep.subr.bf16.mxu0 0
      %5558 = vmatpush1.bf16.msra.mxu0 0
      %5559 = vmatprep.subr.bf16.mxu0 0
      %5560 = vmatpush1.bf16.msra.mxu0 0
      %5561 = vmatprep.subr.bf16.mxu0 0
      %5562 = vmatpush1.bf16.msra.mxu0 0
      %5563 = vmatprep.subr.bf16.mxu0 0
      %5564 = vmatpush1.bf16.msra.mxu0 0
      %5565 = vmatprep.mubr.bf16.mxu0 0
      %5566 = vmatmul.mubr.bf16.gmra.mrb[0].mxu0 %v5522
      %v5567 = vpop.f32.mrb[0].mxu0
      %v5568 = vadd.f32 0.0, %v5567
      %v5569 = vpop.f32.mrb[0].mxu0
      %v5570 = vadd.f32 0.0, %v5569
      %v5571 = vpop.f32.mrb[0].mxu0
      %v5572 = vpop.f32.mrb[0].mxu0
      %5573 = vdwg.mxu0
      %5574 = vmatprep.subr.bf16.mxu0 0
      %5575 = vmatpush1.bf16.msra.mxu0 %v5531
      %5576 = vmatprep.subr.bf16.mxu0 0
      %5577 = vmatpush1.bf16.msra.mxu0 0
      %5578 = vmatprep.subr.bf16.mxu0 0
      %5579 = vmatpush1.bf16.msra.mxu0 0
      %5580 = vmatprep.subr.bf16.mxu0 0
      %5581 = vmatpush1.bf16.msra.mxu0 0
      %5582 = vmatprep.subr.bf16.mxu0 0
      %5583 = vmatpush1.bf16.msra.mxu0 0
      %5584 = vmatprep.subr.bf16.mxu0 0
      %5585 = vmatpush1.bf16.msra.mxu0 0
      %5586 = vmatprep.subr.bf16.mxu0 0
      %5587 = vmatpush1.bf16.msra.mxu0 0
      %5588 = vmatprep.subr.bf16.mxu0 0
      %5589 = vmatpush1.bf16.msra.mxu0 0
      %5590 = vmatprep.subr.bf16.mxu0 0
      %5591 = vmatpush1.bf16.msra.mxu0 0
      %5592 = vmatprep.subr.bf16.mxu0 0
      %5593 = vmatpush1.bf16.msra.mxu0 0
      %5594 = vmatprep.subr.bf16.mxu0 0
      %5595 = vmatpush1.bf16.msra.mxu0 0
      %5596 = vmatprep.subr.bf16.mxu0 0
      %5597 = vmatpush1.bf16.msra.mxu0 0
      %5598 = vmatprep.subr.bf16.mxu0 0
      %5599 = vmatpush1.bf16.msra.mxu0 0
      %5600 = vmatprep.subr.bf16.mxu0 0
      %5601 = vmatpush1.bf16.msra.mxu0 0
      %5602 = vmatprep.subr.bf16.mxu0 0
      %5603 = vmatpush1.bf16.msra.mxu0 0
      %5604 = vmatprep.subr.bf16.mxu0 0
      %5605 = vmatpush1.bf16.msra.mxu0 0
      %5606 = vmatprep.mubr.bf16.mxu0 0
      %5607 = vmatmul.mubr.bf16.gmra.mrb[0].mxu0 %v5522
      %v5608 = vpop.f32.mrb[0].mxu0
      %v5609 = vadd.f32 0.0, %v5608
      %v5610 = vpop.f32.mrb[0].mxu0
      %v5611 = vpop.f32.mrb[0].mxu0
      %v5612 = vpop.f32.mrb[0].mxu0
      %5613 = vdwg.mxu0
      %v5614 = vadd.f32 %v5508, %v5568
      %v5615 = vadd.f32 %v5509, %v5570
      %v5616 = vadd.f32 %v5510, %v5609
      %s5617 = scalar_lea.vmem %s16, 16
      %v5618 = vld [vmem:[%s5617] sm:$0xf]
      %5619 = vrot.lane.b32.xlu0 %v5208, 109
      %v5620 = vpop.permute.xlu0 %5619
      %5621 = vrot.lane.b32.xlu0 %v5209, 109
      %v5622 = vpop.permute.xlu0 %5621
      %5623 = vrot.lane.b32.xlu0 %v5210, 109
      %v5624 = vpop.permute.xlu0 %5623
      %v5625 = vsel %vm1467, %v5620, %v5622
      %v5626 = vsel %vm1467, %v5622, %v5624
      %v5628 = vsel %vm635, %v5618, 0
      %v5631 = vsel %vm1061, %v5625, 0
      %v5634 = vsel %vm1061, %v5626, 0
      %v5637 = vsel %vm1061, %v5624, 0
      %5639 = vmatprep.subr.bf16.mxu0 %v5634
      %5640 = vmatpush1.bf16.msra.mxu0 %v5631
      %5641 = vmatprep.subr.bf16.mxu0 0
      %5642 = vmatpush1.bf16.msra.mxu0 0
      %5643 = vmatprep.subr.bf16.mxu0 0
      %5644 = vmatpush1.bf16.msra.mxu0 0
      %5645 = vmatprep.subr.bf16.mxu0 0
      %5646 = vmatpush1.bf16.msra.mxu0 0
      %5647 = vmatprep.subr.bf16.mxu0 0
      %5648 = vmatpush1.bf16.msra.mxu0 0
      %5649 = vmatprep.subr.bf16.mxu0 0
      %5650 = vmatpush1.bf16.msra.mxu0 0
      %5651 = vmatprep.subr.bf16.mxu0 0
      %5652 = vmatpush1.bf16.msra.mxu0 0
      %5653 = vmatprep.subr.bf16.mxu0 0
      %5654 = vmatpush1.bf16.msra.mxu0 0
      %5655 = vmatprep.subr.bf16.mxu0 0
      %5656 = vmatpush1.bf16.msra.mxu0 0
      %5657 = vmatprep.subr.bf16.mxu0 0
      %5658 = vmatpush1.bf16.msra.mxu0 0
      %5659 = vmatprep.subr.bf16.mxu0 0
      %5660 = vmatpush1.bf16.msra.mxu0 0
      %5661 = vmatprep.subr.bf16.mxu0 0
      %5662 = vmatpush1.bf16.msra.mxu0 0
      %5663 = vmatprep.subr.bf16.mxu0 0
      %5664 = vmatpush1.bf16.msra.mxu0 0
      %5665 = vmatprep.subr.bf16.mxu0 0
      %5666 = vmatpush1.bf16.msra.mxu0 0
      %5667 = vmatprep.subr.bf16.mxu0 0
      %5668 = vmatpush1.bf16.msra.mxu0 0
      %5669 = vmatprep.subr.bf16.mxu0 0
      %5670 = vmatpush1.bf16.msra.mxu0 0
      %5671 = vmatprep.mubr.bf16.mxu0 0
      %5672 = vmatmul.mubr.bf16.gmra.mrb[0].mxu0 %v5628
      %v5673 = vpop.f32.mrb[0].mxu0
      %v5674 = vadd.f32 0.0, %v5673
      %v5675 = vpop.f32.mrb[0].mxu0
      %v5676 = vadd.f32 0.0, %v5675
      %v5677 = vpop.f32.mrb[0].mxu0
      %v5678 = vpop.f32.mrb[0].mxu0
      %5679 = vdwg.mxu0
      %5680 = vmatprep.subr.bf16.mxu0 0
      %5681 = vmatpush1.bf16.msra.mxu0 %v5637
      %5682 = vmatprep.subr.bf16.mxu0 0
      %5683 = vmatpush1.bf16.msra.mxu0 0
      %5684 = vmatprep.subr.bf16.mxu0 0
      %5685 = vmatpush1.bf16.msra.mxu0 0
      %5686 = vmatprep.subr.bf16.mxu0 0
      %5687 = vmatpush1.bf16.msra.mxu0 0
      %5688 = vmatprep.subr.bf16.mxu0 0
      %5689 = vmatpush1.bf16.msra.mxu0 0
      %5690 = vmatprep.subr.bf16.mxu0 0
      %5691 = vmatpush1.bf16.msra.mxu0 0
      %5692 = vmatprep.subr.bf16.mxu0 0
      %5693 = vmatpush1.bf16.msra.mxu0 0
      %5694 = vmatprep.subr.bf16.mxu0 0
      %5695 = vmatpush1.bf16.msra.mxu0 0
      %5696 = vmatprep.subr.bf16.mxu0 0
      %5697 = vmatpush1.bf16.msra.mxu0 0
      %5698 = vmatprep.subr.bf16.mxu0 0
      %5699 = vmatpush1.bf16.msra.mxu0 0
      %5700 = vmatprep.subr.bf16.mxu0 0
      %5701 = vmatpush1.bf16.msra.mxu0 0
      %5702 = vmatprep.subr.bf16.mxu0 0
      %5703 = vmatpush1.bf16.msra.mxu0 0
      %5704 = vmatprep.subr.bf16.mxu0 0
      %5705 = vmatpush1.bf16.msra.mxu0 0
      %5706 = vmatprep.subr.bf16.mxu0 0
      %5707 = vmatpush1.bf16.msra.mxu0 0
      %5708 = vmatprep.subr.bf16.mxu0 0
      %5709 = vmatpush1.bf16.msra.mxu0 0
      %5710 = vmatprep.subr.bf16.mxu0 0
      %5711 = vmatpush1.bf16.msra.mxu0 0
      %5712 = vmatprep.mubr.bf16.mxu0 0
      %5713 = vmatmul.mubr.bf16.gmra.mrb[0].mxu0 %v5628
      %v5714 = vpop.f32.mrb[0].mxu0
      %v5715 = vadd.f32 0.0, %v5714
      %v5716 = vpop.f32.mrb[0].mxu0
      %v5717 = vpop.f32.mrb[0].mxu0
      %v5718 = vpop.f32.mrb[0].mxu0
      %5719 = vdwg.mxu0
      %v5720 = vadd.f32 %v5614, %v5674
      %v5721 = vadd.f32 %v5615, %v5676
      %v5722 = vadd.f32 %v5616, %v5715
      %s5723 = scalar_lea.vmem %s16, 20
      %v5724 = vld [vmem:[%s5723] sm:$0xf]
      %5725 = vrot.lane.b32.xlu0 %v5208, 108
      %v5726 = vpop.permute.xlu0 %5725
      %5727 = vrot.lane.b32.xlu0 %v5209, 108
      %v5728 = vpop.permute.xlu0 %5727
      %5729 = vrot.lane.b32.xlu0 %v5210, 108
      %v5730 = vpop.permute.xlu0 %5729
      %v5731 = vsel %vm1574, %v5726, %v5728
      %v5732 = vsel %vm1574, %v5728, %v5730
      %v5734 = vsel %vm635, %v5724, 0
      %v5737 = vsel %vm1061, %v5731, 0
      %v5740 = vsel %vm1061, %v5732, 0
      %v5743 = vsel %vm1061, %v5730, 0
      %5745 = vmatprep.subr.bf16.mxu0 %v5740
      %5746 = vmatpush1.bf16.msra.mxu0 %v5737
      %5747 = vmatprep.subr.bf16.mxu0 0
      %5748 = vmatpush1.bf16.msra.mxu0 0
      %5749 = vmatprep.subr.bf16.mxu0 0
      %5750 = vmatpush1.bf16.msra.mxu0 0
      %5751 = vmatprep.subr.bf16.mxu0 0
      %5752 = vmatpush1.bf16.msra.mxu0 0
      %5753 = vmatprep.subr.bf16.mxu0 0
      %5754 = vmatpush1.bf16.msra.mxu0 0
      %5755 = vmatprep.subr.bf16.mxu0 0
      %5756 = vmatpush1.bf16.msra.mxu0 0
      %5757 = vmatprep.subr.bf16.mxu0 0
      %5758 = vmatpush1.bf16.msra.mxu0 0
      %5759 = vmatprep.subr.bf16.mxu0 0
      %5760 = vmatpush1.bf16.msra.mxu0 0
      %5761 = vmatprep.subr.bf16.mxu0 0
      %5762 = vmatpush1.bf16.msra.mxu0 0
      %5763 = vmatprep.subr.bf16.mxu0 0
      %5764 = vmatpush1.bf16.msra.mxu0 0
      %5765 = vmatprep.subr.bf16.mxu0 0
      %5766 = vmatpush1.bf16.msra.mxu0 0
      %5767 = vmatprep.subr.bf16.mxu0 0
      %5768 = vmatpush1.bf16.msra.mxu0 0
      %5769 = vmatprep.subr.bf16.mxu0 0
      %5770 = vmatpush1.bf16.msra.mxu0 0
      %5771 = vmatprep.subr.bf16.mxu0 0
      %5772 = vmatpush1.bf16.msra.mxu0 0
      %5773 = vmatprep.subr.bf16.mxu0 0
      %5774 = vmatpush1.bf16.msra.mxu0 0
      %5775 = vmatprep.subr.bf16.mxu0 0
      %5776 = vmatpush1.bf16.msra.mxu0 0
      %5777 = vmatprep.mubr.bf16.mxu0 0
      %5778 = vmatmul.mubr.bf16.gmra.mrb[0].mxu0 %v5734
      %v5779 = vpop.f32.mrb[0].mxu0
      %v5780 = vadd.f32 0.0, %v5779
      %v5781 = vpop.f32.mrb[0].mxu0
      %v5782 = vadd.f32 0.0, %v5781
      %v5783 = vpop.f32.mrb[0].mxu0
      %v5784 = vpop.f32.mrb[0].mxu0
      %5785 = vdwg.mxu0
      %5786 = vmatprep.subr.bf16.mxu0 0
      %5787 = vmatpush1.bf16.msra.mxu0 %v5743
      %5788 = vmatprep.subr.bf16.mxu0 0
      %5789 = vmatpush1.bf16.msra.mxu0 0
      %5790 = vmatprep.subr.bf16.mxu0 0
      %5791 = vmatpush1.bf16.msra.mxu0 0
      %5792 = vmatprep.subr.bf16.mxu0 0
      %5793 = vmatpush1.bf16.msra.mxu0 0
      %5794 = vmatprep.subr.bf16.mxu0 0
      %5795 = vmatpush1.bf16.msra.mxu0 0
      %5796 = vmatprep.subr.bf16.mxu0 0
      %5797 = vmatpush1.bf16.msra.mxu0 0
      %5798 = vmatprep.subr.bf16.mxu0 0
      %5799 = vmatpush1.bf16.msra.mxu0 0
      %5800 = vmatprep.subr.bf16.mxu0 0
      %5801 = vmatpush1.bf16.msra.mxu0 0
      %5802 = vmatprep.subr.bf16.mxu0 0
      %5803 = vmatpush1.bf16.msra.mxu0 0
      %5804 = vmatprep.subr.bf16.mxu0 0
      %5805 = vmatpush1.bf16.msra.mxu0 0
      %5806 = vmatprep.subr.bf16.mxu0 0
      %5807 = vmatpush1.bf16.msra.mxu0 0
      %5808 = vmatprep.subr.bf16.mxu0 0
      %5809 = vmatpush1.bf16.msra.mxu0 0
      %5810 = vmatprep.subr.bf16.mxu0 0
      %5811 = vmatpush1.bf16.msra.mxu0 0
      %5812 = vmatprep.subr.bf16.mxu0 0
      %5813 = vmatpush1.bf16.msra.mxu0 0
      %5814 = vmatprep.subr.bf16.mxu0 0
      %5815 = vmatpush1.bf16.msra.mxu0 0
      %5816 = vmatprep.subr.bf16.mxu0 0
      %5817 = vmatpush1.bf16.msra.mxu0 0
      %5818 = vmatprep.mubr.bf16.mxu0 0
      %5819 = vmatmul.mubr.bf16.gmra.mrb[0].mxu0 %v5734
      %v5820 = vpop.f32.mrb[0].mxu0
      %v5821 = vadd.f32 0.0, %v5820
      %v5822 = vpop.f32.mrb[0].mxu0
      %v5823 = vpop.f32.mrb[0].mxu0
      %v5824 = vpop.f32.mrb[0].mxu0
      %5825 = vdwg.mxu0
      %v5826 = vadd.f32 %v5720, %v5780
      %v5827 = vadd.f32 %v5721, %v5782
      %v5828 = vadd.f32 %v5722, %v5821
      %s5829 = scalar_lea.vmem %s16, 24
      %v5830 = vld [vmem:[%s5829] sm:$0xf]
      %5831 = vrot.lane.b32.xlu0 %v5208, 92
      %v5832 = vpop.permute.xlu0 %5831
      %5833 = vrot.lane.b32.xlu0 %v5209, 92
      %v5834 = vpop.permute.xlu0 %5833
      %5835 = vrot.lane.b32.xlu0 %v5210, 92
      %v5836 = vpop.permute.xlu0 %5835
      %v5837 = vsel %vm1681, %v5832, %v5834
      %v5838 = vsel %vm1681, %v5834, %v5836
      %v5840 = vsel %vm635, %v5830, 0
      %v5843 = vsel %vm1061, %v5837, 0
      %v5846 = vsel %vm1061, %v5838, 0
      %v5849 = vsel %vm1061, %v5836, 0
      %5851 = vmatprep.subr.bf16.mxu0 %v5846
      %5852 = vmatpush1.bf16.msra.mxu0 %v5843
      %5853 = vmatprep.subr.bf16.mxu0 0
      %5854 = vmatpush1.bf16.msra.mxu0 0
      %5855 = vmatprep.subr.bf16.mxu0 0
      %5856 = vmatpush1.bf16.msra.mxu0 0
      %5857 = vmatprep.subr.bf16.mxu0 0
      %5858 = vmatpush1.bf16.msra.mxu0 0
      %5859 = vmatprep.subr.bf16.mxu0 0
      %5860 = vmatpush1.bf16.msra.mxu0 0
      %5861 = vmatprep.subr.bf16.mxu0 0
      %5862 = vmatpush1.bf16.msra.mxu0 0
      %5863 = vmatprep.subr.bf16.mxu0 0
      %5864 = vmatpush1.bf16.msra.mxu0 0
      %5865 = vmatprep.subr.bf16.mxu0 0
      %5866 = vmatpush1.bf16.msra.mxu0 0
      %5867 = vmatprep.subr.bf16.mxu0 0
      %5868 = vmatpush1.bf16.msra.mxu0 0
      %5869 = vmatprep.subr.bf16.mxu0 0
      %5870 = vmatpush1.bf16.msra.mxu0 0
      %5871 = vmatprep.subr.bf16.mxu0 0
      %5872 = vmatpush1.bf16.msra.mxu0 0
      %5873 = vmatprep.subr.bf16.mxu0 0
      %5874 = vmatpush1.bf16.msra.mxu0 0
      %5875 = vmatprep.subr.bf16.mxu0 0
      %5876 = vmatpush1.bf16.msra.mxu0 0
      %5877 = vmatprep.subr.bf16.mxu0 0
      %5878 = vmatpush1.bf16.msra.mxu0 0
      %5879 = vmatprep.subr.bf16.mxu0 0
      %5880 = vmatpush1.bf16.msra.mxu0 0
      %5881 = vmatprep.subr.bf16.mxu0 0
      %5882 = vmatpush1.bf16.msra.mxu0 0
      %5883 = vmatprep.mubr.bf16.mxu0 0
      %5884 = vmatmul.mubr.bf16.gmra.mrb[0].mxu0 %v5840
      %v5885 = vpop.f32.mrb[0].mxu0
      %v5886 = vadd.f32 0.0, %v5885
      %v5887 = vpop.f32.mrb[0].mxu0
      %v5888 = vadd.f32 0.0, %v5887
      %v5889 = vpop.f32.mrb[0].mxu0
      %v5890 = vpop.f32.mrb[0].mxu0
      %5891 = vdwg.mxu0
      %5892 = vmatprep.subr.bf16.mxu0 0
      %5893 = vmatpush1.bf16.msra.mxu0 %v5849
      %5894 = vmatprep.subr.bf16.mxu0 0
      %5895 = vmatpush1.bf16.msra.mxu0 0
      %5896 = vmatprep.subr.bf16.mxu0 0
      %5897 = vmatpush1.bf16.msra.mxu0 0
      %5898 = vmatprep.subr.bf16.mxu0 0
      %5899 = vmatpush1.bf16.msra.mxu0 0
      %5900 = vmatprep.subr.bf16.mxu0 0
      %5901 = vmatpush1.bf16.msra.mxu0 0
      %5902 = vmatprep.subr.bf16.mxu0 0
      %5903 = vmatpush1.bf16.msra.mxu0 0
      %5904 = vmatprep.subr.bf16.mxu0 0
      %5905 = vmatpush1.bf16.msra.mxu0 0
      %5906 = vmatprep.subr.bf16.mxu0 0
      %5907 = vmatpush1.bf16.msra.mxu0 0
      %5908 = vmatprep.subr.bf16.mxu0 0
      %5909 = vmatpush1.bf16.msra.mxu0 0
      %5910 = vmatprep.subr.bf16.mxu0 0
      %5911 = vmatpush1.bf16.msra.mxu0 0
      %5912 = vmatprep.subr.bf16.mxu0 0
      %5913 = vmatpush1.bf16.msra.mxu0 0
      %5914 = vmatprep.subr.bf16.mxu0 0
      %5915 = vmatpush1.bf16.msra.mxu0 0
      %5916 = vmatprep.subr.bf16.mxu0 0
      %5917 = vmatpush1.bf16.msra.mxu0 0
      %5918 = vmatprep.subr.bf16.mxu0 0
      %5919 = vmatpush1.bf16.msra.mxu0 0
      %5920 = vmatprep.subr.bf16.mxu0 0
      %5921 = vmatpush1.bf16.msra.mxu0 0
      %5922 = vmatprep.subr.bf16.mxu0 0
      %5923 = vmatpush1.bf16.msra.mxu0 0
      %5924 = vmatprep.mubr.bf16.mxu0 0
      %5925 = vmatmul.mubr.bf16.gmra.mrb[0].mxu0 %v5840
      %v5926 = vpop.f32.mrb[0].mxu0
      %v5927 = vadd.f32 0.0, %v5926
      %v5928 = vpop.f32.mrb[0].mxu0
      %v5929 = vpop.f32.mrb[0].mxu0
      %v5930 = vpop.f32.mrb[0].mxu0
      %5931 = vdwg.mxu0
      %v5932 = vadd.f32 %v5826, %v5886
      %v5933 = vadd.f32 %v5827, %v5888
      %v5934 = vadd.f32 %v5828, %v5927
      %s5935 = scalar_lea.vmem %s16, 28
      %v5936 = vld [vmem:[%s5935] sm:$0xf]
      %5937 = vrot.lane.b32.xlu0 %v5208, 91
      %v5938 = vpop.permute.xlu0 %5937
      %5939 = vrot.lane.b32.xlu0 %v5209, 91
      %v5940 = vpop.permute.xlu0 %5939
      %5941 = vrot.lane.b32.xlu0 %v5210, 91
      %v5942 = vpop.permute.xlu0 %5941
      %v5943 = vsel %vm1788, %v5938, %v5940
      %v5944 = vsel %vm1788, %v5940, %v5942
      %v5946 = vsel %vm635, %v5936, 0
      %v5949 = vsel %vm1061, %v5943, 0
      %v5952 = vsel %vm1061, %v5944, 0
      %v5955 = vsel %vm1061, %v5942, 0
      %5957 = vmatprep.subr.bf16.mxu0 %v5952
      %5958 = vmatpush1.bf16.msra.mxu0 %v5949
      %5959 = vmatprep.subr.bf16.mxu0 0
      %5960 = vmatpush1.bf16.msra.mxu0 0
      %5961 = vmatprep.subr.bf16.mxu0 0
      %5962 = vmatpush1.bf16.msra.mxu0 0
      %5963 = vmatprep.subr.bf16.mxu0 0
      %5964 = vmatpush1.bf16.msra.mxu0 0
      %5965 = vmatprep.subr.bf16.mxu0 0
      %5966 = vmatpush1.bf16.msra.mxu0 0
      %5967 = vmatprep.subr.bf16.mxu0 0
      %5968 = vmatpush1.bf16.msra.mxu0 0
      %5969 = vmatprep.subr.bf16.mxu0 0
      %5970 = vmatpush1.bf16.msra.mxu0 0
      %5971 = vmatprep.subr.bf16.mxu0 0
      %5972 = vmatpush1.bf16.msra.mxu0 0
      %5973 = vmatprep.subr.bf16.mxu0 0
      %5974 = vmatpush1.bf16.msra.mxu0 0
      %5975 = vmatprep.subr.bf16.mxu0 0
      %5976 = vmatpush1.bf16.msra.mxu0 0
      %5977 = vmatprep.subr.bf16.mxu0 0
      %5978 = vmatpush1.bf16.msra.mxu0 0
      %5979 = vmatprep.subr.bf16.mxu0 0
      %5980 = vmatpush1.bf16.msra.mxu0 0
      %5981 = vmatprep.subr.bf16.mxu0 0
      %5982 = vmatpush1.bf16.msra.mxu0 0
      %5983 = vmatprep.subr.bf16.mxu0 0
      %5984 = vmatpush1.bf16.msra.mxu0 0
      %5985 = vmatprep.subr.bf16.mxu0 0
      %5986 = vmatpush1.bf16.msra.mxu0 0
      %5987 = vmatprep.subr.bf16.mxu0 0
      %5988 = vmatpush1.bf16.msra.mxu0 0
      %5989 = vmatprep.mubr.bf16.mxu0 0
      %5990 = vmatmul.mubr.bf16.gmra.mrb[0].mxu0 %v5946
      %v5991 = vpop.f32.mrb[0].mxu0
      %v5992 = vadd.f32 0.0, %v5991
      %v5993 = vpop.f32.mrb[0].mxu0
      %v5994 = vadd.f32 0.0, %v5993
      %v5995 = vpop.f32.mrb[0].mxu0
      %v5996 = vpop.f32.mrb[0].mxu0
      %5997 = vdwg.mxu0
      %5998 = vmatprep.subr.bf16.mxu0 0
      %5999 = vmatpush1.bf16.msra.mxu0 %v5955
      %6000 = vmatprep.subr.bf16.mxu0 0
      %6001 = vmatpush1.bf16.msra.mxu0 0
      %6002 = vmatprep.subr.bf16.mxu0 0
      %6003 = vmatpush1.bf16.msra.mxu0 0
      %6004 = vmatprep.subr.bf16.mxu0 0
      %6005 = vmatpush1.bf16.msra.mxu0 0
      %6006 = vmatprep.subr.bf16.mxu0 0
      %6007 = vmatpush1.bf16.msra.mxu0 0
      %6008 = vmatprep.subr.bf16.mxu0 0
      %6009 = vmatpush1.bf16.msra.mxu0 0
      %6010 = vmatprep.subr.bf16.mxu0 0
      %6011 = vmatpush1.bf16.msra.mxu0 0
      %6012 = vmatprep.subr.bf16.mxu0 0
      %6013 = vmatpush1.bf16.msra.mxu0 0
      %6014 = vmatprep.subr.bf16.mxu0 0
      %6015 = vmatpush1.bf16.msra.mxu0 0
      %6016 = vmatprep.subr.bf16.mxu0 0
      %6017 = vmatpush1.bf16.msra.mxu0 0
      %6018 = vmatprep.subr.bf16.mxu0 0
      %6019 = vmatpush1.bf16.msra.mxu0 0
      %6020 = vmatprep.subr.bf16.mxu0 0
      %6021 = vmatpush1.bf16.msra.mxu0 0
      %6022 = vmatprep.subr.bf16.mxu0 0
      %6023 = vmatpush1.bf16.msra.mxu0 0
      %6024 = vmatprep.subr.bf16.mxu0 0
      %6025 = vmatpush1.bf16.msra.mxu0 0
      %6026 = vmatprep.subr.bf16.mxu0 0
      %6027 = vmatpush1.bf16.msra.mxu0 0
      %6028 = vmatprep.subr.bf16.mxu0 0
      %6029 = vmatpush1.bf16.msra.mxu0 0
      %6030 = vmatprep.mubr.bf16.mxu0 0
      %6031 = vmatmul.mubr.bf16.gmra.mrb[0].mxu0 %v5946
      %v6032 = vpop.f32.mrb[0].mxu0
      %v6033 = vadd.f32 0.0, %v6032
      %v6034 = vpop.f32.mrb[0].mxu0
      %v6035 = vpop.f32.mrb[0].mxu0
      %v6036 = vpop.f32.mrb[0].mxu0
      %6037 = vdwg.mxu0
      %v6038 = vadd.f32 %v5932, %v5992
      %v6039 = vadd.f32 %v5933, %v5994
      %v6040 = vadd.f32 %v5934, %v6033
      %s6041 = scalar_lea.vmem %s16, 32
      %v6042 = vld [vmem:[%s6041] sm:$0xf]
      %6043 = vrot.lane.b32.xlu0 %v5208, 90
      %v6044 = vpop.permute.xlu0 %6043
      %6045 = vrot.lane.b32.xlu0 %v5209, 90
      %v6046 = vpop.permute.xlu0 %6045
      %6047 = vrot.lane.b32.xlu0 %v5210, 90
      %v6048 = vpop.permute.xlu0 %6047
      %v6049 = vsel %vm1895, %v6044, %v6046
      %v6050 = vsel %vm1895, %v6046, %v6048
      %v6052 = vsel %vm635, %v6042, 0
      %v6055 = vsel %vm1061, %v6049, 0
      %v6058 = vsel %vm1061, %v6050, 0
      %v6061 = vsel %vm1061, %v6048, 0
      %6063 = vmatprep.subr.bf16.mxu0 %v6058
      %6064 = vmatpush1.bf16.msra.mxu0 %v6055
      %6065 = vmatprep.subr.bf16.mxu0 0
      %6066 = vmatpush1.bf16.msra.mxu0 0
      %6067 = vmatprep.subr.bf16.mxu0 0
      %6068 = vmatpush1.bf16.msra.mxu0 0
      %6069 = vmatprep.subr.bf16.mxu0 0
      %6070 = vmatpush1.bf16.msra.mxu0 0
      %6071 = vmatprep.subr.bf16.mxu0 0
      %6072 = vmatpush1.bf16.msra.mxu0 0
      %6073 = vmatprep.subr.bf16.mxu0 0
      %6074 = vmatpush1.bf16.msra.mxu0 0
      %6075 = vmatprep.subr.bf16.mxu0 0
      %6076 = vmatpush1.bf16.msra.mxu0 0
      %6077 = vmatprep.subr.bf16.mxu0 0
      %6078 = vmatpush1.bf16.msra.mxu0 0
      %6079 = vmatprep.subr.bf16.mxu0 0
      %6080 = vmatpush1.bf16.msra.mxu0 0
      %6081 = vmatprep.subr.bf16.mxu0 0
      %6082 = vmatpush1.bf16.msra.mxu0 0
      %6083 = vmatprep.subr.bf16.mxu0 0
      %6084 = vmatpush1.bf16.msra.mxu0 0
      %6085 = vmatprep.subr.bf16.mxu0 0
      %6086 = vmatpush1.bf16.msra.mxu0 0
      %6087 = vmatprep.subr.bf16.mxu0 0
      %6088 = vmatpush1.bf16.msra.mxu0 0
      %6089 = vmatprep.subr.bf16.mxu0 0
      %6090 = vmatpush1.bf16.msra.mxu0 0
      %6091 = vmatprep.subr.bf16.mxu0 0
      %6092 = vmatpush1.bf16.msra.mxu0 0
      %6093 = vmatprep.subr.bf16.mxu0 0
      %6094 = vmatpush1.bf16.msra.mxu0 0
      %6095 = vmatprep.mubr.bf16.mxu0 0
      %6096 = vmatmul.mubr.bf16.gmra.mrb[0].mxu0 %v6052
      %v6097 = vpop.f32.mrb[0].mxu0
      %v6098 = vadd.f32 0.0, %v6097
      %v6099 = vpop.f32.mrb[0].mxu0
      %v6100 = vadd.f32 0.0, %v6099
      %v6101 = vpop.f32.mrb[0].mxu0
      %v6102 = vpop.f32.mrb[0].mxu0
      %6103 = vdwg.mxu0
      %6104 = vmatprep.subr.bf16.mxu0 0
      %6105 = vmatpush1.bf16.msra.mxu0 %v6061
      %6106 = vmatprep.subr.bf16.mxu0 0
      %6107 = vmatpush1.bf16.msra.mxu0 0
      %6108 = vmatprep.subr.bf16.mxu0 0
      %6109 = vmatpush1.bf16.msra.mxu0 0
      %6110 = vmatprep.subr.bf16.mxu0 0
      %6111 = vmatpush1.bf16.msra.mxu0 0
      %6112 = vmatprep.subr.bf16.mxu0 0
      %6113 = vmatpush1.bf16.msra.mxu0 0
      %6114 = vmatprep.subr.bf16.mxu0 0
      %6115 = vmatpush1.bf16.msra.mxu0 0
      %6116 = vmatprep.subr.bf16.mxu0 0
      %6117 = vmatpush1.bf16.msra.mxu0 0
      %6118 = vmatprep.subr.bf16.mxu0 0
      %6119 = vmatpush1.bf16.msra.mxu0 0
      %6120 = vmatprep.subr.bf16.mxu0 0
      %6121 = vmatpush1.bf16.msra.mxu0 0
      %6122 = vmatprep.subr.bf16.mxu0 0
      %6123 = vmatpush1.bf16.msra.mxu0 0
      %6124 = vmatprep.subr.bf16.mxu0 0
      %6125 = vmatpush1.bf16.msra.mxu0 0
      %6126 = vmatprep.subr.bf16.mxu0 0
      %6127 = vmatpush1.bf16.msra.mxu0 0
      %6128 = vmatprep.subr.bf16.mxu0 0
      %6129 = vmatpush1.bf16.msra.mxu0 0
      %6130 = vmatprep.subr.bf16.mxu0 0
      %6131 = vmatpush1.bf16.msra.mxu0 0
      %6132 = vmatprep.subr.bf16.mxu0 0
      %6133 = vmatpush1.bf16.msra.mxu0 0
      %6134 = vmatprep.subr.bf16.mxu0 0
      %6135 = vmatpush1.bf16.msra.mxu0 0
      %6136 = vmatprep.mubr.bf16.mxu0 0
      %6137 = vmatmul.mubr.bf16.gmra.mrb[0].mxu0 %v6052
      %v6138 = vpop.f32.mrb[0].mxu0
      %v6139 = vadd.f32 0.0, %v6138
      %v6140 = vpop.f32.mrb[0].mxu0
      %v6141 = vpop.f32.mrb[0].mxu0
      %v6142 = vpop.f32.mrb[0].mxu0
      %6143 = vdwg.mxu0
      %v6144 = vadd.f32 %v6038, %v6098
      %v6145 = vadd.f32 %v6039, %v6100
      %v6146 = vadd.f32 %v6040, %v6139
      %v6147 = vld [vmem:[%s17] sm:$0xf]
      %v6148 = vpack.c.bf16 %v3450, %v3450
      %v6149 = vpack.c.bf16 %v3451, %v3451
      %v6150 = vpack.c.bf16 %v3452, %v3452
      %6151 = vset.pattern.permute.xlu0 2
      %6152 = vperm.xlu0 %6151, %v3454
      %v6153 = vpop.permute.xlu0 %6152
      %v6156 = vsel %vm635, %v6147, 0
      %v6159 = vsel %vm1061, %v6148, 0
      %v6162 = vsel %vm1061, %v6149, 0
      %v6165 = vsel %vm1061, %v6150, 0
      %6167 = vmatprep.subr.bf16.mxu0 %v6162
      %6168 = vmatpush1.bf16.msra.mxu0 %v6159
      %6169 = vmatprep.subr.bf16.mxu0 0
      %6170 = vmatpush1.bf16.msra.mxu0 0
      %6171 = vmatprep.subr.bf16.mxu0 0
      %6172 = vmatpush1.bf16.msra.mxu0 0
      %6173 = vmatprep.subr.bf16.mxu0 0
      %6174 = vmatpush1.bf16.msra.mxu0 0
      %6175 = vmatprep.subr.bf16.mxu0 0
      %6176 = vmatpush1.bf16.msra.mxu0 0
      %6177 = vmatprep.subr.bf16.mxu0 0
      %6178 = vmatpush1.bf16.msra.mxu0 0
      %6179 = vmatprep.subr.bf16.mxu0 0
      %6180 = vmatpush1.bf16.msra.mxu0 0
      %6181 = vmatprep.subr.bf16.mxu0 0
      %6182 = vmatpush1.bf16.msra.mxu0 0
      %6183 = vmatprep.subr.bf16.mxu0 0
      %6184 = vmatpush1.bf16.msra.mxu0 0
      %6185 = vmatprep.subr.bf16.mxu0 0
      %6186 = vmatpush1.bf16.msra.mxu0 0
      %6187 = vmatprep.subr.bf16.mxu0 0
      %6188 = vmatpush1.bf16.msra.mxu0 0
      %6189 = vmatprep.subr.bf16.mxu0 0
      %6190 = vmatpush1.bf16.msra.mxu0 0
      %6191 = vmatprep.subr.bf16.mxu0 0
      %6192 = vmatpush1.bf16.msra.mxu0 0
      %6193 = vmatprep.subr.bf16.mxu0 0
      %6194 = vmatpush1.bf16.msra.mxu0 0
      %6195 = vmatprep.subr.bf16.mxu0 0
      %6196 = vmatpush1.bf16.msra.mxu0 0
      %6197 = vmatprep.subr.bf16.mxu0 0
      %6198 = vmatpush1.bf16.msra.mxu0 0
      %6199 = vmatprep.mubr.bf16.mxu0 0
      %6200 = vmatmul.mubr.bf16.gmra.mrb[0].mxu0 %v6156
      %v6201 = vpop.f32.mrb[0].mxu0
      %v6202 = vadd.f32 %v6153, %v6201
      %v6203 = vpop.f32.mrb[0].mxu0
      %v6204 = vadd.f32 %v6153, %v6203
      %v6205 = vpop.f32.mrb[0].mxu0
      %v6206 = vpop.f32.mrb[0].mxu0
      %6207 = vdwg.mxu0
      %6208 = vmatprep.subr.bf16.mxu0 0
      %6209 = vmatpush1.bf16.msra.mxu0 %v6165
      %6210 = vmatprep.subr.bf16.mxu0 0
      %6211 = vmatpush1.bf16.msra.mxu0 0
      %6212 = vmatprep.subr.bf16.mxu0 0
      %6213 = vmatpush1.bf16.msra.mxu0 0
      %6214 = vmatprep.subr.bf16.mxu0 0
      %6215 = vmatpush1.bf16.msra.mxu0 0
      %6216 = vmatprep.subr.bf16.mxu0 0
      %6217 = vmatpush1.bf16.msra.mxu0 0
      %6218 = vmatprep.subr.bf16.mxu0 0
      %6219 = vmatpush1.bf16.msra.mxu0 0
      %6220 = vmatprep.subr.bf16.mxu0 0
      %6221 = vmatpush1.bf16.msra.mxu0 0
      %6222 = vmatprep.subr.bf16.mxu0 0
      %6223 = vmatpush1.bf16.msra.mxu0 0
      %6224 = vmatprep.subr.bf16.mxu0 0
      %6225 = vmatpush1.bf16.msra.mxu0 0
      %6226 = vmatprep.subr.bf16.mxu0 0
      %6227 = vmatpush1.bf16.msra.mxu0 0
      %6228 = vmatprep.subr.bf16.mxu0 0
      %6229 = vmatpush1.bf16.msra.mxu0 0
      %6230 = vmatprep.subr.bf16.mxu0 0
      %6231 = vmatpush1.bf16.msra.mxu0 0
      %6232 = vmatprep.subr.bf16.mxu0 0
      %6233 = vmatpush1.bf16.msra.mxu0 0
      %6234 = vmatprep.subr.bf16.mxu0 0
      %6235 = vmatpush1.bf16.msra.mxu0 0
      %6236 = vmatprep.subr.bf16.mxu0 0
      %6237 = vmatpush1.bf16.msra.mxu0 0
      %6238 = vmatprep.subr.bf16.mxu0 0
      %6239 = vmatpush1.bf16.msra.mxu0 0
      %6240 = vmatprep.mubr.bf16.mxu0 0
      %6241 = vmatmul.mubr.bf16.gmra.mrb[0].mxu0 %v6156
      %v6242 = vpop.f32.mrb[0].mxu0
      %v6243 = vadd.f32 %v6153, %v6242
      %v6244 = vpop.f32.mrb[0].mxu0
      %v6245 = vpop.f32.mrb[0].mxu0
      %v6246 = vpop.f32.mrb[0].mxu0
      %6247 = vdwg.mxu0
      %v6248 = vadd.f32 %v6144, %v6202
      %v6249 = vadd.f32 %v6145, %v6204
      %v6250 = vadd.f32 %v6146, %v6243
      %v6251 = vmul.f32 %v6248, %v994
      %v6252 = vmul.f32 %v6249, %v998
      %v6253 = vmul.f32 %v6250, %v1002
      %6254 = vst [vmem:[%s609] sm:$0xff] %v6251
      %6255 = vst [vmem:[%s609 + $0x8] sm:$0xff] %v6252
      %6256 = vst.msk [vmem:[%s609 + $0x10] sm:$0xff] %vm622, %v6253
      %p6257 = scmp.lt.s32.totalorder %s29, 1
      %s6258 = scalar_select %p6257, %s29, 1
      %s6259 = smul.addr %s6258, 3
      %s6260 = smul.addr %s6259, 8
      %s6261 = scalar_lea.vmem %s18, %s6260
      // Predicated region
      $region93: #{res_attn_block.1} parent=91 // pred_check
        %p6262 = pneg %p440
      $region94: #{res_attn_block.1} parent=91 // pred_check_branch
        %6264 = sbr.rel (%p6262) target = $region96
      $region95: #{res_attn_block.1} parent=91 // pred_region
        _
      $region96: #{res_attn_block.1} parent=91 // pred_fallthru
        _
    $region92: #{res_attn_block.1} parent=5 // pred_fallthru
      _
    %p6265 = scmp.le.s32.totalorder 2, %s24
    // Predicated region
    $region97: #{res_attn_block.1} parent=5 // pred_check
      %p6266 = pneg %p6265
    $region98: #{res_attn_block.1} parent=5 // pred_check_branch
      %6268 = sbr.rel (%p6266) target = $region100
    $region99: #{res_attn_block.1} parent=5 // pred_region
      %s6269 = ssub.s32 %s24, 2
      // Predicated region
      $region101: #{res_attn_block.1} parent=99 // pred_check
        %p6270 = pneg %p446
      $region102: #{res_attn_block.1} parent=99 // pred_check_branch
        %6272 = sbr.rel (%p6270) target = $region104
      $region103: #{res_attn_block.1} parent=99 // pred_region
        %p6273 = scmp.lt.s32.totalorder %s30, 1
        %s6274 = scalar_select %p6273, %s30, 1
        %s6275 = smul.addr %s6274, 3
        %s6276 = smul.addr %s6275, 8
        %s6277 = scalar_lea.vmem %s18, %s6276
      $region104: #{res_attn_block.1} parent=99 // pred_fallthru
        _
    $region100: #{res_attn_block.1} parent=5 // pred_fallthru
      _
  $region6: #{res_attn_block.1} parent=0 // loop_footer
    %s28 = sadd.s32 1, %s24
  $region7: #{res_attn_block.1} parent=0 // loop_footer_branch
    %23 = sbr.rel target = $region3
  $region8: #{res_attn_block.1} parent=0 // loop_exit
    _

</llo_original>
